<compile_context>
chip_gen: v7x
topology: tpu7x:2x2x1
jax: 0.10.0
libtpu: 0.0.40
codegen_flags: <defaults>
</compile_context>

<pallas_src>
import functools
import math

import jax
import jax.numpy as jnp
from jax import lax
from jax.experimental import pallas as pl
from jax.experimental.pallas import tpu as pltpu

LN_EPS = 1e-6


def _round_up(x, m):
    return ((x + m - 1) // m) * m


def _nbytes(shape, dtype):
    return math.prod(shape) * jnp.dtype(dtype).itemsize


# --------------------------------- in-kernel helpers --------------------------------
def _layer_norm(y, gamma, beta):
    # One reduction pass: sum and sum-of-squares; rsqrt on the EUP.
    d = y.shape[-1]
    s = jnp.sum(y, axis=-1, keepdims=True)
    ss = jnp.sum(y * y, axis=-1, keepdims=True)
    mean = s * (1.0 / d)
    var = ss * (1.0 / d) - mean * mean
    return (y - mean) * lax.rsqrt(var + LN_EPS) * gamma + beta


def _attention_sublayer(x_res, k_heads, v_heads, wq_ref, wfc_ref, gamma_ref, beta_ref,
                        attn_ref, *, n_head, d_k, d_v, inv_temp, valid_len):
    """One MultiHeadAttention sublayer (residual + LayerNorm included).

    x_res   : (tq, D) f32 query rows (also the residual)
    k_heads : (H, Lk_pad, d_k) bf16 cached key projection
    v_heads : (H, Lk_pad, d_v) bf16 cached value projection
    valid_len: number of real (unpadded) key rows (static Python int)
    """
    tq = x_res.shape[0]
    lk = k_heads.shape[1]
    x_bf = x_res.astype(jnp.bfloat16)

    # fused wide projection: one matmul for all heads, then split heads
    qf = jnp.dot(x_bf, wq_ref[...], preferred_element_type=jnp.float32) * inv_temp
    qh = jnp.transpose(qf.reshape(tq, n_head, d_k), (1, 0, 2)).astype(jnp.bfloat16)

    scores = jnp.einsum('hqd,hkd->hqk', qh, k_heads,
                        preferred_element_type=jnp.float32)            # (H, tq, Lk)
    if valid_len < lk:                                                  # static branch
        col = lax.broadcasted_iota(jnp.int32, (1, 1, lk), 2)
        scores = jnp.where(col < valid_len, scores, -1e9)

    scores = scores - jnp.max(scores, axis=-1, keepdims=True)
    p = jnp.exp(scores)
    p = p * pl.reciprocal(jnp.sum(p, axis=-1, keepdims=True), approx=True)

    if attn_ref is not None:
        attn_ref[0] = p.astype(attn_ref.dtype)

    ctx = jnp.einsum('hqk,hkd->hqd', p.astype(jnp.bfloat16), v_heads,
                     preferred_element_type=jnp.float32)                # (H, tq, dv)
    ctx = jnp.transpose(ctx, (1, 0, 2)).reshape(tq, n_head * d_v)

    proj = jnp.dot(ctx.astype(jnp.bfloat16), wfc_ref[...],
                   preferred_element_type=jnp.float32)                  # (tq, D)
    return _layer_norm(proj + x_res, gamma_ref[...], beta_ref[...])


# ----------------------------------- fused kernel ------------------------------------
def decoder_layer_kernel(
        # inputs (bf16 activations, bf16 matmul weights, f32 LN/bias params)
        dec_full_ref, enc_full_ref,
        wq_s_ref, wk_s_ref, wv_s_ref, wfc_s_ref, g_s_ref, b_s_ref,
        wq_c_ref, wk_c_ref, wv_c_ref, wfc_c_ref, g_c_ref, b_c_ref,
        w1_ref, b1_ref, w2_ref, b2_ref, g_f_ref, b_f_ref,
        # outputs then scratch
        *out_and_scratch,
        n_head, d_k, d_v, tq, l_dec_valid, l_enc_valid, return_attns):
    if return_attns:
        out_ref, slf_attn_ref, enc_attn_ref = out_and_scratch[:3]
        ks_scr, vs_scr, kc_scr, vc_scr = out_and_scratch[3:]
    else:
        out_ref = out_and_scratch[0]
        slf_attn_ref = enc_attn_ref = None
        ks_scr, vs_scr, kc_scr, vc_scr = out_and_scratch[1:]

    inv_temp = 1.0 / (d_k ** 0.5)

    # K/V projections once per batch element (first q-tile), cached in VMEM scratch.
    # NOTE: relies on the qt axis being "arbitrary" (sequential, qt==0 first per b).
    @pl.when(pl.program_id(1) == 0)
    def _():
        dec_bf = dec_full_ref[0]                     # (L_dec_p, D) bf16
        enc_bf = enc_full_ref[0]                     # (L_enc_p, D) bf16
        l_dec, l_enc = dec_bf.shape[0], enc_bf.shape[0]
        ks = jnp.dot(dec_bf, wk_s_ref[...], preferred_element_type=jnp.float32)
        vs = jnp.dot(dec_bf, wv_s_ref[...], preferred_element_type=jnp.float32)
        kc = jnp.dot(enc_bf, wk_c_ref[...], preferred_element_type=jnp.float32)
        vc = jnp.dot(enc_bf, wv_c_ref[...], preferred_element_type=jnp.float32)
        ks_scr[...] = jnp.transpose(ks.reshape(l_dec, n_head, d_k), (1, 0, 2)).astype(jnp.bfloat16)
        vs_scr[...] = jnp.transpose(vs.reshape(l_dec, n_head, d_v), (1, 0, 2)).astype(jnp.bfloat16)
        kc_scr[...] = jnp.transpose(kc.reshape(l_enc, n_head, d_k), (1, 0, 2)).astype(jnp.bfloat16)
        vc_scr[...] = jnp.transpose(vc.reshape(l_enc, n_head, d_v), (1, 0, 2)).astype(jnp.bfloat16)

    # q-tile rows: sliced out of the already-resident full dec block (no 2nd stream)
    q_start = pl.multiple_of(pl.program_id(1) * tq, tq)
    x0 = dec_full_ref[0, pl.ds(q_start, tq), :].astype(jnp.float32)     # (tq, D)

    # self-attention sublayer
    x1 = _attention_sublayer(x0, ks_scr[...], vs_scr[...], wq_s_ref, wfc_s_ref,
                             g_s_ref, b_s_ref, slf_attn_ref,
                             n_head=n_head, d_k=d_k, d_v=d_v,
                             inv_temp=inv_temp, valid_len=l_dec_valid)
    # encoder-decoder attention sublayer
    x2 = _attention_sublayer(x1, kc_scr[...], vc_scr[...], wq_c_ref, wfc_c_ref,
                             g_c_ref, b_c_ref, enc_attn_ref,
                             n_head=n_head, d_k=d_k, d_v=d_v,
                             inv_temp=inv_temp, valid_len=l_enc_valid)
    # position-wise FFN sublayer
    h = jnp.dot(x2.astype(jnp.bfloat16), w1_ref[...],
                preferred_element_type=jnp.float32) + b1_ref[...]
    h = jnp.maximum(h, 0.0)
    y = jnp.dot(h.astype(jnp.bfloat16), w2_ref[...],
                preferred_element_type=jnp.float32) + b2_ref[...]
    y = _layer_norm(y + x2, g_f_ref[...], b_f_ref[...])
    out_ref[0] = y.astype(out_ref.dtype)


# ---------------------------------- Python wrapper -----------------------------------
def decoder_layer(dec_input, enc_output, params, *, q_tile=256,
                  attn_dtype=jnp.bfloat16, return_attns=True):
    """Fused DecoderLayer forward.  q_tile=256 targets v6e/v7x; use 128 on v5e."""
    B, L_dec, D = dec_input.shape
    L_enc = enc_output.shape[1]
    sa, ca, ff = params["slf_attn"], params["enc_attn"], params["pos_ffn"]
    H, d_k, d_v = sa["n_head"], sa["d_k"], sa["d_v"]
    d_inner = ff["w1"].shape[1]
    out_dtype = dec_input.dtype

    # --- tile / padding choice (no whole-sequence fallback) ---
    if L_dec <= q_tile:
        L_dec_p = _round_up(L_dec, 8)
        tq = L_dec_p
    else:
        L_dec_p = _round_up(L_dec, q_tile)
        tq = q_tile
    L_enc_p = _round_up(L_enc, 128 if L_enc >= 128 else 8)
    nqt = L_dec_p // tq

    # Activations fed to the kernel in bf16 (matmul consumers are bf16 anyway).
    dec_bf = dec_input.astype(jnp.bfloat16)
    enc_bf = enc_output.astype(jnp.bfloat16)
    if L_dec_p != L_dec:
        dec_bf = jnp.pad(dec_bf, ((0, 0), (0, L_dec_p - L_dec), (0, 0)))
    if L_enc_p != L_enc:
        enc_bf = jnp.pad(enc_bf, ((0, 0), (0, L_enc_p - L_enc), (0, 0)))

    const2 = lambda b, qt: (0, 0)
    batch3 = lambda b, qt: (b, 0, 0)

    def _call(single_buffer):
        def cspec(shape, imap=const2):
            # constant / per-batch blocks: single-buffered (no per-step index change)
            if single_buffer:
                return pl.BlockSpec(shape, imap, pipeline_mode=pl.Buffered(1))
            return pl.BlockSpec(shape, imap)

        in_specs = [
            cspec((1, L_dec_p, D), batch3),          # full dec (self K/V + q source)
            cspec((1, L_enc_p, D), batch3),          # full enc (cross K/V source)
            # self-attn weights
            cspec((D, H * d_k)), cspec((D, H * d_k)), cspec((D, H * d_v)),
            cspec((H * d_v, D)), cspec((1, D)), cspec((1, D)),
            # cross-attn weights
            cspec((D, H * d_k)), cspec((D, H * d_k)), cspec((D, H * d_v)),
            cspec((H * d_v, D)), cspec((1, D)), cspec((1, D)),
            # FFN weights
            cspec((D, d_inner)), cspec((1, d_inner)), cspec((d_inner, D)),
            cspec((1, D)), cspec((1, D)), cspec((1, D)),
        ]

        out_shapes = [jax.ShapeDtypeStruct((B, L_dec_p, D), out_dtype)]
        out_specs = [pl.BlockSpec((1, tq, D), lambda b, qt: (b, qt, 0))]
        if return_attns:
            out_shapes += [jax.ShapeDtypeStruct((B, H, L_dec_p, L_dec_p), attn_dtype),
                           jax.ShapeDtypeStruct((B, H, L_dec_p, L_enc_p), attn_dtype)]
            out_specs += [pl.BlockSpec((1, H, tq, L_dec_p), lambda b, qt: (b, 0, qt, 0)),
                          pl.BlockSpec((1, H, tq, L_enc_p), lambda b, qt: (b, 0, qt, 0))]

        scratch_shapes = [
            pltpu.VMEM((H, L_dec_p, d_k), jnp.bfloat16),
            pltpu.VMEM((H, L_dec_p, d_v), jnp.bfloat16),
            pltpu.VMEM((H, L_enc_p, d_k), jnp.bfloat16),
            pltpu.VMEM((H, L_enc_p, d_v), jnp.bfloat16),
        ]

        # --- VMEM budget: count buffering factors once (no double hedging) ---
        sb = 1 if single_buffer else 2
        need = 0
        need += sb * (_nbytes((1, L_dec_p, D), jnp.bfloat16) +
                      _nbytes((1, L_enc_p, D), jnp.bfloat16))
        for shp, dt in [((D, H * d_k), jnp.bfloat16)] * 4 + \
                       [((D, H * d_v), jnp.bfloat16)] * 2 + \
                       [((H * d_v, D), jnp.bfloat16)] * 2 + \
                       [((D, d_inner), jnp.bfloat16), ((d_inner, D), jnp.bfloat16),
                        ((1, d_inner), jnp.float32)] + [((1, D), jnp.float32)] * 7:
            need += sb * _nbytes(shp, dt)
        need += 2 * _nbytes((1, tq, D), out_dtype)
        if return_attns:
            need += 2 * (_nbytes((1, H, tq, L_dec_p), attn_dtype) +
                         _nbytes((1, H, tq, L_enc_p), attn_dtype))
        need += _nbytes((H, L_dec_p, d_k + d_v), jnp.bfloat16)
        need += _nbytes((H, L_enc_p, d_k + d_v), jnp.bfloat16)
        need = int(need * 1.5) + (4 << 20)          # margin for f32 temporaries
        try:
            cap = int(pltpu.get_tpu_info().vmem_capacity_bytes * 0.85)
        except Exception:
            cap = 64 * 1024 * 1024
        vmem_limit = max(32 * 1024 * 1024, min(need, cap))

        kernel = functools.partial(
            decoder_layer_kernel, n_head=H, d_k=d_k, d_v=d_v, tq=tq,
            l_dec_valid=L_dec, l_enc_valid=L_enc, return_attns=return_attns)

        return pl.pallas_call(
            kernel,
            out_shape=tuple(out_shapes),
            grid_spec=pltpu.PrefetchScalarGridSpec(
                num_scalar_prefetch=0,
                grid=(B, nqt),
                in_specs=in_specs,
                out_specs=out_specs,
                scratch_shapes=scratch_shapes,
            ),
            compiler_params=pltpu.CompilerParams(
                # qt MUST stay "arbitrary": K/V scratch is filled at qt==0.
                dimension_semantics=("parallel", "arbitrary"),
                vmem_limit_bytes=vmem_limit,
            ),
        )(
            dec_bf, enc_bf,
            sa["wq"], sa["wk"], sa["wv"], sa["wfc"], sa["gamma"], sa["beta"],
            ca["wq"], ca["wk"], ca["wv"], ca["wfc"], ca["gamma"], ca["beta"],
            ff["w1"], ff["b1"], ff["w2"], ff["b2"], ff["gamma"], ff["beta"],
        )

    try:
        outs = _call(single_buffer=True)
    except Exception:
        # Compatibility fallback if pipeline_mode=pl.Buffered(1) is unsupported
        # on this JAX/libtpu version (default double-buffering; same numerics).
        outs = _call(single_buffer=False)

    outs = outs if isinstance(outs, (tuple, list)) else (outs,)
    dec_out = outs[0][:, :L_dec]
    if not return_attns:
        return dec_out, None, None
    slf_attn = outs[1][:, :, :L_dec, :L_dec]
    enc_attn = outs[2][:, :, :L_dec, :L_enc]
    return dec_out, slf_attn, enc_attn


# --------------------------------- parameter setup -----------------------------------
def init_mha_params(key, d_model, n_head, d_k, d_v):
    ks = jax.random.split(key, 4)
    scale = 0.1
    return {
        "n_head": n_head, "d_k": d_k, "d_v": d_v,
        # fused projections stored (in_features, H*head_dim), bf16 for the MXU
        "wq": (scale * jax.random.normal(ks[0], (d_model, n_head * d_k), jnp.float32)
               ).astype(jnp.bfloat16),
        "wk": (scale * jax.random.normal(ks[1], (d_model, n_head * d_k), jnp.float32)
               ).astype(jnp.bfloat16),
        "wv": (scale * jax.random.normal(ks[2], (d_model, n_head * d_v), jnp.float32)
               ).astype(jnp.bfloat16),
        "wfc": (scale * jax.random.normal(ks[3], (n_head * d_v, d_model), jnp.float32)
                ).astype(jnp.bfloat16),
        "gamma": jnp.ones((1, d_model), jnp.float32),
        "beta": jnp.zeros((1, d_model), jnp.float32),
    }


def init_ffn_params(key, d_model, d_inner):
    ks = jax.random.split(key, 4)
    scale = 0.1
    return {
        "w1": (scale * jax.random.normal(ks[0], (d_model, d_inner), jnp.float32)
               ).astype(jnp.bfloat16),
        "b1": scale * jax.random.normal(ks[1], (1, d_inner), jnp.float32),
        "w2": (scale * jax.random.normal(ks[2], (d_inner, d_model), jnp.float32)
               ).astype(jnp.bfloat16),
        "b2": scale * jax.random.normal(ks[3], (1, d_model), jnp.float32),
        "gamma": jnp.ones((1, d_model), jnp.float32),
        "beta": jnp.zeros((1, d_model), jnp.float32),
    }


# ------------------------------ pure-JAX reference ------------------------------------
def _reference(dec_input, enc_output, params):
    def ln(y, gamma, beta):
        mean = y.mean(-1, keepdims=True)
        var = ((y - mean) ** 2).mean(-1, keepdims=True)
        return (y - mean) / jnp.sqrt(var + LN_EPS) * gamma + beta

    def mha(q, kv, p):
        H, dk, dv = p["n_head"], p["d_k"], p["d_v"]
        B, Lq, D = q.shape
        Lk = kv.shape[1]
        wq, wk = p["wq"].astype(jnp.float32), p["wk"].astype(jnp.float32)
        wv, wfc = p["wv"].astype(jnp.float32), p["wfc"].astype(jnp.float32)
        qh = (q @ wq).reshape(B, Lq, H, dk).transpose(0, 2, 1, 3)
        kh = (kv @ wk).reshape(B, Lk, H, dk).transpose(0, 2, 1, 3)
        vh = (kv @ wv).reshape(B, Lk, H, dv).transpose(0, 2, 1, 3)
        s = jnp.einsum('bhqd,bhkd->bhqk', qh / (dk ** 0.5), kh)
        a = jax.nn.softmax(s, axis=-1)
        o = jnp.einsum('bhqk,bhkd->bhqd', a, vh).transpose(0, 2, 1, 3).reshape(B, Lq, H * dv)
        return ln(o @ wfc + q, p["gamma"], p["beta"]), a

    x1, a1 = mha(dec_input, dec_input, params["slf_attn"])
    x2, a2 = mha(x1, enc_output, params["enc_attn"])
    ff = params["pos_ffn"]
    h = jnp.maximum(x2 @ ff["w1"].astype(jnp.float32) + ff["b1"], 0.0)
    y = h @ ff["w2"].astype(jnp.float32) + ff["b2"] + x2
    return ln(y, ff["gamma"], ff["beta"]), a1, a2


if __name__ == "__main__":
    # small, forward-consistent shapes
    B, L_dec, L_enc = 2, 8, 16
    d_model, d_inner, n_head, d_k, d_v = 32, 64, 2, 16, 16

    key = jax.random.PRNGKey(0)
    k_in, k_enc, k_s, k_e, k_f = jax.random.split(key, 5)

    dec_input = jax.random.normal(k_in, (B, L_dec, d_model), jnp.float32)
    enc_output = jax.random.normal(k_enc, (B, L_enc, d_model), jnp.float32)

    params = {
        "slf_attn": init_mha_params(k_s, d_model, n_head, d_k, d_v),
        "enc_attn": init_mha_params(k_e, d_model, n_head, d_k, d_v),
        "pos_ffn": init_ffn_params(k_f, d_model, d_inner),
    }

    dec_out, slf_attn, enc_attn = decoder_layer(dec_input, enc_output, params)
    jax.block_until_ready((dec_out, slf_attn, enc_attn))

    assert dec_out.shape == (B, L_dec, d_model)
    assert slf_attn.shape == (B, n_head, L_dec, L_dec)
    assert enc_attn.shape == (B, n_head, L_dec, L_enc)

    # numerical sanity vs pure-JAX f32 reference (bf16 matmuls + approx recip => loose tol)
    ref_out, ref_sa, ref_ea = _reference(dec_input, enc_output, params)
    assert jnp.allclose(dec_out, ref_out, atol=0.1, rtol=0.1), "dec_out mismatch"
    assert jnp.allclose(slf_attn.astype(jnp.float32), ref_sa, atol=0.05), "slf_attn mismatch"
    assert jnp.allclose(enc_attn.astype(jnp.float32), ref_ea, atol=0.05), "enc_attn mismatch"

    print("KERNEL_OK")
</pallas_src>

<mosaic_0001>
module attributes {stable_mosaic.version = 11 : i64} {
  func.func @decoder_layer_kernel(%arg0: i32, %arg1: i32, %arg2: memref<1x8x32xbf16, #tpu.memory_space<vmem>>, %arg3: memref<1x16x32xbf16, #tpu.memory_space<vmem>>, %arg4: memref<32x32xbf16, #tpu.memory_space<vmem>>, %arg5: memref<32x32xbf16, #tpu.memory_space<vmem>>, %arg6: memref<32x32xbf16, #tpu.memory_space<vmem>>, %arg7: memref<32x32xbf16, #tpu.memory_space<vmem>>, %arg8: memref<1x32xf32, #tpu.memory_space<vmem>>, %arg9: memref<1x32xf32, #tpu.memory_space<vmem>>, %arg10: memref<32x32xbf16, #tpu.memory_space<vmem>>, %arg11: memref<32x32xbf16, #tpu.memory_space<vmem>>, %arg12: memref<32x32xbf16, #tpu.memory_space<vmem>>, %arg13: memref<32x32xbf16, #tpu.memory_space<vmem>>, %arg14: memref<1x32xf32, #tpu.memory_space<vmem>>, %arg15: memref<1x32xf32, #tpu.memory_space<vmem>>, %arg16: memref<32x64xbf16, #tpu.memory_space<vmem>>, %arg17: memref<1x64xf32, #tpu.memory_space<vmem>>, %arg18: memref<64x32xbf16, #tpu.memory_space<vmem>>, %arg19: memref<1x32xf32, #tpu.memory_space<vmem>>, %arg20: memref<1x32xf32, #tpu.memory_space<vmem>>, %arg21: memref<1x32xf32, #tpu.memory_space<vmem>>, %arg22: memref<1x8x32xf32, #tpu.memory_space<vmem>>, %arg23: memref<1x2x8x8xbf16, #tpu.memory_space<vmem>>, %arg24: memref<1x2x8x16xbf16, #tpu.memory_space<vmem>>, %arg25: memref<2x8x16xbf16, #tpu.memory_space<vmem>>, %arg26: memref<2x8x16xbf16, #tpu.memory_space<vmem>>, %arg27: memref<2x16x16xbf16, #tpu.memory_space<vmem>>, %arg28: memref<2x16x16xbf16, #tpu.memory_space<vmem>>) attributes {dimension_semantics = [#tpu.dimension_semantics<parallel>, #tpu.dimension_semantics<arbitrary>], iteration_bounds = array<i64: 2, 1>, scalar_prefetch = 0 : i64, scratch_operands = 4 : i64, tpu.core_type = #tpu.core_type<tc>, window_params = [{pipeline_mode = #tpu.pipeline_mode<synchronous>, transform_indices = @transform_0, window_bounds = array<i64: 1, 8, 32>}, {pipeline_mode = #tpu.pipeline_mode<synchronous>, transform_indices = @transform_1, window_bounds = array<i64: 1, 16, 32>}, {pipeline_mode = #tpu.pipeline_mode<synchronous>, transform_indices = @transform_2, window_bounds = array<i64: 32, 32>}, {pipeline_mode = #tpu.pipeline_mode<synchronous>, transform_indices = @transform_3, window_bounds = array<i64: 32, 32>}, {pipeline_mode = #tpu.pipeline_mode<synchronous>, transform_indices = @transform_4, window_bounds = array<i64: 32, 32>}, {pipeline_mode = #tpu.pipeline_mode<synchronous>, transform_indices = @transform_5, window_bounds = array<i64: 32, 32>}, {pipeline_mode = #tpu.pipeline_mode<synchronous>, transform_indices = @transform_6, window_bounds = array<i64: 1, 32>}, {pipeline_mode = #tpu.pipeline_mode<synchronous>, transform_indices = @transform_7, window_bounds = array<i64: 1, 32>}, {pipeline_mode = #tpu.pipeline_mode<synchronous>, transform_indices = @transform_8, window_bounds = array<i64: 32, 32>}, {pipeline_mode = #tpu.pipeline_mode<synchronous>, transform_indices = @transform_9, window_bounds = array<i64: 32, 32>}, {pipeline_mode = #tpu.pipeline_mode<synchronous>, transform_indices = @transform_10, window_bounds = array<i64: 32, 32>}, {pipeline_mode = #tpu.pipeline_mode<synchronous>, transform_indices = @transform_11, window_bounds = array<i64: 32, 32>}, {pipeline_mode = #tpu.pipeline_mode<synchronous>, transform_indices = @transform_12, window_bounds = array<i64: 1, 32>}, {pipeline_mode = #tpu.pipeline_mode<synchronous>, transform_indices = @transform_13, window_bounds = array<i64: 1, 32>}, {pipeline_mode = #tpu.pipeline_mode<synchronous>, transform_indices = @transform_14, window_bounds = array<i64: 32, 64>}, {pipeline_mode = #tpu.pipeline_mode<synchronous>, transform_indices = @transform_15, window_bounds = array<i64: 1, 64>}, {pipeline_mode = #tpu.pipeline_mode<synchronous>, transform_indices = @transform_16, window_bounds = array<i64: 64, 32>}, {pipeline_mode = #tpu.pipeline_mode<synchronous>, transform_indices = @transform_17, window_bounds = array<i64: 1, 32>}, {pipeline_mode = #tpu.pipeline_mode<synchronous>, transform_indices = @transform_18, window_bounds = array<i64: 1, 32>}, {pipeline_mode = #tpu.pipeline_mode<synchronous>, transform_indices = @transform_19, window_bounds = array<i64: 1, 32>}, {transform_indices = @transform_20, window_bounds = array<i64: 1, 8, 32>}, {transform_indices = @transform_21, window_bounds = array<i64: 1, 2, 8, 8>}, {transform_indices = @transform_22, window_bounds = array<i64: 1, 2, 8, 16>}]} {
    %c0_i32 = arith.constant 0 : i32
    %0 = arith.cmpi eq, %arg1, %c0_i32 : i32
    %1 = arith.extui %0 : i1 to i32
    %c0_i32_0 = arith.constant 0 : i32
    %2 = arith.cmpi ne, %1, %c0_i32_0 : i32
    scf.if %2 {
      %c0_84 = arith.constant 0 : index
      %c0_85 = arith.constant 0 : index
      %c0_86 = arith.constant 0 : index
      %165 = vector.load %arg2[%c0_84, %c0_85, %c0_86] : memref<1x8x32xbf16, #tpu.memory_space<vmem>>, vector<1x8x32xbf16>
      %166 = vector.shape_cast %165 : vector<1x8x32xbf16> to vector<8x32xbf16>
      %c0_87 = arith.constant 0 : index
      %c0_88 = arith.constant 0 : index
      %c0_89 = arith.constant 0 : index
      %167 = vector.load %arg3[%c0_87, %c0_88, %c0_89] : memref<1x16x32xbf16, #tpu.memory_space<vmem>>, vector<1x16x32xbf16>
      %168 = vector.shape_cast %167 : vector<1x16x32xbf16> to vector<16x32xbf16>
      %c0_90 = arith.constant 0 : index
      %c0_91 = arith.constant 0 : index
      %169 = vector.load %arg5[%c0_90, %c0_91] : memref<32x32xbf16, #tpu.memory_space<vmem>>, vector<32x32xbf16>
      %cst_92 = arith.constant dense<0.000000e+00> : vector<8x32xf32>
      %170 = tpu.matmul %166, %169, %cst_92 {dimension_numbers = #tpu.dot_dimension_numbers<[1], [0], [0], [1], [0, 0, 1, 1], [], []>} : vector<8x32xbf16>, vector<32x32xbf16>, vector<8x32xf32> -> vector<8x32xf32>
      %c0_93 = arith.constant 0 : index
      %c0_94 = arith.constant 0 : index
      %171 = vector.load %arg6[%c0_93, %c0_94] : memref<32x32xbf16, #tpu.memory_space<vmem>>, vector<32x32xbf16>
      %cst_95 = arith.constant dense<0.000000e+00> : vector<8x32xf32>
      %172 = tpu.matmul %166, %171, %cst_95 {dimension_numbers = #tpu.dot_dimension_numbers<[1], [0], [0], [1], [0, 0, 1, 1], [], []>} : vector<8x32xbf16>, vector<32x32xbf16>, vector<8x32xf32> -> vector<8x32xf32>
      %c0_96 = arith.constant 0 : index
      %c0_97 = arith.constant 0 : index
      %173 = vector.load %arg11[%c0_96, %c0_97] : memref<32x32xbf16, #tpu.memory_space<vmem>>, vector<32x32xbf16>
      %cst_98 = arith.constant dense<0.000000e+00> : vector<16x32xf32>
      %174 = tpu.matmul %168, %173, %cst_98 {dimension_numbers = #tpu.dot_dimension_numbers<[1], [0], [0], [1], [0, 0, 1, 1], [], []>} : vector<16x32xbf16>, vector<32x32xbf16>, vector<16x32xf32> -> vector<16x32xf32>
      %c0_99 = arith.constant 0 : index
      %c0_100 = arith.constant 0 : index
      %175 = vector.load %arg12[%c0_99, %c0_100] : memref<32x32xbf16, #tpu.memory_space<vmem>>, vector<32x32xbf16>
      %cst_101 = arith.constant dense<0.000000e+00> : vector<16x32xf32>
      %176 = tpu.matmul %168, %175, %cst_101 {dimension_numbers = #tpu.dot_dimension_numbers<[1], [0], [0], [1], [0, 0, 1, 1], [], []>} : vector<16x32xbf16>, vector<32x32xbf16>, vector<16x32xf32> -> vector<16x32xf32>
      %177 = vector.shape_cast %170 : vector<8x32xf32> to vector<8x2x16xf32>
      %178 = tpu.transpose %177, [1, 0, 2] : vector<8x2x16xf32> -> vector<2x8x16xf32>
      %179 = arith.truncf %178 : vector<2x8x16xf32> to vector<2x8x16xbf16>
      %c0_102 = arith.constant 0 : index
      %c0_103 = arith.constant 0 : index
      %c0_104 = arith.constant 0 : index
      %180 = vector.load %arg25[%c0_102, %c0_103, %c0_104] : memref<2x8x16xbf16, #tpu.memory_space<vmem>>, vector<2x8x16xbf16>
      tpu.vector_store %arg25[%c0_102, %c0_103, %c0_104], %179 {strides = array<i32>} : memref<2x8x16xbf16, #tpu.memory_space<vmem>>, vector<2x8x16xbf16>,
      %181 = vector.shape_cast %172 : vector<8x32xf32> to vector<8x2x16xf32>
      %182 = tpu.transpose %181, [1, 0, 2] : vector<8x2x16xf32> -> vector<2x8x16xf32>
      %183 = arith.truncf %182 : vector<2x8x16xf32> to vector<2x8x16xbf16>
      %c0_105 = arith.constant 0 : index
      %c0_106 = arith.constant 0 : index
      %c0_107 = arith.constant 0 : index
      %184 = vector.load %arg26[%c0_105, %c0_106, %c0_107] : memref<2x8x16xbf16, #tpu.memory_space<vmem>>, vector<2x8x16xbf16>
      tpu.vector_store %arg26[%c0_105, %c0_106, %c0_107], %183 {strides = array<i32>} : memref<2x8x16xbf16, #tpu.memory_space<vmem>>, vector<2x8x16xbf16>,
      %185 = vector.shape_cast %174 : vector<16x32xf32> to vector<16x2x16xf32>
      %186 = tpu.transpose %185, [1, 0, 2] : vector<16x2x16xf32> -> vector<2x16x16xf32>
      %187 = arith.truncf %186 : vector<2x16x16xf32> to vector<2x16x16xbf16>
      %c0_108 = arith.constant 0 : index
      %c0_109 = arith.constant 0 : index
      %c0_110 = arith.constant 0 : index
      %188 = vector.load %arg27[%c0_108, %c0_109, %c0_110] : memref<2x16x16xbf16, #tpu.memory_space<vmem>>, vector<2x16x16xbf16>
      tpu.vector_store %arg27[%c0_108, %c0_109, %c0_110], %187 {strides = array<i32>} : memref<2x16x16xbf16, #tpu.memory_space<vmem>>, vector<2x16x16xbf16>,
      %189 = vector.shape_cast %176 : vector<16x32xf32> to vector<16x2x16xf32>
      %190 = tpu.transpose %189, [1, 0, 2] : vector<16x2x16xf32> -> vector<2x16x16xf32>
      %191 = arith.truncf %190 : vector<2x16x16xf32> to vector<2x16x16xbf16>
      %c0_111 = arith.constant 0 : index
      %c0_112 = arith.constant 0 : index
      %c0_113 = arith.constant 0 : index
      %192 = vector.load %arg28[%c0_111, %c0_112, %c0_113] : memref<2x16x16xbf16, #tpu.memory_space<vmem>>, vector<2x16x16xbf16>
      tpu.vector_store %arg28[%c0_111, %c0_112, %c0_113], %191 {strides = array<i32>} : memref<2x16x16xbf16, #tpu.memory_space<vmem>>, vector<2x16x16xbf16>,
    } else {
    }
    %c8_i32 = arith.constant 8 : i32
    %3 = arith.muli %arg1, %c8_i32 : i32
    %4 = tpu.assume_multiple %3, 8 : i32
    %c0 = arith.constant 0 : index
    %5 = arith.index_cast %4 : i32 to index
    %c0_1 = arith.constant 0 : index
    %6 = vector.load %arg2[%c0, %5, %c0_1] : memref<1x8x32xbf16, #tpu.memory_space<vmem>>, vector<1x8x32xbf16>
    %7 = vector.shape_cast %6 : vector<1x8x32xbf16> to vector<8x32xbf16>
    %8 = arith.extf %7 : vector<8x32xbf16> to vector<8x32xf32>
    %c0_2 = arith.constant 0 : index
    %c0_3 = arith.constant 0 : index
    %c0_4 = arith.constant 0 : index
    %9 = vector.load %arg25[%c0_2, %c0_3, %c0_4] : memref<2x8x16xbf16, #tpu.memory_space<vmem>>, vector<2x8x16xbf16>
    %c0_5 = arith.constant 0 : index
    %c0_6 = arith.constant 0 : index
    %c0_7 = arith.constant 0 : index
    %10 = vector.load %arg26[%c0_5, %c0_6, %c0_7] : memref<2x8x16xbf16, #tpu.memory_space<vmem>>, vector<2x8x16xbf16>
    %11 = arith.truncf %8 : vector<8x32xf32> to vector<8x32xbf16>
    %c0_8 = arith.constant 0 : index
    %c0_9 = arith.constant 0 : index
    %12 = vector.load %arg4[%c0_8, %c0_9] : memref<32x32xbf16, #tpu.memory_space<vmem>>, vector<32x32xbf16>
    %cst = arith.constant dense<0.000000e+00> : vector<8x32xf32>
    %13 = tpu.matmul %11, %12, %cst {dimension_numbers = #tpu.dot_dimension_numbers<[1], [0], [0], [1], [0, 0, 1, 1], [], []>} : vector<8x32xbf16>, vector<32x32xbf16>, vector<8x32xf32> -> vector<8x32xf32>
    %cst_10 = arith.constant 2.500000e-01 : f32
    %14 = vector.broadcast %cst_10 : f32 to vector<8x32xf32>
    %15 = arith.mulf %13, %14 : vector<8x32xf32>
    %16 = vector.shape_cast %15 : vector<8x32xf32> to vector<8x2x16xf32>
    %17 = tpu.transpose %16, [1, 0, 2] : vector<8x2x16xf32> -> vector<2x8x16xf32>
    %18 = arith.truncf %17 : vector<2x8x16xf32> to vector<2x8x16xbf16>
    "tpu.trace_start"() <{level = 10 : i32, message = "hqd,hkd->hqk"}> : () -> ()
    %cst_11 = arith.constant dense<0.000000e+00> : vector<2x8x8xf32>
    %19 = tpu.matmul %18, %9, %cst_11 {dimension_numbers = #tpu.dot_dimension_numbers<[2], [2], [1], [1], [0, 0, 0, 1, 1, 1], [0], [0]>} : vector<2x8x16xbf16>, vector<2x8x16xbf16>, vector<2x8x8xf32> -> vector<2x8x8xf32>
    "tpu.trace_stop"() : () -> ()
    %cst_12 = arith.constant dense<0xFF800000> : vector<2x8xf32>
    %20 = vector.multi_reduction <maximumf>, %19, %cst_12 [2] : vector<2x8x8xf32> to vector<2x8xf32>
    %21 = vector.shape_cast %20 : vector<2x8xf32> to vector<2x8x1xf32>
    %22 = vector.broadcast %21 : vector<2x8x1xf32> to vector<2x8x8xf32>
    %23 = arith.subf %19, %22 : vector<2x8x8xf32>
    %24 = math.exp %23 : vector<2x8x8xf32>
    %cst_13 = arith.constant dense<0.000000e+00> : vector<2x8xf32>
    %25 = vector.multi_reduction <add>, %24, %cst_13 [2] : vector<2x8x8xf32> to vector<2x8xf32>
    %26 = vector.shape_cast %25 : vector<2x8xf32> to vector<2x8x1xf32>
    %27 = tpu.reciprocal %26 {approx = true} : vector<2x8x1xf32> -> vector<2x8x1xf32>
    %28 = vector.broadcast %27 : vector<2x8x1xf32> to vector<2x8x8xf32>
    %29 = arith.mulf %24, %28 : vector<2x8x8xf32>
    %30 = arith.truncf %29 : vector<2x8x8xf32> to vector<2x8x8xbf16>
    %c0_14 = arith.constant 0 : index
    %c0_15 = arith.constant 0 : index
    %c0_16 = arith.constant 0 : index
    %c0_17 = arith.constant 0 : index
    %31 = vector.load %arg23[%c0_14, %c0_15, %c0_16, %c0_17] : memref<1x2x8x8xbf16, #tpu.memory_space<vmem>>, vector<1x2x8x8xbf16>
    %32 = vector.shape_cast %31 : vector<1x2x8x8xbf16> to vector<2x8x8xbf16>
    %33 = vector.shape_cast %30 : vector<2x8x8xbf16> to vector<1x2x8x8xbf16>
    tpu.vector_store %arg23[%c0_14, %c0_15, %c0_16, %c0_17], %33 {strides = array<i32>} : memref<1x2x8x8xbf16, #tpu.memory_space<vmem>>, vector<1x2x8x8xbf16>,
    %34 = arith.truncf %29 : vector<2x8x8xf32> to vector<2x8x8xbf16>
    "tpu.trace_start"() <{level = 10 : i32, message = "hqk,hkd->hqd"}> : () -> ()
    %cst_18 = arith.constant dense<0.000000e+00> : vector<2x8x16xf32>
    %35 = tpu.matmul %34, %10, %cst_18 {dimension_numbers = #tpu.dot_dimension_numbers<[2], [1], [1], [2], [0, 0, 0, 1, 1, 2], [0], [0]>} : vector<2x8x8xbf16>, vector<2x8x16xbf16>, vector<2x8x16xf32> -> vector<2x8x16xf32>
    "tpu.trace_stop"() : () -> ()
    %36 = tpu.transpose %35, [1, 0, 2] : vector<2x8x16xf32> -> vector<8x2x16xf32>
    %37 = vector.shape_cast %36 : vector<8x2x16xf32> to vector<8x32xf32>
    %38 = arith.truncf %37 : vector<8x32xf32> to vector<8x32xbf16>
    %c0_19 = arith.constant 0 : index
    %c0_20 = arith.constant 0 : index
    %39 = vector.load %arg7[%c0_19, %c0_20] : memref<32x32xbf16, #tpu.memory_space<vmem>>, vector<32x32xbf16>
    %cst_21 = arith.constant dense<0.000000e+00> : vector<8x32xf32>
    %40 = tpu.matmul %38, %39, %cst_21 {dimension_numbers = #tpu.dot_dimension_numbers<[1], [0], [0], [1], [0, 0, 1, 1], [], []>} : vector<8x32xbf16>, vector<32x32xbf16>, vector<8x32xf32> -> vector<8x32xf32>
    %41 = arith.addf %40, %8 : vector<8x32xf32>
    %c0_22 = arith.constant 0 : index
    %c0_23 = arith.constant 0 : index
    %42 = vector.load %arg8[%c0_22, %c0_23] : memref<1x32xf32, #tpu.memory_space<vmem>>, vector<1x32xf32>
    %c0_24 = arith.constant 0 : index
    %c0_25 = arith.constant 0 : index
    %43 = vector.load %arg9[%c0_24, %c0_25] : memref<1x32xf32, #tpu.memory_space<vmem>>, vector<1x32xf32>
    %cst_26 = arith.constant dense<0.000000e+00> : vector<8xf32>
    %44 = vector.multi_reduction <add>, %41, %cst_26 [1] : vector<8x32xf32> to vector<8xf32>
    %45 = vector.shape_cast %44 : vector<8xf32> to vector<8x1xf32>
    %46 = arith.mulf %41, %41 : vector<8x32xf32>
    %cst_27 = arith.constant dense<0.000000e+00> : vector<8xf32>
    %47 = vector.multi_reduction <add>, %46, %cst_27 [1] : vector<8x32xf32> to vector<8xf32>
    %48 = vector.shape_cast %47 : vector<8xf32> to vector<8x1xf32>
    %cst_28 = arith.constant 3.125000e-02 : f32
    %49 = vector.broadcast %cst_28 : f32 to vector<8x1xf32>
    %50 = arith.mulf %45, %49 : vector<8x1xf32>
    %cst_29 = arith.constant 3.125000e-02 : f32
    %51 = vector.broadcast %cst_29 : f32 to vector<8x1xf32>
    %52 = arith.mulf %48, %51 : vector<8x1xf32>
    %53 = arith.mulf %50, %50 : vector<8x1xf32>
    %54 = arith.subf %52, %53 : vector<8x1xf32>
    %55 = vector.broadcast %50 : vector<8x1xf32> to vector<8x32xf32>
    %56 = arith.subf %41, %55 : vector<8x32xf32>
    %cst_30 = arith.constant 9.99999997E-7 : f32
    %57 = vector.broadcast %cst_30 : f32 to vector<8x1xf32>
    %58 = arith.addf %54, %57 : vector<8x1xf32>
    %59 = math.rsqrt %58 : vector<8x1xf32>
    %60 = vector.broadcast %59 : vector<8x1xf32> to vector<8x32xf32>
    %61 = arith.mulf %56, %60 : vector<8x32xf32>
    %62 = vector.broadcast %42 : vector<1x32xf32> to vector<8x32xf32>
    %63 = arith.mulf %61, %62 : vector<8x32xf32>
    %64 = vector.broadcast %43 : vector<1x32xf32> to vector<8x32xf32>
    %65 = arith.addf %63, %64 : vector<8x32xf32>
    %c0_31 = arith.constant 0 : index
    %c0_32 = arith.constant 0 : index
    %c0_33 = arith.constant 0 : index
    %66 = vector.load %arg27[%c0_31, %c0_32, %c0_33] : memref<2x16x16xbf16, #tpu.memory_space<vmem>>, vector<2x16x16xbf16>
    %c0_34 = arith.constant 0 : index
    %c0_35 = arith.constant 0 : index
    %c0_36 = arith.constant 0 : index
    %67 = vector.load %arg28[%c0_34, %c0_35, %c0_36] : memref<2x16x16xbf16, #tpu.memory_space<vmem>>, vector<2x16x16xbf16>
    %68 = arith.truncf %65 : vector<8x32xf32> to vector<8x32xbf16>
    %c0_37 = arith.constant 0 : index
    %c0_38 = arith.constant 0 : index
    %69 = vector.load %arg10[%c0_37, %c0_38] : memref<32x32xbf16, #tpu.memory_space<vmem>>, vector<32x32xbf16>
    %cst_39 = arith.constant dense<0.000000e+00> : vector<8x32xf32>
    %70 = tpu.matmul %68, %69, %cst_39 {dimension_numbers = #tpu.dot_dimension_numbers<[1], [0], [0], [1], [0, 0, 1, 1], [], []>} : vector<8x32xbf16>, vector<32x32xbf16>, vector<8x32xf32> -> vector<8x32xf32>
    %cst_40 = arith.constant 2.500000e-01 : f32
    %71 = vector.broadcast %cst_40 : f32 to vector<8x32xf32>
    %72 = arith.mulf %70, %71 : vector<8x32xf32>
    %73 = vector.shape_cast %72 : vector<8x32xf32> to vector<8x2x16xf32>
    %74 = tpu.transpose %73, [1, 0, 2] : vector<8x2x16xf32> -> vector<2x8x16xf32>
    %75 = arith.truncf %74 : vector<2x8x16xf32> to vector<2x8x16xbf16>
    "tpu.trace_start"() <{level = 10 : i32, message = "hqd,hkd->hqk"}> : () -> ()
    %cst_41 = arith.constant dense<0.000000e+00> : vector<2x8x16xf32>
    %76 = tpu.matmul %75, %66, %cst_41 {dimension_numbers = #tpu.dot_dimension_numbers<[2], [2], [1], [1], [0, 0, 0, 1, 1, 1], [0], [0]>} : vector<2x8x16xbf16>, vector<2x16x16xbf16>, vector<2x8x16xf32> -> vector<2x8x16xf32>
    "tpu.trace_stop"() : () -> ()
    %cst_42 = arith.constant dense<0xFF800000> : vector<2x8xf32>
    %77 = vector.multi_reduction <maximumf>, %76, %cst_42 [2] : vector<2x8x16xf32> to vector<2x8xf32>
    %78 = vector.shape_cast %77 : vector<2x8xf32> to vector<2x8x1xf32>
    %79 = vector.broadcast %78 : vector<2x8x1xf32> to vector<2x8x16xf32>
    %80 = arith.subf %76, %79 : vector<2x8x16xf32>
    %81 = math.exp %80 : vector<2x8x16xf32>
    %cst_43 = arith.constant dense<0.000000e+00> : vector<2x8xf32>
    %82 = vector.multi_reduction <add>, %81, %cst_43 [2] : vector<2x8x16xf32> to vector<2x8xf32>
    %83 = vector.shape_cast %82 : vector<2x8xf32> to vector<2x8x1xf32>
    %84 = tpu.reciprocal %83 {approx = true} : vector<2x8x1xf32> -> vector<2x8x1xf32>
    %85 = vector.broadcast %84 : vector<2x8x1xf32> to vector<2x8x16xf32>
    %86 = arith.mulf %81, %85 : vector<2x8x16xf32>
    %87 = arith.truncf %86 : vector<2x8x16xf32> to vector<2x8x16xbf16>
    %c0_44 = arith.constant 0 : index
    %c0_45 = arith.constant 0 : index
    %c0_46 = arith.constant 0 : index
    %c0_47 = arith.constant 0 : index
    %88 = vector.load %arg24[%c0_44, %c0_45, %c0_46, %c0_47] : memref<1x2x8x16xbf16, #tpu.memory_space<vmem>>, vector<1x2x8x16xbf16>
    %89 = vector.shape_cast %88 : vector<1x2x8x16xbf16> to vector<2x8x16xbf16>
    %90 = vector.shape_cast %87 : vector<2x8x16xbf16> to vector<1x2x8x16xbf16>
    tpu.vector_store %arg24[%c0_44, %c0_45, %c0_46, %c0_47], %90 {strides = array<i32>} : memref<1x2x8x16xbf16, #tpu.memory_space<vmem>>, vector<1x2x8x16xbf16>,
    %91 = arith.truncf %86 : vector<2x8x16xf32> to vector<2x8x16xbf16>
    "tpu.trace_start"() <{level = 10 : i32, message = "hqk,hkd->hqd"}> : () -> ()
    %cst_48 = arith.constant dense<0.000000e+00> : vector<2x8x16xf32>
    %92 = tpu.matmul %91, %67, %cst_48 {dimension_numbers = #tpu.dot_dimension_numbers<[2], [1], [1], [2], [0, 0, 0, 1, 1, 2], [0], [0]>} : vector<2x8x16xbf16>, vector<2x16x16xbf16>, vector<2x8x16xf32> -> vector<2x8x16xf32>
    "tpu.trace_stop"() : () -> ()
    %93 = tpu.transpose %92, [1, 0, 2] : vector<2x8x16xf32> -> vector<8x2x16xf32>
    %94 = vector.shape_cast %93 : vector<8x2x16xf32> to vector<8x32xf32>
    %95 = arith.truncf %94 : vector<8x32xf32> to vector<8x32xbf16>
    %c0_49 = arith.constant 0 : index
    %c0_50 = arith.constant 0 : index
    %96 = vector.load %arg13[%c0_49, %c0_50] : memref<32x32xbf16, #tpu.memory_space<vmem>>, vector<32x32xbf16>
    %cst_51 = arith.constant dense<0.000000e+00> : vector<8x32xf32>
    %97 = tpu.matmul %95, %96, %cst_51 {dimension_numbers = #tpu.dot_dimension_numbers<[1], [0], [0], [1], [0, 0, 1, 1], [], []>} : vector<8x32xbf16>, vector<32x32xbf16>, vector<8x32xf32> -> vector<8x32xf32>
    %98 = arith.addf %97, %65 : vector<8x32xf32>
    %c0_52 = arith.constant 0 : index
    %c0_53 = arith.constant 0 : index
    %99 = vector.load %arg14[%c0_52, %c0_53] : memref<1x32xf32, #tpu.memory_space<vmem>>, vector<1x32xf32>
    %c0_54 = arith.constant 0 : index
    %c0_55 = arith.constant 0 : index
    %100 = vector.load %arg15[%c0_54, %c0_55] : memref<1x32xf32, #tpu.memory_space<vmem>>, vector<1x32xf32>
    %cst_56 = arith.constant dense<0.000000e+00> : vector<8xf32>
    %101 = vector.multi_reduction <add>, %98, %cst_56 [1] : vector<8x32xf32> to vector<8xf32>
    %102 = vector.shape_cast %101 : vector<8xf32> to vector<8x1xf32>
    %103 = arith.mulf %98, %98 : vector<8x32xf32>
    %cst_57 = arith.constant dense<0.000000e+00> : vector<8xf32>
    %104 = vector.multi_reduction <add>, %103, %cst_57 [1] : vector<8x32xf32> to vector<8xf32>
    %105 = vector.shape_cast %104 : vector<8xf32> to vector<8x1xf32>
    %cst_58 = arith.constant 3.125000e-02 : f32
    %106 = vector.broadcast %cst_58 : f32 to vector<8x1xf32>
    %107 = arith.mulf %102, %106 : vector<8x1xf32>
    %cst_59 = arith.constant 3.125000e-02 : f32
    %108 = vector.broadcast %cst_59 : f32 to vector<8x1xf32>
    %109 = arith.mulf %105, %108 : vector<8x1xf32>
    %110 = arith.mulf %107, %107 : vector<8x1xf32>
    %111 = arith.subf %109, %110 : vector<8x1xf32>
    %112 = vector.broadcast %107 : vector<8x1xf32> to vector<8x32xf32>
    %113 = arith.subf %98, %112 : vector<8x32xf32>
    %cst_60 = arith.constant 9.99999997E-7 : f32
    %114 = vector.broadcast %cst_60 : f32 to vector<8x1xf32>
    %115 = arith.addf %111, %114 : vector<8x1xf32>
    %116 = math.rsqrt %115 : vector<8x1xf32>
    %117 = vector.broadcast %116 : vector<8x1xf32> to vector<8x32xf32>
    %118 = arith.mulf %113, %117 : vector<8x32xf32>
    %119 = vector.broadcast %99 : vector<1x32xf32> to vector<8x32xf32>
    %120 = arith.mulf %118, %119 : vector<8x32xf32>
    %121 = vector.broadcast %100 : vector<1x32xf32> to vector<8x32xf32>
    %122 = arith.addf %120, %121 : vector<8x32xf32>
    %123 = arith.truncf %122 : vector<8x32xf32> to vector<8x32xbf16>
    %c0_61 = arith.constant 0 : index
    %c0_62 = arith.constant 0 : index
    %124 = vector.load %arg16[%c0_61, %c0_62] : memref<32x64xbf16, #tpu.memory_space<vmem>>, vector<32x64xbf16>
    %cst_63 = arith.constant dense<0.000000e+00> : vector<8x64xf32>
    %125 = tpu.matmul %123, %124, %cst_63 {dimension_numbers = #tpu.dot_dimension_numbers<[1], [0], [0], [1], [0, 0, 1, 1], [], []>} : vector<8x32xbf16>, vector<32x64xbf16>, vector<8x64xf32> -> vector<8x64xf32>
    %c0_64 = arith.constant 0 : index
    %c0_65 = arith.constant 0 : index
    %126 = vector.load %arg17[%c0_64, %c0_65] : memref<1x64xf32, #tpu.memory_space<vmem>>, vector<1x64xf32>
    %127 = vector.broadcast %126 : vector<1x64xf32> to vector<8x64xf32>
    %128 = arith.addf %125, %127 : vector<8x64xf32>
    %cst_66 = arith.constant 0.000000e+00 : f32
    %129 = vector.broadcast %cst_66 : f32 to vector<8x64xf32>
    %130 = arith.maximumf %128, %129 : vector<8x64xf32>
    %131 = arith.truncf %130 : vector<8x64xf32> to vector<8x64xbf16>
    %c0_67 = arith.constant 0 : index
    %c0_68 = arith.constant 0 : index
    %132 = vector.load %arg18[%c0_67, %c0_68] : memref<64x32xbf16, #tpu.memory_space<vmem>>, vector<64x32xbf16>
    %cst_69 = arith.constant dense<0.000000e+00> : vector<8x32xf32>
    %133 = tpu.matmul %131, %132, %cst_69 {dimension_numbers = #tpu.dot_dimension_numbers<[1], [0], [0], [1], [0, 0, 1, 1], [], []>} : vector<8x64xbf16>, vector<64x32xbf16>, vector<8x32xf32> -> vector<8x32xf32>
    %c0_70 = arith.constant 0 : index
    %c0_71 = arith.constant 0 : index
    %134 = vector.load %arg19[%c0_70, %c0_71] : memref<1x32xf32, #tpu.memory_space<vmem>>, vector<1x32xf32>
    %135 = vector.broadcast %134 : vector<1x32xf32> to vector<8x32xf32>
    %136 = arith.addf %133, %135 : vector<8x32xf32>
    %137 = arith.addf %136, %122 : vector<8x32xf32>
    %c0_72 = arith.constant 0 : index
    %c0_73 = arith.constant 0 : index
    %138 = vector.load %arg20[%c0_72, %c0_73] : memref<1x32xf32, #tpu.memory_space<vmem>>, vector<1x32xf32>
    %c0_74 = arith.constant 0 : index
    %c0_75 = arith.constant 0 : index
    %139 = vector.load %arg21[%c0_74, %c0_75] : memref<1x32xf32, #tpu.memory_space<vmem>>, vector<1x32xf32>
    %cst_76 = arith.constant dense<0.000000e+00> : vector<8xf32>
    %140 = vector.multi_reduction <add>, %137, %cst_76 [1] : vector<8x32xf32> to vector<8xf32>
    %141 = vector.shape_cast %140 : vector<8xf32> to vector<8x1xf32>
    %142 = arith.mulf %137, %137 : vector<8x32xf32>
    %cst_77 = arith.constant dense<0.000000e+00> : vector<8xf32>
    %143 = vector.multi_reduction <add>, %142, %cst_77 [1] : vector<8x32xf32> to vector<8xf32>
    %144 = vector.shape_cast %143 : vector<8xf32> to vector<8x1xf32>
    %cst_78 = arith.constant 3.125000e-02 : f32
    %145 = vector.broadcast %cst_78 : f32 to vector<8x1xf32>
    %146 = arith.mulf %141, %145 : vector<8x1xf32>
    %cst_79 = arith.constant 3.125000e-02 : f32
    %147 = vector.broadcast %cst_79 : f32 to vector<8x1xf32>
    %148 = arith.mulf %144, %147 : vector<8x1xf32>
    %149 = arith.mulf %146, %146 : vector<8x1xf32>
    %150 = arith.subf %148, %149 : vector<8x1xf32>
    %151 = vector.broadcast %146 : vector<8x1xf32> to vector<8x32xf32>
    %152 = arith.subf %137, %151 : vector<8x32xf32>
    %cst_80 = arith.constant 9.99999997E-7 : f32
    %153 = vector.broadcast %cst_80 : f32 to vector<8x1xf32>
    %154 = arith.addf %150, %153 : vector<8x1xf32>
    %155 = math.rsqrt %154 : vector<8x1xf32>
    %156 = vector.broadcast %155 : vector<8x1xf32> to vector<8x32xf32>
    %157 = arith.mulf %152, %156 : vector<8x32xf32>
    %158 = vector.broadcast %138 : vector<1x32xf32> to vector<8x32xf32>
    %159 = arith.mulf %157, %158 : vector<8x32xf32>
    %160 = vector.broadcast %139 : vector<1x32xf32> to vector<8x32xf32>
    %161 = arith.addf %159, %160 : vector<8x32xf32>
    %c0_81 = arith.constant 0 : index
    %c0_82 = arith.constant 0 : index
    %c0_83 = arith.constant 0 : index
    %162 = vector.load %arg22[%c0_81, %c0_82, %c0_83] : memref<1x8x32xf32, #tpu.memory_space<vmem>>, vector<1x8x32xf32>
    %163 = vector.shape_cast %162 : vector<1x8x32xf32> to vector<8x32xf32>
    %164 = vector.shape_cast %161 : vector<8x32xf32> to vector<1x8x32xf32>
    tpu.vector_store %arg22[%c0_81, %c0_82, %c0_83], %164 {strides = array<i32>} : memref<1x8x32xf32, #tpu.memory_space<vmem>>, vector<1x8x32xf32>,
    return
  }
  func.func @transform_0(%arg0: i32, %arg1: i32) -> (i32, i32, i32) {
    %c0_i32 = arith.constant 0 : i32
    %c0_i32_0 = arith.constant 0 : i32
    %c0_i32_1 = arith.constant 0 : i32
    return %arg0, %c0_i32, %c0_i32_0 : i32, i32, i32
  }
  func.func @transform_1(%arg0: i32, %arg1: i32) -> (i32, i32, i32) {
    %c0_i32 = arith.constant 0 : i32
    %c0_i32_0 = arith.constant 0 : i32
    %c0_i32_1 = arith.constant 0 : i32
    return %arg0, %c0_i32, %c0_i32_0 : i32, i32, i32
  }
  func.func @transform_2(%arg0: i32, %arg1: i32) -> (i32, i32) {
    %c0_i32 = arith.constant 0 : i32
    %c0_i32_0 = arith.constant 0 : i32
    %c0_i32_1 = arith.constant 0 : i32
    return %c0_i32, %c0_i32_0 : i32, i32
  }
  func.func @transform_3(%arg0: i32, %arg1: i32) -> (i32, i32) {
    %c0_i32 = arith.constant 0 : i32
    %c0_i32_0 = arith.constant 0 : i32
    %c0_i32_1 = arith.constant 0 : i32
    return %c0_i32, %c0_i32_0 : i32, i32
  }
  func.func @transform_4(%arg0: i32, %arg1: i32) -> (i32, i32) {
    %c0_i32 = arith.constant 0 : i32
    %c0_i32_0 = arith.constant 0 : i32
    %c0_i32_1 = arith.constant 0 : i32
    return %c0_i32, %c0_i32_0 : i32, i32
  }
  func.func @transform_5(%arg0: i32, %arg1: i32) -> (i32, i32) {
    %c0_i32 = arith.constant 0 : i32
    %c0_i32_0 = arith.constant 0 : i32
    %c0_i32_1 = arith.constant 0 : i32
    return %c0_i32, %c0_i32_0 : i32, i32
  }
  func.func @transform_6(%arg0: i32, %arg1: i32) -> (i32, i32) {
    %c0_i32 = arith.constant 0 : i32
    %c0_i32_0 = arith.constant 0 : i32
    %c0_i32_1 = arith.constant 0 : i32
    return %c0_i32, %c0_i32_0 : i32, i32
  }
  func.func @transform_7(%arg0: i32, %arg1: i32) -> (i32, i32) {
    %c0_i32 = arith.constant 0 : i32
    %c0_i32_0 = arith.constant 0 : i32
    %c0_i32_1 = arith.constant 0 : i32
    return %c0_i32, %c0_i32_0 : i32, i32
  }
  func.func @transform_8(%arg0: i32, %arg1: i32) -> (i32, i32) {
    %c0_i32 = arith.constant 0 : i32
    %c0_i32_0 = arith.constant 0 : i32
    %c0_i32_1 = arith.constant 0 : i32
    return %c0_i32, %c0_i32_0 : i32, i32
  }
  func.func @transform_9(%arg0: i32, %arg1: i32) -> (i32, i32) {
    %c0_i32 = arith.constant 0 : i32
    %c0_i32_0 = arith.constant 0 : i32
    %c0_i32_1 = arith.constant 0 : i32
    return %c0_i32, %c0_i32_0 : i32, i32
  }
  func.func @transform_10(%arg0: i32, %arg1: i32) -> (i32, i32) {
    %c0_i32 = arith.constant 0 : i32
    %c0_i32_0 = arith.constant 0 : i32
    %c0_i32_1 = arith.constant 0 : i32
    return %c0_i32, %c0_i32_0 : i32, i32
  }
  func.func @transform_11(%arg0: i32, %arg1: i32) -> (i32, i32) {
    %c0_i32 = arith.constant 0 : i32
    %c0_i32_0 = arith.constant 0 : i32
    %c0_i32_1 = arith.constant 0 : i32
    return %c0_i32, %c0_i32_0 : i32, i32
  }
  func.func @transform_12(%arg0: i32, %arg1: i32) -> (i32, i32) {
    %c0_i32 = arith.constant 0 : i32
    %c0_i32_0 = arith.constant 0 : i32
    %c0_i32_1 = arith.constant 0 : i32
    return %c0_i32, %c0_i32_0 : i32, i32
  }
  func.func @transform_13(%arg0: i32, %arg1: i32) -> (i32, i32) {
    %c0_i32 = arith.constant 0 : i32
    %c0_i32_0 = arith.constant 0 : i32
    %c0_i32_1 = arith.constant 0 : i32
    return %c0_i32, %c0_i32_0 : i32, i32
  }
  func.func @transform_14(%arg0: i32, %arg1: i32) -> (i32, i32) {
    %c0_i32 = arith.constant 0 : i32
    %c0_i32_0 = arith.constant 0 : i32
    %c0_i32_1 = arith.constant 0 : i32
    return %c0_i32, %c0_i32_0 : i32, i32
  }
  func.func @transform_15(%arg0: i32, %arg1: i32) -> (i32, i32) {
    %c0_i32 = arith.constant 0 : i32
    %c0_i32_0 = arith.constant 0 : i32
    %c0_i32_1 = arith.constant 0 : i32
    return %c0_i32, %c0_i32_0 : i32, i32
  }
  func.func @transform_16(%arg0: i32, %arg1: i32) -> (i32, i32) {
    %c0_i32 = arith.constant 0 : i32
    %c0_i32_0 = arith.constant 0 : i32
    %c0_i32_1 = arith.constant 0 : i32
    return %c0_i32, %c0_i32_0 : i32, i32
  }
  func.func @transform_17(%arg0: i32, %arg1: i32) -> (i32, i32) {
    %c0_i32 = arith.constant 0 : i32
    %c0_i32_0 = arith.constant 0 : i32
    %c0_i32_1 = arith.constant 0 : i32
    return %c0_i32, %c0_i32_0 : i32, i32
  }
  func.func @transform_18(%arg0: i32, %arg1: i32) -> (i32, i32) {
    %c0_i32 = arith.constant 0 : i32
    %c0_i32_0 = arith.constant 0 : i32
    %c0_i32_1 = arith.constant 0 : i32
    return %c0_i32, %c0_i32_0 : i32, i32
  }
  func.func @transform_19(%arg0: i32, %arg1: i32) -> (i32, i32) {
    %c0_i32 = arith.constant 0 : i32
    %c0_i32_0 = arith.constant 0 : i32
    %c0_i32_1 = arith.constant 0 : i32
    return %c0_i32, %c0_i32_0 : i32, i32
  }
  func.func @transform_20(%arg0: i32, %arg1: i32) -> (i32, i32, i32) {
    %c0_i32 = arith.constant 0 : i32
    %c0_i32_0 = arith.constant 0 : i32
    return %arg0, %arg1, %c0_i32 : i32, i32, i32
  }
  func.func @transform_21(%arg0: i32, %arg1: i32) -> (i32, i32, i32, i32) {
    %c0_i32 = arith.constant 0 : i32
    %c0_i32_0 = arith.constant 0 : i32
    %c0_i32_1 = arith.constant 0 : i32
    return %arg0, %c0_i32, %arg1, %c0_i32_0 : i32, i32, i32, i32
  }
  func.func @transform_22(%arg0: i32, %arg1: i32) -> (i32, i32, i32, i32) {
    %c0_i32 = arith.constant 0 : i32
    %c0_i32_0 = arith.constant 0 : i32
    %c0_i32_1 = arith.constant 0 : i32
    return %arg0, %c0_i32, %arg1, %c0_i32_0 : i32, i32, i32, i32
  }
}

module attributes {stable_mosaic.version = 11 : i64} {
  func.func @decoder_layer_kernel(%arg0: i32, %arg1: i32, %arg2: memref<1x8x32xbf16, #tpu.memory_space<vmem>>, %arg3: memref<1x16x32xbf16, #tpu.memory_space<vmem>>, %arg4: memref<32x32xbf16, #tpu.memory_space<vmem>>, %arg5: memref<32x32xbf16, #tpu.memory_space<vmem>>, %arg6: memref<32x32xbf16, #tpu.memory_space<vmem>>, %arg7: memref<32x32xbf16, #tpu.memory_space<vmem>>, %arg8: memref<1x32xf32, #tpu.memory_space<vmem>>, %arg9: memref<1x32xf32, #tpu.memory_space<vmem>>, %arg10: memref<32x32xbf16, #tpu.memory_space<vmem>>, %arg11: memref<32x32xbf16, #tpu.memory_space<vmem>>, %arg12: memref<32x32xbf16, #tpu.memory_space<vmem>>, %arg13: memref<32x32xbf16, #tpu.memory_space<vmem>>, %arg14: memref<1x32xf32, #tpu.memory_space<vmem>>, %arg15: memref<1x32xf32, #tpu.memory_space<vmem>>, %arg16: memref<32x64xbf16, #tpu.memory_space<vmem>>, %arg17: memref<1x64xf32, #tpu.memory_space<vmem>>, %arg18: memref<64x32xbf16, #tpu.memory_space<vmem>>, %arg19: memref<1x32xf32, #tpu.memory_space<vmem>>, %arg20: memref<1x32xf32, #tpu.memory_space<vmem>>, %arg21: memref<1x32xf32, #tpu.memory_space<vmem>>, %arg22: memref<1x8x32xf32, #tpu.memory_space<vmem>>, %arg23: memref<1x2x8x8xbf16, #tpu.memory_space<vmem>>, %arg24: memref<1x2x8x16xbf16, #tpu.memory_space<vmem>>, %arg25: memref<2x8x16xbf16, #tpu.memory_space<vmem>>, %arg26: memref<2x8x16xbf16, #tpu.memory_space<vmem>>, %arg27: memref<2x16x16xbf16, #tpu.memory_space<vmem>>, %arg28: memref<2x16x16xbf16, #tpu.memory_space<vmem>>) attributes {dimension_semantics = [#tpu.dimension_semantics<parallel>, #tpu.dimension_semantics<arbitrary>], iteration_bounds = array<i64: 2, 1>, scalar_prefetch = 0 : i64, scratch_operands = 4 : i64, tpu.core_type = #tpu.core_type<tc>, window_params = [{transform_indices = @transform_0, window_bounds = array<i64: 1, 8, 32>}, {transform_indices = @transform_1, window_bounds = array<i64: 1, 16, 32>}, {pipeline_mode = #tpu.pipeline_mode<synchronous>, transform_indices = @transform_2, window_bounds = array<i64: 32, 32>}, {pipeline_mode = #tpu.pipeline_mode<synchronous>, transform_indices = @transform_3, window_bounds = array<i64: 32, 32>}, {pipeline_mode = #tpu.pipeline_mode<synchronous>, transform_indices = @transform_4, window_bounds = array<i64: 32, 32>}, {pipeline_mode = #tpu.pipeline_mode<synchronous>, transform_indices = @transform_5, window_bounds = array<i64: 32, 32>}, {pipeline_mode = #tpu.pipeline_mode<synchronous>, transform_indices = @transform_6, window_bounds = array<i64: 1, 32>}, {pipeline_mode = #tpu.pipeline_mode<synchronous>, transform_indices = @transform_7, window_bounds = array<i64: 1, 32>}, {pipeline_mode = #tpu.pipeline_mode<synchronous>, transform_indices = @transform_8, window_bounds = array<i64: 32, 32>}, {pipeline_mode = #tpu.pipeline_mode<synchronous>, transform_indices = @transform_9, window_bounds = array<i64: 32, 32>}, {pipeline_mode = #tpu.pipeline_mode<synchronous>, transform_indices = @transform_10, window_bounds = array<i64: 32, 32>}, {pipeline_mode = #tpu.pipeline_mode<synchronous>, transform_indices = @transform_11, window_bounds = array<i64: 32, 32>}, {pipeline_mode = #tpu.pipeline_mode<synchronous>, transform_indices = @transform_12, window_bounds = array<i64: 1, 32>}, {pipeline_mode = #tpu.pipeline_mode<synchronous>, transform_indices = @transform_13, window_bounds = array<i64: 1, 32>}, {pipeline_mode = #tpu.pipeline_mode<synchronous>, transform_indices = @transform_14, window_bounds = array<i64: 32, 64>}, {pipeline_mode = #tpu.pipeline_mode<synchronous>, transform_indices = @transform_15, window_bounds = array<i64: 1, 64>}, {pipeline_mode = #tpu.pipeline_mode<synchronous>, transform_indices = @transform_16, window_bounds = array<i64: 64, 32>}, {pipeline_mode = #tpu.pipeline_mode<synchronous>, transform_indices = @transform_17, window_bounds = array<i64: 1, 32>}, {pipeline_mode = #tpu.pipeline_mode<synchronous>, transform_indices = @transform_18, window_bounds = array<i64: 1, 32>}, {pipeline_mode = #tpu.pipeline_mode<synchronous>, transform_indices = @transform_19, window_bounds = array<i64: 1, 32>}, {transform_indices = @transform_20, window_bounds = array<i64: 1, 8, 32>}, {transform_indices = @transform_21, window_bounds = array<i64: 1, 2, 8, 8>}, {transform_indices = @transform_22, window_bounds = array<i64: 1, 2, 8, 16>}]} {
    %c0_i32 = arith.constant 0 : i32
    %0 = arith.cmpi eq, %arg1, %c0_i32 : i32
    %1 = arith.extui %0 : i1 to i32
    %c0_i32_0 = arith.constant 0 : i32
    %2 = arith.cmpi ne, %1, %c0_i32_0 : i32
    scf.if %2 {
      %c0_84 = arith.constant 0 : index
      %c0_85 = arith.constant 0 : index
      %c0_86 = arith.constant 0 : index
      %165 = vector.load %arg2[%c0_84, %c0_85, %c0_86] : memref<1x8x32xbf16, #tpu.memory_space<vmem>>, vector<1x8x32xbf16>
      %166 = vector.shape_cast %165 : vector<1x8x32xbf16> to vector<8x32xbf16>
      %c0_87 = arith.constant 0 : index
      %c0_88 = arith.constant 0 : index
      %c0_89 = arith.constant 0 : index
      %167 = vector.load %arg3[%c0_87, %c0_88, %c0_89] : memref<1x16x32xbf16, #tpu.memory_space<vmem>>, vector<1x16x32xbf16>
      %168 = vector.shape_cast %167 : vector<1x16x32xbf16> to vector<16x32xbf16>
      %c0_90 = arith.constant 0 : index
      %c0_91 = arith.constant 0 : index
      %169 = vector.load %arg5[%c0_90, %c0_91] : memref<32x32xbf16, #tpu.memory_space<vmem>>, vector<32x32xbf16>
      %cst_92 = arith.constant dense<0.000000e+00> : vector<8x32xf32>
      %170 = tpu.matmul %166, %169, %cst_92 {dimension_numbers = #tpu.dot_dimension_numbers<[1], [0], [0], [1], [0, 0, 1, 1], [], []>} : vector<8x32xbf16>, vector<32x32xbf16>, vector<8x32xf32> -> vector<8x32xf32>
      %c0_93 = arith.constant 0 : index
      %c0_94 = arith.constant 0 : index
      %171 = vector.load %arg6[%c0_93, %c0_94] : memref<32x32xbf16, #tpu.memory_space<vmem>>, vector<32x32xbf16>
      %cst_95 = arith.constant dense<0.000000e+00> : vector<8x32xf32>
      %172 = tpu.matmul %166, %171, %cst_95 {dimension_numbers = #tpu.dot_dimension_numbers<[1], [0], [0], [1], [0, 0, 1, 1], [], []>} : vector<8x32xbf16>, vector<32x32xbf16>, vector<8x32xf32> -> vector<8x32xf32>
      %c0_96 = arith.constant 0 : index
      %c0_97 = arith.constant 0 : index
      %173 = vector.load %arg11[%c0_96, %c0_97] : memref<32x32xbf16, #tpu.memory_space<vmem>>, vector<32x32xbf16>
      %cst_98 = arith.constant dense<0.000000e+00> : vector<16x32xf32>
      %174 = tpu.matmul %168, %173, %cst_98 {dimension_numbers = #tpu.dot_dimension_numbers<[1], [0], [0], [1], [0, 0, 1, 1], [], []>} : vector<16x32xbf16>, vector<32x32xbf16>, vector<16x32xf32> -> vector<16x32xf32>
      %c0_99 = arith.constant 0 : index
      %c0_100 = arith.constant 0 : index
      %175 = vector.load %arg12[%c0_99, %c0_100] : memref<32x32xbf16, #tpu.memory_space<vmem>>, vector<32x32xbf16>
      %cst_101 = arith.constant dense<0.000000e+00> : vector<16x32xf32>
      %176 = tpu.matmul %168, %175, %cst_101 {dimension_numbers = #tpu.dot_dimension_numbers<[1], [0], [0], [1], [0, 0, 1, 1], [], []>} : vector<16x32xbf16>, vector<32x32xbf16>, vector<16x32xf32> -> vector<16x32xf32>
      %177 = vector.shape_cast %170 : vector<8x32xf32> to vector<8x2x16xf32>
      %178 = tpu.transpose %177, [1, 0, 2] : vector<8x2x16xf32> -> vector<2x8x16xf32>
      %179 = arith.truncf %178 : vector<2x8x16xf32> to vector<2x8x16xbf16>
      %c0_102 = arith.constant 0 : index
      %c0_103 = arith.constant 0 : index
      %c0_104 = arith.constant 0 : index
      %180 = vector.load %arg25[%c0_102, %c0_103, %c0_104] : memref<2x8x16xbf16, #tpu.memory_space<vmem>>, vector<2x8x16xbf16>
      tpu.vector_store %arg25[%c0_102, %c0_103, %c0_104], %179 {strides = array<i32>} : memref<2x8x16xbf16, #tpu.memory_space<vmem>>, vector<2x8x16xbf16>,
      %181 = vector.shape_cast %172 : vector<8x32xf32> to vector<8x2x16xf32>
      %182 = tpu.transpose %181, [1, 0, 2] : vector<8x2x16xf32> -> vector<2x8x16xf32>
      %183 = arith.truncf %182 : vector<2x8x16xf32> to vector<2x8x16xbf16>
      %c0_105 = arith.constant 0 : index
      %c0_106 = arith.constant 0 : index
      %c0_107 = arith.constant 0 : index
      %184 = vector.load %arg26[%c0_105, %c0_106, %c0_107] : memref<2x8x16xbf16, #tpu.memory_space<vmem>>, vector<2x8x16xbf16>
      tpu.vector_store %arg26[%c0_105, %c0_106, %c0_107], %183 {strides = array<i32>} : memref<2x8x16xbf16, #tpu.memory_space<vmem>>, vector<2x8x16xbf16>,
      %185 = vector.shape_cast %174 : vector<16x32xf32> to vector<16x2x16xf32>
      %186 = tpu.transpose %185, [1, 0, 2] : vector<16x2x16xf32> -> vector<2x16x16xf32>
      %187 = arith.truncf %186 : vector<2x16x16xf32> to vector<2x16x16xbf16>
      %c0_108 = arith.constant 0 : index
      %c0_109 = arith.constant 0 : index
      %c0_110 = arith.constant 0 : index
      %188 = vector.load %arg27[%c0_108, %c0_109, %c0_110] : memref<2x16x16xbf16, #tpu.memory_space<vmem>>, vector<2x16x16xbf16>
      tpu.vector_store %arg27[%c0_108, %c0_109, %c0_110], %187 {strides = array<i32>} : memref<2x16x16xbf16, #tpu.memory_space<vmem>>, vector<2x16x16xbf16>,
      %189 = vector.shape_cast %176 : vector<16x32xf32> to vector<16x2x16xf32>
      %190 = tpu.transpose %189, [1, 0, 2] : vector<16x2x16xf32> -> vector<2x16x16xf32>
      %191 = arith.truncf %190 : vector<2x16x16xf32> to vector<2x16x16xbf16>
      %c0_111 = arith.constant 0 : index
      %c0_112 = arith.constant 0 : index
      %c0_113 = arith.constant 0 : index
      %192 = vector.load %arg28[%c0_111, %c0_112, %c0_113] : memref<2x16x16xbf16, #tpu.memory_space<vmem>>, vector<2x16x16xbf16>
      tpu.vector_store %arg28[%c0_111, %c0_112, %c0_113], %191 {strides = array<i32>} : memref<2x16x16xbf16, #tpu.memory_space<vmem>>, vector<2x16x16xbf16>,
    } else {
    }
    %c8_i32 = arith.constant 8 : i32
    %3 = arith.muli %arg1, %c8_i32 : i32
    %4 = tpu.assume_multiple %3, 8 : i32
    %c0 = arith.constant 0 : index
    %5 = arith.index_cast %4 : i32 to index
    %c0_1 = arith.constant 0 : index
    %6 = vector.load %arg2[%c0, %5, %c0_1] : memref<1x8x32xbf16, #tpu.memory_space<vmem>>, vector<1x8x32xbf16>
    %7 = vector.shape_cast %6 : vector<1x8x32xbf16> to vector<8x32xbf16>
    %8 = arith.extf %7 : vector<8x32xbf16> to vector<8x32xf32>
    %c0_2 = arith.constant 0 : index
    %c0_3 = arith.constant 0 : index
    %c0_4 = arith.constant 0 : index
    %9 = vector.load %arg25[%c0_2, %c0_3, %c0_4] : memref<2x8x16xbf16, #tpu.memory_space<vmem>>, vector<2x8x16xbf16>
    %c0_5 = arith.constant 0 : index
    %c0_6 = arith.constant 0 : index
    %c0_7 = arith.constant 0 : index
    %10 = vector.load %arg26[%c0_5, %c0_6, %c0_7] : memref<2x8x16xbf16, #tpu.memory_space<vmem>>, vector<2x8x16xbf16>
    %11 = arith.truncf %8 : vector<8x32xf32> to vector<8x32xbf16>
    %c0_8 = arith.constant 0 : index
    %c0_9 = arith.constant 0 : index
    %12 = vector.load %arg4[%c0_8, %c0_9] : memref<32x32xbf16, #tpu.memory_space<vmem>>, vector<32x32xbf16>
    %cst = arith.constant dense<0.000000e+00> : vector<8x32xf32>
    %13 = tpu.matmul %11, %12, %cst {dimension_numbers = #tpu.dot_dimension_numbers<[1], [0], [0], [1], [0, 0, 1, 1], [], []>} : vector<8x32xbf16>, vector<32x32xbf16>, vector<8x32xf32> -> vector<8x32xf32>
    %cst_10 = arith.constant 2.500000e-01 : f32
    %14 = vector.broadcast %cst_10 : f32 to vector<8x32xf32>
    %15 = arith.mulf %13, %14 : vector<8x32xf32>
    %16 = vector.shape_cast %15 : vector<8x32xf32> to vector<8x2x16xf32>
    %17 = tpu.transpose %16, [1, 0, 2] : vector<8x2x16xf32> -> vector<2x8x16xf32>
    %18 = arith.truncf %17 : vector<2x8x16xf32> to vector<2x8x16xbf16>
    "tpu.trace_start"() <{level = 10 : i32, message = "hqd,hkd->hqk"}> : () -> ()
    %cst_11 = arith.constant dense<0.000000e+00> : vector<2x8x8xf32>
    %19 = tpu.matmul %18, %9, %cst_11 {dimension_numbers = #tpu.dot_dimension_numbers<[2], [2], [1], [1], [0, 0, 0, 1, 1, 1], [0], [0]>} : vector<2x8x16xbf16>, vector<2x8x16xbf16>, vector<2x8x8xf32> -> vector<2x8x8xf32>
    "tpu.trace_stop"() : () -> ()
    %cst_12 = arith.constant dense<0xFF800000> : vector<2x8xf32>
    %20 = vector.multi_reduction <maximumf>, %19, %cst_12 [2] : vector<2x8x8xf32> to vector<2x8xf32>
    %21 = vector.shape_cast %20 : vector<2x8xf32> to vector<2x8x1xf32>
    %22 = vector.broadcast %21 : vector<2x8x1xf32> to vector<2x8x8xf32>
    %23 = arith.subf %19, %22 : vector<2x8x8xf32>
    %24 = math.exp %23 : vector<2x8x8xf32>
    %cst_13 = arith.constant dense<0.000000e+00> : vector<2x8xf32>
    %25 = vector.multi_reduction <add>, %24, %cst_13 [2] : vector<2x8x8xf32> to vector<2x8xf32>
    %26 = vector.shape_cast %25 : vector<2x8xf32> to vector<2x8x1xf32>
    %27 = tpu.reciprocal %26 {approx = true} : vector<2x8x1xf32> -> vector<2x8x1xf32>
    %28 = vector.broadcast %27 : vector<2x8x1xf32> to vector<2x8x8xf32>
    %29 = arith.mulf %24, %28 : vector<2x8x8xf32>
    %30 = arith.truncf %29 : vector<2x8x8xf32> to vector<2x8x8xbf16>
    %c0_14 = arith.constant 0 : index
    %c0_15 = arith.constant 0 : index
    %c0_16 = arith.constant 0 : index
    %c0_17 = arith.constant 0 : index
    %31 = vector.load %arg23[%c0_14, %c0_15, %c0_16, %c0_17] : memref<1x2x8x8xbf16, #tpu.memory_space<vmem>>, vector<1x2x8x8xbf16>
    %32 = vector.shape_cast %31 : vector<1x2x8x8xbf16> to vector<2x8x8xbf16>
    %33 = vector.shape_cast %30 : vector<2x8x8xbf16> to vector<1x2x8x8xbf16>
    tpu.vector_store %arg23[%c0_14, %c0_15, %c0_16, %c0_17], %33 {strides = array<i32>} : memref<1x2x8x8xbf16, #tpu.memory_space<vmem>>, vector<1x2x8x8xbf16>,
    %34 = arith.truncf %29 : vector<2x8x8xf32> to vector<2x8x8xbf16>
    "tpu.trace_start"() <{level = 10 : i32, message = "hqk,hkd->hqd"}> : () -> ()
    %cst_18 = arith.constant dense<0.000000e+00> : vector<2x8x16xf32>
    %35 = tpu.matmul %34, %10, %cst_18 {dimension_numbers = #tpu.dot_dimension_numbers<[2], [1], [1], [2], [0, 0, 0, 1, 1, 2], [0], [0]>} : vector<2x8x8xbf16>, vector<2x8x16xbf16>, vector<2x8x16xf32> -> vector<2x8x16xf32>
    "tpu.trace_stop"() : () -> ()
    %36 = tpu.transpose %35, [1, 0, 2] : vector<2x8x16xf32> -> vector<8x2x16xf32>
    %37 = vector.shape_cast %36 : vector<8x2x16xf32> to vector<8x32xf32>
    %38 = arith.truncf %37 : vector<8x32xf32> to vector<8x32xbf16>
    %c0_19 = arith.constant 0 : index
    %c0_20 = arith.constant 0 : index
    %39 = vector.load %arg7[%c0_19, %c0_20] : memref<32x32xbf16, #tpu.memory_space<vmem>>, vector<32x32xbf16>
    %cst_21 = arith.constant dense<0.000000e+00> : vector<8x32xf32>
    %40 = tpu.matmul %38, %39, %cst_21 {dimension_numbers = #tpu.dot_dimension_numbers<[1], [0], [0], [1], [0, 0, 1, 1], [], []>} : vector<8x32xbf16>, vector<32x32xbf16>, vector<8x32xf32> -> vector<8x32xf32>
    %41 = arith.addf %40, %8 : vector<8x32xf32>
    %c0_22 = arith.constant 0 : index
    %c0_23 = arith.constant 0 : index
    %42 = vector.load %arg8[%c0_22, %c0_23] : memref<1x32xf32, #tpu.memory_space<vmem>>, vector<1x32xf32>
    %c0_24 = arith.constant 0 : index
    %c0_25 = arith.constant 0 : index
    %43 = vector.load %arg9[%c0_24, %c0_25] : memref<1x32xf32, #tpu.memory_space<vmem>>, vector<1x32xf32>
    %cst_26 = arith.constant dense<0.000000e+00> : vector<8xf32>
    %44 = vector.multi_reduction <add>, %41, %cst_26 [1] : vector<8x32xf32> to vector<8xf32>
    %45 = vector.shape_cast %44 : vector<8xf32> to vector<8x1xf32>
    %46 = arith.mulf %41, %41 : vector<8x32xf32>
    %cst_27 = arith.constant dense<0.000000e+00> : vector<8xf32>
    %47 = vector.multi_reduction <add>, %46, %cst_27 [1] : vector<8x32xf32> to vector<8xf32>
    %48 = vector.shape_cast %47 : vector<8xf32> to vector<8x1xf32>
    %cst_28 = arith.constant 3.125000e-02 : f32
    %49 = vector.broadcast %cst_28 : f32 to vector<8x1xf32>
    %50 = arith.mulf %45, %49 : vector<8x1xf32>
    %cst_29 = arith.constant 3.125000e-02 : f32
    %51 = vector.broadcast %cst_29 : f32 to vector<8x1xf32>
    %52 = arith.mulf %48, %51 : vector<8x1xf32>
    %53 = arith.mulf %50, %50 : vector<8x1xf32>
    %54 = arith.subf %52, %53 : vector<8x1xf32>
    %55 = vector.broadcast %50 : vector<8x1xf32> to vector<8x32xf32>
    %56 = arith.subf %41, %55 : vector<8x32xf32>
    %cst_30 = arith.constant 9.99999997E-7 : f32
    %57 = vector.broadcast %cst_30 : f32 to vector<8x1xf32>
    %58 = arith.addf %54, %57 : vector<8x1xf32>
    %59 = math.rsqrt %58 : vector<8x1xf32>
    %60 = vector.broadcast %59 : vector<8x1xf32> to vector<8x32xf32>
    %61 = arith.mulf %56, %60 : vector<8x32xf32>
    %62 = vector.broadcast %42 : vector<1x32xf32> to vector<8x32xf32>
    %63 = arith.mulf %61, %62 : vector<8x32xf32>
    %64 = vector.broadcast %43 : vector<1x32xf32> to vector<8x32xf32>
    %65 = arith.addf %63, %64 : vector<8x32xf32>
    %c0_31 = arith.constant 0 : index
    %c0_32 = arith.constant 0 : index
    %c0_33 = arith.constant 0 : index
    %66 = vector.load %arg27[%c0_31, %c0_32, %c0_33] : memref<2x16x16xbf16, #tpu.memory_space<vmem>>, vector<2x16x16xbf16>
    %c0_34 = arith.constant 0 : index
    %c0_35 = arith.constant 0 : index
    %c0_36 = arith.constant 0 : index
    %67 = vector.load %arg28[%c0_34, %c0_35, %c0_36] : memref<2x16x16xbf16, #tpu.memory_space<vmem>>, vector<2x16x16xbf16>
    %68 = arith.truncf %65 : vector<8x32xf32> to vector<8x32xbf16>
    %c0_37 = arith.constant 0 : index
    %c0_38 = arith.constant 0 : index
    %69 = vector.load %arg10[%c0_37, %c0_38] : memref<32x32xbf16, #tpu.memory_space<vmem>>, vector<32x32xbf16>
    %cst_39 = arith.constant dense<0.000000e+00> : vector<8x32xf32>
    %70 = tpu.matmul %68, %69, %cst_39 {dimension_numbers = #tpu.dot_dimension_numbers<[1], [0], [0], [1], [0, 0, 1, 1], [], []>} : vector<8x32xbf16>, vector<32x32xbf16>, vector<8x32xf32> -> vector<8x32xf32>
    %cst_40 = arith.constant 2.500000e-01 : f32
    %71 = vector.broadcast %cst_40 : f32 to vector<8x32xf32>
    %72 = arith.mulf %70, %71 : vector<8x32xf32>
    %73 = vector.shape_cast %72 : vector<8x32xf32> to vector<8x2x16xf32>
    %74 = tpu.transpose %73, [1, 0, 2] : vector<8x2x16xf32> -> vector<2x8x16xf32>
    %75 = arith.truncf %74 : vector<2x8x16xf32> to vector<2x8x16xbf16>
    "tpu.trace_start"() <{level = 10 : i32, message = "hqd,hkd->hqk"}> : () -> ()
    %cst_41 = arith.constant dense<0.000000e+00> : vector<2x8x16xf32>
    %76 = tpu.matmul %75, %66, %cst_41 {dimension_numbers = #tpu.dot_dimension_numbers<[2], [2], [1], [1], [0, 0, 0, 1, 1, 1], [0], [0]>} : vector<2x8x16xbf16>, vector<2x16x16xbf16>, vector<2x8x16xf32> -> vector<2x8x16xf32>
    "tpu.trace_stop"() : () -> ()
    %cst_42 = arith.constant dense<0xFF800000> : vector<2x8xf32>
    %77 = vector.multi_reduction <maximumf>, %76, %cst_42 [2] : vector<2x8x16xf32> to vector<2x8xf32>
    %78 = vector.shape_cast %77 : vector<2x8xf32> to vector<2x8x1xf32>
    %79 = vector.broadcast %78 : vector<2x8x1xf32> to vector<2x8x16xf32>
    %80 = arith.subf %76, %79 : vector<2x8x16xf32>
    %81 = math.exp %80 : vector<2x8x16xf32>
    %cst_43 = arith.constant dense<0.000000e+00> : vector<2x8xf32>
    %82 = vector.multi_reduction <add>, %81, %cst_43 [2] : vector<2x8x16xf32> to vector<2x8xf32>
    %83 = vector.shape_cast %82 : vector<2x8xf32> to vector<2x8x1xf32>
    %84 = tpu.reciprocal %83 {approx = true} : vector<2x8x1xf32> -> vector<2x8x1xf32>
    %85 = vector.broadcast %84 : vector<2x8x1xf32> to vector<2x8x16xf32>
    %86 = arith.mulf %81, %85 : vector<2x8x16xf32>
    %87 = arith.truncf %86 : vector<2x8x16xf32> to vector<2x8x16xbf16>
    %c0_44 = arith.constant 0 : index
    %c0_45 = arith.constant 0 : index
    %c0_46 = arith.constant 0 : index
    %c0_47 = arith.constant 0 : index
    %88 = vector.load %arg24[%c0_44, %c0_45, %c0_46, %c0_47] : memref<1x2x8x16xbf16, #tpu.memory_space<vmem>>, vector<1x2x8x16xbf16>
    %89 = vector.shape_cast %88 : vector<1x2x8x16xbf16> to vector<2x8x16xbf16>
    %90 = vector.shape_cast %87 : vector<2x8x16xbf16> to vector<1x2x8x16xbf16>
    tpu.vector_store %arg24[%c0_44, %c0_45, %c0_46, %c0_47], %90 {strides = array<i32>} : memref<1x2x8x16xbf16, #tpu.memory_space<vmem>>, vector<1x2x8x16xbf16>,
    %91 = arith.truncf %86 : vector<2x8x16xf32> to vector<2x8x16xbf16>
    "tpu.trace_start"() <{level = 10 : i32, message = "hqk,hkd->hqd"}> : () -> ()
    %cst_48 = arith.constant dense<0.000000e+00> : vector<2x8x16xf32>
    %92 = tpu.matmul %91, %67, %cst_48 {dimension_numbers = #tpu.dot_dimension_numbers<[2], [1], [1], [2], [0, 0, 0, 1, 1, 2], [0], [0]>} : vector<2x8x16xbf16>, vector<2x16x16xbf16>, vector<2x8x16xf32> -> vector<2x8x16xf32>
    "tpu.trace_stop"() : () -> ()
    %93 = tpu.transpose %92, [1, 0, 2] : vector<2x8x16xf32> -> vector<8x2x16xf32>
    %94 = vector.shape_cast %93 : vector<8x2x16xf32> to vector<8x32xf32>
    %95 = arith.truncf %94 : vector<8x32xf32> to vector<8x32xbf16>
    %c0_49 = arith.constant 0 : index
    %c0_50 = arith.constant 0 : index
    %96 = vector.load %arg13[%c0_49, %c0_50] : memref<32x32xbf16, #tpu.memory_space<vmem>>, vector<32x32xbf16>
    %cst_51 = arith.constant dense<0.000000e+00> : vector<8x32xf32>
    %97 = tpu.matmul %95, %96, %cst_51 {dimension_numbers = #tpu.dot_dimension_numbers<[1], [0], [0], [1], [0, 0, 1, 1], [], []>} : vector<8x32xbf16>, vector<32x32xbf16>, vector<8x32xf32> -> vector<8x32xf32>
    %98 = arith.addf %97, %65 : vector<8x32xf32>
    %c0_52 = arith.constant 0 : index
    %c0_53 = arith.constant 0 : index
    %99 = vector.load %arg14[%c0_52, %c0_53] : memref<1x32xf32, #tpu.memory_space<vmem>>, vector<1x32xf32>
    %c0_54 = arith.constant 0 : index
    %c0_55 = arith.constant 0 : index
    %100 = vector.load %arg15[%c0_54, %c0_55] : memref<1x32xf32, #tpu.memory_space<vmem>>, vector<1x32xf32>
    %cst_56 = arith.constant dense<0.000000e+00> : vector<8xf32>
    %101 = vector.multi_reduction <add>, %98, %cst_56 [1] : vector<8x32xf32> to vector<8xf32>
    %102 = vector.shape_cast %101 : vector<8xf32> to vector<8x1xf32>
    %103 = arith.mulf %98, %98 : vector<8x32xf32>
    %cst_57 = arith.constant dense<0.000000e+00> : vector<8xf32>
    %104 = vector.multi_reduction <add>, %103, %cst_57 [1] : vector<8x32xf32> to vector<8xf32>
    %105 = vector.shape_cast %104 : vector<8xf32> to vector<8x1xf32>
    %cst_58 = arith.constant 3.125000e-02 : f32
    %106 = vector.broadcast %cst_58 : f32 to vector<8x1xf32>
    %107 = arith.mulf %102, %106 : vector<8x1xf32>
    %cst_59 = arith.constant 3.125000e-02 : f32
    %108 = vector.broadcast %cst_59 : f32 to vector<8x1xf32>
    %109 = arith.mulf %105, %108 : vector<8x1xf32>
    %110 = arith.mulf %107, %107 : vector<8x1xf32>
    %111 = arith.subf %109, %110 : vector<8x1xf32>
    %112 = vector.broadcast %107 : vector<8x1xf32> to vector<8x32xf32>
    %113 = arith.subf %98, %112 : vector<8x32xf32>
    %cst_60 = arith.constant 9.99999997E-7 : f32
    %114 = vector.broadcast %cst_60 : f32 to vector<8x1xf32>
    %115 = arith.addf %111, %114 : vector<8x1xf32>
    %116 = math.rsqrt %115 : vector<8x1xf32>
    %117 = vector.broadcast %116 : vector<8x1xf32> to vector<8x32xf32>
    %118 = arith.mulf %113, %117 : vector<8x32xf32>
    %119 = vector.broadcast %99 : vector<1x32xf32> to vector<8x32xf32>
    %120 = arith.mulf %118, %119 : vector<8x32xf32>
    %121 = vector.broadcast %100 : vector<1x32xf32> to vector<8x32xf32>
    %122 = arith.addf %120, %121 : vector<8x32xf32>
    %123 = arith.truncf %122 : vector<8x32xf32> to vector<8x32xbf16>
    %c0_61 = arith.constant 0 : index
    %c0_62 = arith.constant 0 : index
    %124 = vector.load %arg16[%c0_61, %c0_62] : memref<32x64xbf16, #tpu.memory_space<vmem>>, vector<32x64xbf16>
    %cst_63 = arith.constant dense<0.000000e+00> : vector<8x64xf32>
    %125 = tpu.matmul %123, %124, %cst_63 {dimension_numbers = #tpu.dot_dimension_numbers<[1], [0], [0], [1], [0, 0, 1, 1], [], []>} : vector<8x32xbf16>, vector<32x64xbf16>, vector<8x64xf32> -> vector<8x64xf32>
    %c0_64 = arith.constant 0 : index
    %c0_65 = arith.constant 0 : index
    %126 = vector.load %arg17[%c0_64, %c0_65] : memref<1x64xf32, #tpu.memory_space<vmem>>, vector<1x64xf32>
    %127 = vector.broadcast %126 : vector<1x64xf32> to vector<8x64xf32>
    %128 = arith.addf %125, %127 : vector<8x64xf32>
    %cst_66 = arith.constant 0.000000e+00 : f32
    %129 = vector.broadcast %cst_66 : f32 to vector<8x64xf32>
    %130 = arith.maximumf %128, %129 : vector<8x64xf32>
    %131 = arith.truncf %130 : vector<8x64xf32> to vector<8x64xbf16>
    %c0_67 = arith.constant 0 : index
    %c0_68 = arith.constant 0 : index
    %132 = vector.load %arg18[%c0_67, %c0_68] : memref<64x32xbf16, #tpu.memory_space<vmem>>, vector<64x32xbf16>
    %cst_69 = arith.constant dense<0.000000e+00> : vector<8x32xf32>
    %133 = tpu.matmul %131, %132, %cst_69 {dimension_numbers = #tpu.dot_dimension_numbers<[1], [0], [0], [1], [0, 0, 1, 1], [], []>} : vector<8x64xbf16>, vector<64x32xbf16>, vector<8x32xf32> -> vector<8x32xf32>
    %c0_70 = arith.constant 0 : index
    %c0_71 = arith.constant 0 : index
    %134 = vector.load %arg19[%c0_70, %c0_71] : memref<1x32xf32, #tpu.memory_space<vmem>>, vector<1x32xf32>
    %135 = vector.broadcast %134 : vector<1x32xf32> to vector<8x32xf32>
    %136 = arith.addf %133, %135 : vector<8x32xf32>
    %137 = arith.addf %136, %122 : vector<8x32xf32>
    %c0_72 = arith.constant 0 : index
    %c0_73 = arith.constant 0 : index
    %138 = vector.load %arg20[%c0_72, %c0_73] : memref<1x32xf32, #tpu.memory_space<vmem>>, vector<1x32xf32>
    %c0_74 = arith.constant 0 : index
    %c0_75 = arith.constant 0 : index
    %139 = vector.load %arg21[%c0_74, %c0_75] : memref<1x32xf32, #tpu.memory_space<vmem>>, vector<1x32xf32>
    %cst_76 = arith.constant dense<0.000000e+00> : vector<8xf32>
    %140 = vector.multi_reduction <add>, %137, %cst_76 [1] : vector<8x32xf32> to vector<8xf32>
    %141 = vector.shape_cast %140 : vector<8xf32> to vector<8x1xf32>
    %142 = arith.mulf %137, %137 : vector<8x32xf32>
    %cst_77 = arith.constant dense<0.000000e+00> : vector<8xf32>
    %143 = vector.multi_reduction <add>, %142, %cst_77 [1] : vector<8x32xf32> to vector<8xf32>
    %144 = vector.shape_cast %143 : vector<8xf32> to vector<8x1xf32>
    %cst_78 = arith.constant 3.125000e-02 : f32
    %145 = vector.broadcast %cst_78 : f32 to vector<8x1xf32>
    %146 = arith.mulf %141, %145 : vector<8x1xf32>
    %cst_79 = arith.constant 3.125000e-02 : f32
    %147 = vector.broadcast %cst_79 : f32 to vector<8x1xf32>
    %148 = arith.mulf %144, %147 : vector<8x1xf32>
    %149 = arith.mulf %146, %146 : vector<8x1xf32>
    %150 = arith.subf %148, %149 : vector<8x1xf32>
    %151 = vector.broadcast %146 : vector<8x1xf32> to vector<8x32xf32>
    %152 = arith.subf %137, %151 : vector<8x32xf32>
    %cst_80 = arith.constant 9.99999997E-7 : f32
    %153 = vector.broadcast %cst_80 : f32 to vector<8x1xf32>
    %154 = arith.addf %150, %153 : vector<8x1xf32>
    %155 = math.rsqrt %154 : vector<8x1xf32>
    %156 = vector.broadcast %155 : vector<8x1xf32> to vector<8x32xf32>
    %157 = arith.mulf %152, %156 : vector<8x32xf32>
    %158 = vector.broadcast %138 : vector<1x32xf32> to vector<8x32xf32>
    %159 = arith.mulf %157, %158 : vector<8x32xf32>
    %160 = vector.broadcast %139 : vector<1x32xf32> to vector<8x32xf32>
    %161 = arith.addf %159, %160 : vector<8x32xf32>
    %c0_81 = arith.constant 0 : index
    %c0_82 = arith.constant 0 : index
    %c0_83 = arith.constant 0 : index
    %162 = vector.load %arg22[%c0_81, %c0_82, %c0_83] : memref<1x8x32xf32, #tpu.memory_space<vmem>>, vector<1x8x32xf32>
    %163 = vector.shape_cast %162 : vector<1x8x32xf32> to vector<8x32xf32>
    %164 = vector.shape_cast %161 : vector<8x32xf32> to vector<1x8x32xf32>
    tpu.vector_store %arg22[%c0_81, %c0_82, %c0_83], %164 {strides = array<i32>} : memref<1x8x32xf32, #tpu.memory_space<vmem>>, vector<1x8x32xf32>,
    return
  }
  func.func @transform_0(%arg0: i32, %arg1: i32) -> (i32, i32, i32) {
    %c0_i32 = arith.constant 0 : i32
    %c0_i32_0 = arith.constant 0 : i32
    %c0_i32_1 = arith.constant 0 : i32
    return %arg0, %c0_i32, %c0_i32_0 : i32, i32, i32
  }
  func.func @transform_1(%arg0: i32, %arg1: i32) -> (i32, i32, i32) {
    %c0_i32 = arith.constant 0 : i32
    %c0_i32_0 = arith.constant 0 : i32
    %c0_i32_1 = arith.constant 0 : i32
    return %arg0, %c0_i32, %c0_i32_0 : i32, i32, i32
  }
  func.func @transform_2(%arg0: i32, %arg1: i32) -> (i32, i32) {
    %c0_i32 = arith.constant 0 : i32
    %c0_i32_0 = arith.constant 0 : i32
    %c0_i32_1 = arith.constant 0 : i32
    return %c0_i32, %c0_i32_0 : i32, i32
  }
  func.func @transform_3(%arg0: i32, %arg1: i32) -> (i32, i32) {
    %c0_i32 = arith.constant 0 : i32
    %c0_i32_0 = arith.constant 0 : i32
    %c0_i32_1 = arith.constant 0 : i32
    return %c0_i32, %c0_i32_0 : i32, i32
  }
  func.func @transform_4(%arg0: i32, %arg1: i32) -> (i32, i32) {
    %c0_i32 = arith.constant 0 : i32
    %c0_i32_0 = arith.constant 0 : i32
    %c0_i32_1 = arith.constant 0 : i32
    return %c0_i32, %c0_i32_0 : i32, i32
  }
  func.func @transform_5(%arg0: i32, %arg1: i32) -> (i32, i32) {
    %c0_i32 = arith.constant 0 : i32
    %c0_i32_0 = arith.constant 0 : i32
    %c0_i32_1 = arith.constant 0 : i32
    return %c0_i32, %c0_i32_0 : i32, i32
  }
  func.func @transform_6(%arg0: i32, %arg1: i32) -> (i32, i32) {
    %c0_i32 = arith.constant 0 : i32
    %c0_i32_0 = arith.constant 0 : i32
    %c0_i32_1 = arith.constant 0 : i32
    return %c0_i32, %c0_i32_0 : i32, i32
  }
  func.func @transform_7(%arg0: i32, %arg1: i32) -> (i32, i32) {
    %c0_i32 = arith.constant 0 : i32
    %c0_i32_0 = arith.constant 0 : i32
    %c0_i32_1 = arith.constant 0 : i32
    return %c0_i32, %c0_i32_0 : i32, i32
  }
  func.func @transform_8(%arg0: i32, %arg1: i32) -> (i32, i32) {
    %c0_i32 = arith.constant 0 : i32
    %c0_i32_0 = arith.constant 0 : i32
    %c0_i32_1 = arith.constant 0 : i32
    return %c0_i32, %c0_i32_0 : i32, i32
  }
  func.func @transform_9(%arg0: i32, %arg1: i32) -> (i32, i32) {
    %c0_i32 = arith.constant 0 : i32
    %c0_i32_0 = arith.constant 0 : i32
    %c0_i32_1 = arith.constant 0 : i32
    return %c0_i32, %c0_i32_0 : i32, i32
  }
  func.func @transform_10(%arg0: i32, %arg1: i32) -> (i32, i32) {
    %c0_i32 = arith.constant 0 : i32
    %c0_i32_0 = arith.constant 0 : i32
    %c0_i32_1 = arith.constant 0 : i32
    return %c0_i32, %c0_i32_0 : i32, i32
  }
  func.func @transform_11(%arg0: i32, %arg1: i32) -> (i32, i32) {
    %c0_i32 = arith.constant 0 : i32
    %c0_i32_0 = arith.constant 0 : i32
    %c0_i32_1 = arith.constant 0 : i32
    return %c0_i32, %c0_i32_0 : i32, i32
  }
  func.func @transform_12(%arg0: i32, %arg1: i32) -> (i32, i32) {
    %c0_i32 = arith.constant 0 : i32
    %c0_i32_0 = arith.constant 0 : i32
    %c0_i32_1 = arith.constant 0 : i32
    return %c0_i32, %c0_i32_0 : i32, i32
  }
  func.func @transform_13(%arg0: i32, %arg1: i32) -> (i32, i32) {
    %c0_i32 = arith.constant 0 : i32
    %c0_i32_0 = arith.constant 0 : i32
    %c0_i32_1 = arith.constant 0 : i32
    return %c0_i32, %c0_i32_0 : i32, i32
  }
  func.func @transform_14(%arg0: i32, %arg1: i32) -> (i32, i32) {
    %c0_i32 = arith.constant 0 : i32
    %c0_i32_0 = arith.constant 0 : i32
    %c0_i32_1 = arith.constant 0 : i32
    return %c0_i32, %c0_i32_0 : i32, i32
  }
  func.func @transform_15(%arg0: i32, %arg1: i32) -> (i32, i32) {
    %c0_i32 = arith.constant 0 : i32
    %c0_i32_0 = arith.constant 0 : i32
    %c0_i32_1 = arith.constant 0 : i32
    return %c0_i32, %c0_i32_0 : i32, i32
  }
  func.func @transform_16(%arg0: i32, %arg1: i32) -> (i32, i32) {
    %c0_i32 = arith.constant 0 : i32
    %c0_i32_0 = arith.constant 0 : i32
    %c0_i32_1 = arith.constant 0 : i32
    return %c0_i32, %c0_i32_0 : i32, i32
  }
  func.func @transform_17(%arg0: i32, %arg1: i32) -> (i32, i32) {
    %c0_i32 = arith.constant 0 : i32
    %c0_i32_0 = arith.constant 0 : i32
    %c0_i32_1 = arith.constant 0 : i32
    return %c0_i32, %c0_i32_0 : i32, i32
  }
  func.func @transform_18(%arg0: i32, %arg1: i32) -> (i32, i32) {
    %c0_i32 = arith.constant 0 : i32
    %c0_i32_0 = arith.constant 0 : i32
    %c0_i32_1 = arith.constant 0 : i32
    return %c0_i32, %c0_i32_0 : i32, i32
  }
  func.func @transform_19(%arg0: i32, %arg1: i32) -> (i32, i32) {
    %c0_i32 = arith.constant 0 : i32
    %c0_i32_0 = arith.constant 0 : i32
    %c0_i32_1 = arith.constant 0 : i32
    return %c0_i32, %c0_i32_0 : i32, i32
  }
  func.func @transform_20(%arg0: i32, %arg1: i32) -> (i32, i32, i32) {
    %c0_i32 = arith.constant 0 : i32
    %c0_i32_0 = arith.constant 0 : i32
    return %arg0, %arg1, %c0_i32 : i32, i32, i32
  }
  func.func @transform_21(%arg0: i32, %arg1: i32) -> (i32, i32, i32, i32) {
    %c0_i32 = arith.constant 0 : i32
    %c0_i32_0 = arith.constant 0 : i32
    %c0_i32_1 = arith.constant 0 : i32
    return %arg0, %c0_i32, %arg1, %c0_i32_0 : i32, i32, i32, i32
  }
  func.func @transform_22(%arg0: i32, %arg1: i32) -> (i32, i32, i32, i32) {
    %c0_i32 = arith.constant 0 : i32
    %c0_i32_0 = arith.constant 0 : i32
    %c0_i32_1 = arith.constant 0 : i32
    return %arg0, %c0_i32, %arg1, %c0_i32_0 : i32, i32, i32, i32
  }
}

</mosaic_0001>

<llo_original>
// kernel: tpu_custom_call.1
$region0: #{tpu_custom_call.1}
  #allocation0 [shape = 'u32[]', space=smem, size = 0x4, offset = 0x4, fixed_abs, tag = 'smem constant byte address 0x4 - core index']
  #allocation1 [shape = 'u32[144,128]{1,0:T(1,128)}', space=vmem, size = 0x12000, scoped, tag = 'internal scratch']
  #allocation2 [shape = 'bf16[2,8,16]{2,1,0:T(8,128)(2,1)}', space=vmem, size = 0x1000, scoped, tag = 'scratch operand']
  #allocation3 [shape = 'bf16[2,8,16]{2,1,0:T(8,128)(2,1)}', space=vmem, size = 0x1000, scoped, tag = 'scratch operand']
  #allocation4 [shape = 'bf16[2,16,16]{2,1,0:T(16,128)(2,1)}', space=vmem, size = 0x2000, scoped, tag = 'scratch operand']
  #allocation5 [shape = 'bf16[2,16,16]{2,1,0:T(16,128)(2,1)}', space=vmem, size = 0x2000, scoped, tag = 'scratch operand']
  %s0 = inlined_call_operand.hbm [shape: bf16[2,8,32], index: 0, kind: input, shape index: {}]
  %s1 = inlined_call_operand.vmem [shape: bf16[2,16,32], index: 1, kind: input, shape index: {}]
  %s2 = inlined_call_operand.vmem [shape: bf16[32,32], index: 2, kind: input, shape index: {}]
  %s3 = inlined_call_operand.vmem [shape: bf16[32,32], index: 3, kind: input, shape index: {}]
  %s4 = inlined_call_operand.hbm [shape: bf16[32,32], index: 4, kind: input, shape index: {}]
  %s5 = inlined_call_operand.hbm [shape: bf16[32,32], index: 5, kind: input, shape index: {}]
  %s6 = inlined_call_operand.vmem [shape: f32[1,32], index: 6, kind: input, shape index: {}]
  %s7 = inlined_call_operand.hbm [shape: f32[1,32], index: 7, kind: input, shape index: {}]
  %s8 = inlined_call_operand.hbm [shape: bf16[32,32], index: 8, kind: input, shape index: {}]
  %s9 = inlined_call_operand.vmem [shape: bf16[32,32], index: 9, kind: input, shape index: {}]
  %s10 = inlined_call_operand.hbm [shape: bf16[32,32], index: 10, kind: input, shape index: {}]
  %s11 = inlined_call_operand.hbm [shape: bf16[32,32], index: 11, kind: input, shape index: {}]
  %s12 = inlined_call_operand.hbm [shape: f32[1,32], index: 12, kind: input, shape index: {}]
  %s13 = inlined_call_operand.hbm [shape: f32[1,32], index: 13, kind: input, shape index: {}]
  %s14 = inlined_call_operand.vmem [shape: bf16[32,64], index: 14, kind: input, shape index: {}]
  %s15 = inlined_call_operand.vmem [shape: f32[1,64], index: 15, kind: input, shape index: {}]
  %s16 = inlined_call_operand.vmem [shape: bf16[64,32], index: 16, kind: input, shape index: {}]
  %s17 = inlined_call_operand.vmem [shape: f32[1,32], index: 17, kind: input, shape index: {}]
  %s18 = inlined_call_operand.vmem [shape: f32[1,32], index: 18, kind: input, shape index: {}]
  %s19 = inlined_call_operand.vmem [shape: f32[1,32], index: 19, kind: input, shape index: {}]
  %s20 = inlined_call_operand.hbm [shape: f32[2,8,32], index: 20, kind: output, shape index: {0}]
  %s21 = inlined_call_operand.hbm [shape: bf16[2,2,8,8], index: 21, kind: output, shape index: {1}]
  %s22 = inlined_call_operand.hbm [shape: bf16[2,2,8,16], index: 22, kind: output, shape index: {2}]
  %23 = xla_tuple %s20, %s21, %s22
  %s24 = sld [smem:[#allocation0]]
  $region169: #{tpu_custom_call.1} parent=0
    _
  %s26 = ssub.s32 1, %s24
  %s27 = scalar_select 0, %s26, %s24
  $region1: #{tpu_custom_call.1} parent=0
    #allocation6 [shape = 'u8[2048]{0}', space=vmem, size = 0x800, scoped, tag = 'input window, operand 0, single buffered']
    #allocation7 [shape = 's32[2]{0}', space=sflag, size = 0x8, scoped, tag = 'scoped memory for tpu_custom_call.1']
    #allocation8 [shape = 's32[2]{0}', space=sflag, size = 0x8, scoped, tag = 'scoped memory for tpu_custom_call.1']
    #allocation9 [shape = 'u8[8192]{0}', space=vmem, size = 0x2000, scoped, tag = 'input window, operand 4, single buffered']
    #allocation10 [shape = 's32[1]{0}', space=sflag, size = 0x4, scoped, tag = 'scoped memory for tpu_custom_call.1']
    #allocation11 [shape = 'u8[8192]{0}', space=vmem, size = 0x2000, scoped, tag = 'input window, operand 5, single buffered']
    #allocation12 [shape = 'u8[512]{0}', space=vmem, size = 0x400, scoped, tag = 'input window, operand 7, single buffered']
    #allocation13 [shape = 's32[1]{0}', space=sflag, size = 0x4, scoped, tag = 'scoped memory for tpu_custom_call.1']
    #allocation14 [shape = 'u8[8192]{0}', space=vmem, size = 0x2000, scoped, tag = 'input window, operand 8, single buffered']
    #allocation15 [shape = 'u8[8192]{0}', space=vmem, size = 0x2000, scoped, tag = 'input window, operand 10, single buffered']
    #allocation16 [shape = 's32[1]{0}', space=sflag, size = 0x4, scoped, tag = 'scoped memory for tpu_custom_call.1']
    #allocation17 [shape = 'u8[8192]{0}', space=vmem, size = 0x2000, scoped, tag = 'input window, operand 11, single buffered']
    #allocation18 [shape = 'u8[512]{0}', space=vmem, size = 0x400, scoped, tag = 'input window, operand 12, single buffered']
    #allocation19 [shape = 's32[1]{0}', space=sflag, size = 0x4, scoped, tag = 'scoped memory for tpu_custom_call.1']
    #allocation20 [shape = 'u8[512]{0}', space=vmem, size = 0x400, scoped, tag = 'input window, operand 13, single buffered']
    #allocation21 [shape = 'u8[8192]{0}', space=vmem, size = 0x2000, scoped, tag = 'output window, operand 0']
    #allocation22 [shape = 'u8[8192]{0}', space=vmem, size = 0x2000, scoped, tag = 'output window, operand 1']
    #allocation23 [shape = 's32[2]{0}', space=sflag, size = 0x8, scoped, tag = 'scoped memory for tpu_custom_call.1']
    #allocation24 [shape = 'u8[8192]{0}', space=vmem, size = 0x2000, scoped, tag = 'output window, operand 2']
    %28 = vsyncpa [#allocation7], 0
    %29 = vsyncpa [#allocation10], 0
    %30 = vsyncpa [#allocation13], 0
    %31 = vsyncpa [#allocation16], 0
    %32 = vsyncpa [#allocation19], 0
    %33 = vsyncpa [#allocation8], 0
    %s34 = scalar_lea.sflag [#allocation8], 1
    %35 = vsyncpa %s34, 0
    %36 = vsyncpa [#allocation23], 0
    %s37 = scalar_lea.sflag [#allocation23], 1
    %38 = vsyncpa %s37, 0
    loop: start=0, step=1, limit=4
    $region2: #{tpu_custom_call.1} parent=1 // loop_pre_header
      _
    $region3: #{tpu_custom_call.1} parent=1 // loop_header
      %s40 = sphi 0, %s44
      %p41 = scmp.ge.s32.totalorder %s40, 4
      %s47 = sphi 0, %s59
      %s48 = sphi 0, %s55
      %s49 = sphi 0, %s47
      %s50 = sphi 0, %s48
      %s51 = sphi 0, %s49
      %s52 = sphi 0, %s50
      %s62 = sphi 0, %s64
      %s65 = sphi 0, %s62
      %s66 = sphi 0, %s65
      %s82 = sphi 0, %s66
      %s88 = sphi 0, %s90
      %s91 = sphi 0, %s88
      %s92 = sphi 0, %s91
      %s108 = sphi 0, %s92
      %s112 = sphi 0, %s112
      %s114 = sphi 0, %s112
      %s115 = sphi 0, %s114
      %s129 = sphi 0, %s115
      %s133 = sphi 0, %s133
      %s135 = sphi 0, %s133
      %s136 = sphi 0, %s135
      %s150 = sphi 0, %s136
      %s154 = sphi 0, %s154
      %s156 = sphi 0, %s154
      %s157 = sphi 0, %s156
      %s171 = sphi 0, %s157
      %s175 = sphi 0, %s175
      %s177 = sphi 0, %s175
      %s178 = sphi 0, %s177
      %s192 = sphi 0, %s178
      %s196 = sphi 0, %s196
      %s198 = sphi 0, %s196
      %s199 = sphi 0, %s198
      %s213 = sphi 0, %s199
      %s217 = sphi 0, %s217
      %s219 = sphi 0, %s217
      %s220 = sphi 0, %s219
      %s234 = sphi 0, %s220
      %s238 = sphi 0, %s238
      %s240 = sphi 0, %s238
      %s241 = sphi 0, %s240
      %s255 = sphi 0, %s241
      %s259 = sphi 0, %s259
      %s261 = sphi 0, %s259
      %s262 = sphi 0, %s261
      %s276 = sphi 0, %s262
      %s280 = sphi 0, %s280
      %s282 = sphi 0, %s280
      %s283 = sphi 0, %s282
      %s297 = sphi 0, %s283
      %s301 = sphi 0, %s301
      %s303 = sphi 0, %s301
      %s304 = sphi 0, %s303
      %s318 = sphi 0, %s304
      %s322 = sphi 0, %s322
      %s324 = sphi 0, %s322
      %s325 = sphi 0, %s324
      %s339 = sphi 0, %s325
      %s343 = sphi 0, %s343
      %s345 = sphi 0, %s343
      %s346 = sphi 0, %s345
      %s360 = sphi 0, %s346
      %s364 = sphi 0, %s364
      %s366 = sphi 0, %s364
      %s367 = sphi 0, %s366
      %s381 = sphi 0, %s367
      %s385 = sphi 0, %s385
      %s387 = sphi 0, %s385
      %s388 = sphi 0, %s387
      %s402 = sphi 0, %s388
      %s406 = sphi 0, %s406
      %s408 = sphi 0, %s406
      %s409 = sphi 0, %s408
      %s423 = sphi 0, %s409
      %s427 = sphi 0, %s427
      %s429 = sphi 0, %s427
      %s430 = sphi 0, %s429
      %s444 = sphi 0, %s430
      %s448 = sphi 0, %s448
      %s450 = sphi 0, %s448
      %s451 = sphi 0, %s450
      %s465 = sphi 0, %s451
      %s469 = sphi 0, %s469
      %s471 = sphi 0, %s469
      %s472 = sphi 0, %s471
      %s486 = sphi 0, %s472
      %s494 = sphi 0, %s496
      %s497 = sphi 0, %s494
      %s498 = sphi 0, %s497
      %s514 = sphi 0, %s498
      %s522 = sphi 0, %s524
      %s525 = sphi 0, %s522
      %s526 = sphi 0, %s525
      %s542 = sphi 0, %s526
      %s550 = sphi 0, %s552
      %s553 = sphi 0, %s550
      %s554 = sphi 0, %s553
      %s570 = sphi 0, %s554
    $region4: #{tpu_custom_call.1} parent=1 // loop_header_branch
      %43 = sbr.rel (%p41) target = $region8
    $region5: #{tpu_custom_call.1} parent=1 // loop_body
      %s45 = ssub.s32 %s40, 1
      %s46 = ssub.s32 %s40, 2
      %s53 = sadd.s32 1, %s48
      %p54 = scmp.ge.s32.totalorder %s53, 1
      %s55 = scalar_select %p54, 0, %s53
      %s56 = sadd.s32 1, %s47
      %s57 = scalar_select %p54, %s56, %s47
      %p58 = scmp.ge.s32.totalorder %s57, 2
      %s59 = scalar_select %p58, 0, %s57
      %s60 = ssub.s32 %s47, %s59
      %p61 = scmp.eq.s32.totalorder %s60, 0
      %s63 = sadd.s32 %s62, 1
      %s64 = scalar_select %p61, %s62, %s63
      %p67 = pneg %p61
      %p68 = scmp.eq.s32.totalorder %s40, 1
      %p69 = por %p67, %p68
      %p70 = scmp.ne.s32.totalorder %s62, %s65
      %p71 = scmp.eq.s32.totalorder %s40, 0
      %p72 = por %p70, %p71
      %p73 = scmp.ne.s32.totalorder %s62, %s65
      %p74 = scmp.eq.s32.totalorder %s45, 1
      %p75 = por %p73, %p74
      %p76 = scmp.ne.s32.totalorder %s65, %s66
      %p77 = scmp.eq.s32.totalorder %s45, 0
      %p78 = por %p76, %p77
      %p79 = scmp.ne.s32.totalorder %s65, %s66
      %p80 = scmp.eq.s32.totalorder %s46, 1
      %p81 = por %p79, %p80
      %p83 = scmp.ne.s32.totalorder %s66, %s82
      %p84 = scmp.eq.s32.totalorder %s46, 0
      %p85 = por %p83, %p84
      %s86 = ssub.s32 %s47, %s59
      %p87 = scmp.eq.s32.totalorder %s86, 0
      %s89 = sadd.s32 %s88, 1
      %s90 = scalar_select %p87, %s88, %s89
      %p93 = pneg %p87
      %p94 = scmp.eq.s32.totalorder %s40, 1
      %p95 = por %p93, %p94
      %p96 = scmp.ne.s32.totalorder %s88, %s91
      %p97 = scmp.eq.s32.totalorder %s40, 0
      %p98 = por %p96, %p97
      %p99 = scmp.ne.s32.totalorder %s88, %s91
      %p100 = scmp.eq.s32.totalorder %s45, 1
      %p101 = por %p99, %p100
      %p102 = scmp.ne.s32.totalorder %s91, %s92
      %p103 = scmp.eq.s32.totalorder %s45, 0
      %p104 = por %p102, %p103
      %p105 = scmp.ne.s32.totalorder %s91, %s92
      %p106 = scmp.eq.s32.totalorder %s46, 1
      %p107 = por %p105, %p106
      %p109 = scmp.ne.s32.totalorder %s92, %s108
      %p110 = scmp.eq.s32.totalorder %s46, 0
      %p111 = por %p109, %p110
      %s113 = sadd.s32 %s112, 1
      %p116 = scmp.eq.s32.totalorder %s40, 1
      %p117 = scmp.ne.s32.totalorder %s112, %s114
      %p118 = scmp.eq.s32.totalorder %s40, 0
      %p119 = por %p117, %p118
      %p120 = scmp.ne.s32.totalorder %s112, %s114
      %p121 = scmp.eq.s32.totalorder %s45, 1
      %p122 = por %p120, %p121
      %p123 = scmp.ne.s32.totalorder %s114, %s115
      %p124 = scmp.eq.s32.totalorder %s45, 0
      %p125 = por %p123, %p124
      %p126 = scmp.ne.s32.totalorder %s114, %s115
      %p127 = scmp.eq.s32.totalorder %s46, 1
      %p128 = por %p126, %p127
      %p130 = scmp.ne.s32.totalorder %s115, %s129
      %p131 = scmp.eq.s32.totalorder %s46, 0
      %p132 = por %p130, %p131
      %s134 = sadd.s32 %s133, 1
      %p137 = scmp.eq.s32.totalorder %s40, 1
      %p138 = scmp.ne.s32.totalorder %s133, %s135
      %p139 = scmp.eq.s32.totalorder %s40, 0
      %p140 = por %p138, %p139
      %p141 = scmp.ne.s32.totalorder %s133, %s135
      %p142 = scmp.eq.s32.totalorder %s45, 1
      %p143 = por %p141, %p142
      %p144 = scmp.ne.s32.totalorder %s135, %s136
      %p145 = scmp.eq.s32.totalorder %s45, 0
      %p146 = por %p144, %p145
      %p147 = scmp.ne.s32.totalorder %s135, %s136
      %p148 = scmp.eq.s32.totalorder %s46, 1
      %p149 = por %p147, %p148
      %p151 = scmp.ne.s32.totalorder %s136, %s150
      %p152 = scmp.eq.s32.totalorder %s46, 0
      %p153 = por %p151, %p152
      %s155 = sadd.s32 %s154, 1
      %p158 = scmp.eq.s32.totalorder %s40, 1
      %p159 = scmp.ne.s32.totalorder %s154, %s156
      %p160 = scmp.eq.s32.totalorder %s40, 0
      %p161 = por %p159, %p160
      %p162 = scmp.ne.s32.totalorder %s154, %s156
      %p163 = scmp.eq.s32.totalorder %s45, 1
      %p164 = por %p162, %p163
      %p165 = scmp.ne.s32.totalorder %s156, %s157
      %p166 = scmp.eq.s32.totalorder %s45, 0
      %p167 = por %p165, %p166
      %p168 = scmp.ne.s32.totalorder %s156, %s157
      %p169 = scmp.eq.s32.totalorder %s46, 1
      %p170 = por %p168, %p169
      %p172 = scmp.ne.s32.totalorder %s157, %s171
      %p173 = scmp.eq.s32.totalorder %s46, 0
      %p174 = por %p172, %p173
      %s176 = sadd.s32 %s175, 1
      %p179 = scmp.eq.s32.totalorder %s40, 1
      %p180 = scmp.ne.s32.totalorder %s175, %s177
      %p181 = scmp.eq.s32.totalorder %s40, 0
      %p182 = por %p180, %p181
      %p183 = scmp.ne.s32.totalorder %s175, %s177
      %p184 = scmp.eq.s32.totalorder %s45, 1
      %p185 = por %p183, %p184
      %p186 = scmp.ne.s32.totalorder %s177, %s178
      %p187 = scmp.eq.s32.totalorder %s45, 0
      %p188 = por %p186, %p187
      %p189 = scmp.ne.s32.totalorder %s177, %s178
      %p190 = scmp.eq.s32.totalorder %s46, 1
      %p191 = por %p189, %p190
      %p193 = scmp.ne.s32.totalorder %s178, %s192
      %p194 = scmp.eq.s32.totalorder %s46, 0
      %p195 = por %p193, %p194
      %s197 = sadd.s32 %s196, 1
      %p200 = scmp.eq.s32.totalorder %s40, 1
      %p201 = scmp.ne.s32.totalorder %s196, %s198
      %p202 = scmp.eq.s32.totalorder %s40, 0
      %p203 = por %p201, %p202
      %p204 = scmp.ne.s32.totalorder %s196, %s198
      %p205 = scmp.eq.s32.totalorder %s45, 1
      %p206 = por %p204, %p205
      %p207 = scmp.ne.s32.totalorder %s198, %s199
      %p208 = scmp.eq.s32.totalorder %s45, 0
      %p209 = por %p207, %p208
      %p210 = scmp.ne.s32.totalorder %s198, %s199
      %p211 = scmp.eq.s32.totalorder %s46, 1
      %p212 = por %p210, %p211
      %p214 = scmp.ne.s32.totalorder %s199, %s213
      %p215 = scmp.eq.s32.totalorder %s46, 0
      %p216 = por %p214, %p215
      %s218 = sadd.s32 %s217, 1
      %p221 = scmp.eq.s32.totalorder %s40, 1
      %p222 = scmp.ne.s32.totalorder %s217, %s219
      %p223 = scmp.eq.s32.totalorder %s40, 0
      %p224 = por %p222, %p223
      %p225 = scmp.ne.s32.totalorder %s217, %s219
      %p226 = scmp.eq.s32.totalorder %s45, 1
      %p227 = por %p225, %p226
      %p228 = scmp.ne.s32.totalorder %s219, %s220
      %p229 = scmp.eq.s32.totalorder %s45, 0
      %p230 = por %p228, %p229
      %p231 = scmp.ne.s32.totalorder %s219, %s220
      %p232 = scmp.eq.s32.totalorder %s46, 1
      %p233 = por %p231, %p232
      %p235 = scmp.ne.s32.totalorder %s220, %s234
      %p236 = scmp.eq.s32.totalorder %s46, 0
      %p237 = por %p235, %p236
      %s239 = sadd.s32 %s238, 1
      %p242 = scmp.eq.s32.totalorder %s40, 1
      %p243 = scmp.ne.s32.totalorder %s238, %s240
      %p244 = scmp.eq.s32.totalorder %s40, 0
      %p245 = por %p243, %p244
      %p246 = scmp.ne.s32.totalorder %s238, %s240
      %p247 = scmp.eq.s32.totalorder %s45, 1
      %p248 = por %p246, %p247
      %p249 = scmp.ne.s32.totalorder %s240, %s241
      %p250 = scmp.eq.s32.totalorder %s45, 0
      %p251 = por %p249, %p250
      %p252 = scmp.ne.s32.totalorder %s240, %s241
      %p253 = scmp.eq.s32.totalorder %s46, 1
      %p254 = por %p252, %p253
      %p256 = scmp.ne.s32.totalorder %s241, %s255
      %p257 = scmp.eq.s32.totalorder %s46, 0
      %p258 = por %p256, %p257
      %s260 = sadd.s32 %s259, 1
      %p263 = scmp.eq.s32.totalorder %s40, 1
      %p264 = scmp.ne.s32.totalorder %s259, %s261
      %p265 = scmp.eq.s32.totalorder %s40, 0
      %p266 = por %p264, %p265
      %p267 = scmp.ne.s32.totalorder %s259, %s261
      %p268 = scmp.eq.s32.totalorder %s45, 1
      %p269 = por %p267, %p268
      %p270 = scmp.ne.s32.totalorder %s261, %s262
      %p271 = scmp.eq.s32.totalorder %s45, 0
      %p272 = por %p270, %p271
      %p273 = scmp.ne.s32.totalorder %s261, %s262
      %p274 = scmp.eq.s32.totalorder %s46, 1
      %p275 = por %p273, %p274
      %p277 = scmp.ne.s32.totalorder %s262, %s276
      %p278 = scmp.eq.s32.totalorder %s46, 0
      %p279 = por %p277, %p278
      %s281 = sadd.s32 %s280, 1
      %p284 = scmp.eq.s32.totalorder %s40, 1
      %p285 = scmp.ne.s32.totalorder %s280, %s282
      %p286 = scmp.eq.s32.totalorder %s40, 0
      %p287 = por %p285, %p286
      %p288 = scmp.ne.s32.totalorder %s280, %s282
      %p289 = scmp.eq.s32.totalorder %s45, 1
      %p290 = por %p288, %p289
      %p291 = scmp.ne.s32.totalorder %s282, %s283
      %p292 = scmp.eq.s32.totalorder %s45, 0
      %p293 = por %p291, %p292
      %p294 = scmp.ne.s32.totalorder %s282, %s283
      %p295 = scmp.eq.s32.totalorder %s46, 1
      %p296 = por %p294, %p295
      %p298 = scmp.ne.s32.totalorder %s283, %s297
      %p299 = scmp.eq.s32.totalorder %s46, 0
      %p300 = por %p298, %p299
      %s302 = sadd.s32 %s301, 1
      %p305 = scmp.eq.s32.totalorder %s40, 1
      %p306 = scmp.ne.s32.totalorder %s301, %s303
      %p307 = scmp.eq.s32.totalorder %s40, 0
      %p308 = por %p306, %p307
      %p309 = scmp.ne.s32.totalorder %s301, %s303
      %p310 = scmp.eq.s32.totalorder %s45, 1
      %p311 = por %p309, %p310
      %p312 = scmp.ne.s32.totalorder %s303, %s304
      %p313 = scmp.eq.s32.totalorder %s45, 0
      %p314 = por %p312, %p313
      %p315 = scmp.ne.s32.totalorder %s303, %s304
      %p316 = scmp.eq.s32.totalorder %s46, 1
      %p317 = por %p315, %p316
      %p319 = scmp.ne.s32.totalorder %s304, %s318
      %p320 = scmp.eq.s32.totalorder %s46, 0
      %p321 = por %p319, %p320
      %s323 = sadd.s32 %s322, 1
      %p326 = scmp.eq.s32.totalorder %s40, 1
      %p327 = scmp.ne.s32.totalorder %s322, %s324
      %p328 = scmp.eq.s32.totalorder %s40, 0
      %p329 = por %p327, %p328
      %p330 = scmp.ne.s32.totalorder %s322, %s324
      %p331 = scmp.eq.s32.totalorder %s45, 1
      %p332 = por %p330, %p331
      %p333 = scmp.ne.s32.totalorder %s324, %s325
      %p334 = scmp.eq.s32.totalorder %s45, 0
      %p335 = por %p333, %p334
      %p336 = scmp.ne.s32.totalorder %s324, %s325
      %p337 = scmp.eq.s32.totalorder %s46, 1
      %p338 = por %p336, %p337
      %p340 = scmp.ne.s32.totalorder %s325, %s339
      %p341 = scmp.eq.s32.totalorder %s46, 0
      %p342 = por %p340, %p341
      %s344 = sadd.s32 %s343, 1
      %p347 = scmp.eq.s32.totalorder %s40, 1
      %p348 = scmp.ne.s32.totalorder %s343, %s345
      %p349 = scmp.eq.s32.totalorder %s40, 0
      %p350 = por %p348, %p349
      %p351 = scmp.ne.s32.totalorder %s343, %s345
      %p352 = scmp.eq.s32.totalorder %s45, 1
      %p353 = por %p351, %p352
      %p354 = scmp.ne.s32.totalorder %s345, %s346
      %p355 = scmp.eq.s32.totalorder %s45, 0
      %p356 = por %p354, %p355
      %p357 = scmp.ne.s32.totalorder %s345, %s346
      %p358 = scmp.eq.s32.totalorder %s46, 1
      %p359 = por %p357, %p358
      %p361 = scmp.ne.s32.totalorder %s346, %s360
      %p362 = scmp.eq.s32.totalorder %s46, 0
      %p363 = por %p361, %p362
      %s365 = sadd.s32 %s364, 1
      %p368 = scmp.eq.s32.totalorder %s40, 1
      %p369 = scmp.ne.s32.totalorder %s364, %s366
      %p370 = scmp.eq.s32.totalorder %s40, 0
      %p371 = por %p369, %p370
      %p372 = scmp.ne.s32.totalorder %s364, %s366
      %p373 = scmp.eq.s32.totalorder %s45, 1
      %p374 = por %p372, %p373
      %p375 = scmp.ne.s32.totalorder %s366, %s367
      %p376 = scmp.eq.s32.totalorder %s45, 0
      %p377 = por %p375, %p376
      %p378 = scmp.ne.s32.totalorder %s366, %s367
      %p379 = scmp.eq.s32.totalorder %s46, 1
      %p380 = por %p378, %p379
      %p382 = scmp.ne.s32.totalorder %s367, %s381
      %p383 = scmp.eq.s32.totalorder %s46, 0
      %p384 = por %p382, %p383
      %s386 = sadd.s32 %s385, 1
      %p389 = scmp.eq.s32.totalorder %s40, 1
      %p390 = scmp.ne.s32.totalorder %s385, %s387
      %p391 = scmp.eq.s32.totalorder %s40, 0
      %p392 = por %p390, %p391
      %p393 = scmp.ne.s32.totalorder %s385, %s387
      %p394 = scmp.eq.s32.totalorder %s45, 1
      %p395 = por %p393, %p394
      %p396 = scmp.ne.s32.totalorder %s387, %s388
      %p397 = scmp.eq.s32.totalorder %s45, 0
      %p398 = por %p396, %p397
      %p399 = scmp.ne.s32.totalorder %s387, %s388
      %p400 = scmp.eq.s32.totalorder %s46, 1
      %p401 = por %p399, %p400
      %p403 = scmp.ne.s32.totalorder %s388, %s402
      %p404 = scmp.eq.s32.totalorder %s46, 0
      %p405 = por %p403, %p404
      %s407 = sadd.s32 %s406, 1
      %p410 = scmp.eq.s32.totalorder %s40, 1
      %p411 = scmp.ne.s32.totalorder %s406, %s408
      %p412 = scmp.eq.s32.totalorder %s40, 0
      %p413 = por %p411, %p412
      %p414 = scmp.ne.s32.totalorder %s406, %s408
      %p415 = scmp.eq.s32.totalorder %s45, 1
      %p416 = por %p414, %p415
      %p417 = scmp.ne.s32.totalorder %s408, %s409
      %p418 = scmp.eq.s32.totalorder %s45, 0
      %p419 = por %p417, %p418
      %p420 = scmp.ne.s32.totalorder %s408, %s409
      %p421 = scmp.eq.s32.totalorder %s46, 1
      %p422 = por %p420, %p421
      %p424 = scmp.ne.s32.totalorder %s409, %s423
      %p425 = scmp.eq.s32.totalorder %s46, 0
      %p426 = por %p424, %p425
      %s428 = sadd.s32 %s427, 1
      %p431 = scmp.eq.s32.totalorder %s40, 1
      %p432 = scmp.ne.s32.totalorder %s427, %s429
      %p433 = scmp.eq.s32.totalorder %s40, 0
      %p434 = por %p432, %p433
      %p435 = scmp.ne.s32.totalorder %s427, %s429
      %p436 = scmp.eq.s32.totalorder %s45, 1
      %p437 = por %p435, %p436
      %p438 = scmp.ne.s32.totalorder %s429, %s430
      %p439 = scmp.eq.s32.totalorder %s45, 0
      %p440 = por %p438, %p439
      %p441 = scmp.ne.s32.totalorder %s429, %s430
      %p442 = scmp.eq.s32.totalorder %s46, 1
      %p443 = por %p441, %p442
      %p445 = scmp.ne.s32.totalorder %s430, %s444
      %p446 = scmp.eq.s32.totalorder %s46, 0
      %p447 = por %p445, %p446
      %s449 = sadd.s32 %s448, 1
      %p452 = scmp.eq.s32.totalorder %s40, 1
      %p453 = scmp.ne.s32.totalorder %s448, %s450
      %p454 = scmp.eq.s32.totalorder %s40, 0
      %p455 = por %p453, %p454
      %p456 = scmp.ne.s32.totalorder %s448, %s450
      %p457 = scmp.eq.s32.totalorder %s45, 1
      %p458 = por %p456, %p457
      %p459 = scmp.ne.s32.totalorder %s450, %s451
      %p460 = scmp.eq.s32.totalorder %s45, 0
      %p461 = por %p459, %p460
      %p462 = scmp.ne.s32.totalorder %s450, %s451
      %p463 = scmp.eq.s32.totalorder %s46, 1
      %p464 = por %p462, %p463
      %p466 = scmp.ne.s32.totalorder %s451, %s465
      %p467 = scmp.eq.s32.totalorder %s46, 0
      %p468 = por %p466, %p467
      %s470 = sadd.s32 %s469, 1
      %p473 = scmp.eq.s32.totalorder %s40, 1
      %p474 = scmp.ne.s32.totalorder %s469, %s471
      %p475 = scmp.eq.s32.totalorder %s40, 0
      %p476 = por %p474, %p475
      %p477 = scmp.ne.s32.totalorder %s469, %s471
      %p478 = scmp.eq.s32.totalorder %s45, 1
      %p479 = por %p477, %p478
      %p480 = scmp.ne.s32.totalorder %s471, %s472
      %p481 = scmp.eq.s32.totalorder %s45, 0
      %p482 = por %p480, %p481
      %p483 = scmp.ne.s32.totalorder %s471, %s472
      %p484 = scmp.eq.s32.totalorder %s46, 1
      %p485 = por %p483, %p484
      %p487 = scmp.ne.s32.totalorder %s472, %s486
      %p488 = scmp.eq.s32.totalorder %s46, 0
      %p489 = por %p487, %p488
      %s490 = ssub.s32 %s47, %s59
      %s491 = ssub.s32 %s48, %s55
      %s492 = sor.u32 %s490, %s491
      %p493 = scmp.eq.s32.totalorder %s492, 0
      %s495 = sadd.s32 %s494, 1
      %s496 = scalar_select %p493, %s494, %s495
      %p499 = pneg %p493
      %p500 = scmp.eq.s32.totalorder %s40, 1
      %p501 = por %p499, %p500
      %p502 = scmp.ne.s32.totalorder %s494, %s497
      %p503 = scmp.eq.s32.totalorder %s40, 0
      %p504 = por %p502, %p503
      %p505 = scmp.ne.s32.totalorder %s494, %s497
      %p506 = scmp.eq.s32.totalorder %s45, 1
      %p507 = por %p505, %p506
      %p508 = scmp.ne.s32.totalorder %s497, %s498
      %p509 = scmp.eq.s32.totalorder %s45, 0
      %p510 = por %p508, %p509
      %p511 = scmp.ne.s32.totalorder %s497, %s498
      %p512 = scmp.eq.s32.totalorder %s46, 1
      %p513 = por %p511, %p512
      %p515 = scmp.ne.s32.totalorder %s498, %s514
      %p516 = scmp.eq.s32.totalorder %s46, 0
      %p517 = por %p515, %p516
      %s518 = ssub.s32 %s47, %s59
      %s519 = ssub.s32 %s48, %s55
      %s520 = sor.u32 %s518, %s519
      %p521 = scmp.eq.s32.totalorder %s520, 0
      %s523 = sadd.s32 %s522, 1
      %s524 = scalar_select %p521, %s522, %s523
      %p527 = pneg %p521
      %p528 = scmp.eq.s32.totalorder %s40, 1
      %p529 = por %p527, %p528
      %p530 = scmp.ne.s32.totalorder %s522, %s525
      %p531 = scmp.eq.s32.totalorder %s40, 0
      %p532 = por %p530, %p531
      %p533 = scmp.ne.s32.totalorder %s522, %s525
      %p534 = scmp.eq.s32.totalorder %s45, 1
      %p535 = por %p533, %p534
      %p536 = scmp.ne.s32.totalorder %s525, %s526
      %p537 = scmp.eq.s32.totalorder %s45, 0
      %p538 = por %p536, %p537
      %p539 = scmp.ne.s32.totalorder %s525, %s526
      %p540 = scmp.eq.s32.totalorder %s46, 1
      %p541 = por %p539, %p540
      %p543 = scmp.ne.s32.totalorder %s526, %s542
      %p544 = scmp.eq.s32.totalorder %s46, 0
      %p545 = por %p543, %p544
      %s546 = ssub.s32 %s47, %s59
      %s547 = ssub.s32 %s48, %s55
      %s548 = sor.u32 %s546, %s547
      %p549 = scmp.eq.s32.totalorder %s548, 0
      %s551 = sadd.s32 %s550, 1
      %s552 = scalar_select %p549, %s550, %s551
      %p555 = pneg %p549
      %p556 = scmp.eq.s32.totalorder %s40, 1
      %p557 = por %p555, %p556
      %p558 = scmp.ne.s32.totalorder %s550, %s553
      %p559 = scmp.eq.s32.totalorder %s40, 0
      %p560 = por %p558, %p559
      %p561 = scmp.ne.s32.totalorder %s550, %s553
      %p562 = scmp.eq.s32.totalorder %s45, 1
      %p563 = por %p561, %p562
      %p564 = scmp.ne.s32.totalorder %s553, %s554
      %p565 = scmp.eq.s32.totalorder %s45, 0
      %p566 = por %p564, %p565
      %p567 = scmp.ne.s32.totalorder %s553, %s554
      %p568 = scmp.eq.s32.totalorder %s46, 1
      %p569 = por %p567, %p568
      %p571 = scmp.ne.s32.totalorder %s554, %s570
      %p572 = scmp.eq.s32.totalorder %s46, 0
      %p573 = por %p571, %p572
      %p574 = scmp.le.s32.totalorder 1, %s40
      %p575 = scmp.lt.s32.totalorder %s40, 3
      %p576 = pnand %p574, %p575
      %p577 = pneg %p576
      // Predicated region
      $region9: #{tpu_custom_call.1} parent=5 // pred_check
        _
      $region10: #{tpu_custom_call.1} parent=5 // pred_check_branch
        %579 = sbr.rel (%p576) target = $region12
      $region11: #{tpu_custom_call.1} parent=5 // pred_region
        %s580 = ssub.s32 %s40, 1
        // Predicated region
        $region13: #{tpu_custom_call.1} parent=11 // pred_check
          %p581 = pneg %p78
        $region14: #{tpu_custom_call.1} parent=11 // pred_check_branch
          %583 = sbr.rel (%p581) target = $region16
        $region15: #{tpu_custom_call.1} parent=11 // pred_region
          %s585 = ssub.s32 64, 64
          %586 = vsyncadd [#allocation7], %s585
          %s587 = smul.addr %s49, 64
          %s588 = scalar_lea.hbm %s0, %s587
          %s590 = sshll.u32 [#allocation6], 4
          %s591 = int_to_ptr.vmem [resolvable:$true] %s590
          %593 = dma.hbm_to_vmem [thread:$0]  %s588, 64, %s591, [#allocation7]
        $region16: #{tpu_custom_call.1} parent=11 // pred_fallthru
          _
        // Predicated region
        $region17: #{tpu_custom_call.1} parent=11 // pred_check
          %p594 = pneg %p104
        $region18: #{tpu_custom_call.1} parent=11 // pred_check_branch
          %596 = sbr.rel (%p594) target = $region20
        $region19: #{tpu_custom_call.1} parent=11 // pred_region
          %p597 = scmp.lt.s32.totalorder %s49, 1
          %s598 = scalar_select %p597, %s49, 1
          %s599 = smul.addr %s598, 2
          %s600 = smul.addr %s599, 4
          %s601 = scalar_lea.vmem %s1, %s600
        $region20: #{tpu_custom_call.1} parent=11 // pred_fallthru
          _
        // Predicated region
        $region21: #{tpu_custom_call.1} parent=11 // pred_check
          %p602 = pneg %p125
        $region22: #{tpu_custom_call.1} parent=11 // pred_check_branch
          %604 = sbr.rel (%p602) target = $region24
        $region23: #{tpu_custom_call.1} parent=11 // pred_region
          _
        $region24: #{tpu_custom_call.1} parent=11 // pred_fallthru
          _
        // Predicated region
        $region25: #{tpu_custom_call.1} parent=11 // pred_check
          %p605 = pneg %p146
        $region26: #{tpu_custom_call.1} parent=11 // pred_check_branch
          %607 = sbr.rel (%p605) target = $region28
        $region27: #{tpu_custom_call.1} parent=11 // pred_region
          _
        $region28: #{tpu_custom_call.1} parent=11 // pred_fallthru
          _
        // Predicated region
        $region29: #{tpu_custom_call.1} parent=11 // pred_check
          %p608 = pneg %p167
        $region30: #{tpu_custom_call.1} parent=11 // pred_check_branch
          %610 = sbr.rel (%p608) target = $region32
        $region31: #{tpu_custom_call.1} parent=11 // pred_region
          %s612 = ssub.s32 256, 256
          %613 = vsyncadd [#allocation10], %s612
          %s614 = sshll.u32 [#allocation9], 4
          %s615 = int_to_ptr.vmem [resolvable:$true] %s614
          %620 = dma.hbm_to_vmem [thread:$0]  %s4, 256, %s615, [#allocation10], 64, 64, 4
        $region32: #{tpu_custom_call.1} parent=11 // pred_fallthru
          _
        // Predicated region
        $region33: #{tpu_custom_call.1} parent=11 // pred_check
          %p621 = pneg %p188
        $region34: #{tpu_custom_call.1} parent=11 // pred_check_branch
          %623 = sbr.rel (%p621) target = $region36
        $region35: #{tpu_custom_call.1} parent=11 // pred_region
          %s625 = ssub.s32 256, 256
          %626 = vsyncadd [#allocation10], %s625
          %s627 = sshll.u32 [#allocation11], 4
          %s628 = int_to_ptr.vmem [resolvable:$true] %s627
          %633 = dma.hbm_to_vmem [thread:$0]  %s5, 256, %s628, [#allocation10], 64, 64, 4
        $region36: #{tpu_custom_call.1} parent=11 // pred_fallthru
          _
        // Predicated region
        $region37: #{tpu_custom_call.1} parent=11 // pred_check
          %p634 = pneg %p209
        $region38: #{tpu_custom_call.1} parent=11 // pred_check_branch
          %636 = sbr.rel (%p634) target = $region40
        $region39: #{tpu_custom_call.1} parent=11 // pred_region
          _
        $region40: #{tpu_custom_call.1} parent=11 // pred_fallthru
          _
        // Predicated region
        $region41: #{tpu_custom_call.1} parent=11 // pred_check
          %p637 = pneg %p230
        $region42: #{tpu_custom_call.1} parent=11 // pred_check_branch
          %639 = sbr.rel (%p637) target = $region44
        $region43: #{tpu_custom_call.1} parent=11 // pred_region
          %s641 = ssub.s32 16, 16
          %642 = vsyncadd [#allocation13], %s641
          %s644 = sshll.u32 [#allocation12], 4
          %s645 = int_to_ptr.vmem [resolvable:$true] %s644
          %647 = dma.hbm_to_vmem [thread:$0]  %s7, 16, %s645, [#allocation13]
        $region44: #{tpu_custom_call.1} parent=11 // pred_fallthru
          _
        // Predicated region
        $region45: #{tpu_custom_call.1} parent=11 // pred_check
          %p648 = pneg %p251
        $region46: #{tpu_custom_call.1} parent=11 // pred_check_branch
          %650 = sbr.rel (%p648) target = $region48
        $region47: #{tpu_custom_call.1} parent=11 // pred_region
          %s652 = ssub.s32 256, 256
          %653 = vsyncadd [#allocation13], %s652
          %s654 = sshll.u32 [#allocation14], 4
          %s655 = int_to_ptr.vmem [resolvable:$true] %s654
          %660 = dma.hbm_to_vmem [thread:$0]  %s8, 256, %s655, [#allocation13], 64, 64, 4
        $region48: #{tpu_custom_call.1} parent=11 // pred_fallthru
          _
        // Predicated region
        $region49: #{tpu_custom_call.1} parent=11 // pred_check
          %p661 = pneg %p272
        $region50: #{tpu_custom_call.1} parent=11 // pred_check_branch
          %663 = sbr.rel (%p661) target = $region52
        $region51: #{tpu_custom_call.1} parent=11 // pred_region
          _
        $region52: #{tpu_custom_call.1} parent=11 // pred_fallthru
          _
        // Predicated region
        $region53: #{tpu_custom_call.1} parent=11 // pred_check
          %p664 = pneg %p293
        $region54: #{tpu_custom_call.1} parent=11 // pred_check_branch
          %666 = sbr.rel (%p664) target = $region56
        $region55: #{tpu_custom_call.1} parent=11 // pred_region
          %s668 = ssub.s32 256, 256
          %669 = vsyncadd [#allocation16], %s668
          %s670 = sshll.u32 [#allocation15], 4
          %s671 = int_to_ptr.vmem [resolvable:$true] %s670
          %676 = dma.hbm_to_vmem [thread:$0]  %s10, 256, %s671, [#allocation16], 64, 64, 4
        $region56: #{tpu_custom_call.1} parent=11 // pred_fallthru
          _
        // Predicated region
        $region57: #{tpu_custom_call.1} parent=11 // pred_check
          %p677 = pneg %p314
        $region58: #{tpu_custom_call.1} parent=11 // pred_check_branch
          %679 = sbr.rel (%p677) target = $region60
        $region59: #{tpu_custom_call.1} parent=11 // pred_region
          %s681 = ssub.s32 256, 256
          %682 = vsyncadd [#allocation16], %s681
          %s683 = sshll.u32 [#allocation17], 4
          %s684 = int_to_ptr.vmem [resolvable:$true] %s683
          %689 = dma.hbm_to_vmem [thread:$0]  %s11, 256, %s684, [#allocation16], 64, 64, 4
        $region60: #{tpu_custom_call.1} parent=11 // pred_fallthru
          _
        // Predicated region
        $region61: #{tpu_custom_call.1} parent=11 // pred_check
          %p690 = pneg %p335
        $region62: #{tpu_custom_call.1} parent=11 // pred_check_branch
          %692 = sbr.rel (%p690) target = $region64
        $region63: #{tpu_custom_call.1} parent=11 // pred_region
          %s694 = ssub.s32 16, 16
          %695 = vsyncadd [#allocation19], %s694
          %s697 = sshll.u32 [#allocation18], 4
          %s698 = int_to_ptr.vmem [resolvable:$true] %s697
          %700 = dma.hbm_to_vmem [thread:$0]  %s12, 16, %s698, [#allocation19]
        $region64: #{tpu_custom_call.1} parent=11 // pred_fallthru
          _
        // Predicated region
        $region65: #{tpu_custom_call.1} parent=11 // pred_check
          %p701 = pneg %p356
        $region66: #{tpu_custom_call.1} parent=11 // pred_check_branch
          %703 = sbr.rel (%p701) target = $region68
        $region67: #{tpu_custom_call.1} parent=11 // pred_region
          %s705 = ssub.s32 16, 16
          %706 = vsyncadd [#allocation19], %s705
          %s708 = sshll.u32 [#allocation20], 4
          %s709 = int_to_ptr.vmem [resolvable:$true] %s708
          %711 = dma.hbm_to_vmem [thread:$0]  %s13, 16, %s709, [#allocation19]
        $region68: #{tpu_custom_call.1} parent=11 // pred_fallthru
          _
        // Predicated region
        $region69: #{tpu_custom_call.1} parent=11 // pred_check
          %p712 = pneg %p377
        $region70: #{tpu_custom_call.1} parent=11 // pred_check_branch
          %714 = sbr.rel (%p712) target = $region72
        $region71: #{tpu_custom_call.1} parent=11 // pred_region
          _
        $region72: #{tpu_custom_call.1} parent=11 // pred_fallthru
          _
        // Predicated region
        $region73: #{tpu_custom_call.1} parent=11 // pred_check
          %p715 = pneg %p398
        $region74: #{tpu_custom_call.1} parent=11 // pred_check_branch
          %717 = sbr.rel (%p715) target = $region76
        $region75: #{tpu_custom_call.1} parent=11 // pred_region
          _
        $region76: #{tpu_custom_call.1} parent=11 // pred_fallthru
          _
        // Predicated region
        $region77: #{tpu_custom_call.1} parent=11 // pred_check
          %p718 = pneg %p419
        $region78: #{tpu_custom_call.1} parent=11 // pred_check_branch
          %720 = sbr.rel (%p718) target = $region80
        $region79: #{tpu_custom_call.1} parent=11 // pred_region
          _
        $region80: #{tpu_custom_call.1} parent=11 // pred_fallthru
          _
        // Predicated region
        $region81: #{tpu_custom_call.1} parent=11 // pred_check
          %p721 = pneg %p440
        $region82: #{tpu_custom_call.1} parent=11 // pred_check_branch
          %723 = sbr.rel (%p721) target = $region84
        $region83: #{tpu_custom_call.1} parent=11 // pred_region
          _
        $region84: #{tpu_custom_call.1} parent=11 // pred_fallthru
          _
        // Predicated region
        $region85: #{tpu_custom_call.1} parent=11 // pred_check
          %p724 = pneg %p461
        $region86: #{tpu_custom_call.1} parent=11 // pred_check_branch
          %726 = sbr.rel (%p724) target = $region88
        $region87: #{tpu_custom_call.1} parent=11 // pred_region
          _
        $region88: #{tpu_custom_call.1} parent=11 // pred_fallthru
          _
        // Predicated region
        $region89: #{tpu_custom_call.1} parent=11 // pred_check
          %p727 = pneg %p482
        $region90: #{tpu_custom_call.1} parent=11 // pred_check_branch
          %729 = sbr.rel (%p727) target = $region92
        $region91: #{tpu_custom_call.1} parent=11 // pred_region
          _
        $region92: #{tpu_custom_call.1} parent=11 // pred_fallthru
          _
      $region12: #{tpu_custom_call.1} parent=5 // pred_fallthru
        _
      %p730 = scmp.lt.s32.totalorder %s40, 2
      // Predicated region
      $region93: #{tpu_custom_call.1} parent=5 // pred_check
        %p731 = pneg %p730
      $region94: #{tpu_custom_call.1} parent=5 // pred_check_branch
        %733 = sbr.rel (%p731) target = $region96
      $region95: #{tpu_custom_call.1} parent=5 // pred_region
        _
      $region96: #{tpu_custom_call.1} parent=5 // pred_fallthru
        _
      %p734 = scmp.le.s32.totalorder 1, %s40
      %p735 = scmp.lt.s32.totalorder %s40, 3
      %p736 = pnand %p734, %p735
      %p737 = pneg %p736
      // Predicated region
      $region97: #{tpu_custom_call.1} parent=5 // pred_check
        _
      $region98: #{tpu_custom_call.1} parent=5 // pred_check_branch
        %739 = sbr.rel (%p736) target = $region100
      $region99: #{tpu_custom_call.1} parent=5 // pred_region
        %s740 = ssub.s32 %s40, 1
        // Predicated region
        $region101: #{tpu_custom_call.1} parent=99 // pred_check
          %p741 = pneg %p78
        $region102: #{tpu_custom_call.1} parent=99 // pred_check_branch
          %743 = sbr.rel (%p741) target = $region104
        $region103: #{tpu_custom_call.1} parent=99 // pred_region
          %744 = dma.done [#allocation7], 64
        $region104: #{tpu_custom_call.1} parent=99 // pred_fallthru
          _
        // Predicated region
        $region105: #{tpu_custom_call.1} parent=99 // pred_check
          %p745 = pneg %p167
        $region106: #{tpu_custom_call.1} parent=99 // pred_check_branch
          %747 = sbr.rel (%p745) target = $region108
        $region107: #{tpu_custom_call.1} parent=99 // pred_region
          %748 = dma.done [#allocation10], 256
        $region108: #{tpu_custom_call.1} parent=99 // pred_fallthru
          _
        // Predicated region
        $region109: #{tpu_custom_call.1} parent=99 // pred_check
          %p749 = pneg %p188
        $region110: #{tpu_custom_call.1} parent=99 // pred_check_branch
          %751 = sbr.rel (%p749) target = $region112
        $region111: #{tpu_custom_call.1} parent=99 // pred_region
          %752 = dma.done [#allocation10], 256
        $region112: #{tpu_custom_call.1} parent=99 // pred_fallthru
          _
        // Predicated region
        $region113: #{tpu_custom_call.1} parent=99 // pred_check
          %p753 = pneg %p230
        $region114: #{tpu_custom_call.1} parent=99 // pred_check_branch
          %755 = sbr.rel (%p753) target = $region116
        $region115: #{tpu_custom_call.1} parent=99 // pred_region
          %756 = dma.done [#allocation13], 16
        $region116: #{tpu_custom_call.1} parent=99 // pred_fallthru
          _
        // Predicated region
        $region117: #{tpu_custom_call.1} parent=99 // pred_check
          %p757 = pneg %p251
        $region118: #{tpu_custom_call.1} parent=99 // pred_check_branch
          %759 = sbr.rel (%p757) target = $region120
        $region119: #{tpu_custom_call.1} parent=99 // pred_region
          %760 = dma.done [#allocation13], 256
        $region120: #{tpu_custom_call.1} parent=99 // pred_fallthru
          _
        // Predicated region
        $region121: #{tpu_custom_call.1} parent=99 // pred_check
          %p761 = pneg %p293
        $region122: #{tpu_custom_call.1} parent=99 // pred_check_branch
          %763 = sbr.rel (%p761) target = $region124
        $region123: #{tpu_custom_call.1} parent=99 // pred_region
          %764 = dma.done [#allocation16], 256
        $region124: #{tpu_custom_call.1} parent=99 // pred_fallthru
          _
        // Predicated region
        $region125: #{tpu_custom_call.1} parent=99 // pred_check
          %p765 = pneg %p314
        $region126: #{tpu_custom_call.1} parent=99 // pred_check_branch
          %767 = sbr.rel (%p765) target = $region128
        $region127: #{tpu_custom_call.1} parent=99 // pred_region
          %768 = dma.done [#allocation16], 256
        $region128: #{tpu_custom_call.1} parent=99 // pred_fallthru
          _
        // Predicated region
        $region129: #{tpu_custom_call.1} parent=99 // pred_check
          %p769 = pneg %p335
        $region130: #{tpu_custom_call.1} parent=99 // pred_check_branch
          %771 = sbr.rel (%p769) target = $region132
        $region131: #{tpu_custom_call.1} parent=99 // pred_region
          %772 = dma.done [#allocation19], 16
        $region132: #{tpu_custom_call.1} parent=99 // pred_fallthru
          _
        // Predicated region
        $region133: #{tpu_custom_call.1} parent=99 // pred_check
          %p773 = pneg %p356
        $region134: #{tpu_custom_call.1} parent=99 // pred_check_branch
          %775 = sbr.rel (%p773) target = $region136
        $region135: #{tpu_custom_call.1} parent=99 // pred_region
          %776 = dma.done [#allocation19], 16
        $region136: #{tpu_custom_call.1} parent=99 // pred_fallthru
          _
        %p777 = pneg %p78
        %p778 = pneg %p75
        %p779 = scmp.lt.s32.totalorder %s49, 1
        %s780 = scalar_select %p779, %s49, 1
        %s781 = smul.addr %s780, 2
        %s782 = smul.addr %s781, 4
        %s783 = scalar_lea.vmem %s1, %s782
        %p784 = pneg %p104
        %p785 = pneg %p101
        %p786 = pneg %p125
        %p787 = pneg %p122
        %p788 = pneg %p146
        %p789 = pneg %p143
        %p790 = pneg %p167
        %p791 = pneg %p164
        %p792 = pneg %p188
        %p793 = pneg %p185
        %p794 = pneg %p209
        %p795 = pneg %p206
        %p796 = pneg %p230
        %p797 = pneg %p227
        %p798 = pneg %p251
        %p799 = pneg %p248
        %p800 = pneg %p272
        %p801 = pneg %p269
        %p802 = pneg %p293
        %p803 = pneg %p290
        %p804 = pneg %p314
        %p805 = pneg %p311
        %p806 = pneg %p335
        %p807 = pneg %p332
        %p808 = pneg %p356
        %p809 = pneg %p353
        %p810 = pneg %p377
        %p811 = pneg %p374
        %p812 = pneg %p398
        %p813 = pneg %p395
        %p814 = pneg %p419
        %p815 = pneg %p416
        %p816 = pneg %p440
        %p817 = pneg %p437
        %p818 = pneg %p461
        %p819 = pneg %p458
        %p820 = pneg %p482
        %p821 = pneg %p479
        %p822 = pneg %p510
        %p823 = pneg %p507
        %s824 = sand.u32 %s497, 1
        %s825 = scalar_lea.sflag [#allocation8], %s824
        %s826 = sand.u32 %s497, 1
        %s827 = smul.addr %s826, 8
        %s828 = scalar_lea.vmem [#allocation21], %s827
        %p829 = pneg %p538
        %p830 = pneg %p535
        %s831 = sand.u32 %s45, 1
        %s832 = scalar_lea.sflag [#allocation23], %s831
        %s833 = sand.u32 %s525, 1
        %s834 = smul.addr %s833, 8
        %s835 = scalar_lea.vmem [#allocation22], %s834
        %p836 = pneg %p566
        %p837 = pneg %p563
        %s838 = sand.u32 %s45, 1
        %s839 = scalar_lea.sflag [#allocation23], %s838
        %s840 = sand.u32 %s553, 1
        %s841 = smul.addr %s840, 8
        %s842 = scalar_lea.vmem [#allocation24], %s841
        %p843 = scmp.lt.s32.totalorder %s49, 1
        %s844 = scalar_select %p843, %s49, 1
        %s845 = smul.addr %s844, 2
        %s846 = smul.addr %s845, 4
        %s847 = scalar_lea.vmem %s1, %s846
        %p849 = scmp.eq.s32.totalorder %s50, 0
        // Predicated region
        $region137: #{tpu_custom_call.1} parent=99 // pred_check
          %p850 = pneg %p849
        $region138: #{tpu_custom_call.1} parent=99 // pred_check_branch
          %852 = sbr.rel (%p850) target = $region140
        $region139: #{tpu_custom_call.1} parent=99 // pred_region
          %v853 = vld [vmem:[#allocation6] sm:$0xf]
          %v854 = vld [vmem:[%s847] sm:$0xf]
          %v855 = vld [vmem:[%s847 + $0x4] sm:$0xf]
          %v856 = vld [vmem:[%s3] sm:$0xf]
          %v857 = vld [vmem:[%s3 + $0x4] sm:$0xf]
          %v858 = vld [vmem:[%s3 + $0x8] sm:$0xf]
          %v859 = vld [vmem:[%s3 + $0xc] sm:$0xf]
          %v864 = vunpack.c.l.b16 %v856
          %v865 = vunpack.c.l.b16 %v857
          %v866 = vunpack.c.l.b16 %v858
          %v867 = vunpack.c.l.b16 %v859
          %v868 = vpack.c.b16 %v865, %v864
          %v869 = vpack.c.b16 %v867, %v866
          %vm872 = vcmask 261120
          %v874 = vsel %vm872, %v853, 0
          %876 = vmatprep.subr.bf16.mxu0 0
          %877 = vmatpush1.bf16.msra.mxu0 %v868
          %878 = vmatprep.subr.bf16.mxu0 0
          %879 = vmatpush1.bf16.msra.mxu0 %v869
          %880 = vmatprep.subr.bf16.mxu0 0
          %881 = vmatpush1.bf16.msra.mxu0 0
          %882 = vmatprep.subr.bf16.mxu0 0
          %883 = vmatpush1.bf16.msra.mxu0 0
          %884 = vmatprep.subr.bf16.mxu0 0
          %885 = vmatpush1.bf16.msra.mxu0 0
          %886 = vmatprep.subr.bf16.mxu0 0
          %887 = vmatpush1.bf16.msra.mxu0 0
          %888 = vmatprep.subr.bf16.mxu0 0
          %889 = vmatpush1.bf16.msra.mxu0 0
          %890 = vmatprep.subr.bf16.mxu0 0
          %891 = vmatpush1.bf16.msra.mxu0 0
          %892 = vmatprep.subr.bf16.mxu0 0
          %893 = vmatpush1.bf16.msra.mxu0 0
          %894 = vmatprep.subr.bf16.mxu0 0
          %895 = vmatpush1.bf16.msra.mxu0 0
          %896 = vmatprep.subr.bf16.mxu0 0
          %897 = vmatpush1.bf16.msra.mxu0 0
          %898 = vmatprep.subr.bf16.mxu0 0
          %899 = vmatpush1.bf16.msra.mxu0 0
          %900 = vmatprep.subr.bf16.mxu0 0
          %901 = vmatpush1.bf16.msra.mxu0 0
          %902 = vmatprep.subr.bf16.mxu0 0
          %903 = vmatpush1.bf16.msra.mxu0 0
          %904 = vmatprep.subr.bf16.mxu0 0
          %905 = vmatpush1.bf16.msra.mxu0 0
          %906 = vmatprep.subr.bf16.mxu0 0
          %907 = vmatpush1.bf16.msra.mxu0 0
          %908 = vmatprep.mubr.bf16.mxu0 0
          %909 = vmatmul.mubr.bf16.gmra.mrb[0].mxu0 %v874
          %v910 = vpop.f32.mrb[0].mxu0
          %v911 = vadd.f32 0.0, %v910
          %v912 = vpop.f32.mrb[0].mxu0
          %v913 = vpop.f32.mrb[0].mxu0
          %v914 = vpop.f32.mrb[0].mxu0
          %915 = vdwg.mxu0
          %v916 = vld [vmem:[#allocation9] sm:$0xf]
          %v917 = vld [vmem:[#allocation9 + $0x4] sm:$0xf]
          %v918 = vld [vmem:[#allocation9 + $0x8] sm:$0xf]
          %v919 = vld [vmem:[#allocation9 + $0xc] sm:$0xf]
          %v924 = vunpack.c.l.b16 %v916
          %v925 = vunpack.c.l.b16 %v917
          %v926 = vunpack.c.l.b16 %v918
          %v927 = vunpack.c.l.b16 %v919
          %v928 = vpack.c.b16 %v925, %v924
          %v929 = vpack.c.b16 %v927, %v926
          %932 = vmatprep.subr.bf16.mxu0 0
          %933 = vmatpush1.bf16.msra.mxu0 %v928
          %934 = vmatprep.subr.bf16.mxu0 0
          %935 = vmatpush1.bf16.msra.mxu0 %v929
          %936 = vmatprep.subr.bf16.mxu0 0
          %937 = vmatpush1.bf16.msra.mxu0 0
          %938 = vmatprep.subr.bf16.mxu0 0
          %939 = vmatpush1.bf16.msra.mxu0 0
          %940 = vmatprep.subr.bf16.mxu0 0
          %941 = vmatpush1.bf16.msra.mxu0 0
          %942 = vmatprep.subr.bf16.mxu0 0
          %943 = vmatpush1.bf16.msra.mxu0 0
          %944 = vmatprep.subr.bf16.mxu0 0
          %945 = vmatpush1.bf16.msra.mxu0 0
          %946 = vmatprep.subr.bf16.mxu0 0
          %947 = vmatpush1.bf16.msra.mxu0 0
          %948 = vmatprep.subr.bf16.mxu0 0
          %949 = vmatpush1.bf16.msra.mxu0 0
          %950 = vmatprep.subr.bf16.mxu0 0
          %951 = vmatpush1.bf16.msra.mxu0 0
          %952 = vmatprep.subr.bf16.mxu0 0
          %953 = vmatpush1.bf16.msra.mxu0 0
          %954 = vmatprep.subr.bf16.mxu0 0
          %955 = vmatpush1.bf16.msra.mxu0 0
          %956 = vmatprep.subr.bf16.mxu0 0
          %957 = vmatpush1.bf16.msra.mxu0 0
          %958 = vmatprep.subr.bf16.mxu0 0
          %959 = vmatpush1.bf16.msra.mxu0 0
          %960 = vmatprep.subr.bf16.mxu0 0
          %961 = vmatpush1.bf16.msra.mxu0 0
          %962 = vmatprep.subr.bf16.mxu0 0
          %963 = vmatpush1.bf16.msra.mxu0 0
          %964 = vmatprep.mubr.bf16.mxu0 0
          %965 = vmatmul.mubr.bf16.gmra.mrb[0].mxu0 %v874
          %v966 = vpop.f32.mrb[0].mxu0
          %v967 = vadd.f32 0.0, %v966
          %v968 = vpop.f32.mrb[0].mxu0
          %v969 = vpop.f32.mrb[0].mxu0
          %v970 = vpop.f32.mrb[0].mxu0
          %971 = vdwg.mxu0
          %v972 = vld [vmem:[%s9] sm:$0xf]
          %v973 = vld [vmem:[%s9 + $0x4] sm:$0xf]
          %v974 = vld [vmem:[%s9 + $0x8] sm:$0xf]
          %v975 = vld [vmem:[%s9 + $0xc] sm:$0xf]
          %v978 = vunpack.c.l.b16 %v854
          %v979 = vunpack.c.l.b16 %v855
          %v980 = vpack.c.b16 %v979, %v978
          %v985 = vunpack.c.l.b16 %v972
          %v986 = vunpack.c.l.b16 %v973
          %v987 = vunpack.c.l.b16 %v974
          %v988 = vunpack.c.l.b16 %v975
          %v989 = vpack.c.b16 %v986, %v985
          %v990 = vpack.c.b16 %v988, %v987
          %v994 = vsel %vm872, %v980, 0
          %996 = vmatprep.subr.bf16.mxu0 0
          %997 = vmatpush1.bf16.msra.mxu0 %v989
          %998 = vmatprep.subr.bf16.mxu0 0
          %999 = vmatpush1.bf16.msra.mxu0 %v990
          %1000 = vmatprep.subr.bf16.mxu0 0
          %1001 = vmatpush1.bf16.msra.mxu0 0
          %1002 = vmatprep.subr.bf16.mxu0 0
          %1003 = vmatpush1.bf16.msra.mxu0 0
          %1004 = vmatprep.subr.bf16.mxu0 0
          %1005 = vmatpush1.bf16.msra.mxu0 0
          %1006 = vmatprep.subr.bf16.mxu0 0
          %1007 = vmatpush1.bf16.msra.mxu0 0
          %1008 = vmatprep.subr.bf16.mxu0 0
          %1009 = vmatpush1.bf16.msra.mxu0 0
          %1010 = vmatprep.subr.bf16.mxu0 0
          %1011 = vmatpush1.bf16.msra.mxu0 0
          %1012 = vmatprep.subr.bf16.mxu0 0
          %1013 = vmatpush1.bf16.msra.mxu0 0
          %1014 = vmatprep.subr.bf16.mxu0 0
          %1015 = vmatpush1.bf16.msra.mxu0 0
          %1016 = vmatprep.subr.bf16.mxu0 0
          %1017 = vmatpush1.bf16.msra.mxu0 0
          %1018 = vmatprep.subr.bf16.mxu0 0
          %1019 = vmatpush1.bf16.msra.mxu0 0
          %1020 = vmatprep.subr.bf16.mxu0 0
          %1021 = vmatpush1.bf16.msra.mxu0 0
          %1022 = vmatprep.subr.bf16.mxu0 0
          %1023 = vmatpush1.bf16.msra.mxu0 0
          %1024 = vmatprep.subr.bf16.mxu0 0
          %1025 = vmatpush1.bf16.msra.mxu0 0
          %1026 = vmatprep.subr.bf16.mxu0 0
          %1027 = vmatpush1.bf16.msra.mxu0 0
          %1028 = vmatprep.mubr.bf16.mxu0 0
          %1029 = vmatmul.mubr.bf16.gmra.mrb[0].mxu0 %v994
          %v1030 = vpop.f32.mrb[0].mxu0
          %v1031 = vadd.f32 0.0, %v1030
          %v1032 = vpop.f32.mrb[0].mxu0
          %v1033 = vpop.f32.mrb[0].mxu0
          %v1034 = vadd.f32 0.0, %v1033
          %v1035 = vpop.f32.mrb[0].mxu0
          %1036 = vdwg.mxu0
          %v1037 = vld [vmem:[#allocation15] sm:$0xf]
          %v1038 = vld [vmem:[#allocation15 + $0x4] sm:$0xf]
          %v1039 = vld [vmem:[#allocation15 + $0x8] sm:$0xf]
          %v1040 = vld [vmem:[#allocation15 + $0xc] sm:$0xf]
          %v1045 = vunpack.c.l.b16 %v1037
          %v1046 = vunpack.c.l.b16 %v1038
          %v1047 = vunpack.c.l.b16 %v1039
          %v1048 = vunpack.c.l.b16 %v1040
          %v1049 = vpack.c.b16 %v1046, %v1045
          %v1050 = vpack.c.b16 %v1048, %v1047
          %1053 = vmatprep.subr.bf16.mxu0 0
          %1054 = vmatpush1.bf16.msra.mxu0 %v1049
          %1055 = vmatprep.subr.bf16.mxu0 0
          %1056 = vmatpush1.bf16.msra.mxu0 %v1050
          %1057 = vmatprep.subr.bf16.mxu0 0
          %1058 = vmatpush1.bf16.msra.mxu0 0
          %1059 = vmatprep.subr.bf16.mxu0 0
          %1060 = vmatpush1.bf16.msra.mxu0 0
          %1061 = vmatprep.subr.bf16.mxu0 0
          %1062 = vmatpush1.bf16.msra.mxu0 0
          %1063 = vmatprep.subr.bf16.mxu0 0
          %1064 = vmatpush1.bf16.msra.mxu0 0
          %1065 = vmatprep.subr.bf16.mxu0 0
          %1066 = vmatpush1.bf16.msra.mxu0 0
          %1067 = vmatprep.subr.bf16.mxu0 0
          %1068 = vmatpush1.bf16.msra.mxu0 0
          %1069 = vmatprep.subr.bf16.mxu0 0
          %1070 = vmatpush1.bf16.msra.mxu0 0
          %1071 = vmatprep.subr.bf16.mxu0 0
          %1072 = vmatpush1.bf16.msra.mxu0 0
          %1073 = vmatprep.subr.bf16.mxu0 0
          %1074 = vmatpush1.bf16.msra.mxu0 0
          %1075 = vmatprep.subr.bf16.mxu0 0
          %1076 = vmatpush1.bf16.msra.mxu0 0
          %1077 = vmatprep.subr.bf16.mxu0 0
          %1078 = vmatpush1.bf16.msra.mxu0 0
          %1079 = vmatprep.subr.bf16.mxu0 0
          %1080 = vmatpush1.bf16.msra.mxu0 0
          %1081 = vmatprep.subr.bf16.mxu0 0
          %1082 = vmatpush1.bf16.msra.mxu0 0
          %1083 = vmatprep.subr.bf16.mxu0 0
          %1084 = vmatpush1.bf16.msra.mxu0 0
          %1085 = vmatprep.mubr.bf16.mxu0 0
          %1086 = vmatmul.mubr.bf16.gmra.mrb[0].mxu0 %v994
          %v1087 = vpop.f32.mrb[0].mxu0
          %v1088 = vadd.f32 0.0, %v1087
          %v1089 = vpop.f32.mrb[0].mxu0
          %v1090 = vpop.f32.mrb[0].mxu0
          %v1091 = vadd.f32 0.0, %v1090
          %v1092 = vpop.f32.mrb[0].mxu0
          %1093 = vdwg.mxu0
          %1095 = vrot.lane.b32.xlu0 %v911, 112
          %v1096 = vpop.permute.xlu0 %1095
          %v1098 = vcombine.high %v911, 0.0
          %v1100 = vunpack.c.l.s4 1983009808
          %v1101 = vunpack.c.0.s8 %v1100
          %v1102 = vlaneseq
          %v1103 = vshrl.u32 %v1102, 7
          %v1104 = vsub.s32 %v1101, %v1103
          %v1105 = vrot.slane %v911, %v1104
          %v1107 = vunpack.c.l.s4 1983009808
          %v1108 = vunpack.c.0.s8 %v1107
          %v1109 = vlaneseq
          %v1110 = vshrl.u32 %v1109, 7
          %v1111 = vsub.s32 %v1108, %v1110
          %v1112 = vrot.slane %v1098, %v1111
          %v1113 = vcombine.high %v1096, 0.0
          %v1115 = vunpack.c.l.s4 1983009808
          %v1116 = vunpack.c.0.s8 %v1115
          %v1117 = vlaneseq
          %v1118 = vshrl.u32 %v1117, 7
          %v1119 = vsub.s32 %v1116, %v1118
          %v1120 = vrot.slane %v1096, %v1119
          %v1122 = vunpack.c.l.s4 1983009808
          %v1123 = vunpack.c.0.s8 %v1122
          %v1124 = vlaneseq
          %v1125 = vshrl.u32 %v1124, 7
          %v1126 = vsub.s32 %v1123, %v1125
          %v1127 = vrot.slane %v1113, %v1126
          %v1128 = vcombine.low %v1105, %v1120
          %v1129 = vcombine.high %v1105, %v1120
          %v1131 = vunpack.c.l.s4 1934713408
          %v1132 = vunpack.c.0.s8 %v1131
          %v1133 = vlaneseq
          %v1134 = vshrl.u32 %v1133, 7
          %v1135 = vsub.s32 %v1132, %v1134
          %v1136 = vrot.slane %v1128, %v1135
          %v1138 = vunpack.c.l.s4 1934713408
          %v1139 = vunpack.c.0.s8 %v1138
          %v1140 = vlaneseq
          %v1141 = vshrl.u32 %v1140, 7
          %v1142 = vsub.s32 %v1139, %v1141
          %v1143 = vrot.slane %v1129, %v1142
          %v1144 = vcombine.low %v1112, %v1127
          %v1145 = vcombine.high %v1112, %v1127
          %v1147 = vunpack.c.l.s4 1934713408
          %v1148 = vunpack.c.0.s8 %v1147
          %v1149 = vlaneseq
          %v1150 = vshrl.u32 %v1149, 7
          %v1151 = vsub.s32 %v1148, %v1150
          %v1152 = vrot.slane %v1144, %v1151
          %v1154 = vunpack.c.l.s4 1934713408
          %v1155 = vunpack.c.0.s8 %v1154
          %v1156 = vlaneseq
          %v1157 = vshrl.u32 %v1156, 7
          %v1158 = vsub.s32 %v1155, %v1157
          %v1159 = vrot.slane %v1145, %v1158
          %v1160 = vcombine.high %v1136, 0.0
          %v1161 = vcombine.high %v1143, 0.0
          %v1162 = vcombine.high %v1152, 0.0
          %v1163 = vcombine.high %v1159, 0.0
          %v1164 = vcombine.low %v1136, %v1143
          %v1166 = vunpack.c.l.s4 1983009808
          %v1167 = vunpack.c.0.s8 %v1166
          %v1168 = vlaneseq
          %v1169 = vshrl.u32 %v1168, 7
          %v1170 = vsub.s32 %v1167, %v1169
          %v1171 = vrot.slane %v1164, %v1170
          %v1172 = vcombine.low %v1160, %v1161
          %v1174 = vunpack.c.l.s4 1983009808
          %v1175 = vunpack.c.0.s8 %v1174
          %v1176 = vlaneseq
          %v1177 = vshrl.u32 %v1176, 7
          %v1178 = vsub.s32 %v1175, %v1177
          %v1179 = vrot.slane %v1172, %v1178
          %v1180 = vcombine.low %v1152, %v1159
          %v1182 = vunpack.c.l.s4 1983009808
          %v1183 = vunpack.c.0.s8 %v1182
          %v1184 = vlaneseq
          %v1185 = vshrl.u32 %v1184, 7
          %v1186 = vsub.s32 %v1183, %v1185
          %v1187 = vrot.slane %v1180, %v1186
          %v1188 = vcombine.low %v1162, %v1163
          %v1190 = vunpack.c.l.s4 1983009808
          %v1191 = vunpack.c.0.s8 %v1190
          %v1192 = vlaneseq
          %v1193 = vshrl.u32 %v1192, 7
          %v1194 = vsub.s32 %v1191, %v1193
          %v1195 = vrot.slane %v1188, %v1194
          %v1196 = vcombine.low %v1171, %v1179
          %v1198 = vunpack.c.l.s4 1934713408
          %v1199 = vunpack.c.0.s8 %v1198
          %v1200 = vlaneseq
          %v1201 = vshrl.u32 %v1200, 7
          %v1202 = vsub.s32 %v1199, %v1201
          %v1203 = vrot.slane %v1196, %v1202
          %v1204 = vcombine.low %v1187, %v1195
          %v1206 = vunpack.c.l.s4 1934713408
          %v1207 = vunpack.c.0.s8 %v1206
          %v1208 = vlaneseq
          %v1209 = vshrl.u32 %v1208, 7
          %v1210 = vsub.s32 %v1207, %v1209
          %v1211 = vrot.slane %v1204, %v1210
          %v1212 = vcombine.low %v1203, %v1211
          %v1213 = vcombine.high %v1203, %v1211
          %v1214 = vpack.c.bf16 %v1212, %v1212
          %v1215 = vpack.c.bf16 %v1213, %v1213
          %vm1216 = vcmask 125952
          %1217 = vst.msk [vmem:[#allocation2] sm:$0xf] %vm1216, %v1214
          %1218 = vst.msk [vmem:[#allocation2 + $0x4] sm:$0xf] %vm1216, %v1215
          %1220 = vrot.lane.b32.xlu0 %v967, 112
          %v1221 = vpop.permute.xlu0 %1220
          %v1223 = vcombine.high %v967, 0.0
          %v1225 = vunpack.c.l.s4 1983009808
          %v1226 = vunpack.c.0.s8 %v1225
          %v1227 = vlaneseq
          %v1228 = vshrl.u32 %v1227, 7
          %v1229 = vsub.s32 %v1226, %v1228
          %v1230 = vrot.slane %v967, %v1229
          %v1232 = vunpack.c.l.s4 1983009808
          %v1233 = vunpack.c.0.s8 %v1232
          %v1234 = vlaneseq
          %v1235 = vshrl.u32 %v1234, 7
          %v1236 = vsub.s32 %v1233, %v1235
          %v1237 = vrot.slane %v1223, %v1236
          %v1238 = vcombine.high %v1221, 0.0
          %v1240 = vunpack.c.l.s4 1983009808
          %v1241 = vunpack.c.0.s8 %v1240
          %v1242 = vlaneseq
          %v1243 = vshrl.u32 %v1242, 7
          %v1244 = vsub.s32 %v1241, %v1243
          %v1245 = vrot.slane %v1221, %v1244
          %v1247 = vunpack.c.l.s4 1983009808
          %v1248 = vunpack.c.0.s8 %v1247
          %v1249 = vlaneseq
          %v1250 = vshrl.u32 %v1249, 7
          %v1251 = vsub.s32 %v1248, %v1250
          %v1252 = vrot.slane %v1238, %v1251
          %v1253 = vcombine.low %v1230, %v1245
          %v1254 = vcombine.high %v1230, %v1245
          %v1256 = vunpack.c.l.s4 1934713408
          %v1257 = vunpack.c.0.s8 %v1256
          %v1258 = vlaneseq
          %v1259 = vshrl.u32 %v1258, 7
          %v1260 = vsub.s32 %v1257, %v1259
          %v1261 = vrot.slane %v1253, %v1260
          %v1263 = vunpack.c.l.s4 1934713408
          %v1264 = vunpack.c.0.s8 %v1263
          %v1265 = vlaneseq
          %v1266 = vshrl.u32 %v1265, 7
          %v1267 = vsub.s32 %v1264, %v1266
          %v1268 = vrot.slane %v1254, %v1267
          %v1269 = vcombine.low %v1237, %v1252
          %v1270 = vcombine.high %v1237, %v1252
          %v1272 = vunpack.c.l.s4 1934713408
          %v1273 = vunpack.c.0.s8 %v1272
          %v1274 = vlaneseq
          %v1275 = vshrl.u32 %v1274, 7
          %v1276 = vsub.s32 %v1273, %v1275
          %v1277 = vrot.slane %v1269, %v1276
          %v1279 = vunpack.c.l.s4 1934713408
          %v1280 = vunpack.c.0.s8 %v1279
          %v1281 = vlaneseq
          %v1282 = vshrl.u32 %v1281, 7
          %v1283 = vsub.s32 %v1280, %v1282
          %v1284 = vrot.slane %v1270, %v1283
          %v1285 = vcombine.high %v1261, 0.0
          %v1286 = vcombine.high %v1268, 0.0
          %v1287 = vcombine.high %v1277, 0.0
          %v1288 = vcombine.high %v1284, 0.0
          %v1289 = vcombine.low %v1261, %v1268
          %v1291 = vunpack.c.l.s4 1983009808
          %v1292 = vunpack.c.0.s8 %v1291
          %v1293 = vlaneseq
          %v1294 = vshrl.u32 %v1293, 7
          %v1295 = vsub.s32 %v1292, %v1294
          %v1296 = vrot.slane %v1289, %v1295
          %v1297 = vcombine.low %v1285, %v1286
          %v1299 = vunpack.c.l.s4 1983009808
          %v1300 = vunpack.c.0.s8 %v1299
          %v1301 = vlaneseq
          %v1302 = vshrl.u32 %v1301, 7
          %v1303 = vsub.s32 %v1300, %v1302
          %v1304 = vrot.slane %v1297, %v1303
          %v1305 = vcombine.low %v1277, %v1284
          %v1307 = vunpack.c.l.s4 1983009808
          %v1308 = vunpack.c.0.s8 %v1307
          %v1309 = vlaneseq
          %v1310 = vshrl.u32 %v1309, 7
          %v1311 = vsub.s32 %v1308, %v1310
          %v1312 = vrot.slane %v1305, %v1311
          %v1313 = vcombine.low %v1287, %v1288
          %v1315 = vunpack.c.l.s4 1983009808
          %v1316 = vunpack.c.0.s8 %v1315
          %v1317 = vlaneseq
          %v1318 = vshrl.u32 %v1317, 7
          %v1319 = vsub.s32 %v1316, %v1318
          %v1320 = vrot.slane %v1313, %v1319
          %v1321 = vcombine.low %v1296, %v1304
          %v1323 = vunpack.c.l.s4 1934713408
          %v1324 = vunpack.c.0.s8 %v1323
          %v1325 = vlaneseq
          %v1326 = vshrl.u32 %v1325, 7
          %v1327 = vsub.s32 %v1324, %v1326
          %v1328 = vrot.slane %v1321, %v1327
          %v1329 = vcombine.low %v1312, %v1320
          %v1331 = vunpack.c.l.s4 1934713408
          %v1332 = vunpack.c.0.s8 %v1331
          %v1333 = vlaneseq
          %v1334 = vshrl.u32 %v1333, 7
          %v1335 = vsub.s32 %v1332, %v1334
          %v1336 = vrot.slane %v1329, %v1335
          %v1337 = vcombine.low %v1328, %v1336
          %v1338 = vcombine.high %v1328, %v1336
          %v1339 = vpack.c.bf16 %v1337, %v1337
          %v1340 = vpack.c.bf16 %v1338, %v1338
          %1341 = vst.msk [vmem:[#allocation3] sm:$0xf] %vm1216, %v1339
          %1342 = vst.msk [vmem:[#allocation3 + $0x4] sm:$0xf] %vm1216, %v1340
          %1345 = vrot.lane.b32.xlu0 %v1031, 112
          %v1346 = vpop.permute.xlu0 %1345
          %1347 = vrot.lane.b32.xlu0 %v1034, 112
          %v1348 = vpop.permute.xlu0 %1347
          %v1351 = vcombine.high %v1031, 0.0
          %v1353 = vunpack.c.l.s4 1983009808
          %v1354 = vunpack.c.0.s8 %v1353
          %v1355 = vlaneseq
          %v1356 = vshrl.u32 %v1355, 7
          %v1357 = vsub.s32 %v1354, %v1356
          %v1358 = vrot.slane %v1031, %v1357
          %v1360 = vunpack.c.l.s4 1983009808
          %v1361 = vunpack.c.0.s8 %v1360
          %v1362 = vlaneseq
          %v1363 = vshrl.u32 %v1362, 7
          %v1364 = vsub.s32 %v1361, %v1363
          %v1365 = vrot.slane %v1351, %v1364
          %v1366 = vcombine.high %v1346, 0.0
          %v1368 = vunpack.c.l.s4 1983009808
          %v1369 = vunpack.c.0.s8 %v1368
          %v1370 = vlaneseq
          %v1371 = vshrl.u32 %v1370, 7
          %v1372 = vsub.s32 %v1369, %v1371
          %v1373 = vrot.slane %v1346, %v1372
          %v1375 = vunpack.c.l.s4 1983009808
          %v1376 = vunpack.c.0.s8 %v1375
          %v1377 = vlaneseq
          %v1378 = vshrl.u32 %v1377, 7
          %v1379 = vsub.s32 %v1376, %v1378
          %v1380 = vrot.slane %v1366, %v1379
          %v1381 = vcombine.low %v1358, %v1373
          %v1382 = vcombine.high %v1358, %v1373
          %v1384 = vunpack.c.l.s4 1934713408
          %v1385 = vunpack.c.0.s8 %v1384
          %v1386 = vlaneseq
          %v1387 = vshrl.u32 %v1386, 7
          %v1388 = vsub.s32 %v1385, %v1387
          %v1389 = vrot.slane %v1381, %v1388
          %v1391 = vunpack.c.l.s4 1934713408
          %v1392 = vunpack.c.0.s8 %v1391
          %v1393 = vlaneseq
          %v1394 = vshrl.u32 %v1393, 7
          %v1395 = vsub.s32 %v1392, %v1394
          %v1396 = vrot.slane %v1382, %v1395
          %v1397 = vcombine.low %v1365, %v1380
          %v1398 = vcombine.high %v1365, %v1380
          %v1400 = vunpack.c.l.s4 1934713408
          %v1401 = vunpack.c.0.s8 %v1400
          %v1402 = vlaneseq
          %v1403 = vshrl.u32 %v1402, 7
          %v1404 = vsub.s32 %v1401, %v1403
          %v1405 = vrot.slane %v1397, %v1404
          %v1407 = vunpack.c.l.s4 1934713408
          %v1408 = vunpack.c.0.s8 %v1407
          %v1409 = vlaneseq
          %v1410 = vshrl.u32 %v1409, 7
          %v1411 = vsub.s32 %v1408, %v1410
          %v1412 = vrot.slane %v1398, %v1411
          %v1413 = vcombine.high %v1389, 0.0
          %v1414 = vcombine.high %v1396, 0.0
          %v1415 = vcombine.high %v1405, 0.0
          %v1416 = vcombine.high %v1412, 0.0
          %v1417 = vcombine.high %v1034, 0.0
          %v1419 = vunpack.c.l.s4 1983009808
          %v1420 = vunpack.c.0.s8 %v1419
          %v1421 = vlaneseq
          %v1422 = vshrl.u32 %v1421, 7
          %v1423 = vsub.s32 %v1420, %v1422
          %v1424 = vrot.slane %v1034, %v1423
          %v1426 = vunpack.c.l.s4 1983009808
          %v1427 = vunpack.c.0.s8 %v1426
          %v1428 = vlaneseq
          %v1429 = vshrl.u32 %v1428, 7
          %v1430 = vsub.s32 %v1427, %v1429
          %v1431 = vrot.slane %v1417, %v1430
          %v1432 = vcombine.high %v1348, 0.0
          %v1434 = vunpack.c.l.s4 1983009808
          %v1435 = vunpack.c.0.s8 %v1434
          %v1436 = vlaneseq
          %v1437 = vshrl.u32 %v1436, 7
          %v1438 = vsub.s32 %v1435, %v1437
          %v1439 = vrot.slane %v1348, %v1438
          %v1441 = vunpack.c.l.s4 1983009808
          %v1442 = vunpack.c.0.s8 %v1441
          %v1443 = vlaneseq
          %v1444 = vshrl.u32 %v1443, 7
          %v1445 = vsub.s32 %v1442, %v1444
          %v1446 = vrot.slane %v1432, %v1445
          %v1447 = vcombine.low %v1424, %v1439
          %v1448 = vcombine.high %v1424, %v1439
          %v1450 = vunpack.c.l.s4 1934713408
          %v1451 = vunpack.c.0.s8 %v1450
          %v1452 = vlaneseq
          %v1453 = vshrl.u32 %v1452, 7
          %v1454 = vsub.s32 %v1451, %v1453
          %v1455 = vrot.slane %v1447, %v1454
          %v1457 = vunpack.c.l.s4 1934713408
          %v1458 = vunpack.c.0.s8 %v1457
          %v1459 = vlaneseq
          %v1460 = vshrl.u32 %v1459, 7
          %v1461 = vsub.s32 %v1458, %v1460
          %v1462 = vrot.slane %v1448, %v1461
          %v1463 = vcombine.low %v1431, %v1446
          %v1464 = vcombine.high %v1431, %v1446
          %v1466 = vunpack.c.l.s4 1934713408
          %v1467 = vunpack.c.0.s8 %v1466
          %v1468 = vlaneseq
          %v1469 = vshrl.u32 %v1468, 7
          %v1470 = vsub.s32 %v1467, %v1469
          %v1471 = vrot.slane %v1463, %v1470
          %v1473 = vunpack.c.l.s4 1934713408
          %v1474 = vunpack.c.0.s8 %v1473
          %v1475 = vlaneseq
          %v1476 = vshrl.u32 %v1475, 7
          %v1477 = vsub.s32 %v1474, %v1476
          %v1478 = vrot.slane %v1464, %v1477
          %v1479 = vcombine.high %v1455, 0.0
          %v1480 = vcombine.high %v1462, 0.0
          %v1481 = vcombine.high %v1471, 0.0
          %v1482 = vcombine.high %v1478, 0.0
          %v1483 = vcombine.low %v1389, %v1396
          %v1485 = vunpack.c.l.s4 1983009808
          %v1486 = vunpack.c.0.s8 %v1485
          %v1487 = vlaneseq
          %v1488 = vshrl.u32 %v1487, 7
          %v1489 = vsub.s32 %v1486, %v1488
          %v1490 = vrot.slane %v1483, %v1489
          %v1491 = vcombine.low %v1413, %v1414
          %v1493 = vunpack.c.l.s4 1983009808
          %v1494 = vunpack.c.0.s8 %v1493
          %v1495 = vlaneseq
          %v1496 = vshrl.u32 %v1495, 7
          %v1497 = vsub.s32 %v1494, %v1496
          %v1498 = vrot.slane %v1491, %v1497
          %v1499 = vcombine.low %v1405, %v1412
          %v1501 = vunpack.c.l.s4 1983009808
          %v1502 = vunpack.c.0.s8 %v1501
          %v1503 = vlaneseq
          %v1504 = vshrl.u32 %v1503, 7
          %v1505 = vsub.s32 %v1502, %v1504
          %v1506 = vrot.slane %v1499, %v1505
          %v1507 = vcombine.low %v1415, %v1416
          %v1509 = vunpack.c.l.s4 1983009808
          %v1510 = vunpack.c.0.s8 %v1509
          %v1511 = vlaneseq
          %v1512 = vshrl.u32 %v1511, 7
          %v1513 = vsub.s32 %v1510, %v1512
          %v1514 = vrot.slane %v1507, %v1513
          %v1515 = vcombine.low %v1490, %v1498
          %v1517 = vunpack.c.l.s4 1934713408
          %v1518 = vunpack.c.0.s8 %v1517
          %v1519 = vlaneseq
          %v1520 = vshrl.u32 %v1519, 7
          %v1521 = vsub.s32 %v1518, %v1520
          %v1522 = vrot.slane %v1515, %v1521
          %v1523 = vcombine.low %v1506, %v1514
          %v1525 = vunpack.c.l.s4 1934713408
          %v1526 = vunpack.c.0.s8 %v1525
          %v1527 = vlaneseq
          %v1528 = vshrl.u32 %v1527, 7
          %v1529 = vsub.s32 %v1526, %v1528
          %v1530 = vrot.slane %v1523, %v1529
          %v1531 = vcombine.low %v1522, %v1530
          %v1532 = vcombine.high %v1522, %v1530
          %v1533 = vcombine.low %v1455, %v1462
          %v1535 = vunpack.c.l.s4 1983009808
          %v1536 = vunpack.c.0.s8 %v1535
          %v1537 = vlaneseq
          %v1538 = vshrl.u32 %v1537, 7
          %v1539 = vsub.s32 %v1536, %v1538
          %v1540 = vrot.slane %v1533, %v1539
          %v1541 = vcombine.low %v1479, %v1480
          %v1543 = vunpack.c.l.s4 1983009808
          %v1544 = vunpack.c.0.s8 %v1543
          %v1545 = vlaneseq
          %v1546 = vshrl.u32 %v1545, 7
          %v1547 = vsub.s32 %v1544, %v1546
          %v1548 = vrot.slane %v1541, %v1547
          %v1549 = vcombine.low %v1471, %v1478
          %v1551 = vunpack.c.l.s4 1983009808
          %v1552 = vunpack.c.0.s8 %v1551
          %v1553 = vlaneseq
          %v1554 = vshrl.u32 %v1553, 7
          %v1555 = vsub.s32 %v1552, %v1554
          %v1556 = vrot.slane %v1549, %v1555
          %v1557 = vcombine.low %v1481, %v1482
          %v1559 = vunpack.c.l.s4 1983009808
          %v1560 = vunpack.c.0.s8 %v1559
          %v1561 = vlaneseq
          %v1562 = vshrl.u32 %v1561, 7
          %v1563 = vsub.s32 %v1560, %v1562
          %v1564 = vrot.slane %v1557, %v1563
          %v1565 = vcombine.low %v1540, %v1548
          %v1567 = vunpack.c.l.s4 1934713408
          %v1568 = vunpack.c.0.s8 %v1567
          %v1569 = vlaneseq
          %v1570 = vshrl.u32 %v1569, 7
          %v1571 = vsub.s32 %v1568, %v1570
          %v1572 = vrot.slane %v1565, %v1571
          %v1573 = vcombine.low %v1556, %v1564
          %v1575 = vunpack.c.l.s4 1934713408
          %v1576 = vunpack.c.0.s8 %v1575
          %v1577 = vlaneseq
          %v1578 = vshrl.u32 %v1577, 7
          %v1579 = vsub.s32 %v1576, %v1578
          %v1580 = vrot.slane %v1573, %v1579
          %v1581 = vcombine.low %v1572, %v1580
          %v1582 = vcombine.high %v1572, %v1580
          %v1583 = vpack.c.bf16 %v1581, %v1531
          %v1584 = vpack.c.bf16 %v1582, %v1532
          %vm1585 = vcmask 130048
          %1586 = vst.msk [vmem:[#allocation4] sm:$0xff] %vm1585, %v1583
          %1587 = vst.msk [vmem:[#allocation4 + $0x8] sm:$0xff] %vm1585, %v1584
          %1590 = vrot.lane.b32.xlu0 %v1088, 112
          %v1591 = vpop.permute.xlu0 %1590
          %1592 = vrot.lane.b32.xlu0 %v1091, 112
          %v1593 = vpop.permute.xlu0 %1592
          %v1596 = vcombine.high %v1088, 0.0
          %v1598 = vunpack.c.l.s4 1983009808
          %v1599 = vunpack.c.0.s8 %v1598
          %v1600 = vlaneseq
          %v1601 = vshrl.u32 %v1600, 7
          %v1602 = vsub.s32 %v1599, %v1601
          %v1603 = vrot.slane %v1088, %v1602
          %v1605 = vunpack.c.l.s4 1983009808
          %v1606 = vunpack.c.0.s8 %v1605
          %v1607 = vlaneseq
          %v1608 = vshrl.u32 %v1607, 7
          %v1609 = vsub.s32 %v1606, %v1608
          %v1610 = vrot.slane %v1596, %v1609
          %v1611 = vcombine.high %v1591, 0.0
          %v1613 = vunpack.c.l.s4 1983009808
          %v1614 = vunpack.c.0.s8 %v1613
          %v1615 = vlaneseq
          %v1616 = vshrl.u32 %v1615, 7
          %v1617 = vsub.s32 %v1614, %v1616
          %v1618 = vrot.slane %v1591, %v1617
          %v1620 = vunpack.c.l.s4 1983009808
          %v1621 = vunpack.c.0.s8 %v1620
          %v1622 = vlaneseq
          %v1623 = vshrl.u32 %v1622, 7
          %v1624 = vsub.s32 %v1621, %v1623
          %v1625 = vrot.slane %v1611, %v1624
          %v1626 = vcombine.low %v1603, %v1618
          %v1627 = vcombine.high %v1603, %v1618
          %v1629 = vunpack.c.l.s4 1934713408
          %v1630 = vunpack.c.0.s8 %v1629
          %v1631 = vlaneseq
          %v1632 = vshrl.u32 %v1631, 7
          %v1633 = vsub.s32 %v1630, %v1632
          %v1634 = vrot.slane %v1626, %v1633
          %v1636 = vunpack.c.l.s4 1934713408
          %v1637 = vunpack.c.0.s8 %v1636
          %v1638 = vlaneseq
          %v1639 = vshrl.u32 %v1638, 7
          %v1640 = vsub.s32 %v1637, %v1639
          %v1641 = vrot.slane %v1627, %v1640
          %v1642 = vcombine.low %v1610, %v1625
          %v1643 = vcombine.high %v1610, %v1625
          %v1645 = vunpack.c.l.s4 1934713408
          %v1646 = vunpack.c.0.s8 %v1645
          %v1647 = vlaneseq
          %v1648 = vshrl.u32 %v1647, 7
          %v1649 = vsub.s32 %v1646, %v1648
          %v1650 = vrot.slane %v1642, %v1649
          %v1652 = vunpack.c.l.s4 1934713408
          %v1653 = vunpack.c.0.s8 %v1652
          %v1654 = vlaneseq
          %v1655 = vshrl.u32 %v1654, 7
          %v1656 = vsub.s32 %v1653, %v1655
          %v1657 = vrot.slane %v1643, %v1656
          %v1658 = vcombine.high %v1634, 0.0
          %v1659 = vcombine.high %v1641, 0.0
          %v1660 = vcombine.high %v1650, 0.0
          %v1661 = vcombine.high %v1657, 0.0
          %v1662 = vcombine.high %v1091, 0.0
          %v1664 = vunpack.c.l.s4 1983009808
          %v1665 = vunpack.c.0.s8 %v1664
          %v1666 = vlaneseq
          %v1667 = vshrl.u32 %v1666, 7
          %v1668 = vsub.s32 %v1665, %v1667
          %v1669 = vrot.slane %v1091, %v1668
          %v1671 = vunpack.c.l.s4 1983009808
          %v1672 = vunpack.c.0.s8 %v1671
          %v1673 = vlaneseq
          %v1674 = vshrl.u32 %v1673, 7
          %v1675 = vsub.s32 %v1672, %v1674
          %v1676 = vrot.slane %v1662, %v1675
          %v1677 = vcombine.high %v1593, 0.0
          %v1679 = vunpack.c.l.s4 1983009808
          %v1680 = vunpack.c.0.s8 %v1679
          %v1681 = vlaneseq
          %v1682 = vshrl.u32 %v1681, 7
          %v1683 = vsub.s32 %v1680, %v1682
          %v1684 = vrot.slane %v1593, %v1683
          %v1686 = vunpack.c.l.s4 1983009808
          %v1687 = vunpack.c.0.s8 %v1686
          %v1688 = vlaneseq
          %v1689 = vshrl.u32 %v1688, 7
          %v1690 = vsub.s32 %v1687, %v1689
          %v1691 = vrot.slane %v1677, %v1690
          %v1692 = vcombine.low %v1669, %v1684
          %v1693 = vcombine.high %v1669, %v1684
          %v1695 = vunpack.c.l.s4 1934713408
          %v1696 = vunpack.c.0.s8 %v1695
          %v1697 = vlaneseq
          %v1698 = vshrl.u32 %v1697, 7
          %v1699 = vsub.s32 %v1696, %v1698
          %v1700 = vrot.slane %v1692, %v1699
          %v1702 = vunpack.c.l.s4 1934713408
          %v1703 = vunpack.c.0.s8 %v1702
          %v1704 = vlaneseq
          %v1705 = vshrl.u32 %v1704, 7
          %v1706 = vsub.s32 %v1703, %v1705
          %v1707 = vrot.slane %v1693, %v1706
          %v1708 = vcombine.low %v1676, %v1691
          %v1709 = vcombine.high %v1676, %v1691
          %v1711 = vunpack.c.l.s4 1934713408
          %v1712 = vunpack.c.0.s8 %v1711
          %v1713 = vlaneseq
          %v1714 = vshrl.u32 %v1713, 7
          %v1715 = vsub.s32 %v1712, %v1714
          %v1716 = vrot.slane %v1708, %v1715
          %v1718 = vunpack.c.l.s4 1934713408
          %v1719 = vunpack.c.0.s8 %v1718
          %v1720 = vlaneseq
          %v1721 = vshrl.u32 %v1720, 7
          %v1722 = vsub.s32 %v1719, %v1721
          %v1723 = vrot.slane %v1709, %v1722
          %v1724 = vcombine.high %v1700, 0.0
          %v1725 = vcombine.high %v1707, 0.0
          %v1726 = vcombine.high %v1716, 0.0
          %v1727 = vcombine.high %v1723, 0.0
          %v1728 = vcombine.low %v1634, %v1641
          %v1730 = vunpack.c.l.s4 1983009808
          %v1731 = vunpack.c.0.s8 %v1730
          %v1732 = vlaneseq
          %v1733 = vshrl.u32 %v1732, 7
          %v1734 = vsub.s32 %v1731, %v1733
          %v1735 = vrot.slane %v1728, %v1734
          %v1736 = vcombine.low %v1658, %v1659
          %v1738 = vunpack.c.l.s4 1983009808
          %v1739 = vunpack.c.0.s8 %v1738
          %v1740 = vlaneseq
          %v1741 = vshrl.u32 %v1740, 7
          %v1742 = vsub.s32 %v1739, %v1741
          %v1743 = vrot.slane %v1736, %v1742
          %v1744 = vcombine.low %v1650, %v1657
          %v1746 = vunpack.c.l.s4 1983009808
          %v1747 = vunpack.c.0.s8 %v1746
          %v1748 = vlaneseq
          %v1749 = vshrl.u32 %v1748, 7
          %v1750 = vsub.s32 %v1747, %v1749
          %v1751 = vrot.slane %v1744, %v1750
          %v1752 = vcombine.low %v1660, %v1661
          %v1754 = vunpack.c.l.s4 1983009808
          %v1755 = vunpack.c.0.s8 %v1754
          %v1756 = vlaneseq
          %v1757 = vshrl.u32 %v1756, 7
          %v1758 = vsub.s32 %v1755, %v1757
          %v1759 = vrot.slane %v1752, %v1758
          %v1760 = vcombine.low %v1735, %v1743
          %v1762 = vunpack.c.l.s4 1934713408
          %v1763 = vunpack.c.0.s8 %v1762
          %v1764 = vlaneseq
          %v1765 = vshrl.u32 %v1764, 7
          %v1766 = vsub.s32 %v1763, %v1765
          %v1767 = vrot.slane %v1760, %v1766
          %v1768 = vcombine.low %v1751, %v1759
          %v1770 = vunpack.c.l.s4 1934713408
          %v1771 = vunpack.c.0.s8 %v1770
          %v1772 = vlaneseq
          %v1773 = vshrl.u32 %v1772, 7
          %v1774 = vsub.s32 %v1771, %v1773
          %v1775 = vrot.slane %v1768, %v1774
          %v1776 = vcombine.low %v1767, %v1775
          %v1777 = vcombine.high %v1767, %v1775
          %v1778 = vcombine.low %v1700, %v1707
          %v1780 = vunpack.c.l.s4 1983009808
          %v1781 = vunpack.c.0.s8 %v1780
          %v1782 = vlaneseq
          %v1783 = vshrl.u32 %v1782, 7
          %v1784 = vsub.s32 %v1781, %v1783
          %v1785 = vrot.slane %v1778, %v1784
          %v1786 = vcombine.low %v1724, %v1725
          %v1788 = vunpack.c.l.s4 1983009808
          %v1789 = vunpack.c.0.s8 %v1788
          %v1790 = vlaneseq
          %v1791 = vshrl.u32 %v1790, 7
          %v1792 = vsub.s32 %v1789, %v1791
          %v1793 = vrot.slane %v1786, %v1792
          %v1794 = vcombine.low %v1716, %v1723
          %v1796 = vunpack.c.l.s4 1983009808
          %v1797 = vunpack.c.0.s8 %v1796
          %v1798 = vlaneseq
          %v1799 = vshrl.u32 %v1798, 7
          %v1800 = vsub.s32 %v1797, %v1799
          %v1801 = vrot.slane %v1794, %v1800
          %v1802 = vcombine.low %v1726, %v1727
          %v1804 = vunpack.c.l.s4 1983009808
          %v1805 = vunpack.c.0.s8 %v1804
          %v1806 = vlaneseq
          %v1807 = vshrl.u32 %v1806, 7
          %v1808 = vsub.s32 %v1805, %v1807
          %v1809 = vrot.slane %v1802, %v1808
          %v1810 = vcombine.low %v1785, %v1793
          %v1812 = vunpack.c.l.s4 1934713408
          %v1813 = vunpack.c.0.s8 %v1812
          %v1814 = vlaneseq
          %v1815 = vshrl.u32 %v1814, 7
          %v1816 = vsub.s32 %v1813, %v1815
          %v1817 = vrot.slane %v1810, %v1816
          %v1818 = vcombine.low %v1801, %v1809
          %v1820 = vunpack.c.l.s4 1934713408
          %v1821 = vunpack.c.0.s8 %v1820
          %v1822 = vlaneseq
          %v1823 = vshrl.u32 %v1822, 7
          %v1824 = vsub.s32 %v1821, %v1823
          %v1825 = vrot.slane %v1818, %v1824
          %v1826 = vcombine.low %v1817, %v1825
          %v1827 = vcombine.high %v1817, %v1825
          %v1828 = vpack.c.bf16 %v1826, %v1776
          %v1829 = vpack.c.bf16 %v1827, %v1777
          %1830 = vst.msk [vmem:[#allocation5] sm:$0xff] %vm1585, %v1828
          %1831 = vst.msk [vmem:[#allocation5 + $0x8] sm:$0xff] %vm1585, %v1829
        $region140: #{tpu_custom_call.1} parent=99 // pred_fallthru
          _
        %s1832 = smul.u32 %s50, 8
        %s1833 = sshra.s32 %s1832, 3
        %s1834 = sand.u32 %s1832, 7
        %s1835 = smul.addr %s1833, 4
        %s1836 = scalar_lea.vmem [#allocation6], %s1835
        %v1837 = vld [vmem:[%s1836] sm:$0xf]
        %v1838 = vunpack.c.l.bf16 %v1837
        %v1839 = vld [vmem:[#allocation2] sm:$0xf]
        %v1840 = vld [vmem:[#allocation2 + $0x4] sm:$0xf]
        %v1841 = vld [vmem:[#allocation3] sm:$0xf]
        %v1842 = vld [vmem:[#allocation3 + $0x4] sm:$0xf]
        %v1843 = vld [vmem:[%s2] sm:$0xf]
        %v1844 = vld [vmem:[%s2 + $0x4] sm:$0xf]
        %v1845 = vld [vmem:[%s2 + $0x8] sm:$0xf]
        %v1846 = vld [vmem:[%s2 + $0xc] sm:$0xf]
        %v1851 = vunpack.c.l.b16 %v1843
        %v1852 = vunpack.c.l.b16 %v1844
        %v1853 = vunpack.c.l.b16 %v1845
        %v1854 = vunpack.c.l.b16 %v1846
        %v1855 = vpack.c.b16 %v1852, %v1851
        %v1856 = vpack.c.b16 %v1854, %v1853
        %vm1859 = vcmask 261120
        %v1861 = vsel %vm1859, %v1837, 0
        %1863 = vmatprep.subr.bf16.mxu0 0
        %1864 = vmatpush1.bf16.msra.mxu0 %v1855
        %1865 = vmatprep.subr.bf16.mxu0 0
        %1866 = vmatpush1.bf16.msra.mxu0 %v1856
        %1867 = vmatprep.subr.bf16.mxu0 0
        %1868 = vmatpush1.bf16.msra.mxu0 0
        %1869 = vmatprep.subr.bf16.mxu0 0
        %1870 = vmatpush1.bf16.msra.mxu0 0
        %1871 = vmatprep.subr.bf16.mxu0 0
        %1872 = vmatpush1.bf16.msra.mxu0 0
        %1873 = vmatprep.subr.bf16.mxu0 0
        %1874 = vmatpush1.bf16.msra.mxu0 0
        %1875 = vmatprep.subr.bf16.mxu0 0
        %1876 = vmatpush1.bf16.msra.mxu0 0
        %1877 = vmatprep.subr.bf16.mxu0 0
        %1878 = vmatpush1.bf16.msra.mxu0 0
        %1879 = vmatprep.subr.bf16.mxu0 0
        %1880 = vmatpush1.bf16.msra.mxu0 0
        %1881 = vmatprep.subr.bf16.mxu0 0
        %1882 = vmatpush1.bf16.msra.mxu0 0
        %1883 = vmatprep.subr.bf16.mxu0 0
        %1884 = vmatpush1.bf16.msra.mxu0 0
        %1885 = vmatprep.subr.bf16.mxu0 0
        %1886 = vmatpush1.bf16.msra.mxu0 0
        %1887 = vmatprep.subr.bf16.mxu0 0
        %1888 = vmatpush1.bf16.msra.mxu0 0
        %1889 = vmatprep.subr.bf16.mxu0 0
        %1890 = vmatpush1.bf16.msra.mxu0 0
        %1891 = vmatprep.subr.bf16.mxu0 0
        %1892 = vmatpush1.bf16.msra.mxu0 0
        %1893 = vmatprep.subr.bf16.mxu0 0
        %1894 = vmatpush1.bf16.msra.mxu0 0
        %1895 = vmatprep.mubr.bf16.mxu0 0
        %1896 = vmatmul.mubr.bf16.gmra.mrb[0].mxu0 %v1861
        %v1897 = vpop.f32.mrb[0].mxu0
        %v1898 = vadd.f32 0.0, %v1897
        %v1899 = vpop.f32.mrb[0].mxu0
        %v1900 = vpop.f32.mrb[0].mxu0
        %v1901 = vpop.f32.mrb[0].mxu0
        %1902 = vdwg.mxu0
        %v1903 = vmul.f32 %v1898, 0.25
        %1905 = vrot.lane.b32.xlu0 %v1903, 112
        %v1906 = vpop.permute.xlu0 %1905
        %v1908 = vcombine.high %v1903, 0.0
        %v1910 = vunpack.c.l.s4 1983009808
        %v1911 = vunpack.c.0.s8 %v1910
        %v1912 = vlaneseq
        %v1913 = vshrl.u32 %v1912, 7
        %v1914 = vsub.s32 %v1911, %v1913
        %v1915 = vrot.slane %v1903, %v1914
        %v1917 = vunpack.c.l.s4 1983009808
        %v1918 = vunpack.c.0.s8 %v1917
        %v1919 = vlaneseq
        %v1920 = vshrl.u32 %v1919, 7
        %v1921 = vsub.s32 %v1918, %v1920
        %v1922 = vrot.slane %v1908, %v1921
        %v1923 = vcombine.high %v1906, 0.0
        %v1925 = vunpack.c.l.s4 1983009808
        %v1926 = vunpack.c.0.s8 %v1925
        %v1927 = vlaneseq
        %v1928 = vshrl.u32 %v1927, 7
        %v1929 = vsub.s32 %v1926, %v1928
        %v1930 = vrot.slane %v1906, %v1929
        %v1932 = vunpack.c.l.s4 1983009808
        %v1933 = vunpack.c.0.s8 %v1932
        %v1934 = vlaneseq
        %v1935 = vshrl.u32 %v1934, 7
        %v1936 = vsub.s32 %v1933, %v1935
        %v1937 = vrot.slane %v1923, %v1936
        %v1938 = vcombine.low %v1915, %v1930
        %v1939 = vcombine.high %v1915, %v1930
        %v1941 = vunpack.c.l.s4 1934713408
        %v1942 = vunpack.c.0.s8 %v1941
        %v1943 = vlaneseq
        %v1944 = vshrl.u32 %v1943, 7
        %v1945 = vsub.s32 %v1942, %v1944
        %v1946 = vrot.slane %v1938, %v1945
        %v1948 = vunpack.c.l.s4 1934713408
        %v1949 = vunpack.c.0.s8 %v1948
        %v1950 = vlaneseq
        %v1951 = vshrl.u32 %v1950, 7
        %v1952 = vsub.s32 %v1949, %v1951
        %v1953 = vrot.slane %v1939, %v1952
        %v1954 = vcombine.low %v1922, %v1937
        %v1955 = vcombine.high %v1922, %v1937
        %v1957 = vunpack.c.l.s4 1934713408
        %v1958 = vunpack.c.0.s8 %v1957
        %v1959 = vlaneseq
        %v1960 = vshrl.u32 %v1959, 7
        %v1961 = vsub.s32 %v1958, %v1960
        %v1962 = vrot.slane %v1954, %v1961
        %v1964 = vunpack.c.l.s4 1934713408
        %v1965 = vunpack.c.0.s8 %v1964
        %v1966 = vlaneseq
        %v1967 = vshrl.u32 %v1966, 7
        %v1968 = vsub.s32 %v1965, %v1967
        %v1969 = vrot.slane %v1955, %v1968
        %v1970 = vcombine.high %v1946, 0.0
        %v1971 = vcombine.high %v1953, 0.0
        %v1972 = vcombine.high %v1962, 0.0
        %v1973 = vcombine.high %v1969, 0.0
        %v1974 = vcombine.low %v1946, %v1953
        %v1976 = vunpack.c.l.s4 1983009808
        %v1977 = vunpack.c.0.s8 %v1976
        %v1978 = vlaneseq
        %v1979 = vshrl.u32 %v1978, 7
        %v1980 = vsub.s32 %v1977, %v1979
        %v1981 = vrot.slane %v1974, %v1980
        %v1982 = vcombine.low %v1970, %v1971
        %v1984 = vunpack.c.l.s4 1983009808
        %v1985 = vunpack.c.0.s8 %v1984
        %v1986 = vlaneseq
        %v1987 = vshrl.u32 %v1986, 7
        %v1988 = vsub.s32 %v1985, %v1987
        %v1989 = vrot.slane %v1982, %v1988
        %v1990 = vcombine.low %v1962, %v1969
        %v1992 = vunpack.c.l.s4 1983009808
        %v1993 = vunpack.c.0.s8 %v1992
        %v1994 = vlaneseq
        %v1995 = vshrl.u32 %v1994, 7
        %v1996 = vsub.s32 %v1993, %v1995
        %v1997 = vrot.slane %v1990, %v1996
        %v1998 = vcombine.low %v1972, %v1973
        %v2000 = vunpack.c.l.s4 1983009808
        %v2001 = vunpack.c.0.s8 %v2000
        %v2002 = vlaneseq
        %v2003 = vshrl.u32 %v2002, 7
        %v2004 = vsub.s32 %v2001, %v2003
        %v2005 = vrot.slane %v1998, %v2004
        %v2006 = vcombine.low %v1981, %v1989
        %v2008 = vunpack.c.l.s4 1934713408
        %v2009 = vunpack.c.0.s8 %v2008
        %v2010 = vlaneseq
        %v2011 = vshrl.u32 %v2010, 7
        %v2012 = vsub.s32 %v2009, %v2011
        %v2013 = vrot.slane %v2006, %v2012
        %v2014 = vcombine.low %v1997, %v2005
        %v2016 = vunpack.c.l.s4 1934713408
        %v2017 = vunpack.c.0.s8 %v2016
        %v2018 = vlaneseq
        %v2019 = vshrl.u32 %v2018, 7
        %v2020 = vsub.s32 %v2017, %v2019
        %v2021 = vrot.slane %v2014, %v2020
        %v2022 = vcombine.low %v2013, %v2021
        %v2023 = vcombine.high %v2013, %v2021
        %v2024 = vpack.c.bf16 %v2022, %v2022
        %v2025 = vpack.c.bf16 %v2023, %v2023
        %vm2026 = vcmask 130048
        %v2028 = vsel %vm2026, %v2024, 0
        %v2031 = vsel %vm2026, %v1839, 0
        %2033 = vmatprep.subr.bf16.mxu0 0
        %2034 = vmatpush1.bf16.xpose.msra.mxu0 %v2031
        %2035 = vmatprep.subr.bf16.mxu0 0
        %2036 = vmatpush1.bf16.xpose.msra.mxu0 0
        %2037 = vmatprep.subr.bf16.mxu0 0
        %2038 = vmatpush1.bf16.xpose.msra.mxu0 0
        %2039 = vmatprep.subr.bf16.mxu0 0
        %2040 = vmatpush1.bf16.xpose.msra.mxu0 0
        %2041 = vmatprep.subr.bf16.mxu0 0
        %2042 = vmatpush1.bf16.xpose.msra.mxu0 0
        %2043 = vmatprep.subr.bf16.mxu0 0
        %2044 = vmatpush1.bf16.xpose.msra.mxu0 0
        %2045 = vmatprep.subr.bf16.mxu0 0
        %2046 = vmatpush1.bf16.xpose.msra.mxu0 0
        %2047 = vmatprep.subr.bf16.mxu0 0
        %2048 = vmatpush1.bf16.xpose.msra.mxu0 0
        %2049 = vmatprep.subr.bf16.mxu0 0
        %2050 = vmatpush1.bf16.xpose.msra.mxu0 0
        %2051 = vmatprep.subr.bf16.mxu0 0
        %2052 = vmatpush1.bf16.xpose.msra.mxu0 0
        %2053 = vmatprep.subr.bf16.mxu0 0
        %2054 = vmatpush1.bf16.xpose.msra.mxu0 0
        %2055 = vmatprep.subr.bf16.mxu0 0
        %2056 = vmatpush1.bf16.xpose.msra.mxu0 0
        %2057 = vmatprep.subr.bf16.mxu0 0
        %2058 = vmatpush1.bf16.xpose.msra.mxu0 0
        %2059 = vmatprep.subr.bf16.mxu0 0
        %2060 = vmatpush1.bf16.xpose.msra.mxu0 0
        %2061 = vmatprep.subr.bf16.mxu0 0
        %2062 = vmatpush1.bf16.xpose.msra.mxu0 0
        %2063 = vmatprep.subr.bf16.mxu0 0
        %2064 = vmatpush1.bf16.xpose.msra.mxu0 0
        %2065 = vmatprep.mubr.bf16.mxu0 0
        %2066 = vmatmul.mubr.bf16.gmra.mrb[0].mxu0 %v2028
        %v2067 = vpop.f32.mrb[0].mxu0
        %v2068 = vadd.f32 0.0, %v2067
        %v2069 = vpop.f32.mrb[0].mxu0
        %v2070 = vpop.f32.mrb[0].mxu0
        %v2071 = vpop.f32.mrb[0].mxu0
        %2072 = vdwg.mxu0
        %v2074 = vsel %vm2026, %v2025, 0
        %v2077 = vsel %vm2026, %v1840, 0
        %2079 = vmatprep.subr.bf16.mxu0 0
        %2080 = vmatpush1.bf16.xpose.msra.mxu0 %v2077
        %2081 = vmatprep.subr.bf16.mxu0 0
        %2082 = vmatpush1.bf16.xpose.msra.mxu0 0
        %2083 = vmatprep.subr.bf16.mxu0 0
        %2084 = vmatpush1.bf16.xpose.msra.mxu0 0
        %2085 = vmatprep.subr.bf16.mxu0 0
        %2086 = vmatpush1.bf16.xpose.msra.mxu0 0
        %2087 = vmatprep.subr.bf16.mxu0 0
        %2088 = vmatpush1.bf16.xpose.msra.mxu0 0
        %2089 = vmatprep.subr.bf16.mxu0 0
        %2090 = vmatpush1.bf16.xpose.msra.mxu0 0
        %2091 = vmatprep.subr.bf16.mxu0 0
        %2092 = vmatpush1.bf16.xpose.msra.mxu0 0
        %2093 = vmatprep.subr.bf16.mxu0 0
        %2094 = vmatpush1.bf16.xpose.msra.mxu0 0
        %2095 = vmatprep.subr.bf16.mxu0 0
        %2096 = vmatpush1.bf16.xpose.msra.mxu0 0
        %2097 = vmatprep.subr.bf16.mxu0 0
        %2098 = vmatpush1.bf16.xpose.msra.mxu0 0
        %2099 = vmatprep.subr.bf16.mxu0 0
        %2100 = vmatpush1.bf16.xpose.msra.mxu0 0
        %2101 = vmatprep.subr.bf16.mxu0 0
        %2102 = vmatpush1.bf16.xpose.msra.mxu0 0
        %2103 = vmatprep.subr.bf16.mxu0 0
        %2104 = vmatpush1.bf16.xpose.msra.mxu0 0
        %2105 = vmatprep.subr.bf16.mxu0 0
        %2106 = vmatpush1.bf16.xpose.msra.mxu0 0
        %2107 = vmatprep.subr.bf16.mxu0 0
        %2108 = vmatpush1.bf16.xpose.msra.mxu0 0
        %2109 = vmatprep.subr.bf16.mxu0 0
        %2110 = vmatpush1.bf16.xpose.msra.mxu0 0
        %2111 = vmatprep.mubr.bf16.mxu0 0
        %2112 = vmatmul.mubr.bf16.gmra.mrb[0].mxu0 %v2074
        %v2113 = vpop.f32.mrb[0].mxu0
        %v2114 = vadd.f32 0.0, %v2113
        %v2115 = vpop.f32.mrb[0].mxu0
        %v2116 = vpop.f32.mrb[0].mxu0
        %v2117 = vpop.f32.mrb[0].mxu0
        %2118 = vdwg.mxu0
        %vm2119 = vcmask 64512
        %v2120 = vsel %vm2119, %v2068, -inf
        %2121 = vmax.xlane.f32.xlu0 %v2120
        %v2122 = vpop.xlane.xlu0 %2121
        %v2123 = vsel %vm2119, %v2114, -inf
        %2124 = vmax.xlane.f32.xlu0 %v2123
        %v2125 = vpop.xlane.xlu0 %2124
        %v2126 = vsub.f32 %v2068, %v2122
        %v2127 = vsub.f32 %v2114, %v2125
        %v2128 = vmul.f32 %v2126, 1.442695
        %v2129 = vpow.pop %v2128
        %v2130 = vmul.f32 %v2127, 1.442695
        %v2131 = vpow.pop %v2130
        %v2132 = vsel %vm2119, %v2129, 0.0
        %2133 = vadd.xlane.f32.xlu0 %v2132
        %v2134 = vpop.xlane.xlu0 %2133
        %v2135 = vsel %vm2119, %v2131, 0.0
        %2136 = vadd.xlane.f32.xlu0 %v2135
        %v2137 = vpop.xlane.xlu0 %2136
        %v2138 = vrcp.pop %v2134
        %v2139 = vrcp.pop %v2137
        %v2140 = vmul.f32 %v2129, %v2138
        %v2141 = vmul.f32 %v2131, %v2139
        %v2142 = vpack.c.bf16 %v2140, %v2140
        %v2143 = vpack.c.bf16 %v2141, %v2141
        %vm2144 = vcmask 60416
        %2145 = vst.msk [vmem:[%s835] sm:$0xf] %vm2144, %v2142
        %2146 = vst.msk [vmem:[%s835 + $0x4] sm:$0xf] %vm2144, %v2143
        %v2148 = vsel %vm2119, %v2142, 0
        %vm2150 = vcmask 1043456
        %v2152 = vsel %vm2150, %v1841, 0
        %2154 = vmatprep.subr.bf16.mxu0 0
        %2155 = vmatpush1.bf16.msra.mxu0 %v2152
        %2156 = vmatprep.subr.bf16.mxu0 0
        %2157 = vmatpush1.bf16.msra.mxu0 0
        %2158 = vmatprep.subr.bf16.mxu0 0
        %2159 = vmatpush1.bf16.msra.mxu0 0
        %2160 = vmatprep.subr.bf16.mxu0 0
        %2161 = vmatpush1.bf16.msra.mxu0 0
        %2162 = vmatprep.subr.bf16.mxu0 0
        %2163 = vmatpush1.bf16.msra.mxu0 0
        %2164 = vmatprep.subr.bf16.mxu0 0
        %2165 = vmatpush1.bf16.msra.mxu0 0
        %2166 = vmatprep.subr.bf16.mxu0 0
        %2167 = vmatpush1.bf16.msra.mxu0 0
        %2168 = vmatprep.subr.bf16.mxu0 0
        %2169 = vmatpush1.bf16.msra.mxu0 0
        %2170 = vmatprep.subr.bf16.mxu0 0
        %2171 = vmatpush1.bf16.msra.mxu0 0
        %2172 = vmatprep.subr.bf16.mxu0 0
        %2173 = vmatpush1.bf16.msra.mxu0 0
        %2174 = vmatprep.subr.bf16.mxu0 0
        %2175 = vmatpush1.bf16.msra.mxu0 0
        %2176 = vmatprep.subr.bf16.mxu0 0
        %2177 = vmatpush1.bf16.msra.mxu0 0
        %2178 = vmatprep.subr.bf16.mxu0 0
        %2179 = vmatpush1.bf16.msra.mxu0 0
        %2180 = vmatprep.subr.bf16.mxu0 0
        %2181 = vmatpush1.bf16.msra.mxu0 0
        %2182 = vmatprep.subr.bf16.mxu0 0
        %2183 = vmatpush1.bf16.msra.mxu0 0
        %2184 = vmatprep.subr.bf16.mxu0 0
        %2185 = vmatpush1.bf16.msra.mxu0 0
        %2186 = vmatprep.mubr.bf16.mxu0 0
        %2187 = vmatmul.mubr.bf16.gmra.mrb[0].mxu0 %v2148
        %v2188 = vpop.f32.mrb[0].mxu0
        %v2189 = vadd.f32 0.0, %v2188
        %v2190 = vpop.f32.mrb[0].mxu0
        %v2191 = vpop.f32.mrb[0].mxu0
        %v2192 = vpop.f32.mrb[0].mxu0
        %2193 = vdwg.mxu0
        %v2195 = vsel %vm2119, %v2143, 0
        %v2198 = vsel %vm2150, %v1842, 0
        %2200 = vmatprep.subr.bf16.mxu0 0
        %2201 = vmatpush1.bf16.msra.mxu0 %v2198
        %2202 = vmatprep.subr.bf16.mxu0 0
        %2203 = vmatpush1.bf16.msra.mxu0 0
        %2204 = vmatprep.subr.bf16.mxu0 0
        %2205 = vmatpush1.bf16.msra.mxu0 0
        %2206 = vmatprep.subr.bf16.mxu0 0
        %2207 = vmatpush1.bf16.msra.mxu0 0
        %2208 = vmatprep.subr.bf16.mxu0 0
        %2209 = vmatpush1.bf16.msra.mxu0 0
        %2210 = vmatprep.subr.bf16.mxu0 0
        %2211 = vmatpush1.bf16.msra.mxu0 0
        %2212 = vmatprep.subr.bf16.mxu0 0
        %2213 = vmatpush1.bf16.msra.mxu0 0
        %2214 = vmatprep.subr.bf16.mxu0 0
        %2215 = vmatpush1.bf16.msra.mxu0 0
        %2216 = vmatprep.subr.bf16.mxu0 0
        %2217 = vmatpush1.bf16.msra.mxu0 0
        %2218 = vmatprep.subr.bf16.mxu0 0
        %2219 = vmatpush1.bf16.msra.mxu0 0
        %2220 = vmatprep.subr.bf16.mxu0 0
        %2221 = vmatpush1.bf16.msra.mxu0 0
        %2222 = vmatprep.subr.bf16.mxu0 0
        %2223 = vmatpush1.bf16.msra.mxu0 0
        %2224 = vmatprep.subr.bf16.mxu0 0
        %2225 = vmatpush1.bf16.msra.mxu0 0
        %2226 = vmatprep.subr.bf16.mxu0 0
        %2227 = vmatpush1.bf16.msra.mxu0 0
        %2228 = vmatprep.subr.bf16.mxu0 0
        %2229 = vmatpush1.bf16.msra.mxu0 0
        %2230 = vmatprep.subr.bf16.mxu0 0
        %2231 = vmatpush1.bf16.msra.mxu0 0
        %2232 = vmatprep.mubr.bf16.mxu0 0
        %2233 = vmatmul.mubr.bf16.gmra.mrb[0].mxu0 %v2195
        %v2234 = vpop.f32.mrb[0].mxu0
        %v2235 = vadd.f32 0.0, %v2234
        %v2236 = vpop.f32.mrb[0].mxu0
        %v2237 = vpop.f32.mrb[0].mxu0
        %v2238 = vpop.f32.mrb[0].mxu0
        %2239 = vdwg.mxu0
        %v2240 = vcombine.high %v2189, 0.0
        %v2242 = vunpack.c.l.s4 1983009808
        %v2243 = vunpack.c.0.s8 %v2242
        %v2244 = vlaneseq
        %v2245 = vshrl.u32 %v2244, 7
        %v2246 = vsub.s32 %v2243, %v2245
        %v2247 = vrot.slane %v2189, %v2246
        %v2249 = vunpack.c.l.s4 1983009808
        %v2250 = vunpack.c.0.s8 %v2249
        %v2251 = vlaneseq
        %v2252 = vshrl.u32 %v2251, 7
        %v2253 = vsub.s32 %v2250, %v2252
        %v2254 = vrot.slane %v2240, %v2253
        %v2255 = vcombine.high %v2235, 0.0
        %v2257 = vunpack.c.l.s4 1983009808
        %v2258 = vunpack.c.0.s8 %v2257
        %v2259 = vlaneseq
        %v2260 = vshrl.u32 %v2259, 7
        %v2261 = vsub.s32 %v2258, %v2260
        %v2262 = vrot.slane %v2235, %v2261
        %v2264 = vunpack.c.l.s4 1983009808
        %v2265 = vunpack.c.0.s8 %v2264
        %v2266 = vlaneseq
        %v2267 = vshrl.u32 %v2266, 7
        %v2268 = vsub.s32 %v2265, %v2267
        %v2269 = vrot.slane %v2255, %v2268
        %v2270 = vcombine.low %v2247, %v2262
        %v2271 = vcombine.high %v2247, %v2262
        %v2273 = vunpack.c.l.s4 1934713408
        %v2274 = vunpack.c.0.s8 %v2273
        %v2275 = vlaneseq
        %v2276 = vshrl.u32 %v2275, 7
        %v2277 = vsub.s32 %v2274, %v2276
        %v2278 = vrot.slane %v2270, %v2277
        %v2280 = vunpack.c.l.s4 1934713408
        %v2281 = vunpack.c.0.s8 %v2280
        %v2282 = vlaneseq
        %v2283 = vshrl.u32 %v2282, 7
        %v2284 = vsub.s32 %v2281, %v2283
        %v2285 = vrot.slane %v2271, %v2284
        %v2286 = vcombine.low %v2254, %v2269
        %v2287 = vcombine.high %v2254, %v2269
        %v2289 = vunpack.c.l.s4 1934713408
        %v2290 = vunpack.c.0.s8 %v2289
        %v2291 = vlaneseq
        %v2292 = vshrl.u32 %v2291, 7
        %v2293 = vsub.s32 %v2290, %v2292
        %v2294 = vrot.slane %v2286, %v2293
        %v2296 = vunpack.c.l.s4 1934713408
        %v2297 = vunpack.c.0.s8 %v2296
        %v2298 = vlaneseq
        %v2299 = vshrl.u32 %v2298, 7
        %v2300 = vsub.s32 %v2297, %v2299
        %v2301 = vrot.slane %v2287, %v2300
        %v2302 = vcombine.high %v2278, 0.0
        %v2303 = vcombine.high %v2285, 0.0
        %v2304 = vcombine.high %v2294, 0.0
        %v2305 = vcombine.high %v2301, 0.0
        %v2306 = vcombine.low %v2278, %v2285
        %v2308 = vunpack.c.l.s4 1983009808
        %v2309 = vunpack.c.0.s8 %v2308
        %v2310 = vlaneseq
        %v2311 = vshrl.u32 %v2310, 7
        %v2312 = vsub.s32 %v2309, %v2311
        %v2313 = vrot.slane %v2306, %v2312
        %v2314 = vcombine.low %v2302, %v2303
        %v2316 = vunpack.c.l.s4 1983009808
        %v2317 = vunpack.c.0.s8 %v2316
        %v2318 = vlaneseq
        %v2319 = vshrl.u32 %v2318, 7
        %v2320 = vsub.s32 %v2317, %v2319
        %v2321 = vrot.slane %v2314, %v2320
        %v2322 = vcombine.low %v2294, %v2301
        %v2324 = vunpack.c.l.s4 1983009808
        %v2325 = vunpack.c.0.s8 %v2324
        %v2326 = vlaneseq
        %v2327 = vshrl.u32 %v2326, 7
        %v2328 = vsub.s32 %v2325, %v2327
        %v2329 = vrot.slane %v2322, %v2328
        %v2330 = vcombine.low %v2304, %v2305
        %v2332 = vunpack.c.l.s4 1983009808
        %v2333 = vunpack.c.0.s8 %v2332
        %v2334 = vlaneseq
        %v2335 = vshrl.u32 %v2334, 7
        %v2336 = vsub.s32 %v2333, %v2335
        %v2337 = vrot.slane %v2330, %v2336
        %v2338 = vcombine.low %v2313, %v2321
        %v2340 = vunpack.c.l.s4 1934713408
        %v2341 = vunpack.c.0.s8 %v2340
        %v2342 = vlaneseq
        %v2343 = vshrl.u32 %v2342, 7
        %v2344 = vsub.s32 %v2341, %v2343
        %v2345 = vrot.slane %v2338, %v2344
        %v2346 = vcombine.low %v2329, %v2337
        %v2348 = vunpack.c.l.s4 1934713408
        %v2349 = vunpack.c.0.s8 %v2348
        %v2350 = vlaneseq
        %v2351 = vshrl.u32 %v2350, 7
        %v2352 = vsub.s32 %v2349, %v2351
        %v2353 = vrot.slane %v2346, %v2352
        %v2354 = vcombine.low %v2345, %v2353
        %v2355 = vcombine.high %v2345, %v2353
        %2357 = vrot.lane.b32.xlu0 %v2355, 16
        %v2358 = vpop.permute.xlu0 %2357
        %v2360 = vsel %vm2026, %v2354, %v2358
        %v2361 = vpack.c.bf16 %v2360, %v2360
        %v2362 = vld [vmem:[#allocation11] sm:$0xf]
        %v2363 = vld [vmem:[#allocation11 + $0x4] sm:$0xf]
        %v2364 = vld [vmem:[#allocation11 + $0x8] sm:$0xf]
        %v2365 = vld [vmem:[#allocation11 + $0xc] sm:$0xf]
        %v2370 = vunpack.c.l.b16 %v2362
        %v2371 = vunpack.c.l.b16 %v2363
        %v2372 = vunpack.c.l.b16 %v2364
        %v2373 = vunpack.c.l.b16 %v2365
        %v2374 = vpack.c.b16 %v2371, %v2370
        %v2375 = vpack.c.b16 %v2373, %v2372
        %v2379 = vsel %vm1859, %v2361, 0
        %2381 = vmatprep.subr.bf16.mxu0 0
        %2382 = vmatpush1.bf16.msra.mxu0 %v2374
        %2383 = vmatprep.subr.bf16.mxu0 0
        %2384 = vmatpush1.bf16.msra.mxu0 %v2375
        %2385 = vmatprep.subr.bf16.mxu0 0
        %2386 = vmatpush1.bf16.msra.mxu0 0
        %2387 = vmatprep.subr.bf16.mxu0 0
        %2388 = vmatpush1.bf16.msra.mxu0 0
        %2389 = vmatprep.subr.bf16.mxu0 0
        %2390 = vmatpush1.bf16.msra.mxu0 0
        %2391 = vmatprep.subr.bf16.mxu0 0
        %2392 = vmatpush1.bf16.msra.mxu0 0
        %2393 = vmatprep.subr.bf16.mxu0 0
        %2394 = vmatpush1.bf16.msra.mxu0 0
        %2395 = vmatprep.subr.bf16.mxu0 0
        %2396 = vmatpush1.bf16.msra.mxu0 0
        %2397 = vmatprep.subr.bf16.mxu0 0
        %2398 = vmatpush1.bf16.msra.mxu0 0
        %2399 = vmatprep.subr.bf16.mxu0 0
        %2400 = vmatpush1.bf16.msra.mxu0 0
        %2401 = vmatprep.subr.bf16.mxu0 0
        %2402 = vmatpush1.bf16.msra.mxu0 0
        %2403 = vmatprep.subr.bf16.mxu0 0
        %2404 = vmatpush1.bf16.msra.mxu0 0
        %2405 = vmatprep.subr.bf16.mxu0 0
        %2406 = vmatpush1.bf16.msra.mxu0 0
        %2407 = vmatprep.subr.bf16.mxu0 0
        %2408 = vmatpush1.bf16.msra.mxu0 0
        %2409 = vmatprep.subr.bf16.mxu0 0
        %2410 = vmatpush1.bf16.msra.mxu0 0
        %2411 = vmatprep.subr.bf16.mxu0 0
        %2412 = vmatpush1.bf16.msra.mxu0 0
        %2413 = vmatprep.mubr.bf16.mxu0 0
        %2414 = vmatmul.mubr.bf16.gmra.mrb[0].mxu0 %v2379
        %v2415 = vpop.f32.mrb[0].mxu0
        %v2416 = vadd.f32 %v1838, %v2415
        %v2417 = vpop.f32.mrb[0].mxu0
        %v2418 = vpop.f32.mrb[0].mxu0
        %v2419 = vpop.f32.mrb[0].mxu0
        %2420 = vdwg.mxu0
        %v2421 = vld [vmem:[%s6] sm:$0x1]
        %v2422 = vld [vmem:[#allocation12] sm:$0x1]
        %v2423 = vsel %vm1859, %v2416, 0.0
        %2424 = vadd.xlane.f32.xlu0 %v2423
        %v2425 = vpop.xlane.xlu0 %2424
        %v2426 = vmul.f32 %v2416, %v2416
        %v2427 = vsel %vm1859, %v2426, 0.0
        %2428 = vadd.xlane.f32.xlu0 %v2427
        %v2429 = vpop.xlane.xlu0 %2428
        %v2430 = vmul.f32 %v2425, 0.03125
        %v2431 = vmul.f32 %v2429, 0.03125
        %v2432 = vmul.f32 %v2430, %v2430
        %v2433 = vsub.f32 %v2431, %v2432
        %v2434 = vsub.f32 %v2416, %v2430
        %v2435 = vadd.f32 %v2433, 1e-06
        %v2436 = vrsqrt.pop %v2435
        %v2437 = vmul.f32 %v2434, %v2436
        %v2439 = vlaneseq
        %v2440 = vshrl.u32 %v2439, 7
        %v2441 = vsub.s32 0, %v2440
        %v2442 = vrot.slane %v2421, %v2441
        %v2444 = vmul.f32 %v2437, %v2442
        %v2446 = vlaneseq
        %v2447 = vshrl.u32 %v2446, 7
        %v2448 = vsub.s32 0, %v2447
        %v2449 = vrot.slane %v2422, %v2448
        %v2451 = vadd.f32 %v2444, %v2449
        %v2452 = vld [vmem:[#allocation4] sm:$0xff]
        %v2453 = vld [vmem:[#allocation4 + $0x8] sm:$0xff]
        %v2454 = vld [vmem:[#allocation5] sm:$0xff]
        %v2455 = vld [vmem:[#allocation5 + $0x8] sm:$0xff]
        %v2456 = vpack.c.bf16 %v2451, %v2451
        %v2457 = vld [vmem:[#allocation14] sm:$0xf]
        %v2458 = vld [vmem:[#allocation14 + $0x4] sm:$0xf]
        %v2459 = vld [vmem:[#allocation14 + $0x8] sm:$0xf]
        %v2460 = vld [vmem:[#allocation14 + $0xc] sm:$0xf]
        %v2465 = vunpack.c.l.b16 %v2457
        %v2466 = vunpack.c.l.b16 %v2458
        %v2467 = vunpack.c.l.b16 %v2459
        %v2468 = vunpack.c.l.b16 %v2460
        %v2469 = vpack.c.b16 %v2466, %v2465
        %v2470 = vpack.c.b16 %v2468, %v2467
        %v2474 = vsel %vm1859, %v2456, 0
        %2476 = vmatprep.subr.bf16.mxu0 0
        %2477 = vmatpush1.bf16.msra.mxu0 %v2469
        %2478 = vmatprep.subr.bf16.mxu0 0
        %2479 = vmatpush1.bf16.msra.mxu0 %v2470
        %2480 = vmatprep.subr.bf16.mxu0 0
        %2481 = vmatpush1.bf16.msra.mxu0 0
        %2482 = vmatprep.subr.bf16.mxu0 0
        %2483 = vmatpush1.bf16.msra.mxu0 0
        %2484 = vmatprep.subr.bf16.mxu0 0
        %2485 = vmatpush1.bf16.msra.mxu0 0
        %2486 = vmatprep.subr.bf16.mxu0 0
        %2487 = vmatpush1.bf16.msra.mxu0 0
        %2488 = vmatprep.subr.bf16.mxu0 0
        %2489 = vmatpush1.bf16.msra.mxu0 0
        %2490 = vmatprep.subr.bf16.mxu0 0
        %2491 = vmatpush1.bf16.msra.mxu0 0
        %2492 = vmatprep.subr.bf16.mxu0 0
        %2493 = vmatpush1.bf16.msra.mxu0 0
        %2494 = vmatprep.subr.bf16.mxu0 0
        %2495 = vmatpush1.bf16.msra.mxu0 0
        %2496 = vmatprep.subr.bf16.mxu0 0
        %2497 = vmatpush1.bf16.msra.mxu0 0
        %2498 = vmatprep.subr.bf16.mxu0 0
        %2499 = vmatpush1.bf16.msra.mxu0 0
        %2500 = vmatprep.subr.bf16.mxu0 0
        %2501 = vmatpush1.bf16.msra.mxu0 0
        %2502 = vmatprep.subr.bf16.mxu0 0
        %2503 = vmatpush1.bf16.msra.mxu0 0
        %2504 = vmatprep.subr.bf16.mxu0 0
        %2505 = vmatpush1.bf16.msra.mxu0 0
        %2506 = vmatprep.subr.bf16.mxu0 0
        %2507 = vmatpush1.bf16.msra.mxu0 0
        %2508 = vmatprep.mubr.bf16.mxu0 0
        %2509 = vmatmul.mubr.bf16.gmra.mrb[0].mxu0 %v2474
        %v2510 = vpop.f32.mrb[0].mxu0
        %v2511 = vadd.f32 0.0, %v2510
        %v2512 = vpop.f32.mrb[0].mxu0
        %v2513 = vpop.f32.mrb[0].mxu0
        %v2514 = vpop.f32.mrb[0].mxu0
        %2515 = vdwg.mxu0
        %v2516 = vmul.f32 %v2511, 0.25
        %2518 = vrot.lane.b32.xlu0 %v2516, 112
        %v2519 = vpop.permute.xlu0 %2518
        %v2521 = vcombine.high %v2516, 0.0
        %v2523 = vunpack.c.l.s4 1983009808
        %v2524 = vunpack.c.0.s8 %v2523
        %v2525 = vlaneseq
        %v2526 = vshrl.u32 %v2525, 7
        %v2527 = vsub.s32 %v2524, %v2526
        %v2528 = vrot.slane %v2516, %v2527
        %v2530 = vunpack.c.l.s4 1983009808
        %v2531 = vunpack.c.0.s8 %v2530
        %v2532 = vlaneseq
        %v2533 = vshrl.u32 %v2532, 7
        %v2534 = vsub.s32 %v2531, %v2533
        %v2535 = vrot.slane %v2521, %v2534
        %v2536 = vcombine.high %v2519, 0.0
        %v2538 = vunpack.c.l.s4 1983009808
        %v2539 = vunpack.c.0.s8 %v2538
        %v2540 = vlaneseq
        %v2541 = vshrl.u32 %v2540, 7
        %v2542 = vsub.s32 %v2539, %v2541
        %v2543 = vrot.slane %v2519, %v2542
        %v2545 = vunpack.c.l.s4 1983009808
        %v2546 = vunpack.c.0.s8 %v2545
        %v2547 = vlaneseq
        %v2548 = vshrl.u32 %v2547, 7
        %v2549 = vsub.s32 %v2546, %v2548
        %v2550 = vrot.slane %v2536, %v2549
        %v2551 = vcombine.low %v2528, %v2543
        %v2552 = vcombine.high %v2528, %v2543
        %v2554 = vunpack.c.l.s4 1934713408
        %v2555 = vunpack.c.0.s8 %v2554
        %v2556 = vlaneseq
        %v2557 = vshrl.u32 %v2556, 7
        %v2558 = vsub.s32 %v2555, %v2557
        %v2559 = vrot.slane %v2551, %v2558
        %v2561 = vunpack.c.l.s4 1934713408
        %v2562 = vunpack.c.0.s8 %v2561
        %v2563 = vlaneseq
        %v2564 = vshrl.u32 %v2563, 7
        %v2565 = vsub.s32 %v2562, %v2564
        %v2566 = vrot.slane %v2552, %v2565
        %v2567 = vcombine.low %v2535, %v2550
        %v2568 = vcombine.high %v2535, %v2550
        %v2570 = vunpack.c.l.s4 1934713408
        %v2571 = vunpack.c.0.s8 %v2570
        %v2572 = vlaneseq
        %v2573 = vshrl.u32 %v2572, 7
        %v2574 = vsub.s32 %v2571, %v2573
        %v2575 = vrot.slane %v2567, %v2574
        %v2577 = vunpack.c.l.s4 1934713408
        %v2578 = vunpack.c.0.s8 %v2577
        %v2579 = vlaneseq
        %v2580 = vshrl.u32 %v2579, 7
        %v2581 = vsub.s32 %v2578, %v2580
        %v2582 = vrot.slane %v2568, %v2581
        %v2583 = vcombine.high %v2559, 0.0
        %v2584 = vcombine.high %v2566, 0.0
        %v2585 = vcombine.high %v2575, 0.0
        %v2586 = vcombine.high %v2582, 0.0
        %v2587 = vcombine.low %v2559, %v2566
        %v2589 = vunpack.c.l.s4 1983009808
        %v2590 = vunpack.c.0.s8 %v2589
        %v2591 = vlaneseq
        %v2592 = vshrl.u32 %v2591, 7
        %v2593 = vsub.s32 %v2590, %v2592
        %v2594 = vrot.slane %v2587, %v2593
        %v2595 = vcombine.low %v2583, %v2584
        %v2597 = vunpack.c.l.s4 1983009808
        %v2598 = vunpack.c.0.s8 %v2597
        %v2599 = vlaneseq
        %v2600 = vshrl.u32 %v2599, 7
        %v2601 = vsub.s32 %v2598, %v2600
        %v2602 = vrot.slane %v2595, %v2601
        %v2603 = vcombine.low %v2575, %v2582
        %v2605 = vunpack.c.l.s4 1983009808
        %v2606 = vunpack.c.0.s8 %v2605
        %v2607 = vlaneseq
        %v2608 = vshrl.u32 %v2607, 7
        %v2609 = vsub.s32 %v2606, %v2608
        %v2610 = vrot.slane %v2603, %v2609
        %v2611 = vcombine.low %v2585, %v2586
        %v2613 = vunpack.c.l.s4 1983009808
        %v2614 = vunpack.c.0.s8 %v2613
        %v2615 = vlaneseq
        %v2616 = vshrl.u32 %v2615, 7
        %v2617 = vsub.s32 %v2614, %v2616
        %v2618 = vrot.slane %v2611, %v2617
        %v2619 = vcombine.low %v2594, %v2602
        %v2621 = vunpack.c.l.s4 1934713408
        %v2622 = vunpack.c.0.s8 %v2621
        %v2623 = vlaneseq
        %v2624 = vshrl.u32 %v2623, 7
        %v2625 = vsub.s32 %v2622, %v2624
        %v2626 = vrot.slane %v2619, %v2625
        %v2627 = vcombine.low %v2610, %v2618
        %v2629 = vunpack.c.l.s4 1934713408
        %v2630 = vunpack.c.0.s8 %v2629
        %v2631 = vlaneseq
        %v2632 = vshrl.u32 %v2631, 7
        %v2633 = vsub.s32 %v2630, %v2632
        %v2634 = vrot.slane %v2627, %v2633
        %v2635 = vcombine.low %v2626, %v2634
        %v2636 = vcombine.high %v2626, %v2634
        %v2637 = vpack.c.bf16 %v2635, %v2635
        %v2638 = vpack.c.bf16 %v2636, %v2636
        %v2640 = vsel %vm2026, %v2637, 0
        %v2643 = vsel %vm2026, %v2452, 0
        %2645 = vmatprep.subr.bf16.mxu0 0
        %2646 = vmatpush1.bf16.xpose.msra.mxu0 %v2643
        %2647 = vmatprep.subr.bf16.mxu0 0
        %2648 = vmatpush1.bf16.xpose.msra.mxu0 0
        %2649 = vmatprep.subr.bf16.mxu0 0
        %2650 = vmatpush1.bf16.xpose.msra.mxu0 0
        %2651 = vmatprep.subr.bf16.mxu0 0
        %2652 = vmatpush1.bf16.xpose.msra.mxu0 0
        %2653 = vmatprep.subr.bf16.mxu0 0
        %2654 = vmatpush1.bf16.xpose.msra.mxu0 0
        %2655 = vmatprep.subr.bf16.mxu0 0
        %2656 = vmatpush1.bf16.xpose.msra.mxu0 0
        %2657 = vmatprep.subr.bf16.mxu0 0
        %2658 = vmatpush1.bf16.xpose.msra.mxu0 0
        %2659 = vmatprep.subr.bf16.mxu0 0
        %2660 = vmatpush1.bf16.xpose.msra.mxu0 0
        %2661 = vmatprep.subr.bf16.mxu0 0
        %2662 = vmatpush1.bf16.xpose.msra.mxu0 0
        %2663 = vmatprep.subr.bf16.mxu0 0
        %2664 = vmatpush1.bf16.xpose.msra.mxu0 0
        %2665 = vmatprep.subr.bf16.mxu0 0
        %2666 = vmatpush1.bf16.xpose.msra.mxu0 0
        %2667 = vmatprep.subr.bf16.mxu0 0
        %2668 = vmatpush1.bf16.xpose.msra.mxu0 0
        %2669 = vmatprep.subr.bf16.mxu0 0
        %2670 = vmatpush1.bf16.xpose.msra.mxu0 0
        %2671 = vmatprep.subr.bf16.mxu0 0
        %2672 = vmatpush1.bf16.xpose.msra.mxu0 0
        %2673 = vmatprep.subr.bf16.mxu0 0
        %2674 = vmatpush1.bf16.xpose.msra.mxu0 0
        %2675 = vmatprep.subr.bf16.mxu0 0
        %2676 = vmatpush1.bf16.xpose.msra.mxu0 0
        %2677 = vmatprep.mubr.bf16.mxu0 0
        %2678 = vmatmul.mubr.bf16.gmra.mrb[0].mxu0 %v2640
        %v2679 = vpop.f32.mrb[0].mxu0
        %v2680 = vadd.f32 0.0, %v2679
        %v2681 = vpop.f32.mrb[0].mxu0
        %v2682 = vpop.f32.mrb[0].mxu0
        %v2683 = vpop.f32.mrb[0].mxu0
        %2684 = vdwg.mxu0
        %v2686 = vsel %vm2026, %v2638, 0
        %v2689 = vsel %vm2026, %v2453, 0
        %2691 = vmatprep.subr.bf16.mxu0 0
        %2692 = vmatpush1.bf16.xpose.msra.mxu0 %v2689
        %2693 = vmatprep.subr.bf16.mxu0 0
        %2694 = vmatpush1.bf16.xpose.msra.mxu0 0
        %2695 = vmatprep.subr.bf16.mxu0 0
        %2696 = vmatpush1.bf16.xpose.msra.mxu0 0
        %2697 = vmatprep.subr.bf16.mxu0 0
        %2698 = vmatpush1.bf16.xpose.msra.mxu0 0
        %2699 = vmatprep.subr.bf16.mxu0 0
        %2700 = vmatpush1.bf16.xpose.msra.mxu0 0
        %2701 = vmatprep.subr.bf16.mxu0 0
        %2702 = vmatpush1.bf16.xpose.msra.mxu0 0
        %2703 = vmatprep.subr.bf16.mxu0 0
        %2704 = vmatpush1.bf16.xpose.msra.mxu0 0
        %2705 = vmatprep.subr.bf16.mxu0 0
        %2706 = vmatpush1.bf16.xpose.msra.mxu0 0
        %2707 = vmatprep.subr.bf16.mxu0 0
        %2708 = vmatpush1.bf16.xpose.msra.mxu0 0
        %2709 = vmatprep.subr.bf16.mxu0 0
        %2710 = vmatpush1.bf16.xpose.msra.mxu0 0
        %2711 = vmatprep.subr.bf16.mxu0 0
        %2712 = vmatpush1.bf16.xpose.msra.mxu0 0
        %2713 = vmatprep.subr.bf16.mxu0 0
        %2714 = vmatpush1.bf16.xpose.msra.mxu0 0
        %2715 = vmatprep.subr.bf16.mxu0 0
        %2716 = vmatpush1.bf16.xpose.msra.mxu0 0
        %2717 = vmatprep.subr.bf16.mxu0 0
        %2718 = vmatpush1.bf16.xpose.msra.mxu0 0
        %2719 = vmatprep.subr.bf16.mxu0 0
        %2720 = vmatpush1.bf16.xpose.msra.mxu0 0
        %2721 = vmatprep.subr.bf16.mxu0 0
        %2722 = vmatpush1.bf16.xpose.msra.mxu0 0
        %2723 = vmatprep.mubr.bf16.mxu0 0
        %2724 = vmatmul.mubr.bf16.gmra.mrb[0].mxu0 %v2686
        %v2725 = vpop.f32.mrb[0].mxu0
        %v2726 = vadd.f32 0.0, %v2725
        %v2727 = vpop.f32.mrb[0].mxu0
        %v2728 = vpop.f32.mrb[0].mxu0
        %v2729 = vpop.f32.mrb[0].mxu0
        %2730 = vdwg.mxu0
        %v2731 = vsel %vm2026, %v2680, -inf
        %2732 = vmax.xlane.f32.xlu0 %v2731
        %v2733 = vpop.xlane.xlu0 %2732
        %v2734 = vsel %vm2026, %v2726, -inf
        %2735 = vmax.xlane.f32.xlu0 %v2734
        %v2736 = vpop.xlane.xlu0 %2735
        %v2737 = vsub.f32 %v2680, %v2733
        %v2738 = vsub.f32 %v2726, %v2736
        %v2739 = vmul.f32 %v2737, 1.442695
        %v2740 = vpow.pop %v2739
        %v2741 = vmul.f32 %v2738, 1.442695
        %v2742 = vpow.pop %v2741
        %v2743 = vsel %vm2026, %v2740, 0.0
        %2744 = vadd.xlane.f32.xlu0 %v2743
        %v2745 = vpop.xlane.xlu0 %2744
        %v2746 = vsel %vm2026, %v2742, 0.0
        %2747 = vadd.xlane.f32.xlu0 %v2746
        %v2748 = vpop.xlane.xlu0 %2747
        %v2749 = vrcp.pop %v2745
        %v2750 = vrcp.pop %v2748
        %v2751 = vmul.f32 %v2740, %v2749
        %v2752 = vmul.f32 %v2742, %v2750
        %v2753 = vpack.c.bf16 %v2751, %v2751
        %v2754 = vpack.c.bf16 %v2752, %v2752
        %vm2755 = vcmask 125952
        %2756 = vst.msk [vmem:[%s842] sm:$0xf] %vm2755, %v2753
        %2757 = vst.msk [vmem:[%s842 + $0x4] sm:$0xf] %vm2755, %v2754
        %v2759 = vsel %vm2026, %v2753, 0
        %2761 = vmatprep.subr.bf16.mxu0 0
        %2762 = vmatpush1.bf16.msra.mxu0 %v2454
        %2763 = vmatprep.subr.bf16.mxu0 0
        %2764 = vmatpush1.bf16.msra.mxu0 0
        %2765 = vmatprep.subr.bf16.mxu0 0
        %2766 = vmatpush1.bf16.msra.mxu0 0
        %2767 = vmatprep.subr.bf16.mxu0 0
        %2768 = vmatpush1.bf16.msra.mxu0 0
        %2769 = vmatprep.subr.bf16.mxu0 0
        %2770 = vmatpush1.bf16.msra.mxu0 0
        %2771 = vmatprep.subr.bf16.mxu0 0
        %2772 = vmatpush1.bf16.msra.mxu0 0
        %2773 = vmatprep.subr.bf16.mxu0 0
        %2774 = vmatpush1.bf16.msra.mxu0 0
        %2775 = vmatprep.subr.bf16.mxu0 0
        %2776 = vmatpush1.bf16.msra.mxu0 0
        %2777 = vmatprep.subr.bf16.mxu0 0
        %2778 = vmatpush1.bf16.msra.mxu0 0
        %2779 = vmatprep.subr.bf16.mxu0 0
        %2780 = vmatpush1.bf16.msra.mxu0 0
        %2781 = vmatprep.subr.bf16.mxu0 0
        %2782 = vmatpush1.bf16.msra.mxu0 0
        %2783 = vmatprep.subr.bf16.mxu0 0
        %2784 = vmatpush1.bf16.msra.mxu0 0
        %2785 = vmatprep.subr.bf16.mxu0 0
        %2786 = vmatpush1.bf16.msra.mxu0 0
        %2787 = vmatprep.subr.bf16.mxu0 0
        %2788 = vmatpush1.bf16.msra.mxu0 0
        %2789 = vmatprep.subr.bf16.mxu0 0
        %2790 = vmatpush1.bf16.msra.mxu0 0
        %2791 = vmatprep.subr.bf16.mxu0 0
        %2792 = vmatpush1.bf16.msra.mxu0 0
        %2793 = vmatprep.mubr.bf16.mxu0 0
        %2794 = vmatmul.mubr.bf16.gmra.mrb[0].mxu0 %v2759
        %v2795 = vpop.f32.mrb[0].mxu0
        %v2796 = vadd.f32 0.0, %v2795
        %v2797 = vpop.f32.mrb[0].mxu0
        %v2798 = vpop.f32.mrb[0].mxu0
        %v2799 = vpop.f32.mrb[0].mxu0
        %2800 = vdwg.mxu0
        %v2802 = vsel %vm2026, %v2754, 0
        %2804 = vmatprep.subr.bf16.mxu0 0
        %2805 = vmatpush1.bf16.msra.mxu0 %v2455
        %2806 = vmatprep.subr.bf16.mxu0 0
        %2807 = vmatpush1.bf16.msra.mxu0 0
        %2808 = vmatprep.subr.bf16.mxu0 0
        %2809 = vmatpush1.bf16.msra.mxu0 0
        %2810 = vmatprep.subr.bf16.mxu0 0
        %2811 = vmatpush1.bf16.msra.mxu0 0
        %2812 = vmatprep.subr.bf16.mxu0 0
        %2813 = vmatpush1.bf16.msra.mxu0 0
        %2814 = vmatprep.subr.bf16.mxu0 0
        %2815 = vmatpush1.bf16.msra.mxu0 0
        %2816 = vmatprep.subr.bf16.mxu0 0
        %2817 = vmatpush1.bf16.msra.mxu0 0
        %2818 = vmatprep.subr.bf16.mxu0 0
        %2819 = vmatpush1.bf16.msra.mxu0 0
        %2820 = vmatprep.subr.bf16.mxu0 0
        %2821 = vmatpush1.bf16.msra.mxu0 0
        %2822 = vmatprep.subr.bf16.mxu0 0
        %2823 = vmatpush1.bf16.msra.mxu0 0
        %2824 = vmatprep.subr.bf16.mxu0 0
        %2825 = vmatpush1.bf16.msra.mxu0 0
        %2826 = vmatprep.subr.bf16.mxu0 0
        %2827 = vmatpush1.bf16.msra.mxu0 0
        %2828 = vmatprep.subr.bf16.mxu0 0
        %2829 = vmatpush1.bf16.msra.mxu0 0
        %2830 = vmatprep.subr.bf16.mxu0 0
        %2831 = vmatpush1.bf16.msra.mxu0 0
        %2832 = vmatprep.subr.bf16.mxu0 0
        %2833 = vmatpush1.bf16.msra.mxu0 0
        %2834 = vmatprep.subr.bf16.mxu0 0
        %2835 = vmatpush1.bf16.msra.mxu0 0
        %2836 = vmatprep.mubr.bf16.mxu0 0
        %2837 = vmatmul.mubr.bf16.gmra.mrb[0].mxu0 %v2802
        %v2838 = vpop.f32.mrb[0].mxu0
        %v2839 = vadd.f32 0.0, %v2838
        %v2840 = vpop.f32.mrb[0].mxu0
        %v2841 = vpop.f32.mrb[0].mxu0
        %v2842 = vpop.f32.mrb[0].mxu0
        %2843 = vdwg.mxu0
        %v2844 = vcombine.high %v2796, 0.0
        %v2846 = vunpack.c.l.s4 1983009808
        %v2847 = vunpack.c.0.s8 %v2846
        %v2848 = vlaneseq
        %v2849 = vshrl.u32 %v2848, 7
        %v2850 = vsub.s32 %v2847, %v2849
        %v2851 = vrot.slane %v2796, %v2850
        %v2853 = vunpack.c.l.s4 1983009808
        %v2854 = vunpack.c.0.s8 %v2853
        %v2855 = vlaneseq
        %v2856 = vshrl.u32 %v2855, 7
        %v2857 = vsub.s32 %v2854, %v2856
        %v2858 = vrot.slane %v2844, %v2857
        %v2859 = vcombine.high %v2839, 0.0
        %v2861 = vunpack.c.l.s4 1983009808
        %v2862 = vunpack.c.0.s8 %v2861
        %v2863 = vlaneseq
        %v2864 = vshrl.u32 %v2863, 7
        %v2865 = vsub.s32 %v2862, %v2864
        %v2866 = vrot.slane %v2839, %v2865
        %v2868 = vunpack.c.l.s4 1983009808
        %v2869 = vunpack.c.0.s8 %v2868
        %v2870 = vlaneseq
        %v2871 = vshrl.u32 %v2870, 7
        %v2872 = vsub.s32 %v2869, %v2871
        %v2873 = vrot.slane %v2859, %v2872
        %v2874 = vcombine.low %v2851, %v2866
        %v2875 = vcombine.high %v2851, %v2866
        %v2877 = vunpack.c.l.s4 1934713408
        %v2878 = vunpack.c.0.s8 %v2877
        %v2879 = vlaneseq
        %v2880 = vshrl.u32 %v2879, 7
        %v2881 = vsub.s32 %v2878, %v2880
        %v2882 = vrot.slane %v2874, %v2881
        %v2884 = vunpack.c.l.s4 1934713408
        %v2885 = vunpack.c.0.s8 %v2884
        %v2886 = vlaneseq
        %v2887 = vshrl.u32 %v2886, 7
        %v2888 = vsub.s32 %v2885, %v2887
        %v2889 = vrot.slane %v2875, %v2888
        %v2890 = vcombine.low %v2858, %v2873
        %v2891 = vcombine.high %v2858, %v2873
        %v2893 = vunpack.c.l.s4 1934713408
        %v2894 = vunpack.c.0.s8 %v2893
        %v2895 = vlaneseq
        %v2896 = vshrl.u32 %v2895, 7
        %v2897 = vsub.s32 %v2894, %v2896
        %v2898 = vrot.slane %v2890, %v2897
        %v2900 = vunpack.c.l.s4 1934713408
        %v2901 = vunpack.c.0.s8 %v2900
        %v2902 = vlaneseq
        %v2903 = vshrl.u32 %v2902, 7
        %v2904 = vsub.s32 %v2901, %v2903
        %v2905 = vrot.slane %v2891, %v2904
        %v2906 = vcombine.high %v2882, 0.0
        %v2907 = vcombine.high %v2889, 0.0
        %v2908 = vcombine.high %v2898, 0.0
        %v2909 = vcombine.high %v2905, 0.0
        %v2910 = vcombine.low %v2882, %v2889
        %v2912 = vunpack.c.l.s4 1983009808
        %v2913 = vunpack.c.0.s8 %v2912
        %v2914 = vlaneseq
        %v2915 = vshrl.u32 %v2914, 7
        %v2916 = vsub.s32 %v2913, %v2915
        %v2917 = vrot.slane %v2910, %v2916
        %v2918 = vcombine.low %v2906, %v2907
        %v2920 = vunpack.c.l.s4 1983009808
        %v2921 = vunpack.c.0.s8 %v2920
        %v2922 = vlaneseq
        %v2923 = vshrl.u32 %v2922, 7
        %v2924 = vsub.s32 %v2921, %v2923
        %v2925 = vrot.slane %v2918, %v2924
        %v2926 = vcombine.low %v2898, %v2905
        %v2928 = vunpack.c.l.s4 1983009808
        %v2929 = vunpack.c.0.s8 %v2928
        %v2930 = vlaneseq
        %v2931 = vshrl.u32 %v2930, 7
        %v2932 = vsub.s32 %v2929, %v2931
        %v2933 = vrot.slane %v2926, %v2932
        %v2934 = vcombine.low %v2908, %v2909
        %v2936 = vunpack.c.l.s4 1983009808
        %v2937 = vunpack.c.0.s8 %v2936
        %v2938 = vlaneseq
        %v2939 = vshrl.u32 %v2938, 7
        %v2940 = vsub.s32 %v2937, %v2939
        %v2941 = vrot.slane %v2934, %v2940
        %v2942 = vcombine.low %v2917, %v2925
        %v2944 = vunpack.c.l.s4 1934713408
        %v2945 = vunpack.c.0.s8 %v2944
        %v2946 = vlaneseq
        %v2947 = vshrl.u32 %v2946, 7
        %v2948 = vsub.s32 %v2945, %v2947
        %v2949 = vrot.slane %v2942, %v2948
        %v2950 = vcombine.low %v2933, %v2941
        %v2952 = vunpack.c.l.s4 1934713408
        %v2953 = vunpack.c.0.s8 %v2952
        %v2954 = vlaneseq
        %v2955 = vshrl.u32 %v2954, 7
        %v2956 = vsub.s32 %v2953, %v2955
        %v2957 = vrot.slane %v2950, %v2956
        %v2958 = vcombine.low %v2949, %v2957
        %v2959 = vcombine.high %v2949, %v2957
        %2961 = vrot.lane.b32.xlu0 %v2959, 16
        %v2962 = vpop.permute.xlu0 %2961
        %v2964 = vsel %vm2026, %v2958, %v2962
        %v2965 = vpack.c.bf16 %v2964, %v2964
        %v2966 = vld [vmem:[#allocation17] sm:$0xf]
        %v2967 = vld [vmem:[#allocation17 + $0x4] sm:$0xf]
        %v2968 = vld [vmem:[#allocation17 + $0x8] sm:$0xf]
        %v2969 = vld [vmem:[#allocation17 + $0xc] sm:$0xf]
        %v2974 = vunpack.c.l.b16 %v2966
        %v2975 = vunpack.c.l.b16 %v2967
        %v2976 = vunpack.c.l.b16 %v2968
        %v2977 = vunpack.c.l.b16 %v2969
        %v2978 = vpack.c.b16 %v2975, %v2974
        %v2979 = vpack.c.b16 %v2977, %v2976
        %v2983 = vsel %vm1859, %v2965, 0
        %2985 = vmatprep.subr.bf16.mxu0 0
        %2986 = vmatpush1.bf16.msra.mxu0 %v2978
        %2987 = vmatprep.subr.bf16.mxu0 0
        %2988 = vmatpush1.bf16.msra.mxu0 %v2979
        %2989 = vmatprep.subr.bf16.mxu0 0
        %2990 = vmatpush1.bf16.msra.mxu0 0
        %2991 = vmatprep.subr.bf16.mxu0 0
        %2992 = vmatpush1.bf16.msra.mxu0 0
        %2993 = vmatprep.subr.bf16.mxu0 0
        %2994 = vmatpush1.bf16.msra.mxu0 0
        %2995 = vmatprep.subr.bf16.mxu0 0
        %2996 = vmatpush1.bf16.msra.mxu0 0
        %2997 = vmatprep.subr.bf16.mxu0 0
        %2998 = vmatpush1.bf16.msra.mxu0 0
        %2999 = vmatprep.subr.bf16.mxu0 0
        %3000 = vmatpush1.bf16.msra.mxu0 0
        %3001 = vmatprep.subr.bf16.mxu0 0
        %3002 = vmatpush1.bf16.msra.mxu0 0
        %3003 = vmatprep.subr.bf16.mxu0 0
        %3004 = vmatpush1.bf16.msra.mxu0 0
        %3005 = vmatprep.subr.bf16.mxu0 0
        %3006 = vmatpush1.bf16.msra.mxu0 0
        %3007 = vmatprep.subr.bf16.mxu0 0
        %3008 = vmatpush1.bf16.msra.mxu0 0
        %3009 = vmatprep.subr.bf16.mxu0 0
        %3010 = vmatpush1.bf16.msra.mxu0 0
        %3011 = vmatprep.subr.bf16.mxu0 0
        %3012 = vmatpush1.bf16.msra.mxu0 0
        %3013 = vmatprep.subr.bf16.mxu0 0
        %3014 = vmatpush1.bf16.msra.mxu0 0
        %3015 = vmatprep.subr.bf16.mxu0 0
        %3016 = vmatpush1.bf16.msra.mxu0 0
        %3017 = vmatprep.mubr.bf16.mxu0 0
        %3018 = vmatmul.mubr.bf16.gmra.mrb[0].mxu0 %v2983
        %v3019 = vpop.f32.mrb[0].mxu0
        %v3020 = vadd.f32 %v2451, %v3019
        %v3021 = vpop.f32.mrb[0].mxu0
        %v3022 = vpop.f32.mrb[0].mxu0
        %v3023 = vpop.f32.mrb[0].mxu0
        %3024 = vdwg.mxu0
        %v3025 = vld [vmem:[#allocation18] sm:$0x1]
        %v3026 = vld [vmem:[#allocation20] sm:$0x1]
        %v3027 = vsel %vm1859, %v3020, 0.0
        %3028 = vadd.xlane.f32.xlu0 %v3027
        %v3029 = vpop.xlane.xlu0 %3028
        %v3030 = vmul.f32 %v3020, %v3020
        %v3031 = vsel %vm1859, %v3030, 0.0
        %3032 = vadd.xlane.f32.xlu0 %v3031
        %v3033 = vpop.xlane.xlu0 %3032
        %v3034 = vmul.f32 %v3029, 0.03125
        %v3035 = vmul.f32 %v3033, 0.03125
        %v3036 = vmul.f32 %v3034, %v3034
        %v3037 = vsub.f32 %v3035, %v3036
        %v3038 = vsub.f32 %v3020, %v3034
        %v3039 = vadd.f32 %v3037, 1e-06
        %v3040 = vrsqrt.pop %v3039
        %v3041 = vmul.f32 %v3038, %v3040
        %v3043 = vlaneseq
        %v3044 = vshrl.u32 %v3043, 7
        %v3045 = vsub.s32 0, %v3044
        %v3046 = vrot.slane %v3025, %v3045
        %v3048 = vmul.f32 %v3041, %v3046
        %v3050 = vlaneseq
        %v3051 = vshrl.u32 %v3050, 7
        %v3052 = vsub.s32 0, %v3051
        %v3053 = vrot.slane %v3026, %v3052
        %v3055 = vadd.f32 %v3048, %v3053
        %v3056 = vpack.c.bf16 %v3055, %v3055
        %v3057 = vld [vmem:[%s14] sm:$0xf]
        %v3058 = vld [vmem:[%s14 + $0x4] sm:$0xf]
        %v3059 = vld [vmem:[%s14 + $0x8] sm:$0xf]
        %v3060 = vld [vmem:[%s14 + $0xc] sm:$0xf]
        %v3061 = vld [vmem:[%s15] sm:$0x1]
        %v3063 = vlaneseq
        %v3064 = vshrl.u32 %v3063, 7
        %v3065 = vsub.s32 0, %v3064
        %v3066 = vrot.slane %v3061, %v3065
        %v3072 = vunpack.c.l.b16 %v3057
        %v3073 = vunpack.c.l.b16 %v3058
        %v3074 = vunpack.c.l.b16 %v3059
        %v3075 = vunpack.c.l.b16 %v3060
        %v3076 = vpack.c.b16 %v3073, %v3072
        %v3077 = vpack.c.b16 %v3075, %v3074
        %v3081 = vsel %vm1859, %v3056, 0
        %3083 = vmatprep.subr.bf16.mxu0 0
        %3084 = vmatpush1.bf16.msra.mxu0 %v3076
        %3085 = vmatprep.subr.bf16.mxu0 0
        %3086 = vmatpush1.bf16.msra.mxu0 %v3077
        %3087 = vmatprep.subr.bf16.mxu0 0
        %3088 = vmatpush1.bf16.msra.mxu0 0
        %3089 = vmatprep.subr.bf16.mxu0 0
        %3090 = vmatpush1.bf16.msra.mxu0 0
        %3091 = vmatprep.subr.bf16.mxu0 0
        %3092 = vmatpush1.bf16.msra.mxu0 0
        %3093 = vmatprep.subr.bf16.mxu0 0
        %3094 = vmatpush1.bf16.msra.mxu0 0
        %3095 = vmatprep.subr.bf16.mxu0 0
        %3096 = vmatpush1.bf16.msra.mxu0 0
        %3097 = vmatprep.subr.bf16.mxu0 0
        %3098 = vmatpush1.bf16.msra.mxu0 0
        %3099 = vmatprep.subr.bf16.mxu0 0
        %3100 = vmatpush1.bf16.msra.mxu0 0
        %3101 = vmatprep.subr.bf16.mxu0 0
        %3102 = vmatpush1.bf16.msra.mxu0 0
        %3103 = vmatprep.subr.bf16.mxu0 0
        %3104 = vmatpush1.bf16.msra.mxu0 0
        %3105 = vmatprep.subr.bf16.mxu0 0
        %3106 = vmatpush1.bf16.msra.mxu0 0
        %3107 = vmatprep.subr.bf16.mxu0 0
        %3108 = vmatpush1.bf16.msra.mxu0 0
        %3109 = vmatprep.subr.bf16.mxu0 0
        %3110 = vmatpush1.bf16.msra.mxu0 0
        %3111 = vmatprep.subr.bf16.mxu0 0
        %3112 = vmatpush1.bf16.msra.mxu0 0
        %3113 = vmatprep.subr.bf16.mxu0 0
        %3114 = vmatpush1.bf16.msra.mxu0 0
        %3115 = vmatprep.mubr.bf16.mxu0 0
        %3116 = vmatmul.mubr.bf16.gmra.mrb[0].mxu0 %v3081
        %v3117 = vpop.f32.mrb[0].mxu0
        %v3118 = vadd.f32 %v3066, %v3117
        %v3119 = vpop.f32.mrb[0].mxu0
        %v3120 = vpop.f32.mrb[0].mxu0
        %v3121 = vpop.f32.mrb[0].mxu0
        %3122 = vdwg.mxu0
        %v3123 = vmax.f32 %v3118, 0.0
        %v3124 = vpack.c.bf16 %v3123, %v3123
        %v3125 = vld [vmem:[%s16] sm:$0xf]
        %v3126 = vld [vmem:[%s16 + $0x4] sm:$0xf]
        %v3127 = vld [vmem:[%s16 + $0x8] sm:$0xf]
        %v3128 = vld [vmem:[%s16 + $0xc] sm:$0xf]
        %v3129 = vld [vmem:[%s16 + $0x10] sm:$0xf]
        %v3130 = vld [vmem:[%s16 + $0x14] sm:$0xf]
        %v3131 = vld [vmem:[%s16 + $0x18] sm:$0xf]
        %v3132 = vld [vmem:[%s16 + $0x1c] sm:$0xf]
        %v3133 = vld [vmem:[%s17] sm:$0x1]
        %v3135 = vlaneseq
        %v3136 = vshrl.u32 %v3135, 7
        %v3137 = vsub.s32 0, %v3136
        %v3138 = vrot.slane %v3133, %v3137
        %v3148 = vunpack.c.l.b16 %v3125
        %v3149 = vunpack.c.l.b16 %v3126
        %v3150 = vunpack.c.l.b16 %v3127
        %v3151 = vunpack.c.l.b16 %v3128
        %v3152 = vunpack.c.l.b16 %v3129
        %v3153 = vunpack.c.l.b16 %v3130
        %v3154 = vunpack.c.l.b16 %v3131
        %v3155 = vunpack.c.l.b16 %v3132
        %v3156 = vpack.c.b16 %v3149, %v3148
        %v3157 = vpack.c.b16 %v3151, %v3150
        %v3158 = vpack.c.b16 %v3153, %v3152
        %v3159 = vpack.c.b16 %v3155, %v3154
        %vm3164 = vcmask 523264
        %v3166 = vsel %vm3164, %v3124, 0
        %3168 = vmatprep.subr.bf16.mxu0 0
        %3169 = vmatpush1.bf16.msra.mxu0 %v3156
        %3170 = vmatprep.subr.bf16.mxu0 0
        %3171 = vmatpush1.bf16.msra.mxu0 %v3157
        %3172 = vmatprep.subr.bf16.mxu0 0
        %3173 = vmatpush1.bf16.msra.mxu0 %v3158
        %3174 = vmatprep.subr.bf16.mxu0 0
        %3175 = vmatpush1.bf16.msra.mxu0 %v3159
        %3176 = vmatprep.subr.bf16.mxu0 0
        %3177 = vmatpush1.bf16.msra.mxu0 0
        %3178 = vmatprep.subr.bf16.mxu0 0
        %3179 = vmatpush1.bf16.msra.mxu0 0
        %3180 = vmatprep.subr.bf16.mxu0 0
        %3181 = vmatpush1.bf16.msra.mxu0 0
        %3182 = vmatprep.subr.bf16.mxu0 0
        %3183 = vmatpush1.bf16.msra.mxu0 0
        %3184 = vmatprep.subr.bf16.mxu0 0
        %3185 = vmatpush1.bf16.msra.mxu0 0
        %3186 = vmatprep.subr.bf16.mxu0 0
        %3187 = vmatpush1.bf16.msra.mxu0 0
        %3188 = vmatprep.subr.bf16.mxu0 0
        %3189 = vmatpush1.bf16.msra.mxu0 0
        %3190 = vmatprep.subr.bf16.mxu0 0
        %3191 = vmatpush1.bf16.msra.mxu0 0
        %3192 = vmatprep.subr.bf16.mxu0 0
        %3193 = vmatpush1.bf16.msra.mxu0 0
        %3194 = vmatprep.subr.bf16.mxu0 0
        %3195 = vmatpush1.bf16.msra.mxu0 0
        %3196 = vmatprep.subr.bf16.mxu0 0
        %3197 = vmatpush1.bf16.msra.mxu0 0
        %3198 = vmatprep.subr.bf16.mxu0 0
        %3199 = vmatpush1.bf16.msra.mxu0 0
        %3200 = vmatprep.mubr.bf16.mxu0 0
        %3201 = vmatmul.mubr.bf16.gmra.mrb[0].mxu0 %v3166
        %v3202 = vpop.f32.mrb[0].mxu0
        %v3203 = vadd.f32 %v3138, %v3202
        %v3204 = vpop.f32.mrb[0].mxu0
        %v3205 = vpop.f32.mrb[0].mxu0
        %v3206 = vpop.f32.mrb[0].mxu0
        %3207 = vdwg.mxu0
        %v3208 = vadd.f32 %v3203, %v3055
        %v3209 = vld [vmem:[%s18] sm:$0x1]
        %v3210 = vld [vmem:[%s19] sm:$0x1]
        %v3211 = vsel %vm1859, %v3208, 0.0
        %3212 = vadd.xlane.f32.xlu0 %v3211
        %v3213 = vpop.xlane.xlu0 %3212
        %v3214 = vmul.f32 %v3208, %v3208
        %v3215 = vsel %vm1859, %v3214, 0.0
        %3216 = vadd.xlane.f32.xlu0 %v3215
        %v3217 = vpop.xlane.xlu0 %3216
        %v3218 = vmul.f32 %v3213, 0.03125
        %v3219 = vmul.f32 %v3217, 0.03125
        %v3220 = vmul.f32 %v3218, %v3218
        %v3221 = vsub.f32 %v3219, %v3220
        %v3222 = vsub.f32 %v3208, %v3218
        %v3223 = vadd.f32 %v3221, 1e-06
        %v3224 = vrsqrt.pop %v3223
        %v3225 = vmul.f32 %v3222, %v3224
        %v3227 = vlaneseq
        %v3228 = vshrl.u32 %v3227, 7
        %v3229 = vsub.s32 0, %v3228
        %v3230 = vrot.slane %v3209, %v3229
        %v3232 = vmul.f32 %v3225, %v3230
        %v3234 = vlaneseq
        %v3235 = vshrl.u32 %v3234, 7
        %v3236 = vsub.s32 0, %v3235
        %v3237 = vrot.slane %v3210, %v3236
        %v3239 = vadd.f32 %v3232, %v3237
        %3240 = vst.msk [vmem:[%s828] sm:$0xff] %vm1859, %v3239
        %s3241 = sand.u32 %s497, 1
        %s3242 = scalar_lea.sflag [#allocation8], %s3241
        %s3243 = sand.u32 %s497, 1
        %s3244 = smul.addr %s3243, 8
        %s3245 = scalar_lea.vmem [#allocation21], %s3244
        %s3246 = sand.u32 %s45, 1
        %s3247 = scalar_lea.sflag [#allocation23], %s3246
        %s3248 = sand.u32 %s525, 1
        %s3249 = smul.addr %s3248, 8
        %s3250 = scalar_lea.vmem [#allocation22], %s3249
        %s3251 = sand.u32 %s45, 1
        %s3252 = scalar_lea.sflag [#allocation23], %s3251
        %s3253 = sand.u32 %s553, 1
        %s3254 = smul.addr %s3253, 8
        %s3255 = scalar_lea.vmem [#allocation24], %s3254
        // Predicated region
        $region141: #{tpu_custom_call.1} parent=99 // pred_check
          %p3256 = pneg %p507
        $region142: #{tpu_custom_call.1} parent=99 // pred_check_branch
          %3258 = sbr.rel (%p3256) target = $region144
        $region143: #{tpu_custom_call.1} parent=99 // pred_region
          %s3260 = ssub.s32 128, 128
          %3261 = vsyncadd %s3242, %s3260
          %s3262 = sadd.s32 %s50, %s49
          %s3263 = smul.addr %s3262, 128
          %s3264 = scalar_lea.hbm %s20, %s3263
          %s3266 = sshll.u32 %s3245, 4
          %s3267 = int_to_ptr.vmem [resolvable:$true] %s3266
          %3269 = dma.vmem_to_hbm [thread:$0]  %s3267, 128, %s3264, %s3242
        $region144: #{tpu_custom_call.1} parent=99 // pred_fallthru
          _
        // Predicated region
        $region145: #{tpu_custom_call.1} parent=99 // pred_check
          %p3270 = pneg %p535
        $region146: #{tpu_custom_call.1} parent=99 // pred_check_branch
          %3272 = sbr.rel (%p3270) target = $region148
        $region147: #{tpu_custom_call.1} parent=99 // pred_region
          %s3274 = ssub.s32 128, 128
          %3275 = vsyncadd %s3247, %s3274
          %s3276 = smul.addr %s49, 2
          %s3277 = sadd.s32 %s50, %s3276
          %s3278 = smul.addr %s3277, 64
          %s3279 = scalar_lea.hbm %s21, %s3278
          %s3280 = sshll.u32 %s3250, 4
          %s3281 = int_to_ptr.vmem [resolvable:$true] %s3280
          %3286 = dma.vmem_to_hbm [thread:$0]  %s3281, 128, %s3279, %s3247, 64, 64, 4
        $region148: #{tpu_custom_call.1} parent=99 // pred_fallthru
          _
        // Predicated region
        $region149: #{tpu_custom_call.1} parent=99 // pred_check
          %p3287 = pneg %p563
        $region150: #{tpu_custom_call.1} parent=99 // pred_check_branch
          %3289 = sbr.rel (%p3287) target = $region152
        $region151: #{tpu_custom_call.1} parent=99 // pred_region
          %s3291 = ssub.s32 128, 128
          %3292 = vsyncadd %s3252, %s3291
          %s3293 = smul.addr %s49, 2
          %s3294 = sadd.s32 %s50, %s3293
          %s3295 = smul.addr %s3294, 64
          %s3296 = scalar_lea.hbm %s22, %s3295
          %s3297 = sshll.u32 %s3255, 4
          %s3298 = int_to_ptr.vmem [resolvable:$true] %s3297
          %3303 = dma.vmem_to_hbm [thread:$0]  %s3298, 128, %s3296, %s3252, 64, 64, 4
        $region152: #{tpu_custom_call.1} parent=99 // pred_fallthru
          _
      $region100: #{tpu_custom_call.1} parent=5 // pred_fallthru
        _
      %p3304 = scmp.le.s32.totalorder 2, %s40
      // Predicated region
      $region153: #{tpu_custom_call.1} parent=5 // pred_check
        %p3305 = pneg %p3304
      $region154: #{tpu_custom_call.1} parent=5 // pred_check_branch
        %3307 = sbr.rel (%p3305) target = $region156
      $region155: #{tpu_custom_call.1} parent=5 // pred_region
        %s3308 = ssub.s32 %s40, 2
        // Predicated region
        $region157: #{tpu_custom_call.1} parent=155 // pred_check
          %p3309 = pneg %p513
        $region158: #{tpu_custom_call.1} parent=155 // pred_check_branch
          %3311 = sbr.rel (%p3309) target = $region160
        $region159: #{tpu_custom_call.1} parent=155 // pred_region
          %s3312 = sand.u32 %s498, 1
          %s3313 = scalar_lea.sflag [#allocation8], %s3312
          %s3314 = sand.u32 %s498, 1
          %s3315 = smul.addr %s3314, 8
          %s3316 = scalar_lea.vmem [#allocation21], %s3315
          %3317 = dma.done %s3313, 128
        $region160: #{tpu_custom_call.1} parent=155 // pred_fallthru
          _
        // Predicated region
        $region161: #{tpu_custom_call.1} parent=155 // pred_check
          %p3318 = pneg %p541
        $region162: #{tpu_custom_call.1} parent=155 // pred_check_branch
          %3320 = sbr.rel (%p3318) target = $region164
        $region163: #{tpu_custom_call.1} parent=155 // pred_region
          %s3321 = sand.u32 %s46, 1
          %s3322 = scalar_lea.sflag [#allocation23], %s3321
          %s3323 = sand.u32 %s526, 1
          %s3324 = smul.addr %s3323, 8
          %s3325 = scalar_lea.vmem [#allocation22], %s3324
          %3326 = dma.done %s3322, 128
        $region164: #{tpu_custom_call.1} parent=155 // pred_fallthru
          _
        // Predicated region
        $region165: #{tpu_custom_call.1} parent=155 // pred_check
          %p3327 = pneg %p569
        $region166: #{tpu_custom_call.1} parent=155 // pred_check_branch
          %3329 = sbr.rel (%p3327) target = $region168
        $region167: #{tpu_custom_call.1} parent=155 // pred_region
          %s3330 = sand.u32 %s46, 1
          %s3331 = scalar_lea.sflag [#allocation23], %s3330
          %s3332 = sand.u32 %s554, 1
          %s3333 = smul.addr %s3332, 8
          %s3334 = scalar_lea.vmem [#allocation24], %s3333
          %3335 = dma.done %s3331, 128
        $region168: #{tpu_custom_call.1} parent=155 // pred_fallthru
          _
      $region156: #{tpu_custom_call.1} parent=5 // pred_fallthru
        _
    $region6: #{tpu_custom_call.1} parent=1 // loop_footer
      %s44 = sadd.s32 1, %s40
    $region7: #{tpu_custom_call.1} parent=1 // loop_footer_branch
      %39 = sbr.rel target = $region3
    $region8: #{tpu_custom_call.1} parent=1 // loop_exit
      _
    %3336 = vsyncpa [#allocation7], 1
    %s3337 = scalar_lea.sflag [#allocation7], 1
    %3338 = vsyncpa %s3337, 1
    %3339 = vsyncpa [#allocation10], 1
    %3340 = vsyncpa [#allocation13], 1
    %3341 = vsyncpa [#allocation16], 1
    %3342 = vsyncpa [#allocation19], 1
    %3343 = vsyncpa [#allocation8], 1
    %s3344 = scalar_lea.sflag [#allocation8], 1
    %3345 = vsyncpa %s3344, 1
    %3346 = vsyncpa [#allocation23], 1
    %s3347 = scalar_lea.sflag [#allocation23], 1
    %3348 = vsyncpa %s3347, 1

// kernel: tpu_custom_call.1
$region0: #{tpu_custom_call.1}
  #allocation0 [shape = 'u32[]', space=smem, size = 0x4, offset = 0x4, fixed_abs, tag = 'smem constant byte address 0x4 - core index']
  #allocation1 [shape = 'u32[144,128]{1,0:T(1,128)}', space=vmem, size = 0x12000, scoped, tag = 'internal scratch']
  #allocation2 [shape = 'bf16[2,8,16]{2,1,0:T(8,128)(2,1)}', space=vmem, size = 0x1000, scoped, tag = 'scratch operand']
  #allocation3 [shape = 'bf16[2,8,16]{2,1,0:T(8,128)(2,1)}', space=vmem, size = 0x1000, scoped, tag = 'scratch operand']
  #allocation4 [shape = 'bf16[2,16,16]{2,1,0:T(16,128)(2,1)}', space=vmem, size = 0x2000, scoped, tag = 'scratch operand']
  #allocation5 [shape = 'bf16[2,16,16]{2,1,0:T(16,128)(2,1)}', space=vmem, size = 0x2000, scoped, tag = 'scratch operand']
  %s0 = inlined_call_operand.hbm [shape: bf16[2,8,32], index: 0, kind: input, shape index: {}]
  %s1 = inlined_call_operand.vmem [shape: bf16[2,16,32], index: 1, kind: input, shape index: {}]
  %s2 = inlined_call_operand.vmem [shape: bf16[32,32], index: 2, kind: input, shape index: {}]
  %s3 = inlined_call_operand.vmem [shape: bf16[32,32], index: 3, kind: input, shape index: {}]
  %s4 = inlined_call_operand.hbm [shape: bf16[32,32], index: 4, kind: input, shape index: {}]
  %s5 = inlined_call_operand.hbm [shape: bf16[32,32], index: 5, kind: input, shape index: {}]
  %s6 = inlined_call_operand.vmem [shape: f32[1,32], index: 6, kind: input, shape index: {}]
  %s7 = inlined_call_operand.hbm [shape: f32[1,32], index: 7, kind: input, shape index: {}]
  %s8 = inlined_call_operand.hbm [shape: bf16[32,32], index: 8, kind: input, shape index: {}]
  %s9 = inlined_call_operand.vmem [shape: bf16[32,32], index: 9, kind: input, shape index: {}]
  %s10 = inlined_call_operand.hbm [shape: bf16[32,32], index: 10, kind: input, shape index: {}]
  %s11 = inlined_call_operand.hbm [shape: bf16[32,32], index: 11, kind: input, shape index: {}]
  %s12 = inlined_call_operand.hbm [shape: f32[1,32], index: 12, kind: input, shape index: {}]
  %s13 = inlined_call_operand.hbm [shape: f32[1,32], index: 13, kind: input, shape index: {}]
  %s14 = inlined_call_operand.vmem [shape: bf16[32,64], index: 14, kind: input, shape index: {}]
  %s15 = inlined_call_operand.vmem [shape: f32[1,64], index: 15, kind: input, shape index: {}]
  %s16 = inlined_call_operand.vmem [shape: bf16[64,32], index: 16, kind: input, shape index: {}]
  %s17 = inlined_call_operand.vmem [shape: f32[1,32], index: 17, kind: input, shape index: {}]
  %s18 = inlined_call_operand.vmem [shape: f32[1,32], index: 18, kind: input, shape index: {}]
  %s19 = inlined_call_operand.vmem [shape: f32[1,32], index: 19, kind: input, shape index: {}]
  %s20 = inlined_call_operand.hbm [shape: f32[2,8,32], index: 20, kind: output, shape index: {0}]
  %s21 = inlined_call_operand.hbm [shape: bf16[2,2,8,8], index: 21, kind: output, shape index: {1}]
  %s22 = inlined_call_operand.hbm [shape: bf16[2,2,8,16], index: 22, kind: output, shape index: {2}]
  %23 = xla_tuple %s20, %s21, %s22
  %s24 = sld [smem:[#allocation0]]
  $region169: #{tpu_custom_call.1} parent=0
    _
  %s26 = ssub.s32 1, %s24
  %s27 = scalar_select 0, %s26, %s24
  $region1: #{tpu_custom_call.1} parent=0
    #allocation6 [shape = 'u8[4096]{0}', space=vmem, size = 0x1000, scoped, tag = 'input window, operand 0']
    #allocation7 [shape = 's32[2]{0}', space=sflag, size = 0x8, scoped, tag = 'scoped memory for tpu_custom_call.1']
    #allocation8 [shape = 's32[2]{0}', space=sflag, size = 0x8, scoped, tag = 'scoped memory for tpu_custom_call.1']
    #allocation9 [shape = 'u8[8192]{0}', space=vmem, size = 0x2000, scoped, tag = 'input window, operand 4, single buffered']
    #allocation10 [shape = 's32[1]{0}', space=sflag, size = 0x4, scoped, tag = 'scoped memory for tpu_custom_call.1']
    #allocation11 [shape = 'u8[8192]{0}', space=vmem, size = 0x2000, scoped, tag = 'input window, operand 5, single buffered']
    #allocation12 [shape = 'u8[512]{0}', space=vmem, size = 0x400, scoped, tag = 'input window, operand 7, single buffered']
    #allocation13 [shape = 's32[1]{0}', space=sflag, size = 0x4, scoped, tag = 'scoped memory for tpu_custom_call.1']
    #allocation14 [shape = 'u8[8192]{0}', space=vmem, size = 0x2000, scoped, tag = 'input window, operand 8, single buffered']
    #allocation15 [shape = 'u8[8192]{0}', space=vmem, size = 0x2000, scoped, tag = 'input window, operand 10, single buffered']
    #allocation16 [shape = 's32[1]{0}', space=sflag, size = 0x4, scoped, tag = 'scoped memory for tpu_custom_call.1']
    #allocation17 [shape = 'u8[8192]{0}', space=vmem, size = 0x2000, scoped, tag = 'input window, operand 11, single buffered']
    #allocation18 [shape = 'u8[512]{0}', space=vmem, size = 0x400, scoped, tag = 'input window, operand 12, single buffered']
    #allocation19 [shape = 's32[1]{0}', space=sflag, size = 0x4, scoped, tag = 'scoped memory for tpu_custom_call.1']
    #allocation20 [shape = 'u8[512]{0}', space=vmem, size = 0x400, scoped, tag = 'input window, operand 13, single buffered']
    #allocation21 [shape = 'u8[8192]{0}', space=vmem, size = 0x2000, scoped, tag = 'output window, operand 0']
    #allocation22 [shape = 'u8[8192]{0}', space=vmem, size = 0x2000, scoped, tag = 'output window, operand 1']
    #allocation23 [shape = 's32[2]{0}', space=sflag, size = 0x8, scoped, tag = 'scoped memory for tpu_custom_call.1']
    #allocation24 [shape = 'u8[8192]{0}', space=vmem, size = 0x2000, scoped, tag = 'output window, operand 2']
    %28 = vsyncpa [#allocation7], 0
    %s29 = scalar_lea.sflag [#allocation7], 1
    %30 = vsyncpa %s29, 0
    %31 = vsyncpa [#allocation10], 0
    %32 = vsyncpa [#allocation13], 0
    %33 = vsyncpa [#allocation16], 0
    %34 = vsyncpa [#allocation19], 0
    %35 = vsyncpa [#allocation8], 0
    %s36 = scalar_lea.sflag [#allocation8], 1
    %37 = vsyncpa %s36, 0
    %38 = vsyncpa [#allocation23], 0
    %s39 = scalar_lea.sflag [#allocation23], 1
    %40 = vsyncpa %s39, 0
    loop: start=0, step=1, limit=4
    $region2: #{tpu_custom_call.1} parent=1 // loop_pre_header
      _
    $region3: #{tpu_custom_call.1} parent=1 // loop_header
      %s42 = sphi 0, %s46
      %p43 = scmp.ge.s32.totalorder %s42, 4
      %s49 = sphi 0, %s61
      %s50 = sphi 0, %s57
      %s51 = sphi 0, %s49
      %s52 = sphi 0, %s50
      %s53 = sphi 0, %s51
      %s54 = sphi 0, %s52
      %s64 = sphi 0, %s66
      %s67 = sphi 0, %s64
      %s68 = sphi 0, %s67
      %s84 = sphi 0, %s68
      %s90 = sphi 0, %s92
      %s93 = sphi 0, %s90
      %s94 = sphi 0, %s93
      %s110 = sphi 0, %s94
      %s114 = sphi 0, %s114
      %s116 = sphi 0, %s114
      %s117 = sphi 0, %s116
      %s131 = sphi 0, %s117
      %s135 = sphi 0, %s135
      %s137 = sphi 0, %s135
      %s138 = sphi 0, %s137
      %s152 = sphi 0, %s138
      %s156 = sphi 0, %s156
      %s158 = sphi 0, %s156
      %s159 = sphi 0, %s158
      %s173 = sphi 0, %s159
      %s177 = sphi 0, %s177
      %s179 = sphi 0, %s177
      %s180 = sphi 0, %s179
      %s194 = sphi 0, %s180
      %s198 = sphi 0, %s198
      %s200 = sphi 0, %s198
      %s201 = sphi 0, %s200
      %s215 = sphi 0, %s201
      %s219 = sphi 0, %s219
      %s221 = sphi 0, %s219
      %s222 = sphi 0, %s221
      %s236 = sphi 0, %s222
      %s240 = sphi 0, %s240
      %s242 = sphi 0, %s240
      %s243 = sphi 0, %s242
      %s257 = sphi 0, %s243
      %s261 = sphi 0, %s261
      %s263 = sphi 0, %s261
      %s264 = sphi 0, %s263
      %s278 = sphi 0, %s264
      %s282 = sphi 0, %s282
      %s284 = sphi 0, %s282
      %s285 = sphi 0, %s284
      %s299 = sphi 0, %s285
      %s303 = sphi 0, %s303
      %s305 = sphi 0, %s303
      %s306 = sphi 0, %s305
      %s320 = sphi 0, %s306
      %s324 = sphi 0, %s324
      %s326 = sphi 0, %s324
      %s327 = sphi 0, %s326
      %s341 = sphi 0, %s327
      %s345 = sphi 0, %s345
      %s347 = sphi 0, %s345
      %s348 = sphi 0, %s347
      %s362 = sphi 0, %s348
      %s366 = sphi 0, %s366
      %s368 = sphi 0, %s366
      %s369 = sphi 0, %s368
      %s383 = sphi 0, %s369
      %s387 = sphi 0, %s387
      %s389 = sphi 0, %s387
      %s390 = sphi 0, %s389
      %s404 = sphi 0, %s390
      %s408 = sphi 0, %s408
      %s410 = sphi 0, %s408
      %s411 = sphi 0, %s410
      %s425 = sphi 0, %s411
      %s429 = sphi 0, %s429
      %s431 = sphi 0, %s429
      %s432 = sphi 0, %s431
      %s446 = sphi 0, %s432
      %s450 = sphi 0, %s450
      %s452 = sphi 0, %s450
      %s453 = sphi 0, %s452
      %s467 = sphi 0, %s453
      %s471 = sphi 0, %s471
      %s473 = sphi 0, %s471
      %s474 = sphi 0, %s473
      %s488 = sphi 0, %s474
      %s496 = sphi 0, %s498
      %s499 = sphi 0, %s496
      %s500 = sphi 0, %s499
      %s516 = sphi 0, %s500
      %s524 = sphi 0, %s526
      %s527 = sphi 0, %s524
      %s528 = sphi 0, %s527
      %s544 = sphi 0, %s528
      %s552 = sphi 0, %s554
      %s555 = sphi 0, %s552
      %s556 = sphi 0, %s555
      %s572 = sphi 0, %s556
    $region4: #{tpu_custom_call.1} parent=1 // loop_header_branch
      %45 = sbr.rel (%p43) target = $region8
    $region5: #{tpu_custom_call.1} parent=1 // loop_body
      %s47 = ssub.s32 %s42, 1
      %s48 = ssub.s32 %s42, 2
      %s55 = sadd.s32 1, %s50
      %p56 = scmp.ge.s32.totalorder %s55, 1
      %s57 = scalar_select %p56, 0, %s55
      %s58 = sadd.s32 1, %s49
      %s59 = scalar_select %p56, %s58, %s49
      %p60 = scmp.ge.s32.totalorder %s59, 2
      %s61 = scalar_select %p60, 0, %s59
      %s62 = ssub.s32 %s49, %s61
      %p63 = scmp.eq.s32.totalorder %s62, 0
      %s65 = sadd.s32 %s64, 1
      %s66 = scalar_select %p63, %s64, %s65
      %p69 = pneg %p63
      %p70 = scmp.eq.s32.totalorder %s42, 1
      %p71 = por %p69, %p70
      %p72 = scmp.ne.s32.totalorder %s64, %s67
      %p73 = scmp.eq.s32.totalorder %s42, 0
      %p74 = por %p72, %p73
      %p75 = scmp.ne.s32.totalorder %s64, %s67
      %p76 = scmp.eq.s32.totalorder %s47, 1
      %p77 = por %p75, %p76
      %p78 = scmp.ne.s32.totalorder %s67, %s68
      %p79 = scmp.eq.s32.totalorder %s47, 0
      %p80 = por %p78, %p79
      %p81 = scmp.ne.s32.totalorder %s67, %s68
      %p82 = scmp.eq.s32.totalorder %s48, 1
      %p83 = por %p81, %p82
      %p85 = scmp.ne.s32.totalorder %s68, %s84
      %p86 = scmp.eq.s32.totalorder %s48, 0
      %p87 = por %p85, %p86
      %s88 = ssub.s32 %s49, %s61
      %p89 = scmp.eq.s32.totalorder %s88, 0
      %s91 = sadd.s32 %s90, 1
      %s92 = scalar_select %p89, %s90, %s91
      %p95 = pneg %p89
      %p96 = scmp.eq.s32.totalorder %s42, 1
      %p97 = por %p95, %p96
      %p98 = scmp.ne.s32.totalorder %s90, %s93
      %p99 = scmp.eq.s32.totalorder %s42, 0
      %p100 = por %p98, %p99
      %p101 = scmp.ne.s32.totalorder %s90, %s93
      %p102 = scmp.eq.s32.totalorder %s47, 1
      %p103 = por %p101, %p102
      %p104 = scmp.ne.s32.totalorder %s93, %s94
      %p105 = scmp.eq.s32.totalorder %s47, 0
      %p106 = por %p104, %p105
      %p107 = scmp.ne.s32.totalorder %s93, %s94
      %p108 = scmp.eq.s32.totalorder %s48, 1
      %p109 = por %p107, %p108
      %p111 = scmp.ne.s32.totalorder %s94, %s110
      %p112 = scmp.eq.s32.totalorder %s48, 0
      %p113 = por %p111, %p112
      %s115 = sadd.s32 %s114, 1
      %p118 = scmp.eq.s32.totalorder %s42, 1
      %p119 = scmp.ne.s32.totalorder %s114, %s116
      %p120 = scmp.eq.s32.totalorder %s42, 0
      %p121 = por %p119, %p120
      %p122 = scmp.ne.s32.totalorder %s114, %s116
      %p123 = scmp.eq.s32.totalorder %s47, 1
      %p124 = por %p122, %p123
      %p125 = scmp.ne.s32.totalorder %s116, %s117
      %p126 = scmp.eq.s32.totalorder %s47, 0
      %p127 = por %p125, %p126
      %p128 = scmp.ne.s32.totalorder %s116, %s117
      %p129 = scmp.eq.s32.totalorder %s48, 1
      %p130 = por %p128, %p129
      %p132 = scmp.ne.s32.totalorder %s117, %s131
      %p133 = scmp.eq.s32.totalorder %s48, 0
      %p134 = por %p132, %p133
      %s136 = sadd.s32 %s135, 1
      %p139 = scmp.eq.s32.totalorder %s42, 1
      %p140 = scmp.ne.s32.totalorder %s135, %s137
      %p141 = scmp.eq.s32.totalorder %s42, 0
      %p142 = por %p140, %p141
      %p143 = scmp.ne.s32.totalorder %s135, %s137
      %p144 = scmp.eq.s32.totalorder %s47, 1
      %p145 = por %p143, %p144
      %p146 = scmp.ne.s32.totalorder %s137, %s138
      %p147 = scmp.eq.s32.totalorder %s47, 0
      %p148 = por %p146, %p147
      %p149 = scmp.ne.s32.totalorder %s137, %s138
      %p150 = scmp.eq.s32.totalorder %s48, 1
      %p151 = por %p149, %p150
      %p153 = scmp.ne.s32.totalorder %s138, %s152
      %p154 = scmp.eq.s32.totalorder %s48, 0
      %p155 = por %p153, %p154
      %s157 = sadd.s32 %s156, 1
      %p160 = scmp.eq.s32.totalorder %s42, 1
      %p161 = scmp.ne.s32.totalorder %s156, %s158
      %p162 = scmp.eq.s32.totalorder %s42, 0
      %p163 = por %p161, %p162
      %p164 = scmp.ne.s32.totalorder %s156, %s158
      %p165 = scmp.eq.s32.totalorder %s47, 1
      %p166 = por %p164, %p165
      %p167 = scmp.ne.s32.totalorder %s158, %s159
      %p168 = scmp.eq.s32.totalorder %s47, 0
      %p169 = por %p167, %p168
      %p170 = scmp.ne.s32.totalorder %s158, %s159
      %p171 = scmp.eq.s32.totalorder %s48, 1
      %p172 = por %p170, %p171
      %p174 = scmp.ne.s32.totalorder %s159, %s173
      %p175 = scmp.eq.s32.totalorder %s48, 0
      %p176 = por %p174, %p175
      %s178 = sadd.s32 %s177, 1
      %p181 = scmp.eq.s32.totalorder %s42, 1
      %p182 = scmp.ne.s32.totalorder %s177, %s179
      %p183 = scmp.eq.s32.totalorder %s42, 0
      %p184 = por %p182, %p183
      %p185 = scmp.ne.s32.totalorder %s177, %s179
      %p186 = scmp.eq.s32.totalorder %s47, 1
      %p187 = por %p185, %p186
      %p188 = scmp.ne.s32.totalorder %s179, %s180
      %p189 = scmp.eq.s32.totalorder %s47, 0
      %p190 = por %p188, %p189
      %p191 = scmp.ne.s32.totalorder %s179, %s180
      %p192 = scmp.eq.s32.totalorder %s48, 1
      %p193 = por %p191, %p192
      %p195 = scmp.ne.s32.totalorder %s180, %s194
      %p196 = scmp.eq.s32.totalorder %s48, 0
      %p197 = por %p195, %p196
      %s199 = sadd.s32 %s198, 1
      %p202 = scmp.eq.s32.totalorder %s42, 1
      %p203 = scmp.ne.s32.totalorder %s198, %s200
      %p204 = scmp.eq.s32.totalorder %s42, 0
      %p205 = por %p203, %p204
      %p206 = scmp.ne.s32.totalorder %s198, %s200
      %p207 = scmp.eq.s32.totalorder %s47, 1
      %p208 = por %p206, %p207
      %p209 = scmp.ne.s32.totalorder %s200, %s201
      %p210 = scmp.eq.s32.totalorder %s47, 0
      %p211 = por %p209, %p210
      %p212 = scmp.ne.s32.totalorder %s200, %s201
      %p213 = scmp.eq.s32.totalorder %s48, 1
      %p214 = por %p212, %p213
      %p216 = scmp.ne.s32.totalorder %s201, %s215
      %p217 = scmp.eq.s32.totalorder %s48, 0
      %p218 = por %p216, %p217
      %s220 = sadd.s32 %s219, 1
      %p223 = scmp.eq.s32.totalorder %s42, 1
      %p224 = scmp.ne.s32.totalorder %s219, %s221
      %p225 = scmp.eq.s32.totalorder %s42, 0
      %p226 = por %p224, %p225
      %p227 = scmp.ne.s32.totalorder %s219, %s221
      %p228 = scmp.eq.s32.totalorder %s47, 1
      %p229 = por %p227, %p228
      %p230 = scmp.ne.s32.totalorder %s221, %s222
      %p231 = scmp.eq.s32.totalorder %s47, 0
      %p232 = por %p230, %p231
      %p233 = scmp.ne.s32.totalorder %s221, %s222
      %p234 = scmp.eq.s32.totalorder %s48, 1
      %p235 = por %p233, %p234
      %p237 = scmp.ne.s32.totalorder %s222, %s236
      %p238 = scmp.eq.s32.totalorder %s48, 0
      %p239 = por %p237, %p238
      %s241 = sadd.s32 %s240, 1
      %p244 = scmp.eq.s32.totalorder %s42, 1
      %p245 = scmp.ne.s32.totalorder %s240, %s242
      %p246 = scmp.eq.s32.totalorder %s42, 0
      %p247 = por %p245, %p246
      %p248 = scmp.ne.s32.totalorder %s240, %s242
      %p249 = scmp.eq.s32.totalorder %s47, 1
      %p250 = por %p248, %p249
      %p251 = scmp.ne.s32.totalorder %s242, %s243
      %p252 = scmp.eq.s32.totalorder %s47, 0
      %p253 = por %p251, %p252
      %p254 = scmp.ne.s32.totalorder %s242, %s243
      %p255 = scmp.eq.s32.totalorder %s48, 1
      %p256 = por %p254, %p255
      %p258 = scmp.ne.s32.totalorder %s243, %s257
      %p259 = scmp.eq.s32.totalorder %s48, 0
      %p260 = por %p258, %p259
      %s262 = sadd.s32 %s261, 1
      %p265 = scmp.eq.s32.totalorder %s42, 1
      %p266 = scmp.ne.s32.totalorder %s261, %s263
      %p267 = scmp.eq.s32.totalorder %s42, 0
      %p268 = por %p266, %p267
      %p269 = scmp.ne.s32.totalorder %s261, %s263
      %p270 = scmp.eq.s32.totalorder %s47, 1
      %p271 = por %p269, %p270
      %p272 = scmp.ne.s32.totalorder %s263, %s264
      %p273 = scmp.eq.s32.totalorder %s47, 0
      %p274 = por %p272, %p273
      %p275 = scmp.ne.s32.totalorder %s263, %s264
      %p276 = scmp.eq.s32.totalorder %s48, 1
      %p277 = por %p275, %p276
      %p279 = scmp.ne.s32.totalorder %s264, %s278
      %p280 = scmp.eq.s32.totalorder %s48, 0
      %p281 = por %p279, %p280
      %s283 = sadd.s32 %s282, 1
      %p286 = scmp.eq.s32.totalorder %s42, 1
      %p287 = scmp.ne.s32.totalorder %s282, %s284
      %p288 = scmp.eq.s32.totalorder %s42, 0
      %p289 = por %p287, %p288
      %p290 = scmp.ne.s32.totalorder %s282, %s284
      %p291 = scmp.eq.s32.totalorder %s47, 1
      %p292 = por %p290, %p291
      %p293 = scmp.ne.s32.totalorder %s284, %s285
      %p294 = scmp.eq.s32.totalorder %s47, 0
      %p295 = por %p293, %p294
      %p296 = scmp.ne.s32.totalorder %s284, %s285
      %p297 = scmp.eq.s32.totalorder %s48, 1
      %p298 = por %p296, %p297
      %p300 = scmp.ne.s32.totalorder %s285, %s299
      %p301 = scmp.eq.s32.totalorder %s48, 0
      %p302 = por %p300, %p301
      %s304 = sadd.s32 %s303, 1
      %p307 = scmp.eq.s32.totalorder %s42, 1
      %p308 = scmp.ne.s32.totalorder %s303, %s305
      %p309 = scmp.eq.s32.totalorder %s42, 0
      %p310 = por %p308, %p309
      %p311 = scmp.ne.s32.totalorder %s303, %s305
      %p312 = scmp.eq.s32.totalorder %s47, 1
      %p313 = por %p311, %p312
      %p314 = scmp.ne.s32.totalorder %s305, %s306
      %p315 = scmp.eq.s32.totalorder %s47, 0
      %p316 = por %p314, %p315
      %p317 = scmp.ne.s32.totalorder %s305, %s306
      %p318 = scmp.eq.s32.totalorder %s48, 1
      %p319 = por %p317, %p318
      %p321 = scmp.ne.s32.totalorder %s306, %s320
      %p322 = scmp.eq.s32.totalorder %s48, 0
      %p323 = por %p321, %p322
      %s325 = sadd.s32 %s324, 1
      %p328 = scmp.eq.s32.totalorder %s42, 1
      %p329 = scmp.ne.s32.totalorder %s324, %s326
      %p330 = scmp.eq.s32.totalorder %s42, 0
      %p331 = por %p329, %p330
      %p332 = scmp.ne.s32.totalorder %s324, %s326
      %p333 = scmp.eq.s32.totalorder %s47, 1
      %p334 = por %p332, %p333
      %p335 = scmp.ne.s32.totalorder %s326, %s327
      %p336 = scmp.eq.s32.totalorder %s47, 0
      %p337 = por %p335, %p336
      %p338 = scmp.ne.s32.totalorder %s326, %s327
      %p339 = scmp.eq.s32.totalorder %s48, 1
      %p340 = por %p338, %p339
      %p342 = scmp.ne.s32.totalorder %s327, %s341
      %p343 = scmp.eq.s32.totalorder %s48, 0
      %p344 = por %p342, %p343
      %s346 = sadd.s32 %s345, 1
      %p349 = scmp.eq.s32.totalorder %s42, 1
      %p350 = scmp.ne.s32.totalorder %s345, %s347
      %p351 = scmp.eq.s32.totalorder %s42, 0
      %p352 = por %p350, %p351
      %p353 = scmp.ne.s32.totalorder %s345, %s347
      %p354 = scmp.eq.s32.totalorder %s47, 1
      %p355 = por %p353, %p354
      %p356 = scmp.ne.s32.totalorder %s347, %s348
      %p357 = scmp.eq.s32.totalorder %s47, 0
      %p358 = por %p356, %p357
      %p359 = scmp.ne.s32.totalorder %s347, %s348
      %p360 = scmp.eq.s32.totalorder %s48, 1
      %p361 = por %p359, %p360
      %p363 = scmp.ne.s32.totalorder %s348, %s362
      %p364 = scmp.eq.s32.totalorder %s48, 0
      %p365 = por %p363, %p364
      %s367 = sadd.s32 %s366, 1
      %p370 = scmp.eq.s32.totalorder %s42, 1
      %p371 = scmp.ne.s32.totalorder %s366, %s368
      %p372 = scmp.eq.s32.totalorder %s42, 0
      %p373 = por %p371, %p372
      %p374 = scmp.ne.s32.totalorder %s366, %s368
      %p375 = scmp.eq.s32.totalorder %s47, 1
      %p376 = por %p374, %p375
      %p377 = scmp.ne.s32.totalorder %s368, %s369
      %p378 = scmp.eq.s32.totalorder %s47, 0
      %p379 = por %p377, %p378
      %p380 = scmp.ne.s32.totalorder %s368, %s369
      %p381 = scmp.eq.s32.totalorder %s48, 1
      %p382 = por %p380, %p381
      %p384 = scmp.ne.s32.totalorder %s369, %s383
      %p385 = scmp.eq.s32.totalorder %s48, 0
      %p386 = por %p384, %p385
      %s388 = sadd.s32 %s387, 1
      %p391 = scmp.eq.s32.totalorder %s42, 1
      %p392 = scmp.ne.s32.totalorder %s387, %s389
      %p393 = scmp.eq.s32.totalorder %s42, 0
      %p394 = por %p392, %p393
      %p395 = scmp.ne.s32.totalorder %s387, %s389
      %p396 = scmp.eq.s32.totalorder %s47, 1
      %p397 = por %p395, %p396
      %p398 = scmp.ne.s32.totalorder %s389, %s390
      %p399 = scmp.eq.s32.totalorder %s47, 0
      %p400 = por %p398, %p399
      %p401 = scmp.ne.s32.totalorder %s389, %s390
      %p402 = scmp.eq.s32.totalorder %s48, 1
      %p403 = por %p401, %p402
      %p405 = scmp.ne.s32.totalorder %s390, %s404
      %p406 = scmp.eq.s32.totalorder %s48, 0
      %p407 = por %p405, %p406
      %s409 = sadd.s32 %s408, 1
      %p412 = scmp.eq.s32.totalorder %s42, 1
      %p413 = scmp.ne.s32.totalorder %s408, %s410
      %p414 = scmp.eq.s32.totalorder %s42, 0
      %p415 = por %p413, %p414
      %p416 = scmp.ne.s32.totalorder %s408, %s410
      %p417 = scmp.eq.s32.totalorder %s47, 1
      %p418 = por %p416, %p417
      %p419 = scmp.ne.s32.totalorder %s410, %s411
      %p420 = scmp.eq.s32.totalorder %s47, 0
      %p421 = por %p419, %p420
      %p422 = scmp.ne.s32.totalorder %s410, %s411
      %p423 = scmp.eq.s32.totalorder %s48, 1
      %p424 = por %p422, %p423
      %p426 = scmp.ne.s32.totalorder %s411, %s425
      %p427 = scmp.eq.s32.totalorder %s48, 0
      %p428 = por %p426, %p427
      %s430 = sadd.s32 %s429, 1
      %p433 = scmp.eq.s32.totalorder %s42, 1
      %p434 = scmp.ne.s32.totalorder %s429, %s431
      %p435 = scmp.eq.s32.totalorder %s42, 0
      %p436 = por %p434, %p435
      %p437 = scmp.ne.s32.totalorder %s429, %s431
      %p438 = scmp.eq.s32.totalorder %s47, 1
      %p439 = por %p437, %p438
      %p440 = scmp.ne.s32.totalorder %s431, %s432
      %p441 = scmp.eq.s32.totalorder %s47, 0
      %p442 = por %p440, %p441
      %p443 = scmp.ne.s32.totalorder %s431, %s432
      %p444 = scmp.eq.s32.totalorder %s48, 1
      %p445 = por %p443, %p444
      %p447 = scmp.ne.s32.totalorder %s432, %s446
      %p448 = scmp.eq.s32.totalorder %s48, 0
      %p449 = por %p447, %p448
      %s451 = sadd.s32 %s450, 1
      %p454 = scmp.eq.s32.totalorder %s42, 1
      %p455 = scmp.ne.s32.totalorder %s450, %s452
      %p456 = scmp.eq.s32.totalorder %s42, 0
      %p457 = por %p455, %p456
      %p458 = scmp.ne.s32.totalorder %s450, %s452
      %p459 = scmp.eq.s32.totalorder %s47, 1
      %p460 = por %p458, %p459
      %p461 = scmp.ne.s32.totalorder %s452, %s453
      %p462 = scmp.eq.s32.totalorder %s47, 0
      %p463 = por %p461, %p462
      %p464 = scmp.ne.s32.totalorder %s452, %s453
      %p465 = scmp.eq.s32.totalorder %s48, 1
      %p466 = por %p464, %p465
      %p468 = scmp.ne.s32.totalorder %s453, %s467
      %p469 = scmp.eq.s32.totalorder %s48, 0
      %p470 = por %p468, %p469
      %s472 = sadd.s32 %s471, 1
      %p475 = scmp.eq.s32.totalorder %s42, 1
      %p476 = scmp.ne.s32.totalorder %s471, %s473
      %p477 = scmp.eq.s32.totalorder %s42, 0
      %p478 = por %p476, %p477
      %p479 = scmp.ne.s32.totalorder %s471, %s473
      %p480 = scmp.eq.s32.totalorder %s47, 1
      %p481 = por %p479, %p480
      %p482 = scmp.ne.s32.totalorder %s473, %s474
      %p483 = scmp.eq.s32.totalorder %s47, 0
      %p484 = por %p482, %p483
      %p485 = scmp.ne.s32.totalorder %s473, %s474
      %p486 = scmp.eq.s32.totalorder %s48, 1
      %p487 = por %p485, %p486
      %p489 = scmp.ne.s32.totalorder %s474, %s488
      %p490 = scmp.eq.s32.totalorder %s48, 0
      %p491 = por %p489, %p490
      %s492 = ssub.s32 %s49, %s61
      %s493 = ssub.s32 %s50, %s57
      %s494 = sor.u32 %s492, %s493
      %p495 = scmp.eq.s32.totalorder %s494, 0
      %s497 = sadd.s32 %s496, 1
      %s498 = scalar_select %p495, %s496, %s497
      %p501 = pneg %p495
      %p502 = scmp.eq.s32.totalorder %s42, 1
      %p503 = por %p501, %p502
      %p504 = scmp.ne.s32.totalorder %s496, %s499
      %p505 = scmp.eq.s32.totalorder %s42, 0
      %p506 = por %p504, %p505
      %p507 = scmp.ne.s32.totalorder %s496, %s499
      %p508 = scmp.eq.s32.totalorder %s47, 1
      %p509 = por %p507, %p508
      %p510 = scmp.ne.s32.totalorder %s499, %s500
      %p511 = scmp.eq.s32.totalorder %s47, 0
      %p512 = por %p510, %p511
      %p513 = scmp.ne.s32.totalorder %s499, %s500
      %p514 = scmp.eq.s32.totalorder %s48, 1
      %p515 = por %p513, %p514
      %p517 = scmp.ne.s32.totalorder %s500, %s516
      %p518 = scmp.eq.s32.totalorder %s48, 0
      %p519 = por %p517, %p518
      %s520 = ssub.s32 %s49, %s61
      %s521 = ssub.s32 %s50, %s57
      %s522 = sor.u32 %s520, %s521
      %p523 = scmp.eq.s32.totalorder %s522, 0
      %s525 = sadd.s32 %s524, 1
      %s526 = scalar_select %p523, %s524, %s525
      %p529 = pneg %p523
      %p530 = scmp.eq.s32.totalorder %s42, 1
      %p531 = por %p529, %p530
      %p532 = scmp.ne.s32.totalorder %s524, %s527
      %p533 = scmp.eq.s32.totalorder %s42, 0
      %p534 = por %p532, %p533
      %p535 = scmp.ne.s32.totalorder %s524, %s527
      %p536 = scmp.eq.s32.totalorder %s47, 1
      %p537 = por %p535, %p536
      %p538 = scmp.ne.s32.totalorder %s527, %s528
      %p539 = scmp.eq.s32.totalorder %s47, 0
      %p540 = por %p538, %p539
      %p541 = scmp.ne.s32.totalorder %s527, %s528
      %p542 = scmp.eq.s32.totalorder %s48, 1
      %p543 = por %p541, %p542
      %p545 = scmp.ne.s32.totalorder %s528, %s544
      %p546 = scmp.eq.s32.totalorder %s48, 0
      %p547 = por %p545, %p546
      %s548 = ssub.s32 %s49, %s61
      %s549 = ssub.s32 %s50, %s57
      %s550 = sor.u32 %s548, %s549
      %p551 = scmp.eq.s32.totalorder %s550, 0
      %s553 = sadd.s32 %s552, 1
      %s554 = scalar_select %p551, %s552, %s553
      %p557 = pneg %p551
      %p558 = scmp.eq.s32.totalorder %s42, 1
      %p559 = por %p557, %p558
      %p560 = scmp.ne.s32.totalorder %s552, %s555
      %p561 = scmp.eq.s32.totalorder %s42, 0
      %p562 = por %p560, %p561
      %p563 = scmp.ne.s32.totalorder %s552, %s555
      %p564 = scmp.eq.s32.totalorder %s47, 1
      %p565 = por %p563, %p564
      %p566 = scmp.ne.s32.totalorder %s555, %s556
      %p567 = scmp.eq.s32.totalorder %s47, 0
      %p568 = por %p566, %p567
      %p569 = scmp.ne.s32.totalorder %s555, %s556
      %p570 = scmp.eq.s32.totalorder %s48, 1
      %p571 = por %p569, %p570
      %p573 = scmp.ne.s32.totalorder %s556, %s572
      %p574 = scmp.eq.s32.totalorder %s48, 0
      %p575 = por %p573, %p574
      %p576 = scmp.le.s32.totalorder 1, %s42
      %p577 = scmp.lt.s32.totalorder %s42, 3
      %p578 = pnand %p576, %p577
      %p579 = pneg %p578
      // Predicated region
      $region9: #{tpu_custom_call.1} parent=5 // pred_check
        _
      $region10: #{tpu_custom_call.1} parent=5 // pred_check_branch
        %581 = sbr.rel (%p578) target = $region12
      $region11: #{tpu_custom_call.1} parent=5 // pred_region
        %s582 = ssub.s32 %s42, 1
        // Predicated region
        $region13: #{tpu_custom_call.1} parent=11 // pred_check
          %p583 = pneg %p127
        $region14: #{tpu_custom_call.1} parent=11 // pred_check_branch
          %585 = sbr.rel (%p583) target = $region16
        $region15: #{tpu_custom_call.1} parent=11 // pred_region
          _
        $region16: #{tpu_custom_call.1} parent=11 // pred_fallthru
          _
        // Predicated region
        $region17: #{tpu_custom_call.1} parent=11 // pred_check
          %p586 = pneg %p148
        $region18: #{tpu_custom_call.1} parent=11 // pred_check_branch
          %588 = sbr.rel (%p586) target = $region20
        $region19: #{tpu_custom_call.1} parent=11 // pred_region
          _
        $region20: #{tpu_custom_call.1} parent=11 // pred_fallthru
          _
        // Predicated region
        $region21: #{tpu_custom_call.1} parent=11 // pred_check
          %p589 = pneg %p169
        $region22: #{tpu_custom_call.1} parent=11 // pred_check_branch
          %591 = sbr.rel (%p589) target = $region24
        $region23: #{tpu_custom_call.1} parent=11 // pred_region
          %s593 = ssub.s32 256, 256
          %594 = vsyncadd [#allocation10], %s593
          %s595 = sshll.u32 [#allocation9], 4
          %s596 = int_to_ptr.vmem [resolvable:$true] %s595
          %601 = dma.hbm_to_vmem [thread:$0]  %s4, 256, %s596, [#allocation10], 64, 64, 4
        $region24: #{tpu_custom_call.1} parent=11 // pred_fallthru
          _
        // Predicated region
        $region25: #{tpu_custom_call.1} parent=11 // pred_check
          %p602 = pneg %p190
        $region26: #{tpu_custom_call.1} parent=11 // pred_check_branch
          %604 = sbr.rel (%p602) target = $region28
        $region27: #{tpu_custom_call.1} parent=11 // pred_region
          %s606 = ssub.s32 256, 256
          %607 = vsyncadd [#allocation10], %s606
          %s608 = sshll.u32 [#allocation11], 4
          %s609 = int_to_ptr.vmem [resolvable:$true] %s608
          %614 = dma.hbm_to_vmem [thread:$0]  %s5, 256, %s609, [#allocation10], 64, 64, 4
        $region28: #{tpu_custom_call.1} parent=11 // pred_fallthru
          _
        // Predicated region
        $region29: #{tpu_custom_call.1} parent=11 // pred_check
          %p615 = pneg %p211
        $region30: #{tpu_custom_call.1} parent=11 // pred_check_branch
          %617 = sbr.rel (%p615) target = $region32
        $region31: #{tpu_custom_call.1} parent=11 // pred_region
          _
        $region32: #{tpu_custom_call.1} parent=11 // pred_fallthru
          _
        // Predicated region
        $region33: #{tpu_custom_call.1} parent=11 // pred_check
          %p618 = pneg %p232
        $region34: #{tpu_custom_call.1} parent=11 // pred_check_branch
          %620 = sbr.rel (%p618) target = $region36
        $region35: #{tpu_custom_call.1} parent=11 // pred_region
          %s622 = ssub.s32 16, 16
          %623 = vsyncadd [#allocation13], %s622
          %s625 = sshll.u32 [#allocation12], 4
          %s626 = int_to_ptr.vmem [resolvable:$true] %s625
          %628 = dma.hbm_to_vmem [thread:$0]  %s7, 16, %s626, [#allocation13]
        $region36: #{tpu_custom_call.1} parent=11 // pred_fallthru
          _
        // Predicated region
        $region37: #{tpu_custom_call.1} parent=11 // pred_check
          %p629 = pneg %p253
        $region38: #{tpu_custom_call.1} parent=11 // pred_check_branch
          %631 = sbr.rel (%p629) target = $region40
        $region39: #{tpu_custom_call.1} parent=11 // pred_region
          %s633 = ssub.s32 256, 256
          %634 = vsyncadd [#allocation13], %s633
          %s635 = sshll.u32 [#allocation14], 4
          %s636 = int_to_ptr.vmem [resolvable:$true] %s635
          %641 = dma.hbm_to_vmem [thread:$0]  %s8, 256, %s636, [#allocation13], 64, 64, 4
        $region40: #{tpu_custom_call.1} parent=11 // pred_fallthru
          _
        // Predicated region
        $region41: #{tpu_custom_call.1} parent=11 // pred_check
          %p642 = pneg %p274
        $region42: #{tpu_custom_call.1} parent=11 // pred_check_branch
          %644 = sbr.rel (%p642) target = $region44
        $region43: #{tpu_custom_call.1} parent=11 // pred_region
          _
        $region44: #{tpu_custom_call.1} parent=11 // pred_fallthru
          _
        // Predicated region
        $region45: #{tpu_custom_call.1} parent=11 // pred_check
          %p645 = pneg %p295
        $region46: #{tpu_custom_call.1} parent=11 // pred_check_branch
          %647 = sbr.rel (%p645) target = $region48
        $region47: #{tpu_custom_call.1} parent=11 // pred_region
          %s649 = ssub.s32 256, 256
          %650 = vsyncadd [#allocation16], %s649
          %s651 = sshll.u32 [#allocation15], 4
          %s652 = int_to_ptr.vmem [resolvable:$true] %s651
          %657 = dma.hbm_to_vmem [thread:$0]  %s10, 256, %s652, [#allocation16], 64, 64, 4
        $region48: #{tpu_custom_call.1} parent=11 // pred_fallthru
          _
        // Predicated region
        $region49: #{tpu_custom_call.1} parent=11 // pred_check
          %p658 = pneg %p316
        $region50: #{tpu_custom_call.1} parent=11 // pred_check_branch
          %660 = sbr.rel (%p658) target = $region52
        $region51: #{tpu_custom_call.1} parent=11 // pred_region
          %s662 = ssub.s32 256, 256
          %663 = vsyncadd [#allocation16], %s662
          %s664 = sshll.u32 [#allocation17], 4
          %s665 = int_to_ptr.vmem [resolvable:$true] %s664
          %670 = dma.hbm_to_vmem [thread:$0]  %s11, 256, %s665, [#allocation16], 64, 64, 4
        $region52: #{tpu_custom_call.1} parent=11 // pred_fallthru
          _
        // Predicated region
        $region53: #{tpu_custom_call.1} parent=11 // pred_check
          %p671 = pneg %p337
        $region54: #{tpu_custom_call.1} parent=11 // pred_check_branch
          %673 = sbr.rel (%p671) target = $region56
        $region55: #{tpu_custom_call.1} parent=11 // pred_region
          %s675 = ssub.s32 16, 16
          %676 = vsyncadd [#allocation19], %s675
          %s678 = sshll.u32 [#allocation18], 4
          %s679 = int_to_ptr.vmem [resolvable:$true] %s678
          %681 = dma.hbm_to_vmem [thread:$0]  %s12, 16, %s679, [#allocation19]
        $region56: #{tpu_custom_call.1} parent=11 // pred_fallthru
          _
        // Predicated region
        $region57: #{tpu_custom_call.1} parent=11 // pred_check
          %p682 = pneg %p358
        $region58: #{tpu_custom_call.1} parent=11 // pred_check_branch
          %684 = sbr.rel (%p682) target = $region60
        $region59: #{tpu_custom_call.1} parent=11 // pred_region
          %s686 = ssub.s32 16, 16
          %687 = vsyncadd [#allocation19], %s686
          %s689 = sshll.u32 [#allocation20], 4
          %s690 = int_to_ptr.vmem [resolvable:$true] %s689
          %692 = dma.hbm_to_vmem [thread:$0]  %s13, 16, %s690, [#allocation19]
        $region60: #{tpu_custom_call.1} parent=11 // pred_fallthru
          _
        // Predicated region
        $region61: #{tpu_custom_call.1} parent=11 // pred_check
          %p693 = pneg %p379
        $region62: #{tpu_custom_call.1} parent=11 // pred_check_branch
          %695 = sbr.rel (%p693) target = $region64
        $region63: #{tpu_custom_call.1} parent=11 // pred_region
          _
        $region64: #{tpu_custom_call.1} parent=11 // pred_fallthru
          _
        // Predicated region
        $region65: #{tpu_custom_call.1} parent=11 // pred_check
          %p696 = pneg %p400
        $region66: #{tpu_custom_call.1} parent=11 // pred_check_branch
          %698 = sbr.rel (%p696) target = $region68
        $region67: #{tpu_custom_call.1} parent=11 // pred_region
          _
        $region68: #{tpu_custom_call.1} parent=11 // pred_fallthru
          _
        // Predicated region
        $region69: #{tpu_custom_call.1} parent=11 // pred_check
          %p699 = pneg %p421
        $region70: #{tpu_custom_call.1} parent=11 // pred_check_branch
          %701 = sbr.rel (%p699) target = $region72
        $region71: #{tpu_custom_call.1} parent=11 // pred_region
          _
        $region72: #{tpu_custom_call.1} parent=11 // pred_fallthru
          _
        // Predicated region
        $region73: #{tpu_custom_call.1} parent=11 // pred_check
          %p702 = pneg %p442
        $region74: #{tpu_custom_call.1} parent=11 // pred_check_branch
          %704 = sbr.rel (%p702) target = $region76
        $region75: #{tpu_custom_call.1} parent=11 // pred_region
          _
        $region76: #{tpu_custom_call.1} parent=11 // pred_fallthru
          _
        // Predicated region
        $region77: #{tpu_custom_call.1} parent=11 // pred_check
          %p705 = pneg %p463
        $region78: #{tpu_custom_call.1} parent=11 // pred_check_branch
          %707 = sbr.rel (%p705) target = $region80
        $region79: #{tpu_custom_call.1} parent=11 // pred_region
          _
        $region80: #{tpu_custom_call.1} parent=11 // pred_fallthru
          _
        // Predicated region
        $region81: #{tpu_custom_call.1} parent=11 // pred_check
          %p708 = pneg %p484
        $region82: #{tpu_custom_call.1} parent=11 // pred_check_branch
          %710 = sbr.rel (%p708) target = $region84
        $region83: #{tpu_custom_call.1} parent=11 // pred_region
          _
        $region84: #{tpu_custom_call.1} parent=11 // pred_fallthru
          _
      $region12: #{tpu_custom_call.1} parent=5 // pred_fallthru
        _
      %p711 = scmp.lt.s32.totalorder %s42, 2
      // Predicated region
      $region85: #{tpu_custom_call.1} parent=5 // pred_check
        %p712 = pneg %p711
      $region86: #{tpu_custom_call.1} parent=5 // pred_check_branch
        %714 = sbr.rel (%p712) target = $region88
      $region87: #{tpu_custom_call.1} parent=5 // pred_region
        // Predicated region
        $region89: #{tpu_custom_call.1} parent=87 // pred_check
          %p715 = pneg %p74
        $region90: #{tpu_custom_call.1} parent=87 // pred_check_branch
          %717 = sbr.rel (%p715) target = $region92
        $region91: #{tpu_custom_call.1} parent=87 // pred_region
          %s718 = sand.u32 %s64, 1
          %s719 = scalar_lea.sflag [#allocation7], %s718
          %s720 = sand.u32 %s64, 1
          %s721 = smul.addr %s720, 4
          %s722 = scalar_lea.vmem [#allocation6], %s721
          %s724 = ssub.s32 64, 64
          %725 = vsyncadd %s719, %s724
          %s726 = smul.addr %s49, 64
          %s727 = scalar_lea.hbm %s0, %s726
          %s729 = sshll.u32 %s722, 4
          %s730 = int_to_ptr.vmem [resolvable:$true] %s729
          %732 = dma.hbm_to_vmem [thread:$0]  %s727, 64, %s730, %s719
        $region92: #{tpu_custom_call.1} parent=87 // pred_fallthru
          _
        // Predicated region
        $region93: #{tpu_custom_call.1} parent=87 // pred_check
          %p733 = pneg %p100
        $region94: #{tpu_custom_call.1} parent=87 // pred_check_branch
          %735 = sbr.rel (%p733) target = $region96
        $region95: #{tpu_custom_call.1} parent=87 // pred_region
          %p736 = scmp.lt.s32.totalorder %s49, 1
          %s737 = scalar_select %p736, %s49, 1
          %s738 = smul.addr %s737, 2
          %s739 = smul.addr %s738, 4
          %s740 = scalar_lea.vmem %s1, %s739
        $region96: #{tpu_custom_call.1} parent=87 // pred_fallthru
          _
      $region88: #{tpu_custom_call.1} parent=5 // pred_fallthru
        _
      %p741 = scmp.le.s32.totalorder 1, %s42
      %p742 = scmp.lt.s32.totalorder %s42, 3
      %p743 = pnand %p741, %p742
      %p744 = pneg %p743
      // Predicated region
      $region97: #{tpu_custom_call.1} parent=5 // pred_check
        _
      $region98: #{tpu_custom_call.1} parent=5 // pred_check_branch
        %746 = sbr.rel (%p743) target = $region100
      $region99: #{tpu_custom_call.1} parent=5 // pred_region
        %s747 = ssub.s32 %s42, 1
        %s748 = sand.u32 %s67, 1
        %s749 = scalar_lea.sflag [#allocation7], %s748
        %s750 = sand.u32 %s67, 1
        %s751 = smul.addr %s750, 4
        %s752 = scalar_lea.vmem [#allocation6], %s751
        // Predicated region
        $region101: #{tpu_custom_call.1} parent=99 // pred_check
          %p753 = pneg %p80
        $region102: #{tpu_custom_call.1} parent=99 // pred_check_branch
          %755 = sbr.rel (%p753) target = $region104
        $region103: #{tpu_custom_call.1} parent=99 // pred_region
          %756 = dma.done %s749, 64
        $region104: #{tpu_custom_call.1} parent=99 // pred_fallthru
          _
        // Predicated region
        $region105: #{tpu_custom_call.1} parent=99 // pred_check
          %p757 = pneg %p169
        $region106: #{tpu_custom_call.1} parent=99 // pred_check_branch
          %759 = sbr.rel (%p757) target = $region108
        $region107: #{tpu_custom_call.1} parent=99 // pred_region
          %760 = dma.done [#allocation10], 256
        $region108: #{tpu_custom_call.1} parent=99 // pred_fallthru
          _
        // Predicated region
        $region109: #{tpu_custom_call.1} parent=99 // pred_check
          %p761 = pneg %p190
        $region110: #{tpu_custom_call.1} parent=99 // pred_check_branch
          %763 = sbr.rel (%p761) target = $region112
        $region111: #{tpu_custom_call.1} parent=99 // pred_region
          %764 = dma.done [#allocation10], 256
        $region112: #{tpu_custom_call.1} parent=99 // pred_fallthru
          _
        // Predicated region
        $region113: #{tpu_custom_call.1} parent=99 // pred_check
          %p765 = pneg %p232
        $region114: #{tpu_custom_call.1} parent=99 // pred_check_branch
          %767 = sbr.rel (%p765) target = $region116
        $region115: #{tpu_custom_call.1} parent=99 // pred_region
          %768 = dma.done [#allocation13], 16
        $region116: #{tpu_custom_call.1} parent=99 // pred_fallthru
          _
        // Predicated region
        $region117: #{tpu_custom_call.1} parent=99 // pred_check
          %p769 = pneg %p253
        $region118: #{tpu_custom_call.1} parent=99 // pred_check_branch
          %771 = sbr.rel (%p769) target = $region120
        $region119: #{tpu_custom_call.1} parent=99 // pred_region
          %772 = dma.done [#allocation13], 256
        $region120: #{tpu_custom_call.1} parent=99 // pred_fallthru
          _
        // Predicated region
        $region121: #{tpu_custom_call.1} parent=99 // pred_check
          %p773 = pneg %p295
        $region122: #{tpu_custom_call.1} parent=99 // pred_check_branch
          %775 = sbr.rel (%p773) target = $region124
        $region123: #{tpu_custom_call.1} parent=99 // pred_region
          %776 = dma.done [#allocation16], 256
        $region124: #{tpu_custom_call.1} parent=99 // pred_fallthru
          _
        // Predicated region
        $region125: #{tpu_custom_call.1} parent=99 // pred_check
          %p777 = pneg %p316
        $region126: #{tpu_custom_call.1} parent=99 // pred_check_branch
          %779 = sbr.rel (%p777) target = $region128
        $region127: #{tpu_custom_call.1} parent=99 // pred_region
          %780 = dma.done [#allocation16], 256
        $region128: #{tpu_custom_call.1} parent=99 // pred_fallthru
          _
        // Predicated region
        $region129: #{tpu_custom_call.1} parent=99 // pred_check
          %p781 = pneg %p337
        $region130: #{tpu_custom_call.1} parent=99 // pred_check_branch
          %783 = sbr.rel (%p781) target = $region132
        $region131: #{tpu_custom_call.1} parent=99 // pred_region
          %784 = dma.done [#allocation19], 16
        $region132: #{tpu_custom_call.1} parent=99 // pred_fallthru
          _
        // Predicated region
        $region133: #{tpu_custom_call.1} parent=99 // pred_check
          %p785 = pneg %p358
        $region134: #{tpu_custom_call.1} parent=99 // pred_check_branch
          %787 = sbr.rel (%p785) target = $region136
        $region135: #{tpu_custom_call.1} parent=99 // pred_region
          %788 = dma.done [#allocation19], 16
        $region136: #{tpu_custom_call.1} parent=99 // pred_fallthru
          _
        %s789 = sand.u32 %s67, 1
        %s790 = scalar_lea.sflag [#allocation7], %s789
        %s791 = sand.u32 %s67, 1
        %s792 = smul.addr %s791, 4
        %s793 = scalar_lea.vmem [#allocation6], %s792
        %p794 = pneg %p80
        %p795 = pneg %p77
        %p796 = scmp.lt.s32.totalorder %s51, 1
        %s797 = scalar_select %p796, %s51, 1
        %s798 = smul.addr %s797, 2
        %s799 = smul.addr %s798, 4
        %s800 = scalar_lea.vmem %s1, %s799
        %p801 = pneg %p106
        %p802 = pneg %p103
        %p803 = pneg %p127
        %p804 = pneg %p124
        %p805 = pneg %p148
        %p806 = pneg %p145
        %p807 = pneg %p169
        %p808 = pneg %p166
        %p809 = pneg %p190
        %p810 = pneg %p187
        %p811 = pneg %p211
        %p812 = pneg %p208
        %p813 = pneg %p232
        %p814 = pneg %p229
        %p815 = pneg %p253
        %p816 = pneg %p250
        %p817 = pneg %p274
        %p818 = pneg %p271
        %p819 = pneg %p295
        %p820 = pneg %p292
        %p821 = pneg %p316
        %p822 = pneg %p313
        %p823 = pneg %p337
        %p824 = pneg %p334
        %p825 = pneg %p358
        %p826 = pneg %p355
        %p827 = pneg %p379
        %p828 = pneg %p376
        %p829 = pneg %p400
        %p830 = pneg %p397
        %p831 = pneg %p421
        %p832 = pneg %p418
        %p833 = pneg %p442
        %p834 = pneg %p439
        %p835 = pneg %p463
        %p836 = pneg %p460
        %p837 = pneg %p484
        %p838 = pneg %p481
        %p839 = pneg %p512
        %p840 = pneg %p509
        %s841 = sand.u32 %s499, 1
        %s842 = scalar_lea.sflag [#allocation8], %s841
        %s843 = sand.u32 %s499, 1
        %s844 = smul.addr %s843, 8
        %s845 = scalar_lea.vmem [#allocation21], %s844
        %p846 = pneg %p540
        %p847 = pneg %p537
        %s848 = sand.u32 %s47, 1
        %s849 = scalar_lea.sflag [#allocation23], %s848
        %s850 = sand.u32 %s527, 1
        %s851 = smul.addr %s850, 8
        %s852 = scalar_lea.vmem [#allocation22], %s851
        %p853 = pneg %p568
        %p854 = pneg %p565
        %s855 = sand.u32 %s47, 1
        %s856 = scalar_lea.sflag [#allocation23], %s855
        %s857 = sand.u32 %s555, 1
        %s858 = smul.addr %s857, 8
        %s859 = scalar_lea.vmem [#allocation24], %s858
        %p860 = scmp.lt.s32.totalorder %s51, 1
        %s861 = scalar_select %p860, %s51, 1
        %s862 = smul.addr %s861, 2
        %s863 = smul.addr %s862, 4
        %s864 = scalar_lea.vmem %s1, %s863
        %p866 = scmp.eq.s32.totalorder %s52, 0
        // Predicated region
        $region137: #{tpu_custom_call.1} parent=99 // pred_check
          %p867 = pneg %p866
        $region138: #{tpu_custom_call.1} parent=99 // pred_check_branch
          %869 = sbr.rel (%p867) target = $region140
        $region139: #{tpu_custom_call.1} parent=99 // pred_region
          %v870 = vld [vmem:[%s752] sm:$0xf]
          %v871 = vld [vmem:[%s864] sm:$0xf]
          %v872 = vld [vmem:[%s864 + $0x4] sm:$0xf]
          %v873 = vld [vmem:[%s3] sm:$0xf]
          %v874 = vld [vmem:[%s3 + $0x4] sm:$0xf]
          %v875 = vld [vmem:[%s3 + $0x8] sm:$0xf]
          %v876 = vld [vmem:[%s3 + $0xc] sm:$0xf]
          %v881 = vunpack.c.l.b16 %v873
          %v882 = vunpack.c.l.b16 %v874
          %v883 = vunpack.c.l.b16 %v875
          %v884 = vunpack.c.l.b16 %v876
          %v885 = vpack.c.b16 %v882, %v881
          %v886 = vpack.c.b16 %v884, %v883
          %vm889 = vcmask 261120
          %v891 = vsel %vm889, %v870, 0
          %893 = vmatprep.subr.bf16.mxu0 0
          %894 = vmatpush1.bf16.msra.mxu0 %v885
          %895 = vmatprep.subr.bf16.mxu0 0
          %896 = vmatpush1.bf16.msra.mxu0 %v886
          %897 = vmatprep.subr.bf16.mxu0 0
          %898 = vmatpush1.bf16.msra.mxu0 0
          %899 = vmatprep.subr.bf16.mxu0 0
          %900 = vmatpush1.bf16.msra.mxu0 0
          %901 = vmatprep.subr.bf16.mxu0 0
          %902 = vmatpush1.bf16.msra.mxu0 0
          %903 = vmatprep.subr.bf16.mxu0 0
          %904 = vmatpush1.bf16.msra.mxu0 0
          %905 = vmatprep.subr.bf16.mxu0 0
          %906 = vmatpush1.bf16.msra.mxu0 0
          %907 = vmatprep.subr.bf16.mxu0 0
          %908 = vmatpush1.bf16.msra.mxu0 0
          %909 = vmatprep.subr.bf16.mxu0 0
          %910 = vmatpush1.bf16.msra.mxu0 0
          %911 = vmatprep.subr.bf16.mxu0 0
          %912 = vmatpush1.bf16.msra.mxu0 0
          %913 = vmatprep.subr.bf16.mxu0 0
          %914 = vmatpush1.bf16.msra.mxu0 0
          %915 = vmatprep.subr.bf16.mxu0 0
          %916 = vmatpush1.bf16.msra.mxu0 0
          %917 = vmatprep.subr.bf16.mxu0 0
          %918 = vmatpush1.bf16.msra.mxu0 0
          %919 = vmatprep.subr.bf16.mxu0 0
          %920 = vmatpush1.bf16.msra.mxu0 0
          %921 = vmatprep.subr.bf16.mxu0 0
          %922 = vmatpush1.bf16.msra.mxu0 0
          %923 = vmatprep.subr.bf16.mxu0 0
          %924 = vmatpush1.bf16.msra.mxu0 0
          %925 = vmatprep.mubr.bf16.mxu0 0
          %926 = vmatmul.mubr.bf16.gmra.mrb[0].mxu0 %v891
          %v927 = vpop.f32.mrb[0].mxu0
          %v928 = vadd.f32 0.0, %v927
          %v929 = vpop.f32.mrb[0].mxu0
          %v930 = vpop.f32.mrb[0].mxu0
          %v931 = vpop.f32.mrb[0].mxu0
          %932 = vdwg.mxu0
          %v933 = vld [vmem:[#allocation9] sm:$0xf]
          %v934 = vld [vmem:[#allocation9 + $0x4] sm:$0xf]
          %v935 = vld [vmem:[#allocation9 + $0x8] sm:$0xf]
          %v936 = vld [vmem:[#allocation9 + $0xc] sm:$0xf]
          %v941 = vunpack.c.l.b16 %v933
          %v942 = vunpack.c.l.b16 %v934
          %v943 = vunpack.c.l.b16 %v935
          %v944 = vunpack.c.l.b16 %v936
          %v945 = vpack.c.b16 %v942, %v941
          %v946 = vpack.c.b16 %v944, %v943
          %949 = vmatprep.subr.bf16.mxu0 0
          %950 = vmatpush1.bf16.msra.mxu0 %v945
          %951 = vmatprep.subr.bf16.mxu0 0
          %952 = vmatpush1.bf16.msra.mxu0 %v946
          %953 = vmatprep.subr.bf16.mxu0 0
          %954 = vmatpush1.bf16.msra.mxu0 0
          %955 = vmatprep.subr.bf16.mxu0 0
          %956 = vmatpush1.bf16.msra.mxu0 0
          %957 = vmatprep.subr.bf16.mxu0 0
          %958 = vmatpush1.bf16.msra.mxu0 0
          %959 = vmatprep.subr.bf16.mxu0 0
          %960 = vmatpush1.bf16.msra.mxu0 0
          %961 = vmatprep.subr.bf16.mxu0 0
          %962 = vmatpush1.bf16.msra.mxu0 0
          %963 = vmatprep.subr.bf16.mxu0 0
          %964 = vmatpush1.bf16.msra.mxu0 0
          %965 = vmatprep.subr.bf16.mxu0 0
          %966 = vmatpush1.bf16.msra.mxu0 0
          %967 = vmatprep.subr.bf16.mxu0 0
          %968 = vmatpush1.bf16.msra.mxu0 0
          %969 = vmatprep.subr.bf16.mxu0 0
          %970 = vmatpush1.bf16.msra.mxu0 0
          %971 = vmatprep.subr.bf16.mxu0 0
          %972 = vmatpush1.bf16.msra.mxu0 0
          %973 = vmatprep.subr.bf16.mxu0 0
          %974 = vmatpush1.bf16.msra.mxu0 0
          %975 = vmatprep.subr.bf16.mxu0 0
          %976 = vmatpush1.bf16.msra.mxu0 0
          %977 = vmatprep.subr.bf16.mxu0 0
          %978 = vmatpush1.bf16.msra.mxu0 0
          %979 = vmatprep.subr.bf16.mxu0 0
          %980 = vmatpush1.bf16.msra.mxu0 0
          %981 = vmatprep.mubr.bf16.mxu0 0
          %982 = vmatmul.mubr.bf16.gmra.mrb[0].mxu0 %v891
          %v983 = vpop.f32.mrb[0].mxu0
          %v984 = vadd.f32 0.0, %v983
          %v985 = vpop.f32.mrb[0].mxu0
          %v986 = vpop.f32.mrb[0].mxu0
          %v987 = vpop.f32.mrb[0].mxu0
          %988 = vdwg.mxu0
          %v989 = vld [vmem:[%s9] sm:$0xf]
          %v990 = vld [vmem:[%s9 + $0x4] sm:$0xf]
          %v991 = vld [vmem:[%s9 + $0x8] sm:$0xf]
          %v992 = vld [vmem:[%s9 + $0xc] sm:$0xf]
          %v995 = vunpack.c.l.b16 %v871
          %v996 = vunpack.c.l.b16 %v872
          %v997 = vpack.c.b16 %v996, %v995
          %v1002 = vunpack.c.l.b16 %v989
          %v1003 = vunpack.c.l.b16 %v990
          %v1004 = vunpack.c.l.b16 %v991
          %v1005 = vunpack.c.l.b16 %v992
          %v1006 = vpack.c.b16 %v1003, %v1002
          %v1007 = vpack.c.b16 %v1005, %v1004
          %v1011 = vsel %vm889, %v997, 0
          %1013 = vmatprep.subr.bf16.mxu0 0
          %1014 = vmatpush1.bf16.msra.mxu0 %v1006
          %1015 = vmatprep.subr.bf16.mxu0 0
          %1016 = vmatpush1.bf16.msra.mxu0 %v1007
          %1017 = vmatprep.subr.bf16.mxu0 0
          %1018 = vmatpush1.bf16.msra.mxu0 0
          %1019 = vmatprep.subr.bf16.mxu0 0
          %1020 = vmatpush1.bf16.msra.mxu0 0
          %1021 = vmatprep.subr.bf16.mxu0 0
          %1022 = vmatpush1.bf16.msra.mxu0 0
          %1023 = vmatprep.subr.bf16.mxu0 0
          %1024 = vmatpush1.bf16.msra.mxu0 0
          %1025 = vmatprep.subr.bf16.mxu0 0
          %1026 = vmatpush1.bf16.msra.mxu0 0
          %1027 = vmatprep.subr.bf16.mxu0 0
          %1028 = vmatpush1.bf16.msra.mxu0 0
          %1029 = vmatprep.subr.bf16.mxu0 0
          %1030 = vmatpush1.bf16.msra.mxu0 0
          %1031 = vmatprep.subr.bf16.mxu0 0
          %1032 = vmatpush1.bf16.msra.mxu0 0
          %1033 = vmatprep.subr.bf16.mxu0 0
          %1034 = vmatpush1.bf16.msra.mxu0 0
          %1035 = vmatprep.subr.bf16.mxu0 0
          %1036 = vmatpush1.bf16.msra.mxu0 0
          %1037 = vmatprep.subr.bf16.mxu0 0
          %1038 = vmatpush1.bf16.msra.mxu0 0
          %1039 = vmatprep.subr.bf16.mxu0 0
          %1040 = vmatpush1.bf16.msra.mxu0 0
          %1041 = vmatprep.subr.bf16.mxu0 0
          %1042 = vmatpush1.bf16.msra.mxu0 0
          %1043 = vmatprep.subr.bf16.mxu0 0
          %1044 = vmatpush1.bf16.msra.mxu0 0
          %1045 = vmatprep.mubr.bf16.mxu0 0
          %1046 = vmatmul.mubr.bf16.gmra.mrb[0].mxu0 %v1011
          %v1047 = vpop.f32.mrb[0].mxu0
          %v1048 = vadd.f32 0.0, %v1047
          %v1049 = vpop.f32.mrb[0].mxu0
          %v1050 = vpop.f32.mrb[0].mxu0
          %v1051 = vadd.f32 0.0, %v1050
          %v1052 = vpop.f32.mrb[0].mxu0
          %1053 = vdwg.mxu0
          %v1054 = vld [vmem:[#allocation15] sm:$0xf]
          %v1055 = vld [vmem:[#allocation15 + $0x4] sm:$0xf]
          %v1056 = vld [vmem:[#allocation15 + $0x8] sm:$0xf]
          %v1057 = vld [vmem:[#allocation15 + $0xc] sm:$0xf]
          %v1062 = vunpack.c.l.b16 %v1054
          %v1063 = vunpack.c.l.b16 %v1055
          %v1064 = vunpack.c.l.b16 %v1056
          %v1065 = vunpack.c.l.b16 %v1057
          %v1066 = vpack.c.b16 %v1063, %v1062
          %v1067 = vpack.c.b16 %v1065, %v1064
          %1070 = vmatprep.subr.bf16.mxu0 0
          %1071 = vmatpush1.bf16.msra.mxu0 %v1066
          %1072 = vmatprep.subr.bf16.mxu0 0
          %1073 = vmatpush1.bf16.msra.mxu0 %v1067
          %1074 = vmatprep.subr.bf16.mxu0 0
          %1075 = vmatpush1.bf16.msra.mxu0 0
          %1076 = vmatprep.subr.bf16.mxu0 0
          %1077 = vmatpush1.bf16.msra.mxu0 0
          %1078 = vmatprep.subr.bf16.mxu0 0
          %1079 = vmatpush1.bf16.msra.mxu0 0
          %1080 = vmatprep.subr.bf16.mxu0 0
          %1081 = vmatpush1.bf16.msra.mxu0 0
          %1082 = vmatprep.subr.bf16.mxu0 0
          %1083 = vmatpush1.bf16.msra.mxu0 0
          %1084 = vmatprep.subr.bf16.mxu0 0
          %1085 = vmatpush1.bf16.msra.mxu0 0
          %1086 = vmatprep.subr.bf16.mxu0 0
          %1087 = vmatpush1.bf16.msra.mxu0 0
          %1088 = vmatprep.subr.bf16.mxu0 0
          %1089 = vmatpush1.bf16.msra.mxu0 0
          %1090 = vmatprep.subr.bf16.mxu0 0
          %1091 = vmatpush1.bf16.msra.mxu0 0
          %1092 = vmatprep.subr.bf16.mxu0 0
          %1093 = vmatpush1.bf16.msra.mxu0 0
          %1094 = vmatprep.subr.bf16.mxu0 0
          %1095 = vmatpush1.bf16.msra.mxu0 0
          %1096 = vmatprep.subr.bf16.mxu0 0
          %1097 = vmatpush1.bf16.msra.mxu0 0
          %1098 = vmatprep.subr.bf16.mxu0 0
          %1099 = vmatpush1.bf16.msra.mxu0 0
          %1100 = vmatprep.subr.bf16.mxu0 0
          %1101 = vmatpush1.bf16.msra.mxu0 0
          %1102 = vmatprep.mubr.bf16.mxu0 0
          %1103 = vmatmul.mubr.bf16.gmra.mrb[0].mxu0 %v1011
          %v1104 = vpop.f32.mrb[0].mxu0
          %v1105 = vadd.f32 0.0, %v1104
          %v1106 = vpop.f32.mrb[0].mxu0
          %v1107 = vpop.f32.mrb[0].mxu0
          %v1108 = vadd.f32 0.0, %v1107
          %v1109 = vpop.f32.mrb[0].mxu0
          %1110 = vdwg.mxu0
          %1112 = vrot.lane.b32.xlu0 %v928, 112
          %v1113 = vpop.permute.xlu0 %1112
          %v1115 = vcombine.high %v928, 0.0
          %v1117 = vunpack.c.l.s4 1983009808
          %v1118 = vunpack.c.0.s8 %v1117
          %v1119 = vlaneseq
          %v1120 = vshrl.u32 %v1119, 7
          %v1121 = vsub.s32 %v1118, %v1120
          %v1122 = vrot.slane %v928, %v1121
          %v1124 = vunpack.c.l.s4 1983009808
          %v1125 = vunpack.c.0.s8 %v1124
          %v1126 = vlaneseq
          %v1127 = vshrl.u32 %v1126, 7
          %v1128 = vsub.s32 %v1125, %v1127
          %v1129 = vrot.slane %v1115, %v1128
          %v1130 = vcombine.high %v1113, 0.0
          %v1132 = vunpack.c.l.s4 1983009808
          %v1133 = vunpack.c.0.s8 %v1132
          %v1134 = vlaneseq
          %v1135 = vshrl.u32 %v1134, 7
          %v1136 = vsub.s32 %v1133, %v1135
          %v1137 = vrot.slane %v1113, %v1136
          %v1139 = vunpack.c.l.s4 1983009808
          %v1140 = vunpack.c.0.s8 %v1139
          %v1141 = vlaneseq
          %v1142 = vshrl.u32 %v1141, 7
          %v1143 = vsub.s32 %v1140, %v1142
          %v1144 = vrot.slane %v1130, %v1143
          %v1145 = vcombine.low %v1122, %v1137
          %v1146 = vcombine.high %v1122, %v1137
          %v1148 = vunpack.c.l.s4 1934713408
          %v1149 = vunpack.c.0.s8 %v1148
          %v1150 = vlaneseq
          %v1151 = vshrl.u32 %v1150, 7
          %v1152 = vsub.s32 %v1149, %v1151
          %v1153 = vrot.slane %v1145, %v1152
          %v1155 = vunpack.c.l.s4 1934713408
          %v1156 = vunpack.c.0.s8 %v1155
          %v1157 = vlaneseq
          %v1158 = vshrl.u32 %v1157, 7
          %v1159 = vsub.s32 %v1156, %v1158
          %v1160 = vrot.slane %v1146, %v1159
          %v1161 = vcombine.low %v1129, %v1144
          %v1162 = vcombine.high %v1129, %v1144
          %v1164 = vunpack.c.l.s4 1934713408
          %v1165 = vunpack.c.0.s8 %v1164
          %v1166 = vlaneseq
          %v1167 = vshrl.u32 %v1166, 7
          %v1168 = vsub.s32 %v1165, %v1167
          %v1169 = vrot.slane %v1161, %v1168
          %v1171 = vunpack.c.l.s4 1934713408
          %v1172 = vunpack.c.0.s8 %v1171
          %v1173 = vlaneseq
          %v1174 = vshrl.u32 %v1173, 7
          %v1175 = vsub.s32 %v1172, %v1174
          %v1176 = vrot.slane %v1162, %v1175
          %v1177 = vcombine.high %v1153, 0.0
          %v1178 = vcombine.high %v1160, 0.0
          %v1179 = vcombine.high %v1169, 0.0
          %v1180 = vcombine.high %v1176, 0.0
          %v1181 = vcombine.low %v1153, %v1160
          %v1183 = vunpack.c.l.s4 1983009808
          %v1184 = vunpack.c.0.s8 %v1183
          %v1185 = vlaneseq
          %v1186 = vshrl.u32 %v1185, 7
          %v1187 = vsub.s32 %v1184, %v1186
          %v1188 = vrot.slane %v1181, %v1187
          %v1189 = vcombine.low %v1177, %v1178
          %v1191 = vunpack.c.l.s4 1983009808
          %v1192 = vunpack.c.0.s8 %v1191
          %v1193 = vlaneseq
          %v1194 = vshrl.u32 %v1193, 7
          %v1195 = vsub.s32 %v1192, %v1194
          %v1196 = vrot.slane %v1189, %v1195
          %v1197 = vcombine.low %v1169, %v1176
          %v1199 = vunpack.c.l.s4 1983009808
          %v1200 = vunpack.c.0.s8 %v1199
          %v1201 = vlaneseq
          %v1202 = vshrl.u32 %v1201, 7
          %v1203 = vsub.s32 %v1200, %v1202
          %v1204 = vrot.slane %v1197, %v1203
          %v1205 = vcombine.low %v1179, %v1180
          %v1207 = vunpack.c.l.s4 1983009808
          %v1208 = vunpack.c.0.s8 %v1207
          %v1209 = vlaneseq
          %v1210 = vshrl.u32 %v1209, 7
          %v1211 = vsub.s32 %v1208, %v1210
          %v1212 = vrot.slane %v1205, %v1211
          %v1213 = vcombine.low %v1188, %v1196
          %v1215 = vunpack.c.l.s4 1934713408
          %v1216 = vunpack.c.0.s8 %v1215
          %v1217 = vlaneseq
          %v1218 = vshrl.u32 %v1217, 7
          %v1219 = vsub.s32 %v1216, %v1218
          %v1220 = vrot.slane %v1213, %v1219
          %v1221 = vcombine.low %v1204, %v1212
          %v1223 = vunpack.c.l.s4 1934713408
          %v1224 = vunpack.c.0.s8 %v1223
          %v1225 = vlaneseq
          %v1226 = vshrl.u32 %v1225, 7
          %v1227 = vsub.s32 %v1224, %v1226
          %v1228 = vrot.slane %v1221, %v1227
          %v1229 = vcombine.low %v1220, %v1228
          %v1230 = vcombine.high %v1220, %v1228
          %v1231 = vpack.c.bf16 %v1229, %v1229
          %v1232 = vpack.c.bf16 %v1230, %v1230
          %vm1233 = vcmask 125952
          %1234 = vst.msk [vmem:[#allocation2] sm:$0xf] %vm1233, %v1231
          %1235 = vst.msk [vmem:[#allocation2 + $0x4] sm:$0xf] %vm1233, %v1232
          %1237 = vrot.lane.b32.xlu0 %v984, 112
          %v1238 = vpop.permute.xlu0 %1237
          %v1240 = vcombine.high %v984, 0.0
          %v1242 = vunpack.c.l.s4 1983009808
          %v1243 = vunpack.c.0.s8 %v1242
          %v1244 = vlaneseq
          %v1245 = vshrl.u32 %v1244, 7
          %v1246 = vsub.s32 %v1243, %v1245
          %v1247 = vrot.slane %v984, %v1246
          %v1249 = vunpack.c.l.s4 1983009808
          %v1250 = vunpack.c.0.s8 %v1249
          %v1251 = vlaneseq
          %v1252 = vshrl.u32 %v1251, 7
          %v1253 = vsub.s32 %v1250, %v1252
          %v1254 = vrot.slane %v1240, %v1253
          %v1255 = vcombine.high %v1238, 0.0
          %v1257 = vunpack.c.l.s4 1983009808
          %v1258 = vunpack.c.0.s8 %v1257
          %v1259 = vlaneseq
          %v1260 = vshrl.u32 %v1259, 7
          %v1261 = vsub.s32 %v1258, %v1260
          %v1262 = vrot.slane %v1238, %v1261
          %v1264 = vunpack.c.l.s4 1983009808
          %v1265 = vunpack.c.0.s8 %v1264
          %v1266 = vlaneseq
          %v1267 = vshrl.u32 %v1266, 7
          %v1268 = vsub.s32 %v1265, %v1267
          %v1269 = vrot.slane %v1255, %v1268
          %v1270 = vcombine.low %v1247, %v1262
          %v1271 = vcombine.high %v1247, %v1262
          %v1273 = vunpack.c.l.s4 1934713408
          %v1274 = vunpack.c.0.s8 %v1273
          %v1275 = vlaneseq
          %v1276 = vshrl.u32 %v1275, 7
          %v1277 = vsub.s32 %v1274, %v1276
          %v1278 = vrot.slane %v1270, %v1277
          %v1280 = vunpack.c.l.s4 1934713408
          %v1281 = vunpack.c.0.s8 %v1280
          %v1282 = vlaneseq
          %v1283 = vshrl.u32 %v1282, 7
          %v1284 = vsub.s32 %v1281, %v1283
          %v1285 = vrot.slane %v1271, %v1284
          %v1286 = vcombine.low %v1254, %v1269
          %v1287 = vcombine.high %v1254, %v1269
          %v1289 = vunpack.c.l.s4 1934713408
          %v1290 = vunpack.c.0.s8 %v1289
          %v1291 = vlaneseq
          %v1292 = vshrl.u32 %v1291, 7
          %v1293 = vsub.s32 %v1290, %v1292
          %v1294 = vrot.slane %v1286, %v1293
          %v1296 = vunpack.c.l.s4 1934713408
          %v1297 = vunpack.c.0.s8 %v1296
          %v1298 = vlaneseq
          %v1299 = vshrl.u32 %v1298, 7
          %v1300 = vsub.s32 %v1297, %v1299
          %v1301 = vrot.slane %v1287, %v1300
          %v1302 = vcombine.high %v1278, 0.0
          %v1303 = vcombine.high %v1285, 0.0
          %v1304 = vcombine.high %v1294, 0.0
          %v1305 = vcombine.high %v1301, 0.0
          %v1306 = vcombine.low %v1278, %v1285
          %v1308 = vunpack.c.l.s4 1983009808
          %v1309 = vunpack.c.0.s8 %v1308
          %v1310 = vlaneseq
          %v1311 = vshrl.u32 %v1310, 7
          %v1312 = vsub.s32 %v1309, %v1311
          %v1313 = vrot.slane %v1306, %v1312
          %v1314 = vcombine.low %v1302, %v1303
          %v1316 = vunpack.c.l.s4 1983009808
          %v1317 = vunpack.c.0.s8 %v1316
          %v1318 = vlaneseq
          %v1319 = vshrl.u32 %v1318, 7
          %v1320 = vsub.s32 %v1317, %v1319
          %v1321 = vrot.slane %v1314, %v1320
          %v1322 = vcombine.low %v1294, %v1301
          %v1324 = vunpack.c.l.s4 1983009808
          %v1325 = vunpack.c.0.s8 %v1324
          %v1326 = vlaneseq
          %v1327 = vshrl.u32 %v1326, 7
          %v1328 = vsub.s32 %v1325, %v1327
          %v1329 = vrot.slane %v1322, %v1328
          %v1330 = vcombine.low %v1304, %v1305
          %v1332 = vunpack.c.l.s4 1983009808
          %v1333 = vunpack.c.0.s8 %v1332
          %v1334 = vlaneseq
          %v1335 = vshrl.u32 %v1334, 7
          %v1336 = vsub.s32 %v1333, %v1335
          %v1337 = vrot.slane %v1330, %v1336
          %v1338 = vcombine.low %v1313, %v1321
          %v1340 = vunpack.c.l.s4 1934713408
          %v1341 = vunpack.c.0.s8 %v1340
          %v1342 = vlaneseq
          %v1343 = vshrl.u32 %v1342, 7
          %v1344 = vsub.s32 %v1341, %v1343
          %v1345 = vrot.slane %v1338, %v1344
          %v1346 = vcombine.low %v1329, %v1337
          %v1348 = vunpack.c.l.s4 1934713408
          %v1349 = vunpack.c.0.s8 %v1348
          %v1350 = vlaneseq
          %v1351 = vshrl.u32 %v1350, 7
          %v1352 = vsub.s32 %v1349, %v1351
          %v1353 = vrot.slane %v1346, %v1352
          %v1354 = vcombine.low %v1345, %v1353
          %v1355 = vcombine.high %v1345, %v1353
          %v1356 = vpack.c.bf16 %v1354, %v1354
          %v1357 = vpack.c.bf16 %v1355, %v1355
          %1358 = vst.msk [vmem:[#allocation3] sm:$0xf] %vm1233, %v1356
          %1359 = vst.msk [vmem:[#allocation3 + $0x4] sm:$0xf] %vm1233, %v1357
          %1362 = vrot.lane.b32.xlu0 %v1048, 112
          %v1363 = vpop.permute.xlu0 %1362
          %1364 = vrot.lane.b32.xlu0 %v1051, 112
          %v1365 = vpop.permute.xlu0 %1364
          %v1368 = vcombine.high %v1048, 0.0
          %v1370 = vunpack.c.l.s4 1983009808
          %v1371 = vunpack.c.0.s8 %v1370
          %v1372 = vlaneseq
          %v1373 = vshrl.u32 %v1372, 7
          %v1374 = vsub.s32 %v1371, %v1373
          %v1375 = vrot.slane %v1048, %v1374
          %v1377 = vunpack.c.l.s4 1983009808
          %v1378 = vunpack.c.0.s8 %v1377
          %v1379 = vlaneseq
          %v1380 = vshrl.u32 %v1379, 7
          %v1381 = vsub.s32 %v1378, %v1380
          %v1382 = vrot.slane %v1368, %v1381
          %v1383 = vcombine.high %v1363, 0.0
          %v1385 = vunpack.c.l.s4 1983009808
          %v1386 = vunpack.c.0.s8 %v1385
          %v1387 = vlaneseq
          %v1388 = vshrl.u32 %v1387, 7
          %v1389 = vsub.s32 %v1386, %v1388
          %v1390 = vrot.slane %v1363, %v1389
          %v1392 = vunpack.c.l.s4 1983009808
          %v1393 = vunpack.c.0.s8 %v1392
          %v1394 = vlaneseq
          %v1395 = vshrl.u32 %v1394, 7
          %v1396 = vsub.s32 %v1393, %v1395
          %v1397 = vrot.slane %v1383, %v1396
          %v1398 = vcombine.low %v1375, %v1390
          %v1399 = vcombine.high %v1375, %v1390
          %v1401 = vunpack.c.l.s4 1934713408
          %v1402 = vunpack.c.0.s8 %v1401
          %v1403 = vlaneseq
          %v1404 = vshrl.u32 %v1403, 7
          %v1405 = vsub.s32 %v1402, %v1404
          %v1406 = vrot.slane %v1398, %v1405
          %v1408 = vunpack.c.l.s4 1934713408
          %v1409 = vunpack.c.0.s8 %v1408
          %v1410 = vlaneseq
          %v1411 = vshrl.u32 %v1410, 7
          %v1412 = vsub.s32 %v1409, %v1411
          %v1413 = vrot.slane %v1399, %v1412
          %v1414 = vcombine.low %v1382, %v1397
          %v1415 = vcombine.high %v1382, %v1397
          %v1417 = vunpack.c.l.s4 1934713408
          %v1418 = vunpack.c.0.s8 %v1417
          %v1419 = vlaneseq
          %v1420 = vshrl.u32 %v1419, 7
          %v1421 = vsub.s32 %v1418, %v1420
          %v1422 = vrot.slane %v1414, %v1421
          %v1424 = vunpack.c.l.s4 1934713408
          %v1425 = vunpack.c.0.s8 %v1424
          %v1426 = vlaneseq
          %v1427 = vshrl.u32 %v1426, 7
          %v1428 = vsub.s32 %v1425, %v1427
          %v1429 = vrot.slane %v1415, %v1428
          %v1430 = vcombine.high %v1406, 0.0
          %v1431 = vcombine.high %v1413, 0.0
          %v1432 = vcombine.high %v1422, 0.0
          %v1433 = vcombine.high %v1429, 0.0
          %v1434 = vcombine.high %v1051, 0.0
          %v1436 = vunpack.c.l.s4 1983009808
          %v1437 = vunpack.c.0.s8 %v1436
          %v1438 = vlaneseq
          %v1439 = vshrl.u32 %v1438, 7
          %v1440 = vsub.s32 %v1437, %v1439
          %v1441 = vrot.slane %v1051, %v1440
          %v1443 = vunpack.c.l.s4 1983009808
          %v1444 = vunpack.c.0.s8 %v1443
          %v1445 = vlaneseq
          %v1446 = vshrl.u32 %v1445, 7
          %v1447 = vsub.s32 %v1444, %v1446
          %v1448 = vrot.slane %v1434, %v1447
          %v1449 = vcombine.high %v1365, 0.0
          %v1451 = vunpack.c.l.s4 1983009808
          %v1452 = vunpack.c.0.s8 %v1451
          %v1453 = vlaneseq
          %v1454 = vshrl.u32 %v1453, 7
          %v1455 = vsub.s32 %v1452, %v1454
          %v1456 = vrot.slane %v1365, %v1455
          %v1458 = vunpack.c.l.s4 1983009808
          %v1459 = vunpack.c.0.s8 %v1458
          %v1460 = vlaneseq
          %v1461 = vshrl.u32 %v1460, 7
          %v1462 = vsub.s32 %v1459, %v1461
          %v1463 = vrot.slane %v1449, %v1462
          %v1464 = vcombine.low %v1441, %v1456
          %v1465 = vcombine.high %v1441, %v1456
          %v1467 = vunpack.c.l.s4 1934713408
          %v1468 = vunpack.c.0.s8 %v1467
          %v1469 = vlaneseq
          %v1470 = vshrl.u32 %v1469, 7
          %v1471 = vsub.s32 %v1468, %v1470
          %v1472 = vrot.slane %v1464, %v1471
          %v1474 = vunpack.c.l.s4 1934713408
          %v1475 = vunpack.c.0.s8 %v1474
          %v1476 = vlaneseq
          %v1477 = vshrl.u32 %v1476, 7
          %v1478 = vsub.s32 %v1475, %v1477
          %v1479 = vrot.slane %v1465, %v1478
          %v1480 = vcombine.low %v1448, %v1463
          %v1481 = vcombine.high %v1448, %v1463
          %v1483 = vunpack.c.l.s4 1934713408
          %v1484 = vunpack.c.0.s8 %v1483
          %v1485 = vlaneseq
          %v1486 = vshrl.u32 %v1485, 7
          %v1487 = vsub.s32 %v1484, %v1486
          %v1488 = vrot.slane %v1480, %v1487
          %v1490 = vunpack.c.l.s4 1934713408
          %v1491 = vunpack.c.0.s8 %v1490
          %v1492 = vlaneseq
          %v1493 = vshrl.u32 %v1492, 7
          %v1494 = vsub.s32 %v1491, %v1493
          %v1495 = vrot.slane %v1481, %v1494
          %v1496 = vcombine.high %v1472, 0.0
          %v1497 = vcombine.high %v1479, 0.0
          %v1498 = vcombine.high %v1488, 0.0
          %v1499 = vcombine.high %v1495, 0.0
          %v1500 = vcombine.low %v1406, %v1413
          %v1502 = vunpack.c.l.s4 1983009808
          %v1503 = vunpack.c.0.s8 %v1502
          %v1504 = vlaneseq
          %v1505 = vshrl.u32 %v1504, 7
          %v1506 = vsub.s32 %v1503, %v1505
          %v1507 = vrot.slane %v1500, %v1506
          %v1508 = vcombine.low %v1430, %v1431
          %v1510 = vunpack.c.l.s4 1983009808
          %v1511 = vunpack.c.0.s8 %v1510
          %v1512 = vlaneseq
          %v1513 = vshrl.u32 %v1512, 7
          %v1514 = vsub.s32 %v1511, %v1513
          %v1515 = vrot.slane %v1508, %v1514
          %v1516 = vcombine.low %v1422, %v1429
          %v1518 = vunpack.c.l.s4 1983009808
          %v1519 = vunpack.c.0.s8 %v1518
          %v1520 = vlaneseq
          %v1521 = vshrl.u32 %v1520, 7
          %v1522 = vsub.s32 %v1519, %v1521
          %v1523 = vrot.slane %v1516, %v1522
          %v1524 = vcombine.low %v1432, %v1433
          %v1526 = vunpack.c.l.s4 1983009808
          %v1527 = vunpack.c.0.s8 %v1526
          %v1528 = vlaneseq
          %v1529 = vshrl.u32 %v1528, 7
          %v1530 = vsub.s32 %v1527, %v1529
          %v1531 = vrot.slane %v1524, %v1530
          %v1532 = vcombine.low %v1507, %v1515
          %v1534 = vunpack.c.l.s4 1934713408
          %v1535 = vunpack.c.0.s8 %v1534
          %v1536 = vlaneseq
          %v1537 = vshrl.u32 %v1536, 7
          %v1538 = vsub.s32 %v1535, %v1537
          %v1539 = vrot.slane %v1532, %v1538
          %v1540 = vcombine.low %v1523, %v1531
          %v1542 = vunpack.c.l.s4 1934713408
          %v1543 = vunpack.c.0.s8 %v1542
          %v1544 = vlaneseq
          %v1545 = vshrl.u32 %v1544, 7
          %v1546 = vsub.s32 %v1543, %v1545
          %v1547 = vrot.slane %v1540, %v1546
          %v1548 = vcombine.low %v1539, %v1547
          %v1549 = vcombine.high %v1539, %v1547
          %v1550 = vcombine.low %v1472, %v1479
          %v1552 = vunpack.c.l.s4 1983009808
          %v1553 = vunpack.c.0.s8 %v1552
          %v1554 = vlaneseq
          %v1555 = vshrl.u32 %v1554, 7
          %v1556 = vsub.s32 %v1553, %v1555
          %v1557 = vrot.slane %v1550, %v1556
          %v1558 = vcombine.low %v1496, %v1497
          %v1560 = vunpack.c.l.s4 1983009808
          %v1561 = vunpack.c.0.s8 %v1560
          %v1562 = vlaneseq
          %v1563 = vshrl.u32 %v1562, 7
          %v1564 = vsub.s32 %v1561, %v1563
          %v1565 = vrot.slane %v1558, %v1564
          %v1566 = vcombine.low %v1488, %v1495
          %v1568 = vunpack.c.l.s4 1983009808
          %v1569 = vunpack.c.0.s8 %v1568
          %v1570 = vlaneseq
          %v1571 = vshrl.u32 %v1570, 7
          %v1572 = vsub.s32 %v1569, %v1571
          %v1573 = vrot.slane %v1566, %v1572
          %v1574 = vcombine.low %v1498, %v1499
          %v1576 = vunpack.c.l.s4 1983009808
          %v1577 = vunpack.c.0.s8 %v1576
          %v1578 = vlaneseq
          %v1579 = vshrl.u32 %v1578, 7
          %v1580 = vsub.s32 %v1577, %v1579
          %v1581 = vrot.slane %v1574, %v1580
          %v1582 = vcombine.low %v1557, %v1565
          %v1584 = vunpack.c.l.s4 1934713408
          %v1585 = vunpack.c.0.s8 %v1584
          %v1586 = vlaneseq
          %v1587 = vshrl.u32 %v1586, 7
          %v1588 = vsub.s32 %v1585, %v1587
          %v1589 = vrot.slane %v1582, %v1588
          %v1590 = vcombine.low %v1573, %v1581
          %v1592 = vunpack.c.l.s4 1934713408
          %v1593 = vunpack.c.0.s8 %v1592
          %v1594 = vlaneseq
          %v1595 = vshrl.u32 %v1594, 7
          %v1596 = vsub.s32 %v1593, %v1595
          %v1597 = vrot.slane %v1590, %v1596
          %v1598 = vcombine.low %v1589, %v1597
          %v1599 = vcombine.high %v1589, %v1597
          %v1600 = vpack.c.bf16 %v1598, %v1548
          %v1601 = vpack.c.bf16 %v1599, %v1549
          %vm1602 = vcmask 130048
          %1603 = vst.msk [vmem:[#allocation4] sm:$0xff] %vm1602, %v1600
          %1604 = vst.msk [vmem:[#allocation4 + $0x8] sm:$0xff] %vm1602, %v1601
          %1607 = vrot.lane.b32.xlu0 %v1105, 112
          %v1608 = vpop.permute.xlu0 %1607
          %1609 = vrot.lane.b32.xlu0 %v1108, 112
          %v1610 = vpop.permute.xlu0 %1609
          %v1613 = vcombine.high %v1105, 0.0
          %v1615 = vunpack.c.l.s4 1983009808
          %v1616 = vunpack.c.0.s8 %v1615
          %v1617 = vlaneseq
          %v1618 = vshrl.u32 %v1617, 7
          %v1619 = vsub.s32 %v1616, %v1618
          %v1620 = vrot.slane %v1105, %v1619
          %v1622 = vunpack.c.l.s4 1983009808
          %v1623 = vunpack.c.0.s8 %v1622
          %v1624 = vlaneseq
          %v1625 = vshrl.u32 %v1624, 7
          %v1626 = vsub.s32 %v1623, %v1625
          %v1627 = vrot.slane %v1613, %v1626
          %v1628 = vcombine.high %v1608, 0.0
          %v1630 = vunpack.c.l.s4 1983009808
          %v1631 = vunpack.c.0.s8 %v1630
          %v1632 = vlaneseq
          %v1633 = vshrl.u32 %v1632, 7
          %v1634 = vsub.s32 %v1631, %v1633
          %v1635 = vrot.slane %v1608, %v1634
          %v1637 = vunpack.c.l.s4 1983009808
          %v1638 = vunpack.c.0.s8 %v1637
          %v1639 = vlaneseq
          %v1640 = vshrl.u32 %v1639, 7
          %v1641 = vsub.s32 %v1638, %v1640
          %v1642 = vrot.slane %v1628, %v1641
          %v1643 = vcombine.low %v1620, %v1635
          %v1644 = vcombine.high %v1620, %v1635
          %v1646 = vunpack.c.l.s4 1934713408
          %v1647 = vunpack.c.0.s8 %v1646
          %v1648 = vlaneseq
          %v1649 = vshrl.u32 %v1648, 7
          %v1650 = vsub.s32 %v1647, %v1649
          %v1651 = vrot.slane %v1643, %v1650
          %v1653 = vunpack.c.l.s4 1934713408
          %v1654 = vunpack.c.0.s8 %v1653
          %v1655 = vlaneseq
          %v1656 = vshrl.u32 %v1655, 7
          %v1657 = vsub.s32 %v1654, %v1656
          %v1658 = vrot.slane %v1644, %v1657
          %v1659 = vcombine.low %v1627, %v1642
          %v1660 = vcombine.high %v1627, %v1642
          %v1662 = vunpack.c.l.s4 1934713408
          %v1663 = vunpack.c.0.s8 %v1662
          %v1664 = vlaneseq
          %v1665 = vshrl.u32 %v1664, 7
          %v1666 = vsub.s32 %v1663, %v1665
          %v1667 = vrot.slane %v1659, %v1666
          %v1669 = vunpack.c.l.s4 1934713408
          %v1670 = vunpack.c.0.s8 %v1669
          %v1671 = vlaneseq
          %v1672 = vshrl.u32 %v1671, 7
          %v1673 = vsub.s32 %v1670, %v1672
          %v1674 = vrot.slane %v1660, %v1673
          %v1675 = vcombine.high %v1651, 0.0
          %v1676 = vcombine.high %v1658, 0.0
          %v1677 = vcombine.high %v1667, 0.0
          %v1678 = vcombine.high %v1674, 0.0
          %v1679 = vcombine.high %v1108, 0.0
          %v1681 = vunpack.c.l.s4 1983009808
          %v1682 = vunpack.c.0.s8 %v1681
          %v1683 = vlaneseq
          %v1684 = vshrl.u32 %v1683, 7
          %v1685 = vsub.s32 %v1682, %v1684
          %v1686 = vrot.slane %v1108, %v1685
          %v1688 = vunpack.c.l.s4 1983009808
          %v1689 = vunpack.c.0.s8 %v1688
          %v1690 = vlaneseq
          %v1691 = vshrl.u32 %v1690, 7
          %v1692 = vsub.s32 %v1689, %v1691
          %v1693 = vrot.slane %v1679, %v1692
          %v1694 = vcombine.high %v1610, 0.0
          %v1696 = vunpack.c.l.s4 1983009808
          %v1697 = vunpack.c.0.s8 %v1696
          %v1698 = vlaneseq
          %v1699 = vshrl.u32 %v1698, 7
          %v1700 = vsub.s32 %v1697, %v1699
          %v1701 = vrot.slane %v1610, %v1700
          %v1703 = vunpack.c.l.s4 1983009808
          %v1704 = vunpack.c.0.s8 %v1703
          %v1705 = vlaneseq
          %v1706 = vshrl.u32 %v1705, 7
          %v1707 = vsub.s32 %v1704, %v1706
          %v1708 = vrot.slane %v1694, %v1707
          %v1709 = vcombine.low %v1686, %v1701
          %v1710 = vcombine.high %v1686, %v1701
          %v1712 = vunpack.c.l.s4 1934713408
          %v1713 = vunpack.c.0.s8 %v1712
          %v1714 = vlaneseq
          %v1715 = vshrl.u32 %v1714, 7
          %v1716 = vsub.s32 %v1713, %v1715
          %v1717 = vrot.slane %v1709, %v1716
          %v1719 = vunpack.c.l.s4 1934713408
          %v1720 = vunpack.c.0.s8 %v1719
          %v1721 = vlaneseq
          %v1722 = vshrl.u32 %v1721, 7
          %v1723 = vsub.s32 %v1720, %v1722
          %v1724 = vrot.slane %v1710, %v1723
          %v1725 = vcombine.low %v1693, %v1708
          %v1726 = vcombine.high %v1693, %v1708
          %v1728 = vunpack.c.l.s4 1934713408
          %v1729 = vunpack.c.0.s8 %v1728
          %v1730 = vlaneseq
          %v1731 = vshrl.u32 %v1730, 7
          %v1732 = vsub.s32 %v1729, %v1731
          %v1733 = vrot.slane %v1725, %v1732
          %v1735 = vunpack.c.l.s4 1934713408
          %v1736 = vunpack.c.0.s8 %v1735
          %v1737 = vlaneseq
          %v1738 = vshrl.u32 %v1737, 7
          %v1739 = vsub.s32 %v1736, %v1738
          %v1740 = vrot.slane %v1726, %v1739
          %v1741 = vcombine.high %v1717, 0.0
          %v1742 = vcombine.high %v1724, 0.0
          %v1743 = vcombine.high %v1733, 0.0
          %v1744 = vcombine.high %v1740, 0.0
          %v1745 = vcombine.low %v1651, %v1658
          %v1747 = vunpack.c.l.s4 1983009808
          %v1748 = vunpack.c.0.s8 %v1747
          %v1749 = vlaneseq
          %v1750 = vshrl.u32 %v1749, 7
          %v1751 = vsub.s32 %v1748, %v1750
          %v1752 = vrot.slane %v1745, %v1751
          %v1753 = vcombine.low %v1675, %v1676
          %v1755 = vunpack.c.l.s4 1983009808
          %v1756 = vunpack.c.0.s8 %v1755
          %v1757 = vlaneseq
          %v1758 = vshrl.u32 %v1757, 7
          %v1759 = vsub.s32 %v1756, %v1758
          %v1760 = vrot.slane %v1753, %v1759
          %v1761 = vcombine.low %v1667, %v1674
          %v1763 = vunpack.c.l.s4 1983009808
          %v1764 = vunpack.c.0.s8 %v1763
          %v1765 = vlaneseq
          %v1766 = vshrl.u32 %v1765, 7
          %v1767 = vsub.s32 %v1764, %v1766
          %v1768 = vrot.slane %v1761, %v1767
          %v1769 = vcombine.low %v1677, %v1678
          %v1771 = vunpack.c.l.s4 1983009808
          %v1772 = vunpack.c.0.s8 %v1771
          %v1773 = vlaneseq
          %v1774 = vshrl.u32 %v1773, 7
          %v1775 = vsub.s32 %v1772, %v1774
          %v1776 = vrot.slane %v1769, %v1775
          %v1777 = vcombine.low %v1752, %v1760
          %v1779 = vunpack.c.l.s4 1934713408
          %v1780 = vunpack.c.0.s8 %v1779
          %v1781 = vlaneseq
          %v1782 = vshrl.u32 %v1781, 7
          %v1783 = vsub.s32 %v1780, %v1782
          %v1784 = vrot.slane %v1777, %v1783
          %v1785 = vcombine.low %v1768, %v1776
          %v1787 = vunpack.c.l.s4 1934713408
          %v1788 = vunpack.c.0.s8 %v1787
          %v1789 = vlaneseq
          %v1790 = vshrl.u32 %v1789, 7
          %v1791 = vsub.s32 %v1788, %v1790
          %v1792 = vrot.slane %v1785, %v1791
          %v1793 = vcombine.low %v1784, %v1792
          %v1794 = vcombine.high %v1784, %v1792
          %v1795 = vcombine.low %v1717, %v1724
          %v1797 = vunpack.c.l.s4 1983009808
          %v1798 = vunpack.c.0.s8 %v1797
          %v1799 = vlaneseq
          %v1800 = vshrl.u32 %v1799, 7
          %v1801 = vsub.s32 %v1798, %v1800
          %v1802 = vrot.slane %v1795, %v1801
          %v1803 = vcombine.low %v1741, %v1742
          %v1805 = vunpack.c.l.s4 1983009808
          %v1806 = vunpack.c.0.s8 %v1805
          %v1807 = vlaneseq
          %v1808 = vshrl.u32 %v1807, 7
          %v1809 = vsub.s32 %v1806, %v1808
          %v1810 = vrot.slane %v1803, %v1809
          %v1811 = vcombine.low %v1733, %v1740
          %v1813 = vunpack.c.l.s4 1983009808
          %v1814 = vunpack.c.0.s8 %v1813
          %v1815 = vlaneseq
          %v1816 = vshrl.u32 %v1815, 7
          %v1817 = vsub.s32 %v1814, %v1816
          %v1818 = vrot.slane %v1811, %v1817
          %v1819 = vcombine.low %v1743, %v1744
          %v1821 = vunpack.c.l.s4 1983009808
          %v1822 = vunpack.c.0.s8 %v1821
          %v1823 = vlaneseq
          %v1824 = vshrl.u32 %v1823, 7
          %v1825 = vsub.s32 %v1822, %v1824
          %v1826 = vrot.slane %v1819, %v1825
          %v1827 = vcombine.low %v1802, %v1810
          %v1829 = vunpack.c.l.s4 1934713408
          %v1830 = vunpack.c.0.s8 %v1829
          %v1831 = vlaneseq
          %v1832 = vshrl.u32 %v1831, 7
          %v1833 = vsub.s32 %v1830, %v1832
          %v1834 = vrot.slane %v1827, %v1833
          %v1835 = vcombine.low %v1818, %v1826
          %v1837 = vunpack.c.l.s4 1934713408
          %v1838 = vunpack.c.0.s8 %v1837
          %v1839 = vlaneseq
          %v1840 = vshrl.u32 %v1839, 7
          %v1841 = vsub.s32 %v1838, %v1840
          %v1842 = vrot.slane %v1835, %v1841
          %v1843 = vcombine.low %v1834, %v1842
          %v1844 = vcombine.high %v1834, %v1842
          %v1845 = vpack.c.bf16 %v1843, %v1793
          %v1846 = vpack.c.bf16 %v1844, %v1794
          %1847 = vst.msk [vmem:[#allocation5] sm:$0xff] %vm1602, %v1845
          %1848 = vst.msk [vmem:[#allocation5 + $0x8] sm:$0xff] %vm1602, %v1846
        $region140: #{tpu_custom_call.1} parent=99 // pred_fallthru
          _
        %s1849 = smul.u32 %s52, 8
        %s1850 = sshra.s32 %s1849, 3
        %s1851 = sand.u32 %s1849, 7
        %s1852 = smul.addr %s1850, 4
        %s1853 = scalar_lea.vmem %s752, %s1852 [#allocation6]
        %v1854 = vld [vmem:[%s1853] sm:$0xf]
        %v1855 = vunpack.c.l.bf16 %v1854
        %v1856 = vld [vmem:[#allocation2] sm:$0xf]
        %v1857 = vld [vmem:[#allocation2 + $0x4] sm:$0xf]
        %v1858 = vld [vmem:[#allocation3] sm:$0xf]
        %v1859 = vld [vmem:[#allocation3 + $0x4] sm:$0xf]
        %v1860 = vld [vmem:[%s2] sm:$0xf]
        %v1861 = vld [vmem:[%s2 + $0x4] sm:$0xf]
        %v1862 = vld [vmem:[%s2 + $0x8] sm:$0xf]
        %v1863 = vld [vmem:[%s2 + $0xc] sm:$0xf]
        %v1868 = vunpack.c.l.b16 %v1860
        %v1869 = vunpack.c.l.b16 %v1861
        %v1870 = vunpack.c.l.b16 %v1862
        %v1871 = vunpack.c.l.b16 %v1863
        %v1872 = vpack.c.b16 %v1869, %v1868
        %v1873 = vpack.c.b16 %v1871, %v1870
        %vm1876 = vcmask 261120
        %v1878 = vsel %vm1876, %v1854, 0
        %1880 = vmatprep.subr.bf16.mxu0 0
        %1881 = vmatpush1.bf16.msra.mxu0 %v1872
        %1882 = vmatprep.subr.bf16.mxu0 0
        %1883 = vmatpush1.bf16.msra.mxu0 %v1873
        %1884 = vmatprep.subr.bf16.mxu0 0
        %1885 = vmatpush1.bf16.msra.mxu0 0
        %1886 = vmatprep.subr.bf16.mxu0 0
        %1887 = vmatpush1.bf16.msra.mxu0 0
        %1888 = vmatprep.subr.bf16.mxu0 0
        %1889 = vmatpush1.bf16.msra.mxu0 0
        %1890 = vmatprep.subr.bf16.mxu0 0
        %1891 = vmatpush1.bf16.msra.mxu0 0
        %1892 = vmatprep.subr.bf16.mxu0 0
        %1893 = vmatpush1.bf16.msra.mxu0 0
        %1894 = vmatprep.subr.bf16.mxu0 0
        %1895 = vmatpush1.bf16.msra.mxu0 0
        %1896 = vmatprep.subr.bf16.mxu0 0
        %1897 = vmatpush1.bf16.msra.mxu0 0
        %1898 = vmatprep.subr.bf16.mxu0 0
        %1899 = vmatpush1.bf16.msra.mxu0 0
        %1900 = vmatprep.subr.bf16.mxu0 0
        %1901 = vmatpush1.bf16.msra.mxu0 0
        %1902 = vmatprep.subr.bf16.mxu0 0
        %1903 = vmatpush1.bf16.msra.mxu0 0
        %1904 = vmatprep.subr.bf16.mxu0 0
        %1905 = vmatpush1.bf16.msra.mxu0 0
        %1906 = vmatprep.subr.bf16.mxu0 0
        %1907 = vmatpush1.bf16.msra.mxu0 0
        %1908 = vmatprep.subr.bf16.mxu0 0
        %1909 = vmatpush1.bf16.msra.mxu0 0
        %1910 = vmatprep.subr.bf16.mxu0 0
        %1911 = vmatpush1.bf16.msra.mxu0 0
        %1912 = vmatprep.mubr.bf16.mxu0 0
        %1913 = vmatmul.mubr.bf16.gmra.mrb[0].mxu0 %v1878
        %v1914 = vpop.f32.mrb[0].mxu0
        %v1915 = vadd.f32 0.0, %v1914
        %v1916 = vpop.f32.mrb[0].mxu0
        %v1917 = vpop.f32.mrb[0].mxu0
        %v1918 = vpop.f32.mrb[0].mxu0
        %1919 = vdwg.mxu0
        %v1920 = vmul.f32 %v1915, 0.25
        %1922 = vrot.lane.b32.xlu0 %v1920, 112
        %v1923 = vpop.permute.xlu0 %1922
        %v1925 = vcombine.high %v1920, 0.0
        %v1927 = vunpack.c.l.s4 1983009808
        %v1928 = vunpack.c.0.s8 %v1927
        %v1929 = vlaneseq
        %v1930 = vshrl.u32 %v1929, 7
        %v1931 = vsub.s32 %v1928, %v1930
        %v1932 = vrot.slane %v1920, %v1931
        %v1934 = vunpack.c.l.s4 1983009808
        %v1935 = vunpack.c.0.s8 %v1934
        %v1936 = vlaneseq
        %v1937 = vshrl.u32 %v1936, 7
        %v1938 = vsub.s32 %v1935, %v1937
        %v1939 = vrot.slane %v1925, %v1938
        %v1940 = vcombine.high %v1923, 0.0
        %v1942 = vunpack.c.l.s4 1983009808
        %v1943 = vunpack.c.0.s8 %v1942
        %v1944 = vlaneseq
        %v1945 = vshrl.u32 %v1944, 7
        %v1946 = vsub.s32 %v1943, %v1945
        %v1947 = vrot.slane %v1923, %v1946
        %v1949 = vunpack.c.l.s4 1983009808
        %v1950 = vunpack.c.0.s8 %v1949
        %v1951 = vlaneseq
        %v1952 = vshrl.u32 %v1951, 7
        %v1953 = vsub.s32 %v1950, %v1952
        %v1954 = vrot.slane %v1940, %v1953
        %v1955 = vcombine.low %v1932, %v1947
        %v1956 = vcombine.high %v1932, %v1947
        %v1958 = vunpack.c.l.s4 1934713408
        %v1959 = vunpack.c.0.s8 %v1958
        %v1960 = vlaneseq
        %v1961 = vshrl.u32 %v1960, 7
        %v1962 = vsub.s32 %v1959, %v1961
        %v1963 = vrot.slane %v1955, %v1962
        %v1965 = vunpack.c.l.s4 1934713408
        %v1966 = vunpack.c.0.s8 %v1965
        %v1967 = vlaneseq
        %v1968 = vshrl.u32 %v1967, 7
        %v1969 = vsub.s32 %v1966, %v1968
        %v1970 = vrot.slane %v1956, %v1969
        %v1971 = vcombine.low %v1939, %v1954
        %v1972 = vcombine.high %v1939, %v1954
        %v1974 = vunpack.c.l.s4 1934713408
        %v1975 = vunpack.c.0.s8 %v1974
        %v1976 = vlaneseq
        %v1977 = vshrl.u32 %v1976, 7
        %v1978 = vsub.s32 %v1975, %v1977
        %v1979 = vrot.slane %v1971, %v1978
        %v1981 = vunpack.c.l.s4 1934713408
        %v1982 = vunpack.c.0.s8 %v1981
        %v1983 = vlaneseq
        %v1984 = vshrl.u32 %v1983, 7
        %v1985 = vsub.s32 %v1982, %v1984
        %v1986 = vrot.slane %v1972, %v1985
        %v1987 = vcombine.high %v1963, 0.0
        %v1988 = vcombine.high %v1970, 0.0
        %v1989 = vcombine.high %v1979, 0.0
        %v1990 = vcombine.high %v1986, 0.0
        %v1991 = vcombine.low %v1963, %v1970
        %v1993 = vunpack.c.l.s4 1983009808
        %v1994 = vunpack.c.0.s8 %v1993
        %v1995 = vlaneseq
        %v1996 = vshrl.u32 %v1995, 7
        %v1997 = vsub.s32 %v1994, %v1996
        %v1998 = vrot.slane %v1991, %v1997
        %v1999 = vcombine.low %v1987, %v1988
        %v2001 = vunpack.c.l.s4 1983009808
        %v2002 = vunpack.c.0.s8 %v2001
        %v2003 = vlaneseq
        %v2004 = vshrl.u32 %v2003, 7
        %v2005 = vsub.s32 %v2002, %v2004
        %v2006 = vrot.slane %v1999, %v2005
        %v2007 = vcombine.low %v1979, %v1986
        %v2009 = vunpack.c.l.s4 1983009808
        %v2010 = vunpack.c.0.s8 %v2009
        %v2011 = vlaneseq
        %v2012 = vshrl.u32 %v2011, 7
        %v2013 = vsub.s32 %v2010, %v2012
        %v2014 = vrot.slane %v2007, %v2013
        %v2015 = vcombine.low %v1989, %v1990
        %v2017 = vunpack.c.l.s4 1983009808
        %v2018 = vunpack.c.0.s8 %v2017
        %v2019 = vlaneseq
        %v2020 = vshrl.u32 %v2019, 7
        %v2021 = vsub.s32 %v2018, %v2020
        %v2022 = vrot.slane %v2015, %v2021
        %v2023 = vcombine.low %v1998, %v2006
        %v2025 = vunpack.c.l.s4 1934713408
        %v2026 = vunpack.c.0.s8 %v2025
        %v2027 = vlaneseq
        %v2028 = vshrl.u32 %v2027, 7
        %v2029 = vsub.s32 %v2026, %v2028
        %v2030 = vrot.slane %v2023, %v2029
        %v2031 = vcombine.low %v2014, %v2022
        %v2033 = vunpack.c.l.s4 1934713408
        %v2034 = vunpack.c.0.s8 %v2033
        %v2035 = vlaneseq
        %v2036 = vshrl.u32 %v2035, 7
        %v2037 = vsub.s32 %v2034, %v2036
        %v2038 = vrot.slane %v2031, %v2037
        %v2039 = vcombine.low %v2030, %v2038
        %v2040 = vcombine.high %v2030, %v2038
        %v2041 = vpack.c.bf16 %v2039, %v2039
        %v2042 = vpack.c.bf16 %v2040, %v2040
        %vm2043 = vcmask 130048
        %v2045 = vsel %vm2043, %v2041, 0
        %v2048 = vsel %vm2043, %v1856, 0
        %2050 = vmatprep.subr.bf16.mxu0 0
        %2051 = vmatpush1.bf16.xpose.msra.mxu0 %v2048
        %2052 = vmatprep.subr.bf16.mxu0 0
        %2053 = vmatpush1.bf16.xpose.msra.mxu0 0
        %2054 = vmatprep.subr.bf16.mxu0 0
        %2055 = vmatpush1.bf16.xpose.msra.mxu0 0
        %2056 = vmatprep.subr.bf16.mxu0 0
        %2057 = vmatpush1.bf16.xpose.msra.mxu0 0
        %2058 = vmatprep.subr.bf16.mxu0 0
        %2059 = vmatpush1.bf16.xpose.msra.mxu0 0
        %2060 = vmatprep.subr.bf16.mxu0 0
        %2061 = vmatpush1.bf16.xpose.msra.mxu0 0
        %2062 = vmatprep.subr.bf16.mxu0 0
        %2063 = vmatpush1.bf16.xpose.msra.mxu0 0
        %2064 = vmatprep.subr.bf16.mxu0 0
        %2065 = vmatpush1.bf16.xpose.msra.mxu0 0
        %2066 = vmatprep.subr.bf16.mxu0 0
        %2067 = vmatpush1.bf16.xpose.msra.mxu0 0
        %2068 = vmatprep.subr.bf16.mxu0 0
        %2069 = vmatpush1.bf16.xpose.msra.mxu0 0
        %2070 = vmatprep.subr.bf16.mxu0 0
        %2071 = vmatpush1.bf16.xpose.msra.mxu0 0
        %2072 = vmatprep.subr.bf16.mxu0 0
        %2073 = vmatpush1.bf16.xpose.msra.mxu0 0
        %2074 = vmatprep.subr.bf16.mxu0 0
        %2075 = vmatpush1.bf16.xpose.msra.mxu0 0
        %2076 = vmatprep.subr.bf16.mxu0 0
        %2077 = vmatpush1.bf16.xpose.msra.mxu0 0
        %2078 = vmatprep.subr.bf16.mxu0 0
        %2079 = vmatpush1.bf16.xpose.msra.mxu0 0
        %2080 = vmatprep.subr.bf16.mxu0 0
        %2081 = vmatpush1.bf16.xpose.msra.mxu0 0
        %2082 = vmatprep.mubr.bf16.mxu0 0
        %2083 = vmatmul.mubr.bf16.gmra.mrb[0].mxu0 %v2045
        %v2084 = vpop.f32.mrb[0].mxu0
        %v2085 = vadd.f32 0.0, %v2084
        %v2086 = vpop.f32.mrb[0].mxu0
        %v2087 = vpop.f32.mrb[0].mxu0
        %v2088 = vpop.f32.mrb[0].mxu0
        %2089 = vdwg.mxu0
        %v2091 = vsel %vm2043, %v2042, 0
        %v2094 = vsel %vm2043, %v1857, 0
        %2096 = vmatprep.subr.bf16.mxu0 0
        %2097 = vmatpush1.bf16.xpose.msra.mxu0 %v2094
        %2098 = vmatprep.subr.bf16.mxu0 0
        %2099 = vmatpush1.bf16.xpose.msra.mxu0 0
        %2100 = vmatprep.subr.bf16.mxu0 0
        %2101 = vmatpush1.bf16.xpose.msra.mxu0 0
        %2102 = vmatprep.subr.bf16.mxu0 0
        %2103 = vmatpush1.bf16.xpose.msra.mxu0 0
        %2104 = vmatprep.subr.bf16.mxu0 0
        %2105 = vmatpush1.bf16.xpose.msra.mxu0 0
        %2106 = vmatprep.subr.bf16.mxu0 0
        %2107 = vmatpush1.bf16.xpose.msra.mxu0 0
        %2108 = vmatprep.subr.bf16.mxu0 0
        %2109 = vmatpush1.bf16.xpose.msra.mxu0 0
        %2110 = vmatprep.subr.bf16.mxu0 0
        %2111 = vmatpush1.bf16.xpose.msra.mxu0 0
        %2112 = vmatprep.subr.bf16.mxu0 0
        %2113 = vmatpush1.bf16.xpose.msra.mxu0 0
        %2114 = vmatprep.subr.bf16.mxu0 0
        %2115 = vmatpush1.bf16.xpose.msra.mxu0 0
        %2116 = vmatprep.subr.bf16.mxu0 0
        %2117 = vmatpush1.bf16.xpose.msra.mxu0 0
        %2118 = vmatprep.subr.bf16.mxu0 0
        %2119 = vmatpush1.bf16.xpose.msra.mxu0 0
        %2120 = vmatprep.subr.bf16.mxu0 0
        %2121 = vmatpush1.bf16.xpose.msra.mxu0 0
        %2122 = vmatprep.subr.bf16.mxu0 0
        %2123 = vmatpush1.bf16.xpose.msra.mxu0 0
        %2124 = vmatprep.subr.bf16.mxu0 0
        %2125 = vmatpush1.bf16.xpose.msra.mxu0 0
        %2126 = vmatprep.subr.bf16.mxu0 0
        %2127 = vmatpush1.bf16.xpose.msra.mxu0 0
        %2128 = vmatprep.mubr.bf16.mxu0 0
        %2129 = vmatmul.mubr.bf16.gmra.mrb[0].mxu0 %v2091
        %v2130 = vpop.f32.mrb[0].mxu0
        %v2131 = vadd.f32 0.0, %v2130
        %v2132 = vpop.f32.mrb[0].mxu0
        %v2133 = vpop.f32.mrb[0].mxu0
        %v2134 = vpop.f32.mrb[0].mxu0
        %2135 = vdwg.mxu0
        %vm2136 = vcmask 64512
        %v2137 = vsel %vm2136, %v2085, -inf
        %2138 = vmax.xlane.f32.xlu0 %v2137
        %v2139 = vpop.xlane.xlu0 %2138
        %v2140 = vsel %vm2136, %v2131, -inf
        %2141 = vmax.xlane.f32.xlu0 %v2140
        %v2142 = vpop.xlane.xlu0 %2141
        %v2143 = vsub.f32 %v2085, %v2139
        %v2144 = vsub.f32 %v2131, %v2142
        %v2145 = vmul.f32 %v2143, 1.442695
        %v2146 = vpow.pop %v2145
        %v2147 = vmul.f32 %v2144, 1.442695
        %v2148 = vpow.pop %v2147
        %v2149 = vsel %vm2136, %v2146, 0.0
        %2150 = vadd.xlane.f32.xlu0 %v2149
        %v2151 = vpop.xlane.xlu0 %2150
        %v2152 = vsel %vm2136, %v2148, 0.0
        %2153 = vadd.xlane.f32.xlu0 %v2152
        %v2154 = vpop.xlane.xlu0 %2153
        %v2155 = vrcp.pop %v2151
        %v2156 = vrcp.pop %v2154
        %v2157 = vmul.f32 %v2146, %v2155
        %v2158 = vmul.f32 %v2148, %v2156
        %v2159 = vpack.c.bf16 %v2157, %v2157
        %v2160 = vpack.c.bf16 %v2158, %v2158
        %vm2161 = vcmask 60416
        %2162 = vst.msk [vmem:[%s852] sm:$0xf] %vm2161, %v2159
        %2163 = vst.msk [vmem:[%s852 + $0x4] sm:$0xf] %vm2161, %v2160
        %v2165 = vsel %vm2136, %v2159, 0
        %vm2167 = vcmask 1043456
        %v2169 = vsel %vm2167, %v1858, 0
        %2171 = vmatprep.subr.bf16.mxu0 0
        %2172 = vmatpush1.bf16.msra.mxu0 %v2169
        %2173 = vmatprep.subr.bf16.mxu0 0
        %2174 = vmatpush1.bf16.msra.mxu0 0
        %2175 = vmatprep.subr.bf16.mxu0 0
        %2176 = vmatpush1.bf16.msra.mxu0 0
        %2177 = vmatprep.subr.bf16.mxu0 0
        %2178 = vmatpush1.bf16.msra.mxu0 0
        %2179 = vmatprep.subr.bf16.mxu0 0
        %2180 = vmatpush1.bf16.msra.mxu0 0
        %2181 = vmatprep.subr.bf16.mxu0 0
        %2182 = vmatpush1.bf16.msra.mxu0 0
        %2183 = vmatprep.subr.bf16.mxu0 0
        %2184 = vmatpush1.bf16.msra.mxu0 0
        %2185 = vmatprep.subr.bf16.mxu0 0
        %2186 = vmatpush1.bf16.msra.mxu0 0
        %2187 = vmatprep.subr.bf16.mxu0 0
        %2188 = vmatpush1.bf16.msra.mxu0 0
        %2189 = vmatprep.subr.bf16.mxu0 0
        %2190 = vmatpush1.bf16.msra.mxu0 0
        %2191 = vmatprep.subr.bf16.mxu0 0
        %2192 = vmatpush1.bf16.msra.mxu0 0
        %2193 = vmatprep.subr.bf16.mxu0 0
        %2194 = vmatpush1.bf16.msra.mxu0 0
        %2195 = vmatprep.subr.bf16.mxu0 0
        %2196 = vmatpush1.bf16.msra.mxu0 0
        %2197 = vmatprep.subr.bf16.mxu0 0
        %2198 = vmatpush1.bf16.msra.mxu0 0
        %2199 = vmatprep.subr.bf16.mxu0 0
        %2200 = vmatpush1.bf16.msra.mxu0 0
        %2201 = vmatprep.subr.bf16.mxu0 0
        %2202 = vmatpush1.bf16.msra.mxu0 0
        %2203 = vmatprep.mubr.bf16.mxu0 0
        %2204 = vmatmul.mubr.bf16.gmra.mrb[0].mxu0 %v2165
        %v2205 = vpop.f32.mrb[0].mxu0
        %v2206 = vadd.f32 0.0, %v2205
        %v2207 = vpop.f32.mrb[0].mxu0
        %v2208 = vpop.f32.mrb[0].mxu0
        %v2209 = vpop.f32.mrb[0].mxu0
        %2210 = vdwg.mxu0
        %v2212 = vsel %vm2136, %v2160, 0
        %v2215 = vsel %vm2167, %v1859, 0
        %2217 = vmatprep.subr.bf16.mxu0 0
        %2218 = vmatpush1.bf16.msra.mxu0 %v2215
        %2219 = vmatprep.subr.bf16.mxu0 0
        %2220 = vmatpush1.bf16.msra.mxu0 0
        %2221 = vmatprep.subr.bf16.mxu0 0
        %2222 = vmatpush1.bf16.msra.mxu0 0
        %2223 = vmatprep.subr.bf16.mxu0 0
        %2224 = vmatpush1.bf16.msra.mxu0 0
        %2225 = vmatprep.subr.bf16.mxu0 0
        %2226 = vmatpush1.bf16.msra.mxu0 0
        %2227 = vmatprep.subr.bf16.mxu0 0
        %2228 = vmatpush1.bf16.msra.mxu0 0
        %2229 = vmatprep.subr.bf16.mxu0 0
        %2230 = vmatpush1.bf16.msra.mxu0 0
        %2231 = vmatprep.subr.bf16.mxu0 0
        %2232 = vmatpush1.bf16.msra.mxu0 0
        %2233 = vmatprep.subr.bf16.mxu0 0
        %2234 = vmatpush1.bf16.msra.mxu0 0
        %2235 = vmatprep.subr.bf16.mxu0 0
        %2236 = vmatpush1.bf16.msra.mxu0 0
        %2237 = vmatprep.subr.bf16.mxu0 0
        %2238 = vmatpush1.bf16.msra.mxu0 0
        %2239 = vmatprep.subr.bf16.mxu0 0
        %2240 = vmatpush1.bf16.msra.mxu0 0
        %2241 = vmatprep.subr.bf16.mxu0 0
        %2242 = vmatpush1.bf16.msra.mxu0 0
        %2243 = vmatprep.subr.bf16.mxu0 0
        %2244 = vmatpush1.bf16.msra.mxu0 0
        %2245 = vmatprep.subr.bf16.mxu0 0
        %2246 = vmatpush1.bf16.msra.mxu0 0
        %2247 = vmatprep.subr.bf16.mxu0 0
        %2248 = vmatpush1.bf16.msra.mxu0 0
        %2249 = vmatprep.mubr.bf16.mxu0 0
        %2250 = vmatmul.mubr.bf16.gmra.mrb[0].mxu0 %v2212
        %v2251 = vpop.f32.mrb[0].mxu0
        %v2252 = vadd.f32 0.0, %v2251
        %v2253 = vpop.f32.mrb[0].mxu0
        %v2254 = vpop.f32.mrb[0].mxu0
        %v2255 = vpop.f32.mrb[0].mxu0
        %2256 = vdwg.mxu0
        %v2257 = vcombine.high %v2206, 0.0
        %v2259 = vunpack.c.l.s4 1983009808
        %v2260 = vunpack.c.0.s8 %v2259
        %v2261 = vlaneseq
        %v2262 = vshrl.u32 %v2261, 7
        %v2263 = vsub.s32 %v2260, %v2262
        %v2264 = vrot.slane %v2206, %v2263
        %v2266 = vunpack.c.l.s4 1983009808
        %v2267 = vunpack.c.0.s8 %v2266
        %v2268 = vlaneseq
        %v2269 = vshrl.u32 %v2268, 7
        %v2270 = vsub.s32 %v2267, %v2269
        %v2271 = vrot.slane %v2257, %v2270
        %v2272 = vcombine.high %v2252, 0.0
        %v2274 = vunpack.c.l.s4 1983009808
        %v2275 = vunpack.c.0.s8 %v2274
        %v2276 = vlaneseq
        %v2277 = vshrl.u32 %v2276, 7
        %v2278 = vsub.s32 %v2275, %v2277
        %v2279 = vrot.slane %v2252, %v2278
        %v2281 = vunpack.c.l.s4 1983009808
        %v2282 = vunpack.c.0.s8 %v2281
        %v2283 = vlaneseq
        %v2284 = vshrl.u32 %v2283, 7
        %v2285 = vsub.s32 %v2282, %v2284
        %v2286 = vrot.slane %v2272, %v2285
        %v2287 = vcombine.low %v2264, %v2279
        %v2288 = vcombine.high %v2264, %v2279
        %v2290 = vunpack.c.l.s4 1934713408
        %v2291 = vunpack.c.0.s8 %v2290
        %v2292 = vlaneseq
        %v2293 = vshrl.u32 %v2292, 7
        %v2294 = vsub.s32 %v2291, %v2293
        %v2295 = vrot.slane %v2287, %v2294
        %v2297 = vunpack.c.l.s4 1934713408
        %v2298 = vunpack.c.0.s8 %v2297
        %v2299 = vlaneseq
        %v2300 = vshrl.u32 %v2299, 7
        %v2301 = vsub.s32 %v2298, %v2300
        %v2302 = vrot.slane %v2288, %v2301
        %v2303 = vcombine.low %v2271, %v2286
        %v2304 = vcombine.high %v2271, %v2286
        %v2306 = vunpack.c.l.s4 1934713408
        %v2307 = vunpack.c.0.s8 %v2306
        %v2308 = vlaneseq
        %v2309 = vshrl.u32 %v2308, 7
        %v2310 = vsub.s32 %v2307, %v2309
        %v2311 = vrot.slane %v2303, %v2310
        %v2313 = vunpack.c.l.s4 1934713408
        %v2314 = vunpack.c.0.s8 %v2313
        %v2315 = vlaneseq
        %v2316 = vshrl.u32 %v2315, 7
        %v2317 = vsub.s32 %v2314, %v2316
        %v2318 = vrot.slane %v2304, %v2317
        %v2319 = vcombine.high %v2295, 0.0
        %v2320 = vcombine.high %v2302, 0.0
        %v2321 = vcombine.high %v2311, 0.0
        %v2322 = vcombine.high %v2318, 0.0
        %v2323 = vcombine.low %v2295, %v2302
        %v2325 = vunpack.c.l.s4 1983009808
        %v2326 = vunpack.c.0.s8 %v2325
        %v2327 = vlaneseq
        %v2328 = vshrl.u32 %v2327, 7
        %v2329 = vsub.s32 %v2326, %v2328
        %v2330 = vrot.slane %v2323, %v2329
        %v2331 = vcombine.low %v2319, %v2320
        %v2333 = vunpack.c.l.s4 1983009808
        %v2334 = vunpack.c.0.s8 %v2333
        %v2335 = vlaneseq
        %v2336 = vshrl.u32 %v2335, 7
        %v2337 = vsub.s32 %v2334, %v2336
        %v2338 = vrot.slane %v2331, %v2337
        %v2339 = vcombine.low %v2311, %v2318
        %v2341 = vunpack.c.l.s4 1983009808
        %v2342 = vunpack.c.0.s8 %v2341
        %v2343 = vlaneseq
        %v2344 = vshrl.u32 %v2343, 7
        %v2345 = vsub.s32 %v2342, %v2344
        %v2346 = vrot.slane %v2339, %v2345
        %v2347 = vcombine.low %v2321, %v2322
        %v2349 = vunpack.c.l.s4 1983009808
        %v2350 = vunpack.c.0.s8 %v2349
        %v2351 = vlaneseq
        %v2352 = vshrl.u32 %v2351, 7
        %v2353 = vsub.s32 %v2350, %v2352
        %v2354 = vrot.slane %v2347, %v2353
        %v2355 = vcombine.low %v2330, %v2338
        %v2357 = vunpack.c.l.s4 1934713408
        %v2358 = vunpack.c.0.s8 %v2357
        %v2359 = vlaneseq
        %v2360 = vshrl.u32 %v2359, 7
        %v2361 = vsub.s32 %v2358, %v2360
        %v2362 = vrot.slane %v2355, %v2361
        %v2363 = vcombine.low %v2346, %v2354
        %v2365 = vunpack.c.l.s4 1934713408
        %v2366 = vunpack.c.0.s8 %v2365
        %v2367 = vlaneseq
        %v2368 = vshrl.u32 %v2367, 7
        %v2369 = vsub.s32 %v2366, %v2368
        %v2370 = vrot.slane %v2363, %v2369
        %v2371 = vcombine.low %v2362, %v2370
        %v2372 = vcombine.high %v2362, %v2370
        %2374 = vrot.lane.b32.xlu0 %v2372, 16
        %v2375 = vpop.permute.xlu0 %2374
        %v2377 = vsel %vm2043, %v2371, %v2375
        %v2378 = vpack.c.bf16 %v2377, %v2377
        %v2379 = vld [vmem:[#allocation11] sm:$0xf]
        %v2380 = vld [vmem:[#allocation11 + $0x4] sm:$0xf]
        %v2381 = vld [vmem:[#allocation11 + $0x8] sm:$0xf]
        %v2382 = vld [vmem:[#allocation11 + $0xc] sm:$0xf]
        %v2387 = vunpack.c.l.b16 %v2379
        %v2388 = vunpack.c.l.b16 %v2380
        %v2389 = vunpack.c.l.b16 %v2381
        %v2390 = vunpack.c.l.b16 %v2382
        %v2391 = vpack.c.b16 %v2388, %v2387
        %v2392 = vpack.c.b16 %v2390, %v2389
        %v2396 = vsel %vm1876, %v2378, 0
        %2398 = vmatprep.subr.bf16.mxu0 0
        %2399 = vmatpush1.bf16.msra.mxu0 %v2391
        %2400 = vmatprep.subr.bf16.mxu0 0
        %2401 = vmatpush1.bf16.msra.mxu0 %v2392
        %2402 = vmatprep.subr.bf16.mxu0 0
        %2403 = vmatpush1.bf16.msra.mxu0 0
        %2404 = vmatprep.subr.bf16.mxu0 0
        %2405 = vmatpush1.bf16.msra.mxu0 0
        %2406 = vmatprep.subr.bf16.mxu0 0
        %2407 = vmatpush1.bf16.msra.mxu0 0
        %2408 = vmatprep.subr.bf16.mxu0 0
        %2409 = vmatpush1.bf16.msra.mxu0 0
        %2410 = vmatprep.subr.bf16.mxu0 0
        %2411 = vmatpush1.bf16.msra.mxu0 0
        %2412 = vmatprep.subr.bf16.mxu0 0
        %2413 = vmatpush1.bf16.msra.mxu0 0
        %2414 = vmatprep.subr.bf16.mxu0 0
        %2415 = vmatpush1.bf16.msra.mxu0 0
        %2416 = vmatprep.subr.bf16.mxu0 0
        %2417 = vmatpush1.bf16.msra.mxu0 0
        %2418 = vmatprep.subr.bf16.mxu0 0
        %2419 = vmatpush1.bf16.msra.mxu0 0
        %2420 = vmatprep.subr.bf16.mxu0 0
        %2421 = vmatpush1.bf16.msra.mxu0 0
        %2422 = vmatprep.subr.bf16.mxu0 0
        %2423 = vmatpush1.bf16.msra.mxu0 0
        %2424 = vmatprep.subr.bf16.mxu0 0
        %2425 = vmatpush1.bf16.msra.mxu0 0
        %2426 = vmatprep.subr.bf16.mxu0 0
        %2427 = vmatpush1.bf16.msra.mxu0 0
        %2428 = vmatprep.subr.bf16.mxu0 0
        %2429 = vmatpush1.bf16.msra.mxu0 0
        %2430 = vmatprep.mubr.bf16.mxu0 0
        %2431 = vmatmul.mubr.bf16.gmra.mrb[0].mxu0 %v2396
        %v2432 = vpop.f32.mrb[0].mxu0
        %v2433 = vadd.f32 %v1855, %v2432
        %v2434 = vpop.f32.mrb[0].mxu0
        %v2435 = vpop.f32.mrb[0].mxu0
        %v2436 = vpop.f32.mrb[0].mxu0
        %2437 = vdwg.mxu0
        %v2438 = vld [vmem:[%s6] sm:$0x1]
        %v2439 = vld [vmem:[#allocation12] sm:$0x1]
        %v2440 = vsel %vm1876, %v2433, 0.0
        %2441 = vadd.xlane.f32.xlu0 %v2440
        %v2442 = vpop.xlane.xlu0 %2441
        %v2443 = vmul.f32 %v2433, %v2433
        %v2444 = vsel %vm1876, %v2443, 0.0
        %2445 = vadd.xlane.f32.xlu0 %v2444
        %v2446 = vpop.xlane.xlu0 %2445
        %v2447 = vmul.f32 %v2442, 0.03125
        %v2448 = vmul.f32 %v2446, 0.03125
        %v2449 = vmul.f32 %v2447, %v2447
        %v2450 = vsub.f32 %v2448, %v2449
        %v2451 = vsub.f32 %v2433, %v2447
        %v2452 = vadd.f32 %v2450, 1e-06
        %v2453 = vrsqrt.pop %v2452
        %v2454 = vmul.f32 %v2451, %v2453
        %v2456 = vlaneseq
        %v2457 = vshrl.u32 %v2456, 7
        %v2458 = vsub.s32 0, %v2457
        %v2459 = vrot.slane %v2438, %v2458
        %v2461 = vmul.f32 %v2454, %v2459
        %v2463 = vlaneseq
        %v2464 = vshrl.u32 %v2463, 7
        %v2465 = vsub.s32 0, %v2464
        %v2466 = vrot.slane %v2439, %v2465
        %v2468 = vadd.f32 %v2461, %v2466
        %v2469 = vld [vmem:[#allocation4] sm:$0xff]
        %v2470 = vld [vmem:[#allocation4 + $0x8] sm:$0xff]
        %v2471 = vld [vmem:[#allocation5] sm:$0xff]
        %v2472 = vld [vmem:[#allocation5 + $0x8] sm:$0xff]
        %v2473 = vpack.c.bf16 %v2468, %v2468
        %v2474 = vld [vmem:[#allocation14] sm:$0xf]
        %v2475 = vld [vmem:[#allocation14 + $0x4] sm:$0xf]
        %v2476 = vld [vmem:[#allocation14 + $0x8] sm:$0xf]
        %v2477 = vld [vmem:[#allocation14 + $0xc] sm:$0xf]
        %v2482 = vunpack.c.l.b16 %v2474
        %v2483 = vunpack.c.l.b16 %v2475
        %v2484 = vunpack.c.l.b16 %v2476
        %v2485 = vunpack.c.l.b16 %v2477
        %v2486 = vpack.c.b16 %v2483, %v2482
        %v2487 = vpack.c.b16 %v2485, %v2484
        %v2491 = vsel %vm1876, %v2473, 0
        %2493 = vmatprep.subr.bf16.mxu0 0
        %2494 = vmatpush1.bf16.msra.mxu0 %v2486
        %2495 = vmatprep.subr.bf16.mxu0 0
        %2496 = vmatpush1.bf16.msra.mxu0 %v2487
        %2497 = vmatprep.subr.bf16.mxu0 0
        %2498 = vmatpush1.bf16.msra.mxu0 0
        %2499 = vmatprep.subr.bf16.mxu0 0
        %2500 = vmatpush1.bf16.msra.mxu0 0
        %2501 = vmatprep.subr.bf16.mxu0 0
        %2502 = vmatpush1.bf16.msra.mxu0 0
        %2503 = vmatprep.subr.bf16.mxu0 0
        %2504 = vmatpush1.bf16.msra.mxu0 0
        %2505 = vmatprep.subr.bf16.mxu0 0
        %2506 = vmatpush1.bf16.msra.mxu0 0
        %2507 = vmatprep.subr.bf16.mxu0 0
        %2508 = vmatpush1.bf16.msra.mxu0 0
        %2509 = vmatprep.subr.bf16.mxu0 0
        %2510 = vmatpush1.bf16.msra.mxu0 0
        %2511 = vmatprep.subr.bf16.mxu0 0
        %2512 = vmatpush1.bf16.msra.mxu0 0
        %2513 = vmatprep.subr.bf16.mxu0 0
        %2514 = vmatpush1.bf16.msra.mxu0 0
        %2515 = vmatprep.subr.bf16.mxu0 0
        %2516 = vmatpush1.bf16.msra.mxu0 0
        %2517 = vmatprep.subr.bf16.mxu0 0
        %2518 = vmatpush1.bf16.msra.mxu0 0
        %2519 = vmatprep.subr.bf16.mxu0 0
        %2520 = vmatpush1.bf16.msra.mxu0 0
        %2521 = vmatprep.subr.bf16.mxu0 0
        %2522 = vmatpush1.bf16.msra.mxu0 0
        %2523 = vmatprep.subr.bf16.mxu0 0
        %2524 = vmatpush1.bf16.msra.mxu0 0
        %2525 = vmatprep.mubr.bf16.mxu0 0
        %2526 = vmatmul.mubr.bf16.gmra.mrb[0].mxu0 %v2491
        %v2527 = vpop.f32.mrb[0].mxu0
        %v2528 = vadd.f32 0.0, %v2527
        %v2529 = vpop.f32.mrb[0].mxu0
        %v2530 = vpop.f32.mrb[0].mxu0
        %v2531 = vpop.f32.mrb[0].mxu0
        %2532 = vdwg.mxu0
        %v2533 = vmul.f32 %v2528, 0.25
        %2535 = vrot.lane.b32.xlu0 %v2533, 112
        %v2536 = vpop.permute.xlu0 %2535
        %v2538 = vcombine.high %v2533, 0.0
        %v2540 = vunpack.c.l.s4 1983009808
        %v2541 = vunpack.c.0.s8 %v2540
        %v2542 = vlaneseq
        %v2543 = vshrl.u32 %v2542, 7
        %v2544 = vsub.s32 %v2541, %v2543
        %v2545 = vrot.slane %v2533, %v2544
        %v2547 = vunpack.c.l.s4 1983009808
        %v2548 = vunpack.c.0.s8 %v2547
        %v2549 = vlaneseq
        %v2550 = vshrl.u32 %v2549, 7
        %v2551 = vsub.s32 %v2548, %v2550
        %v2552 = vrot.slane %v2538, %v2551
        %v2553 = vcombine.high %v2536, 0.0
        %v2555 = vunpack.c.l.s4 1983009808
        %v2556 = vunpack.c.0.s8 %v2555
        %v2557 = vlaneseq
        %v2558 = vshrl.u32 %v2557, 7
        %v2559 = vsub.s32 %v2556, %v2558
        %v2560 = vrot.slane %v2536, %v2559
        %v2562 = vunpack.c.l.s4 1983009808
        %v2563 = vunpack.c.0.s8 %v2562
        %v2564 = vlaneseq
        %v2565 = vshrl.u32 %v2564, 7
        %v2566 = vsub.s32 %v2563, %v2565
        %v2567 = vrot.slane %v2553, %v2566
        %v2568 = vcombine.low %v2545, %v2560
        %v2569 = vcombine.high %v2545, %v2560
        %v2571 = vunpack.c.l.s4 1934713408
        %v2572 = vunpack.c.0.s8 %v2571
        %v2573 = vlaneseq
        %v2574 = vshrl.u32 %v2573, 7
        %v2575 = vsub.s32 %v2572, %v2574
        %v2576 = vrot.slane %v2568, %v2575
        %v2578 = vunpack.c.l.s4 1934713408
        %v2579 = vunpack.c.0.s8 %v2578
        %v2580 = vlaneseq
        %v2581 = vshrl.u32 %v2580, 7
        %v2582 = vsub.s32 %v2579, %v2581
        %v2583 = vrot.slane %v2569, %v2582
        %v2584 = vcombine.low %v2552, %v2567
        %v2585 = vcombine.high %v2552, %v2567
        %v2587 = vunpack.c.l.s4 1934713408
        %v2588 = vunpack.c.0.s8 %v2587
        %v2589 = vlaneseq
        %v2590 = vshrl.u32 %v2589, 7
        %v2591 = vsub.s32 %v2588, %v2590
        %v2592 = vrot.slane %v2584, %v2591
        %v2594 = vunpack.c.l.s4 1934713408
        %v2595 = vunpack.c.0.s8 %v2594
        %v2596 = vlaneseq
        %v2597 = vshrl.u32 %v2596, 7
        %v2598 = vsub.s32 %v2595, %v2597
        %v2599 = vrot.slane %v2585, %v2598
        %v2600 = vcombine.high %v2576, 0.0
        %v2601 = vcombine.high %v2583, 0.0
        %v2602 = vcombine.high %v2592, 0.0
        %v2603 = vcombine.high %v2599, 0.0
        %v2604 = vcombine.low %v2576, %v2583
        %v2606 = vunpack.c.l.s4 1983009808
        %v2607 = vunpack.c.0.s8 %v2606
        %v2608 = vlaneseq
        %v2609 = vshrl.u32 %v2608, 7
        %v2610 = vsub.s32 %v2607, %v2609
        %v2611 = vrot.slane %v2604, %v2610
        %v2612 = vcombine.low %v2600, %v2601
        %v2614 = vunpack.c.l.s4 1983009808
        %v2615 = vunpack.c.0.s8 %v2614
        %v2616 = vlaneseq
        %v2617 = vshrl.u32 %v2616, 7
        %v2618 = vsub.s32 %v2615, %v2617
        %v2619 = vrot.slane %v2612, %v2618
        %v2620 = vcombine.low %v2592, %v2599
        %v2622 = vunpack.c.l.s4 1983009808
        %v2623 = vunpack.c.0.s8 %v2622
        %v2624 = vlaneseq
        %v2625 = vshrl.u32 %v2624, 7
        %v2626 = vsub.s32 %v2623, %v2625
        %v2627 = vrot.slane %v2620, %v2626
        %v2628 = vcombine.low %v2602, %v2603
        %v2630 = vunpack.c.l.s4 1983009808
        %v2631 = vunpack.c.0.s8 %v2630
        %v2632 = vlaneseq
        %v2633 = vshrl.u32 %v2632, 7
        %v2634 = vsub.s32 %v2631, %v2633
        %v2635 = vrot.slane %v2628, %v2634
        %v2636 = vcombine.low %v2611, %v2619
        %v2638 = vunpack.c.l.s4 1934713408
        %v2639 = vunpack.c.0.s8 %v2638
        %v2640 = vlaneseq
        %v2641 = vshrl.u32 %v2640, 7
        %v2642 = vsub.s32 %v2639, %v2641
        %v2643 = vrot.slane %v2636, %v2642
        %v2644 = vcombine.low %v2627, %v2635
        %v2646 = vunpack.c.l.s4 1934713408
        %v2647 = vunpack.c.0.s8 %v2646
        %v2648 = vlaneseq
        %v2649 = vshrl.u32 %v2648, 7
        %v2650 = vsub.s32 %v2647, %v2649
        %v2651 = vrot.slane %v2644, %v2650
        %v2652 = vcombine.low %v2643, %v2651
        %v2653 = vcombine.high %v2643, %v2651
        %v2654 = vpack.c.bf16 %v2652, %v2652
        %v2655 = vpack.c.bf16 %v2653, %v2653
        %v2657 = vsel %vm2043, %v2654, 0
        %v2660 = vsel %vm2043, %v2469, 0
        %2662 = vmatprep.subr.bf16.mxu0 0
        %2663 = vmatpush1.bf16.xpose.msra.mxu0 %v2660
        %2664 = vmatprep.subr.bf16.mxu0 0
        %2665 = vmatpush1.bf16.xpose.msra.mxu0 0
        %2666 = vmatprep.subr.bf16.mxu0 0
        %2667 = vmatpush1.bf16.xpose.msra.mxu0 0
        %2668 = vmatprep.subr.bf16.mxu0 0
        %2669 = vmatpush1.bf16.xpose.msra.mxu0 0
        %2670 = vmatprep.subr.bf16.mxu0 0
        %2671 = vmatpush1.bf16.xpose.msra.mxu0 0
        %2672 = vmatprep.subr.bf16.mxu0 0
        %2673 = vmatpush1.bf16.xpose.msra.mxu0 0
        %2674 = vmatprep.subr.bf16.mxu0 0
        %2675 = vmatpush1.bf16.xpose.msra.mxu0 0
        %2676 = vmatprep.subr.bf16.mxu0 0
        %2677 = vmatpush1.bf16.xpose.msra.mxu0 0
        %2678 = vmatprep.subr.bf16.mxu0 0
        %2679 = vmatpush1.bf16.xpose.msra.mxu0 0
        %2680 = vmatprep.subr.bf16.mxu0 0
        %2681 = vmatpush1.bf16.xpose.msra.mxu0 0
        %2682 = vmatprep.subr.bf16.mxu0 0
        %2683 = vmatpush1.bf16.xpose.msra.mxu0 0
        %2684 = vmatprep.subr.bf16.mxu0 0
        %2685 = vmatpush1.bf16.xpose.msra.mxu0 0
        %2686 = vmatprep.subr.bf16.mxu0 0
        %2687 = vmatpush1.bf16.xpose.msra.mxu0 0
        %2688 = vmatprep.subr.bf16.mxu0 0
        %2689 = vmatpush1.bf16.xpose.msra.mxu0 0
        %2690 = vmatprep.subr.bf16.mxu0 0
        %2691 = vmatpush1.bf16.xpose.msra.mxu0 0
        %2692 = vmatprep.subr.bf16.mxu0 0
        %2693 = vmatpush1.bf16.xpose.msra.mxu0 0
        %2694 = vmatprep.mubr.bf16.mxu0 0
        %2695 = vmatmul.mubr.bf16.gmra.mrb[0].mxu0 %v2657
        %v2696 = vpop.f32.mrb[0].mxu0
        %v2697 = vadd.f32 0.0, %v2696
        %v2698 = vpop.f32.mrb[0].mxu0
        %v2699 = vpop.f32.mrb[0].mxu0
        %v2700 = vpop.f32.mrb[0].mxu0
        %2701 = vdwg.mxu0
        %v2703 = vsel %vm2043, %v2655, 0
        %v2706 = vsel %vm2043, %v2470, 0
        %2708 = vmatprep.subr.bf16.mxu0 0
        %2709 = vmatpush1.bf16.xpose.msra.mxu0 %v2706
        %2710 = vmatprep.subr.bf16.mxu0 0
        %2711 = vmatpush1.bf16.xpose.msra.mxu0 0
        %2712 = vmatprep.subr.bf16.mxu0 0
        %2713 = vmatpush1.bf16.xpose.msra.mxu0 0
        %2714 = vmatprep.subr.bf16.mxu0 0
        %2715 = vmatpush1.bf16.xpose.msra.mxu0 0
        %2716 = vmatprep.subr.bf16.mxu0 0
        %2717 = vmatpush1.bf16.xpose.msra.mxu0 0
        %2718 = vmatprep.subr.bf16.mxu0 0
        %2719 = vmatpush1.bf16.xpose.msra.mxu0 0
        %2720 = vmatprep.subr.bf16.mxu0 0
        %2721 = vmatpush1.bf16.xpose.msra.mxu0 0
        %2722 = vmatprep.subr.bf16.mxu0 0
        %2723 = vmatpush1.bf16.xpose.msra.mxu0 0
        %2724 = vmatprep.subr.bf16.mxu0 0
        %2725 = vmatpush1.bf16.xpose.msra.mxu0 0
        %2726 = vmatprep.subr.bf16.mxu0 0
        %2727 = vmatpush1.bf16.xpose.msra.mxu0 0
        %2728 = vmatprep.subr.bf16.mxu0 0
        %2729 = vmatpush1.bf16.xpose.msra.mxu0 0
        %2730 = vmatprep.subr.bf16.mxu0 0
        %2731 = vmatpush1.bf16.xpose.msra.mxu0 0
        %2732 = vmatprep.subr.bf16.mxu0 0
        %2733 = vmatpush1.bf16.xpose.msra.mxu0 0
        %2734 = vmatprep.subr.bf16.mxu0 0
        %2735 = vmatpush1.bf16.xpose.msra.mxu0 0
        %2736 = vmatprep.subr.bf16.mxu0 0
        %2737 = vmatpush1.bf16.xpose.msra.mxu0 0
        %2738 = vmatprep.subr.bf16.mxu0 0
        %2739 = vmatpush1.bf16.xpose.msra.mxu0 0
        %2740 = vmatprep.mubr.bf16.mxu0 0
        %2741 = vmatmul.mubr.bf16.gmra.mrb[0].mxu0 %v2703
        %v2742 = vpop.f32.mrb[0].mxu0
        %v2743 = vadd.f32 0.0, %v2742
        %v2744 = vpop.f32.mrb[0].mxu0
        %v2745 = vpop.f32.mrb[0].mxu0
        %v2746 = vpop.f32.mrb[0].mxu0
        %2747 = vdwg.mxu0
        %v2748 = vsel %vm2043, %v2697, -inf
        %2749 = vmax.xlane.f32.xlu0 %v2748
        %v2750 = vpop.xlane.xlu0 %2749
        %v2751 = vsel %vm2043, %v2743, -inf
        %2752 = vmax.xlane.f32.xlu0 %v2751
        %v2753 = vpop.xlane.xlu0 %2752
        %v2754 = vsub.f32 %v2697, %v2750
        %v2755 = vsub.f32 %v2743, %v2753
        %v2756 = vmul.f32 %v2754, 1.442695
        %v2757 = vpow.pop %v2756
        %v2758 = vmul.f32 %v2755, 1.442695
        %v2759 = vpow.pop %v2758
        %v2760 = vsel %vm2043, %v2757, 0.0
        %2761 = vadd.xlane.f32.xlu0 %v2760
        %v2762 = vpop.xlane.xlu0 %2761
        %v2763 = vsel %vm2043, %v2759, 0.0
        %2764 = vadd.xlane.f32.xlu0 %v2763
        %v2765 = vpop.xlane.xlu0 %2764
        %v2766 = vrcp.pop %v2762
        %v2767 = vrcp.pop %v2765
        %v2768 = vmul.f32 %v2757, %v2766
        %v2769 = vmul.f32 %v2759, %v2767
        %v2770 = vpack.c.bf16 %v2768, %v2768
        %v2771 = vpack.c.bf16 %v2769, %v2769
        %vm2772 = vcmask 125952
        %2773 = vst.msk [vmem:[%s859] sm:$0xf] %vm2772, %v2770
        %2774 = vst.msk [vmem:[%s859 + $0x4] sm:$0xf] %vm2772, %v2771
        %v2776 = vsel %vm2043, %v2770, 0
        %2778 = vmatprep.subr.bf16.mxu0 0
        %2779 = vmatpush1.bf16.msra.mxu0 %v2471
        %2780 = vmatprep.subr.bf16.mxu0 0
        %2781 = vmatpush1.bf16.msra.mxu0 0
        %2782 = vmatprep.subr.bf16.mxu0 0
        %2783 = vmatpush1.bf16.msra.mxu0 0
        %2784 = vmatprep.subr.bf16.mxu0 0
        %2785 = vmatpush1.bf16.msra.mxu0 0
        %2786 = vmatprep.subr.bf16.mxu0 0
        %2787 = vmatpush1.bf16.msra.mxu0 0
        %2788 = vmatprep.subr.bf16.mxu0 0
        %2789 = vmatpush1.bf16.msra.mxu0 0
        %2790 = vmatprep.subr.bf16.mxu0 0
        %2791 = vmatpush1.bf16.msra.mxu0 0
        %2792 = vmatprep.subr.bf16.mxu0 0
        %2793 = vmatpush1.bf16.msra.mxu0 0
        %2794 = vmatprep.subr.bf16.mxu0 0
        %2795 = vmatpush1.bf16.msra.mxu0 0
        %2796 = vmatprep.subr.bf16.mxu0 0
        %2797 = vmatpush1.bf16.msra.mxu0 0
        %2798 = vmatprep.subr.bf16.mxu0 0
        %2799 = vmatpush1.bf16.msra.mxu0 0
        %2800 = vmatprep.subr.bf16.mxu0 0
        %2801 = vmatpush1.bf16.msra.mxu0 0
        %2802 = vmatprep.subr.bf16.mxu0 0
        %2803 = vmatpush1.bf16.msra.mxu0 0
        %2804 = vmatprep.subr.bf16.mxu0 0
        %2805 = vmatpush1.bf16.msra.mxu0 0
        %2806 = vmatprep.subr.bf16.mxu0 0
        %2807 = vmatpush1.bf16.msra.mxu0 0
        %2808 = vmatprep.subr.bf16.mxu0 0
        %2809 = vmatpush1.bf16.msra.mxu0 0
        %2810 = vmatprep.mubr.bf16.mxu0 0
        %2811 = vmatmul.mubr.bf16.gmra.mrb[0].mxu0 %v2776
        %v2812 = vpop.f32.mrb[0].mxu0
        %v2813 = vadd.f32 0.0, %v2812
        %v2814 = vpop.f32.mrb[0].mxu0
        %v2815 = vpop.f32.mrb[0].mxu0
        %v2816 = vpop.f32.mrb[0].mxu0
        %2817 = vdwg.mxu0
        %v2819 = vsel %vm2043, %v2771, 0
        %2821 = vmatprep.subr.bf16.mxu0 0
        %2822 = vmatpush1.bf16.msra.mxu0 %v2472
        %2823 = vmatprep.subr.bf16.mxu0 0
        %2824 = vmatpush1.bf16.msra.mxu0 0
        %2825 = vmatprep.subr.bf16.mxu0 0
        %2826 = vmatpush1.bf16.msra.mxu0 0
        %2827 = vmatprep.subr.bf16.mxu0 0
        %2828 = vmatpush1.bf16.msra.mxu0 0
        %2829 = vmatprep.subr.bf16.mxu0 0
        %2830 = vmatpush1.bf16.msra.mxu0 0
        %2831 = vmatprep.subr.bf16.mxu0 0
        %2832 = vmatpush1.bf16.msra.mxu0 0
        %2833 = vmatprep.subr.bf16.mxu0 0
        %2834 = vmatpush1.bf16.msra.mxu0 0
        %2835 = vmatprep.subr.bf16.mxu0 0
        %2836 = vmatpush1.bf16.msra.mxu0 0
        %2837 = vmatprep.subr.bf16.mxu0 0
        %2838 = vmatpush1.bf16.msra.mxu0 0
        %2839 = vmatprep.subr.bf16.mxu0 0
        %2840 = vmatpush1.bf16.msra.mxu0 0
        %2841 = vmatprep.subr.bf16.mxu0 0
        %2842 = vmatpush1.bf16.msra.mxu0 0
        %2843 = vmatprep.subr.bf16.mxu0 0
        %2844 = vmatpush1.bf16.msra.mxu0 0
        %2845 = vmatprep.subr.bf16.mxu0 0
        %2846 = vmatpush1.bf16.msra.mxu0 0
        %2847 = vmatprep.subr.bf16.mxu0 0
        %2848 = vmatpush1.bf16.msra.mxu0 0
        %2849 = vmatprep.subr.bf16.mxu0 0
        %2850 = vmatpush1.bf16.msra.mxu0 0
        %2851 = vmatprep.subr.bf16.mxu0 0
        %2852 = vmatpush1.bf16.msra.mxu0 0
        %2853 = vmatprep.mubr.bf16.mxu0 0
        %2854 = vmatmul.mubr.bf16.gmra.mrb[0].mxu0 %v2819
        %v2855 = vpop.f32.mrb[0].mxu0
        %v2856 = vadd.f32 0.0, %v2855
        %v2857 = vpop.f32.mrb[0].mxu0
        %v2858 = vpop.f32.mrb[0].mxu0
        %v2859 = vpop.f32.mrb[0].mxu0
        %2860 = vdwg.mxu0
        %v2861 = vcombine.high %v2813, 0.0
        %v2863 = vunpack.c.l.s4 1983009808
        %v2864 = vunpack.c.0.s8 %v2863
        %v2865 = vlaneseq
        %v2866 = vshrl.u32 %v2865, 7
        %v2867 = vsub.s32 %v2864, %v2866
        %v2868 = vrot.slane %v2813, %v2867
        %v2870 = vunpack.c.l.s4 1983009808
        %v2871 = vunpack.c.0.s8 %v2870
        %v2872 = vlaneseq
        %v2873 = vshrl.u32 %v2872, 7
        %v2874 = vsub.s32 %v2871, %v2873
        %v2875 = vrot.slane %v2861, %v2874
        %v2876 = vcombine.high %v2856, 0.0
        %v2878 = vunpack.c.l.s4 1983009808
        %v2879 = vunpack.c.0.s8 %v2878
        %v2880 = vlaneseq
        %v2881 = vshrl.u32 %v2880, 7
        %v2882 = vsub.s32 %v2879, %v2881
        %v2883 = vrot.slane %v2856, %v2882
        %v2885 = vunpack.c.l.s4 1983009808
        %v2886 = vunpack.c.0.s8 %v2885
        %v2887 = vlaneseq
        %v2888 = vshrl.u32 %v2887, 7
        %v2889 = vsub.s32 %v2886, %v2888
        %v2890 = vrot.slane %v2876, %v2889
        %v2891 = vcombine.low %v2868, %v2883
        %v2892 = vcombine.high %v2868, %v2883
        %v2894 = vunpack.c.l.s4 1934713408
        %v2895 = vunpack.c.0.s8 %v2894
        %v2896 = vlaneseq
        %v2897 = vshrl.u32 %v2896, 7
        %v2898 = vsub.s32 %v2895, %v2897
        %v2899 = vrot.slane %v2891, %v2898
        %v2901 = vunpack.c.l.s4 1934713408
        %v2902 = vunpack.c.0.s8 %v2901
        %v2903 = vlaneseq
        %v2904 = vshrl.u32 %v2903, 7
        %v2905 = vsub.s32 %v2902, %v2904
        %v2906 = vrot.slane %v2892, %v2905
        %v2907 = vcombine.low %v2875, %v2890
        %v2908 = vcombine.high %v2875, %v2890
        %v2910 = vunpack.c.l.s4 1934713408
        %v2911 = vunpack.c.0.s8 %v2910
        %v2912 = vlaneseq
        %v2913 = vshrl.u32 %v2912, 7
        %v2914 = vsub.s32 %v2911, %v2913
        %v2915 = vrot.slane %v2907, %v2914
        %v2917 = vunpack.c.l.s4 1934713408
        %v2918 = vunpack.c.0.s8 %v2917
        %v2919 = vlaneseq
        %v2920 = vshrl.u32 %v2919, 7
        %v2921 = vsub.s32 %v2918, %v2920
        %v2922 = vrot.slane %v2908, %v2921
        %v2923 = vcombine.high %v2899, 0.0
        %v2924 = vcombine.high %v2906, 0.0
        %v2925 = vcombine.high %v2915, 0.0
        %v2926 = vcombine.high %v2922, 0.0
        %v2927 = vcombine.low %v2899, %v2906
        %v2929 = vunpack.c.l.s4 1983009808
        %v2930 = vunpack.c.0.s8 %v2929
        %v2931 = vlaneseq
        %v2932 = vshrl.u32 %v2931, 7
        %v2933 = vsub.s32 %v2930, %v2932
        %v2934 = vrot.slane %v2927, %v2933
        %v2935 = vcombine.low %v2923, %v2924
        %v2937 = vunpack.c.l.s4 1983009808
        %v2938 = vunpack.c.0.s8 %v2937
        %v2939 = vlaneseq
        %v2940 = vshrl.u32 %v2939, 7
        %v2941 = vsub.s32 %v2938, %v2940
        %v2942 = vrot.slane %v2935, %v2941
        %v2943 = vcombine.low %v2915, %v2922
        %v2945 = vunpack.c.l.s4 1983009808
        %v2946 = vunpack.c.0.s8 %v2945
        %v2947 = vlaneseq
        %v2948 = vshrl.u32 %v2947, 7
        %v2949 = vsub.s32 %v2946, %v2948
        %v2950 = vrot.slane %v2943, %v2949
        %v2951 = vcombine.low %v2925, %v2926
        %v2953 = vunpack.c.l.s4 1983009808
        %v2954 = vunpack.c.0.s8 %v2953
        %v2955 = vlaneseq
        %v2956 = vshrl.u32 %v2955, 7
        %v2957 = vsub.s32 %v2954, %v2956
        %v2958 = vrot.slane %v2951, %v2957
        %v2959 = vcombine.low %v2934, %v2942
        %v2961 = vunpack.c.l.s4 1934713408
        %v2962 = vunpack.c.0.s8 %v2961
        %v2963 = vlaneseq
        %v2964 = vshrl.u32 %v2963, 7
        %v2965 = vsub.s32 %v2962, %v2964
        %v2966 = vrot.slane %v2959, %v2965
        %v2967 = vcombine.low %v2950, %v2958
        %v2969 = vunpack.c.l.s4 1934713408
        %v2970 = vunpack.c.0.s8 %v2969
        %v2971 = vlaneseq
        %v2972 = vshrl.u32 %v2971, 7
        %v2973 = vsub.s32 %v2970, %v2972
        %v2974 = vrot.slane %v2967, %v2973
        %v2975 = vcombine.low %v2966, %v2974
        %v2976 = vcombine.high %v2966, %v2974
        %2978 = vrot.lane.b32.xlu0 %v2976, 16
        %v2979 = vpop.permute.xlu0 %2978
        %v2981 = vsel %vm2043, %v2975, %v2979
        %v2982 = vpack.c.bf16 %v2981, %v2981
        %v2983 = vld [vmem:[#allocation17] sm:$0xf]
        %v2984 = vld [vmem:[#allocation17 + $0x4] sm:$0xf]
        %v2985 = vld [vmem:[#allocation17 + $0x8] sm:$0xf]
        %v2986 = vld [vmem:[#allocation17 + $0xc] sm:$0xf]
        %v2991 = vunpack.c.l.b16 %v2983
        %v2992 = vunpack.c.l.b16 %v2984
        %v2993 = vunpack.c.l.b16 %v2985
        %v2994 = vunpack.c.l.b16 %v2986
        %v2995 = vpack.c.b16 %v2992, %v2991
        %v2996 = vpack.c.b16 %v2994, %v2993
        %v3000 = vsel %vm1876, %v2982, 0
        %3002 = vmatprep.subr.bf16.mxu0 0
        %3003 = vmatpush1.bf16.msra.mxu0 %v2995
        %3004 = vmatprep.subr.bf16.mxu0 0
        %3005 = vmatpush1.bf16.msra.mxu0 %v2996
        %3006 = vmatprep.subr.bf16.mxu0 0
        %3007 = vmatpush1.bf16.msra.mxu0 0
        %3008 = vmatprep.subr.bf16.mxu0 0
        %3009 = vmatpush1.bf16.msra.mxu0 0
        %3010 = vmatprep.subr.bf16.mxu0 0
        %3011 = vmatpush1.bf16.msra.mxu0 0
        %3012 = vmatprep.subr.bf16.mxu0 0
        %3013 = vmatpush1.bf16.msra.mxu0 0
        %3014 = vmatprep.subr.bf16.mxu0 0
        %3015 = vmatpush1.bf16.msra.mxu0 0
        %3016 = vmatprep.subr.bf16.mxu0 0
        %3017 = vmatpush1.bf16.msra.mxu0 0
        %3018 = vmatprep.subr.bf16.mxu0 0
        %3019 = vmatpush1.bf16.msra.mxu0 0
        %3020 = vmatprep.subr.bf16.mxu0 0
        %3021 = vmatpush1.bf16.msra.mxu0 0
        %3022 = vmatprep.subr.bf16.mxu0 0
        %3023 = vmatpush1.bf16.msra.mxu0 0
        %3024 = vmatprep.subr.bf16.mxu0 0
        %3025 = vmatpush1.bf16.msra.mxu0 0
        %3026 = vmatprep.subr.bf16.mxu0 0
        %3027 = vmatpush1.bf16.msra.mxu0 0
        %3028 = vmatprep.subr.bf16.mxu0 0
        %3029 = vmatpush1.bf16.msra.mxu0 0
        %3030 = vmatprep.subr.bf16.mxu0 0
        %3031 = vmatpush1.bf16.msra.mxu0 0
        %3032 = vmatprep.subr.bf16.mxu0 0
        %3033 = vmatpush1.bf16.msra.mxu0 0
        %3034 = vmatprep.mubr.bf16.mxu0 0
        %3035 = vmatmul.mubr.bf16.gmra.mrb[0].mxu0 %v3000
        %v3036 = vpop.f32.mrb[0].mxu0
        %v3037 = vadd.f32 %v2468, %v3036
        %v3038 = vpop.f32.mrb[0].mxu0
        %v3039 = vpop.f32.mrb[0].mxu0
        %v3040 = vpop.f32.mrb[0].mxu0
        %3041 = vdwg.mxu0
        %v3042 = vld [vmem:[#allocation18] sm:$0x1]
        %v3043 = vld [vmem:[#allocation20] sm:$0x1]
        %v3044 = vsel %vm1876, %v3037, 0.0
        %3045 = vadd.xlane.f32.xlu0 %v3044
        %v3046 = vpop.xlane.xlu0 %3045
        %v3047 = vmul.f32 %v3037, %v3037
        %v3048 = vsel %vm1876, %v3047, 0.0
        %3049 = vadd.xlane.f32.xlu0 %v3048
        %v3050 = vpop.xlane.xlu0 %3049
        %v3051 = vmul.f32 %v3046, 0.03125
        %v3052 = vmul.f32 %v3050, 0.03125
        %v3053 = vmul.f32 %v3051, %v3051
        %v3054 = vsub.f32 %v3052, %v3053
        %v3055 = vsub.f32 %v3037, %v3051
        %v3056 = vadd.f32 %v3054, 1e-06
        %v3057 = vrsqrt.pop %v3056
        %v3058 = vmul.f32 %v3055, %v3057
        %v3060 = vlaneseq
        %v3061 = vshrl.u32 %v3060, 7
        %v3062 = vsub.s32 0, %v3061
        %v3063 = vrot.slane %v3042, %v3062
        %v3065 = vmul.f32 %v3058, %v3063
        %v3067 = vlaneseq
        %v3068 = vshrl.u32 %v3067, 7
        %v3069 = vsub.s32 0, %v3068
        %v3070 = vrot.slane %v3043, %v3069
        %v3072 = vadd.f32 %v3065, %v3070
        %v3073 = vpack.c.bf16 %v3072, %v3072
        %v3074 = vld [vmem:[%s14] sm:$0xf]
        %v3075 = vld [vmem:[%s14 + $0x4] sm:$0xf]
        %v3076 = vld [vmem:[%s14 + $0x8] sm:$0xf]
        %v3077 = vld [vmem:[%s14 + $0xc] sm:$0xf]
        %v3078 = vld [vmem:[%s15] sm:$0x1]
        %v3080 = vlaneseq
        %v3081 = vshrl.u32 %v3080, 7
        %v3082 = vsub.s32 0, %v3081
        %v3083 = vrot.slane %v3078, %v3082
        %v3089 = vunpack.c.l.b16 %v3074
        %v3090 = vunpack.c.l.b16 %v3075
        %v3091 = vunpack.c.l.b16 %v3076
        %v3092 = vunpack.c.l.b16 %v3077
        %v3093 = vpack.c.b16 %v3090, %v3089
        %v3094 = vpack.c.b16 %v3092, %v3091
        %v3098 = vsel %vm1876, %v3073, 0
        %3100 = vmatprep.subr.bf16.mxu0 0
        %3101 = vmatpush1.bf16.msra.mxu0 %v3093
        %3102 = vmatprep.subr.bf16.mxu0 0
        %3103 = vmatpush1.bf16.msra.mxu0 %v3094
        %3104 = vmatprep.subr.bf16.mxu0 0
        %3105 = vmatpush1.bf16.msra.mxu0 0
        %3106 = vmatprep.subr.bf16.mxu0 0
        %3107 = vmatpush1.bf16.msra.mxu0 0
        %3108 = vmatprep.subr.bf16.mxu0 0
        %3109 = vmatpush1.bf16.msra.mxu0 0
        %3110 = vmatprep.subr.bf16.mxu0 0
        %3111 = vmatpush1.bf16.msra.mxu0 0
        %3112 = vmatprep.subr.bf16.mxu0 0
        %3113 = vmatpush1.bf16.msra.mxu0 0
        %3114 = vmatprep.subr.bf16.mxu0 0
        %3115 = vmatpush1.bf16.msra.mxu0 0
        %3116 = vmatprep.subr.bf16.mxu0 0
        %3117 = vmatpush1.bf16.msra.mxu0 0
        %3118 = vmatprep.subr.bf16.mxu0 0
        %3119 = vmatpush1.bf16.msra.mxu0 0
        %3120 = vmatprep.subr.bf16.mxu0 0
        %3121 = vmatpush1.bf16.msra.mxu0 0
        %3122 = vmatprep.subr.bf16.mxu0 0
        %3123 = vmatpush1.bf16.msra.mxu0 0
        %3124 = vmatprep.subr.bf16.mxu0 0
        %3125 = vmatpush1.bf16.msra.mxu0 0
        %3126 = vmatprep.subr.bf16.mxu0 0
        %3127 = vmatpush1.bf16.msra.mxu0 0
        %3128 = vmatprep.subr.bf16.mxu0 0
        %3129 = vmatpush1.bf16.msra.mxu0 0
        %3130 = vmatprep.subr.bf16.mxu0 0
        %3131 = vmatpush1.bf16.msra.mxu0 0
        %3132 = vmatprep.mubr.bf16.mxu0 0
        %3133 = vmatmul.mubr.bf16.gmra.mrb[0].mxu0 %v3098
        %v3134 = vpop.f32.mrb[0].mxu0
        %v3135 = vadd.f32 %v3083, %v3134
        %v3136 = vpop.f32.mrb[0].mxu0
        %v3137 = vpop.f32.mrb[0].mxu0
        %v3138 = vpop.f32.mrb[0].mxu0
        %3139 = vdwg.mxu0
        %v3140 = vmax.f32 %v3135, 0.0
        %v3141 = vpack.c.bf16 %v3140, %v3140
        %v3142 = vld [vmem:[%s16] sm:$0xf]
        %v3143 = vld [vmem:[%s16 + $0x4] sm:$0xf]
        %v3144 = vld [vmem:[%s16 + $0x8] sm:$0xf]
        %v3145 = vld [vmem:[%s16 + $0xc] sm:$0xf]
        %v3146 = vld [vmem:[%s16 + $0x10] sm:$0xf]
        %v3147 = vld [vmem:[%s16 + $0x14] sm:$0xf]
        %v3148 = vld [vmem:[%s16 + $0x18] sm:$0xf]
        %v3149 = vld [vmem:[%s16 + $0x1c] sm:$0xf]
        %v3150 = vld [vmem:[%s17] sm:$0x1]
        %v3152 = vlaneseq
        %v3153 = vshrl.u32 %v3152, 7
        %v3154 = vsub.s32 0, %v3153
        %v3155 = vrot.slane %v3150, %v3154
        %v3165 = vunpack.c.l.b16 %v3142
        %v3166 = vunpack.c.l.b16 %v3143
        %v3167 = vunpack.c.l.b16 %v3144
        %v3168 = vunpack.c.l.b16 %v3145
        %v3169 = vunpack.c.l.b16 %v3146
        %v3170 = vunpack.c.l.b16 %v3147
        %v3171 = vunpack.c.l.b16 %v3148
        %v3172 = vunpack.c.l.b16 %v3149
        %v3173 = vpack.c.b16 %v3166, %v3165
        %v3174 = vpack.c.b16 %v3168, %v3167
        %v3175 = vpack.c.b16 %v3170, %v3169
        %v3176 = vpack.c.b16 %v3172, %v3171
        %vm3181 = vcmask 523264
        %v3183 = vsel %vm3181, %v3141, 0
        %3185 = vmatprep.subr.bf16.mxu0 0
        %3186 = vmatpush1.bf16.msra.mxu0 %v3173
        %3187 = vmatprep.subr.bf16.mxu0 0
        %3188 = vmatpush1.bf16.msra.mxu0 %v3174
        %3189 = vmatprep.subr.bf16.mxu0 0
        %3190 = vmatpush1.bf16.msra.mxu0 %v3175
        %3191 = vmatprep.subr.bf16.mxu0 0
        %3192 = vmatpush1.bf16.msra.mxu0 %v3176
        %3193 = vmatprep.subr.bf16.mxu0 0
        %3194 = vmatpush1.bf16.msra.mxu0 0
        %3195 = vmatprep.subr.bf16.mxu0 0
        %3196 = vmatpush1.bf16.msra.mxu0 0
        %3197 = vmatprep.subr.bf16.mxu0 0
        %3198 = vmatpush1.bf16.msra.mxu0 0
        %3199 = vmatprep.subr.bf16.mxu0 0
        %3200 = vmatpush1.bf16.msra.mxu0 0
        %3201 = vmatprep.subr.bf16.mxu0 0
        %3202 = vmatpush1.bf16.msra.mxu0 0
        %3203 = vmatprep.subr.bf16.mxu0 0
        %3204 = vmatpush1.bf16.msra.mxu0 0
        %3205 = vmatprep.subr.bf16.mxu0 0
        %3206 = vmatpush1.bf16.msra.mxu0 0
        %3207 = vmatprep.subr.bf16.mxu0 0
        %3208 = vmatpush1.bf16.msra.mxu0 0
        %3209 = vmatprep.subr.bf16.mxu0 0
        %3210 = vmatpush1.bf16.msra.mxu0 0
        %3211 = vmatprep.subr.bf16.mxu0 0
        %3212 = vmatpush1.bf16.msra.mxu0 0
        %3213 = vmatprep.subr.bf16.mxu0 0
        %3214 = vmatpush1.bf16.msra.mxu0 0
        %3215 = vmatprep.subr.bf16.mxu0 0
        %3216 = vmatpush1.bf16.msra.mxu0 0
        %3217 = vmatprep.mubr.bf16.mxu0 0
        %3218 = vmatmul.mubr.bf16.gmra.mrb[0].mxu0 %v3183
        %v3219 = vpop.f32.mrb[0].mxu0
        %v3220 = vadd.f32 %v3155, %v3219
        %v3221 = vpop.f32.mrb[0].mxu0
        %v3222 = vpop.f32.mrb[0].mxu0
        %v3223 = vpop.f32.mrb[0].mxu0
        %3224 = vdwg.mxu0
        %v3225 = vadd.f32 %v3220, %v3072
        %v3226 = vld [vmem:[%s18] sm:$0x1]
        %v3227 = vld [vmem:[%s19] sm:$0x1]
        %v3228 = vsel %vm1876, %v3225, 0.0
        %3229 = vadd.xlane.f32.xlu0 %v3228
        %v3230 = vpop.xlane.xlu0 %3229
        %v3231 = vmul.f32 %v3225, %v3225
        %v3232 = vsel %vm1876, %v3231, 0.0
        %3233 = vadd.xlane.f32.xlu0 %v3232
        %v3234 = vpop.xlane.xlu0 %3233
        %v3235 = vmul.f32 %v3230, 0.03125
        %v3236 = vmul.f32 %v3234, 0.03125
        %v3237 = vmul.f32 %v3235, %v3235
        %v3238 = vsub.f32 %v3236, %v3237
        %v3239 = vsub.f32 %v3225, %v3235
        %v3240 = vadd.f32 %v3238, 1e-06
        %v3241 = vrsqrt.pop %v3240
        %v3242 = vmul.f32 %v3239, %v3241
        %v3244 = vlaneseq
        %v3245 = vshrl.u32 %v3244, 7
        %v3246 = vsub.s32 0, %v3245
        %v3247 = vrot.slane %v3226, %v3246
        %v3249 = vmul.f32 %v3242, %v3247
        %v3251 = vlaneseq
        %v3252 = vshrl.u32 %v3251, 7
        %v3253 = vsub.s32 0, %v3252
        %v3254 = vrot.slane %v3227, %v3253
        %v3256 = vadd.f32 %v3249, %v3254
        %3257 = vst.msk [vmem:[%s845] sm:$0xff] %vm1876, %v3256
        %s3258 = sand.u32 %s499, 1
        %s3259 = scalar_lea.sflag [#allocation8], %s3258
        %s3260 = sand.u32 %s499, 1
        %s3261 = smul.addr %s3260, 8
        %s3262 = scalar_lea.vmem [#allocation21], %s3261
        %s3263 = sand.u32 %s47, 1
        %s3264 = scalar_lea.sflag [#allocation23], %s3263
        %s3265 = sand.u32 %s527, 1
        %s3266 = smul.addr %s3265, 8
        %s3267 = scalar_lea.vmem [#allocation22], %s3266
        %s3268 = sand.u32 %s47, 1
        %s3269 = scalar_lea.sflag [#allocation23], %s3268
        %s3270 = sand.u32 %s555, 1
        %s3271 = smul.addr %s3270, 8
        %s3272 = scalar_lea.vmem [#allocation24], %s3271
        // Predicated region
        $region141: #{tpu_custom_call.1} parent=99 // pred_check
          %p3273 = pneg %p509
        $region142: #{tpu_custom_call.1} parent=99 // pred_check_branch
          %3275 = sbr.rel (%p3273) target = $region144
        $region143: #{tpu_custom_call.1} parent=99 // pred_region
          %s3277 = ssub.s32 128, 128
          %3278 = vsyncadd %s3259, %s3277
          %s3279 = sadd.s32 %s52, %s51
          %s3280 = smul.addr %s3279, 128
          %s3281 = scalar_lea.hbm %s20, %s3280
          %s3283 = sshll.u32 %s3262, 4
          %s3284 = int_to_ptr.vmem [resolvable:$true] %s3283
          %3286 = dma.vmem_to_hbm [thread:$0]  %s3284, 128, %s3281, %s3259
        $region144: #{tpu_custom_call.1} parent=99 // pred_fallthru
          _
        // Predicated region
        $region145: #{tpu_custom_call.1} parent=99 // pred_check
          %p3287 = pneg %p537
        $region146: #{tpu_custom_call.1} parent=99 // pred_check_branch
          %3289 = sbr.rel (%p3287) target = $region148
        $region147: #{tpu_custom_call.1} parent=99 // pred_region
          %s3291 = ssub.s32 128, 128
          %3292 = vsyncadd %s3264, %s3291
          %s3293 = smul.addr %s51, 2
          %s3294 = sadd.s32 %s52, %s3293
          %s3295 = smul.addr %s3294, 64
          %s3296 = scalar_lea.hbm %s21, %s3295
          %s3297 = sshll.u32 %s3267, 4
          %s3298 = int_to_ptr.vmem [resolvable:$true] %s3297
          %3303 = dma.vmem_to_hbm [thread:$0]  %s3298, 128, %s3296, %s3264, 64, 64, 4
        $region148: #{tpu_custom_call.1} parent=99 // pred_fallthru
          _
        // Predicated region
        $region149: #{tpu_custom_call.1} parent=99 // pred_check
          %p3304 = pneg %p565
        $region150: #{tpu_custom_call.1} parent=99 // pred_check_branch
          %3306 = sbr.rel (%p3304) target = $region152
        $region151: #{tpu_custom_call.1} parent=99 // pred_region
          %s3308 = ssub.s32 128, 128
          %3309 = vsyncadd %s3269, %s3308
          %s3310 = smul.addr %s51, 2
          %s3311 = sadd.s32 %s52, %s3310
          %s3312 = smul.addr %s3311, 64
          %s3313 = scalar_lea.hbm %s22, %s3312
          %s3314 = sshll.u32 %s3272, 4
          %s3315 = int_to_ptr.vmem [resolvable:$true] %s3314
          %3320 = dma.vmem_to_hbm [thread:$0]  %s3315, 128, %s3313, %s3269, 64, 64, 4
        $region152: #{tpu_custom_call.1} parent=99 // pred_fallthru
          _
      $region100: #{tpu_custom_call.1} parent=5 // pred_fallthru
        _
      %p3321 = scmp.le.s32.totalorder 2, %s42
      // Predicated region
      $region153: #{tpu_custom_call.1} parent=5 // pred_check
        %p3322 = pneg %p3321
      $region154: #{tpu_custom_call.1} parent=5 // pred_check_branch
        %3324 = sbr.rel (%p3322) target = $region156
      $region155: #{tpu_custom_call.1} parent=5 // pred_region
        %s3325 = ssub.s32 %s42, 2
        // Predicated region
        $region157: #{tpu_custom_call.1} parent=155 // pred_check
          %p3326 = pneg %p515
        $region158: #{tpu_custom_call.1} parent=155 // pred_check_branch
          %3328 = sbr.rel (%p3326) target = $region160
        $region159: #{tpu_custom_call.1} parent=155 // pred_region
          %s3329 = sand.u32 %s500, 1
          %s3330 = scalar_lea.sflag [#allocation8], %s3329
          %s3331 = sand.u32 %s500, 1
          %s3332 = smul.addr %s3331, 8
          %s3333 = scalar_lea.vmem [#allocation21], %s3332
          %3334 = dma.done %s3330, 128
        $region160: #{tpu_custom_call.1} parent=155 // pred_fallthru
          _
        // Predicated region
        $region161: #{tpu_custom_call.1} parent=155 // pred_check
          %p3335 = pneg %p543
        $region162: #{tpu_custom_call.1} parent=155 // pred_check_branch
          %3337 = sbr.rel (%p3335) target = $region164
        $region163: #{tpu_custom_call.1} parent=155 // pred_region
          %s3338 = sand.u32 %s48, 1
          %s3339 = scalar_lea.sflag [#allocation23], %s3338
          %s3340 = sand.u32 %s528, 1
          %s3341 = smul.addr %s3340, 8
          %s3342 = scalar_lea.vmem [#allocation22], %s3341
          %3343 = dma.done %s3339, 128
        $region164: #{tpu_custom_call.1} parent=155 // pred_fallthru
          _
        // Predicated region
        $region165: #{tpu_custom_call.1} parent=155 // pred_check
          %p3344 = pneg %p571
        $region166: #{tpu_custom_call.1} parent=155 // pred_check_branch
          %3346 = sbr.rel (%p3344) target = $region168
        $region167: #{tpu_custom_call.1} parent=155 // pred_region
          %s3347 = sand.u32 %s48, 1
          %s3348 = scalar_lea.sflag [#allocation23], %s3347
          %s3349 = sand.u32 %s556, 1
          %s3350 = smul.addr %s3349, 8
          %s3351 = scalar_lea.vmem [#allocation24], %s3350
          %3352 = dma.done %s3348, 128
        $region168: #{tpu_custom_call.1} parent=155 // pred_fallthru
          _
      $region156: #{tpu_custom_call.1} parent=5 // pred_fallthru
        _
    $region6: #{tpu_custom_call.1} parent=1 // loop_footer
      %s46 = sadd.s32 1, %s42
    $region7: #{tpu_custom_call.1} parent=1 // loop_footer_branch
      %41 = sbr.rel target = $region3
    $region8: #{tpu_custom_call.1} parent=1 // loop_exit
      _
    %3353 = vsyncpa [#allocation7], 1
    %s3354 = scalar_lea.sflag [#allocation7], 1
    %3355 = vsyncpa %s3354, 1
    %3356 = vsyncpa [#allocation10], 1
    %3357 = vsyncpa [#allocation13], 1
    %3358 = vsyncpa [#allocation16], 1
    %3359 = vsyncpa [#allocation19], 1
    %3360 = vsyncpa [#allocation8], 1
    %s3361 = scalar_lea.sflag [#allocation8], 1
    %3362 = vsyncpa %s3361, 1
    %3363 = vsyncpa [#allocation23], 1
    %s3364 = scalar_lea.sflag [#allocation23], 1
    %3365 = vsyncpa %s3364, 1

</llo_original>
